<compile_context>
chip_gen: v7x
topology: tpu7x:2x2x1
jax: 0.10.0
libtpu: 0.0.40
codegen_flags: <defaults>
</compile_context>

<pallas_src>
"""
Pallas TPU implementation of the PyTorch `DNN` module:

    nn.Sequential(nn.Linear(6, 4000), nn.ReLU(), nn.Linear(4000, 594))
    forward(x): logits.view(-1, 99, 6)

Changes vs. the previous version (per perf review):
  * Layer 1 now runs on the MXU as a zero-padded K=128 bf16 matmul instead of
    a serial 6-step VPU broadcast-MAC prologue (removes 25-45% of the per-tile
    critical path; the zero rows of W1 / zero lanes of x contribute nothing).
  * The resident weight/bias BlockSpecs (constant index_map) are single
    buffered via pipeline_mode=pl.Buffered(1) — the default 2-deep pipeline
    would just duplicate ~6 MiB of constants in VMEM (matters on v7x's 64 MiB).
  * Batch tiling guarantees >=2 grid steps whenever batch > 8 so the
    "parallel" grid axis can actually engage v7x's second TensorCore, and
    MAX_TILE_B is raised to 512 (vmem_limit_bytes 48 MiB, ~25-30 MiB used)
    to amortize per-grid-step overhead and improve MXU M-occupancy.
  * A pl.CostEstimate is attached so XLA schedules the surrounding ops
    (x pad, output slice/reshape) sensibly around the kernel.
Dims stay padded to MXU/lane-aligned sizes: K 6 -> 128, HIDDEN 4000 -> 4096,
OUT 594 -> 640 (lane-dense unmasked stores); padding is mathematically inert
(zero rows/cols) and the extra output lanes are sliced off in the JAX wrapper.
The final .view(-1, 99, 6) is a pure reshape done in JAX glue.
"""

import jax
import jax.numpy as jnp
from jax.experimental import pallas as pl
from jax.experimental.pallas import tpu as pltpu

IN_DIM = 6
HIDDEN = 4000
OUT_DIM = 594          # = 99 * 6

IN_PAD = 128           # layer-1 contraction dim padded to one MXU K tile
HIDDEN_PAD = 4096      # HIDDEN rounded up to a multiple of 128
OUT_PAD = 640          # OUT_DIM rounded up to a multiple of 128 (lane-dense)
MAX_TILE_B = 512       # batch tile per grid step (sublane-aligned)


def _dnn_kernel(x_ref, w1_ref, b1_ref, w2_ref, b2_ref, o_ref):
    """relu(x @ W1 + b1) @ W2 + b2 for one batch tile — both layers on the MXU."""
    # ---- Layer 1: (TB, 128) x (128, 4096), bf16 inputs, f32 accumulation ---
    # x lanes 6..127 and W1 rows 6..127 are zero, so the padding is inert.
    h = jnp.dot(x_ref[...].astype(jnp.bfloat16), w1_ref[...],
                preferred_element_type=jnp.float32)          # (TB, 4096) f32
    h = jnp.maximum(h + b1_ref[...], 0.0)                    # bias + ReLU

    # ---- Layer 2: (TB, 4096) x (4096, 640), bf16 inputs, f32 accumulation --
    y = jnp.dot(h.astype(jnp.bfloat16), w2_ref[...],
                preferred_element_type=jnp.float32)          # (TB, 640) f32
    o_ref[...] = y + b2_ref[...]


def _round_up(v, m):
    return ((v + m - 1) // m) * m


@jax.jit
def dnn_forward(x, w1, b1, w2, b2):
    """x: (B, 6) f32 -> (B, 99, 6) f32.  w1/w2 are padded bf16, b1/b2 padded f32."""
    batch = x.shape[0]
    # Batch tile: aim for >=2 grid steps (so v7x's second TC gets work) while
    # staying sublane-aligned and capped at MAX_TILE_B.
    tile_b = min(MAX_TILE_B, max(8, _round_up(-(-batch // 2), 8)))
    grid = (pl.cdiv(batch, tile_b),)

    # Lane-pad x: (B, 6) -> (B, 128).  Tiny vs. output traffic; gives aligned
    # loads and a clean K=128 MXU pass for layer 1.
    x_pad = jnp.pad(x, ((0, 0), (0, IN_PAD - IN_DIM)))

    # Advisory cost hint for XLA's scheduler around the custom call.
    flops = 2 * batch * (IN_PAD * HIDDEN_PAD + HIDDEN_PAD * OUT_PAD)
    bytes_accessed = (IN_PAD * HIDDEN_PAD * 2 + HIDDEN_PAD * 4        # W1, b1
                      + HIDDEN_PAD * OUT_PAD * 2 + OUT_PAD * 4        # W2, b2
                      + batch * (IN_PAD * 4 + OUT_PAD * 4))           # x, out

    resident = dict(pipeline_mode=pl.Buffered(1))   # constant-index: 1 buffer

    logits = pl.pallas_call(
        _dnn_kernel,
        out_shape=jax.ShapeDtypeStruct((batch, OUT_PAD), jnp.float32),
        grid=grid,
        in_specs=[
            pl.BlockSpec((tile_b, IN_PAD), lambda i: (i, 0)),              # x tile
            pl.BlockSpec((IN_PAD, HIDDEN_PAD), lambda i: (0, 0), **resident),   # W1
            pl.BlockSpec((1, HIDDEN_PAD), lambda i: (0, 0), **resident),        # b1
            pl.BlockSpec((HIDDEN_PAD, OUT_PAD), lambda i: (0, 0), **resident),  # W2
            pl.BlockSpec((1, OUT_PAD), lambda i: (0, 0), **resident),           # b2
        ],
        out_specs=pl.BlockSpec((tile_b, OUT_PAD), lambda i: (i, 0)),
        compiler_params=pltpu.CompilerParams(
            dimension_semantics=("parallel",),   # batch steps shardable across TCs
            vmem_limit_bytes=48 << 20,           # ~25-30 MiB used at tile 512
        ),
        cost_estimate=pl.CostEstimate(
            flops=flops, transcendentals=0, bytes_accessed=bytes_accessed),
    )(x_pad, w1, b1, w2, b2)

    # Drop lane padding, then torch's .view(-1, 99, 6).  (Consumers that can
    # read the padded (B, 640) buffer directly would avoid this extra copy.)
    return logits[:, :OUT_DIM].reshape(-1, 99, 6)


def init_params(key):
    """torch.nn.Linear default init: uniform(-1/sqrt(fan_in), 1/sqrt(fan_in)).
    Returned unpadded, f32, stored (in_features, out_features)."""
    k1, k2, k3, k4 = jax.random.split(key, 4)
    bound1 = 1.0 / (IN_DIM ** 0.5)
    bound2 = 1.0 / (HIDDEN ** 0.5)
    w1 = jax.random.uniform(k1, (IN_DIM, HIDDEN), jnp.float32, -bound1, bound1)
    b1 = jax.random.uniform(k2, (1, HIDDEN), jnp.float32, -bound1, bound1)
    w2 = jax.random.uniform(k3, (HIDDEN, OUT_DIM), jnp.float32, -bound2, bound2)
    b2 = jax.random.uniform(k4, (1, OUT_DIM), jnp.float32, -bound2, bound2)
    return w1, b1, w2, b2


def prepare_params(w1, b1, w2, b2):
    """Pad to MXU/lane-aligned shapes and cast weights to bf16.

    Zero-padded W1 rows (K 6->128) multiply the zero lanes of padded x; zero
    b1 entries / zero W2 rows make the padded hidden units contribute nothing;
    padded output columns are sliced off in the wrapper.
    """
    w1p = jnp.zeros((IN_PAD, HIDDEN_PAD), jnp.bfloat16)
    w1p = w1p.at[:IN_DIM, :HIDDEN].set(w1.astype(jnp.bfloat16))
    b1p = jnp.zeros((1, HIDDEN_PAD), jnp.float32).at[:, :HIDDEN].set(b1)
    # TODO(synk): on v7x, W2 could be quantized to fp8 (per-column scale) to
    # halve the resident weight footprint and raise MXU throughput.
    w2p = jnp.zeros((HIDDEN_PAD, OUT_PAD), jnp.bfloat16)
    w2p = w2p.at[:HIDDEN, :OUT_DIM].set(w2.astype(jnp.bfloat16))
    b2p = jnp.zeros((1, OUT_PAD), jnp.float32).at[:, :OUT_DIM].set(b2)
    return w1p, b1p, w2p, b2p


if __name__ == "__main__":
    key = jax.random.PRNGKey(0)
    k_param, k_x = jax.random.split(key)
    w1, b1, w2, b2 = init_params(k_param)
    w1p, b1p, w2p, b2p = prepare_params(w1, b1, w2, b2)

    batch = 8
    x = jax.random.normal(k_x, (batch, IN_DIM), jnp.float32)

    out = dnn_forward(x, w1p, b1p, w2p, b2p)
    out = jax.block_until_ready(out)
    assert out.shape == (batch, 99, 6), out.shape

    # Reference in plain JAX using the same bf16-rounded weights.
    w1r = w1p[:IN_DIM, :HIDDEN].astype(jnp.float32)
    w2r = w2p[:HIDDEN, :OUT_DIM].astype(jnp.float32)
    h_ref = jnp.maximum(x @ w1r + b1, 0.0)
    ref = jnp.dot(h_ref, w2r, precision=jax.lax.Precision.HIGHEST) + b2
    ref = ref.reshape(-1, 99, 6)
    max_err = float(jnp.max(jnp.abs(out - ref)))
    assert jnp.allclose(out, ref, atol=2e-2, rtol=2e-2), max_err

    print("KERNEL_OK")
</pallas_src>

<mosaic_0001>
module attributes {stable_mosaic.version = 11 : i64} {
  func.func @_dnn_kernel(%arg0: i32, %arg1: memref<8x128xf32, #tpu.memory_space<vmem>>, %arg2: memref<128x4096xbf16, #tpu.memory_space<vmem>>, %arg3: memref<1x4096xf32, #tpu.memory_space<vmem>>, %arg4: memref<4096x640xbf16, #tpu.memory_space<vmem>>, %arg5: memref<1x640xf32, #tpu.memory_space<vmem>>, %arg6: memref<8x640xf32, #tpu.memory_space<vmem>>) attributes {dimension_semantics = [#tpu.dimension_semantics<parallel>], iteration_bounds = array<i64: 1>, scalar_prefetch = 0 : i64, scratch_operands = 0 : i64, tpu.core_type = #tpu.core_type<tc>, window_params = [{transform_indices = @transform_0, window_bounds = array<i64: 8, 128>}, {pipeline_mode = #tpu.pipeline_mode<synchronous>, transform_indices = @transform_1, window_bounds = array<i64: 128, 4096>}, {pipeline_mode = #tpu.pipeline_mode<synchronous>, transform_indices = @transform_2, window_bounds = array<i64: 1, 4096>}, {pipeline_mode = #tpu.pipeline_mode<synchronous>, transform_indices = @transform_3, window_bounds = array<i64: 4096, 640>}, {pipeline_mode = #tpu.pipeline_mode<synchronous>, transform_indices = @transform_4, window_bounds = array<i64: 1, 640>}, {transform_indices = @transform_5, window_bounds = array<i64: 8, 640>}]} {
    %c0 = arith.constant 0 : index
    %c0_0 = arith.constant 0 : index
    %0 = vector.load %arg1[%c0, %c0_0] : memref<8x128xf32, #tpu.memory_space<vmem>>, vector<8x128xf32>
    %1 = arith.truncf %0 : vector<8x128xf32> to vector<8x128xbf16>
    %c0_1 = arith.constant 0 : index
    %c0_2 = arith.constant 0 : index
    %2 = vector.load %arg2[%c0_1, %c0_2] : memref<128x4096xbf16, #tpu.memory_space<vmem>>, vector<128x4096xbf16>
    %cst = arith.constant dense<0.000000e+00> : vector<8x4096xf32>
    %3 = tpu.matmul %1, %2, %cst {dimension_numbers = #tpu.dot_dimension_numbers<[1], [0], [0], [1], [0, 0, 1, 1], [], []>} : vector<8x128xbf16>, vector<128x4096xbf16>, vector<8x4096xf32> -> vector<8x4096xf32>
    %c0_3 = arith.constant 0 : index
    %c0_4 = arith.constant 0 : index
    %4 = vector.load %arg3[%c0_3, %c0_4] : memref<1x4096xf32, #tpu.memory_space<vmem>>, vector<1x4096xf32>
    %5 = vector.broadcast %4 : vector<1x4096xf32> to vector<8x4096xf32>
    %6 = arith.addf %3, %5 : vector<8x4096xf32>
    %cst_5 = arith.constant 0.000000e+00 : f32
    %7 = vector.broadcast %cst_5 : f32 to vector<8x4096xf32>
    %8 = arith.maximumf %6, %7 : vector<8x4096xf32>
    %9 = arith.truncf %8 : vector<8x4096xf32> to vector<8x4096xbf16>
    %c0_6 = arith.constant 0 : index
    %c0_7 = arith.constant 0 : index
    %10 = vector.load %arg4[%c0_6, %c0_7] : memref<4096x640xbf16, #tpu.memory_space<vmem>>, vector<4096x640xbf16>
    %cst_8 = arith.constant dense<0.000000e+00> : vector<8x640xf32>
    %11 = tpu.matmul %9, %10, %cst_8 {dimension_numbers = #tpu.dot_dimension_numbers<[1], [0], [0], [1], [0, 0, 1, 1], [], []>} : vector<8x4096xbf16>, vector<4096x640xbf16>, vector<8x640xf32> -> vector<8x640xf32>
    %c0_9 = arith.constant 0 : index
    %c0_10 = arith.constant 0 : index
    %12 = vector.load %arg5[%c0_9, %c0_10] : memref<1x640xf32, #tpu.memory_space<vmem>>, vector<1x640xf32>
    %13 = vector.broadcast %12 : vector<1x640xf32> to vector<8x640xf32>
    %14 = arith.addf %11, %13 : vector<8x640xf32>
    %c0_11 = arith.constant 0 : index
    %c0_12 = arith.constant 0 : index
    %15 = vector.load %arg6[%c0_11, %c0_12] : memref<8x640xf32, #tpu.memory_space<vmem>>, vector<8x640xf32>
    tpu.vector_store %arg6[%c0_11, %c0_12], %14 {strides = array<i32>} : memref<8x640xf32, #tpu.memory_space<vmem>>, vector<8x640xf32>,
    return
  }
  func.func @transform_0(%arg0: i32) -> (i32, i32) {
    %c0_i32 = arith.constant 0 : i32
    %c0_i32_0 = arith.constant 0 : i32
    return %arg0, %c0_i32 : i32, i32
  }
  func.func @transform_1(%arg0: i32) -> (i32, i32) {
    %c0_i32 = arith.constant 0 : i32
    %c0_i32_0 = arith.constant 0 : i32
    %c0_i32_1 = arith.constant 0 : i32
    return %c0_i32, %c0_i32_0 : i32, i32
  }
  func.func @transform_2(%arg0: i32) -> (i32, i32) {
    %c0_i32 = arith.constant 0 : i32
    %c0_i32_0 = arith.constant 0 : i32
    %c0_i32_1 = arith.constant 0 : i32
    return %c0_i32, %c0_i32_0 : i32, i32
  }
  func.func @transform_3(%arg0: i32) -> (i32, i32) {
    %c0_i32 = arith.constant 0 : i32
    %c0_i32_0 = arith.constant 0 : i32
    %c0_i32_1 = arith.constant 0 : i32
    return %c0_i32, %c0_i32_0 : i32, i32
  }
  func.func @transform_4(%arg0: i32) -> (i32, i32) {
    %c0_i32 = arith.constant 0 : i32
    %c0_i32_0 = arith.constant 0 : i32
    %c0_i32_1 = arith.constant 0 : i32
    return %c0_i32, %c0_i32_0 : i32, i32
  }
  func.func @transform_5(%arg0: i32) -> (i32, i32) {
    %c0_i32 = arith.constant 0 : i32
    %c0_i32_0 = arith.constant 0 : i32
    return %arg0, %c0_i32 : i32, i32
  }
}

</mosaic_0001>

<llo_original>
// kernel: dnn_forward.1
$region0: #{dnn_forward.1}
  #allocation0 [shape = 'u32[]', space=smem, size = 0x4, offset = 0x4, fixed_abs, tag = 'smem constant byte address 0x4 - core index']
  #allocation1 [shape = 'u32[144,128]{1,0:T(1,128)}', space=vmem, size = 0x12000, scoped, tag = 'internal scratch']
  %s0 = inlined_call_operand.vmem [shape: f32[8,128], index: 0, kind: input, shape index: {}]
  %s1 = inlined_call_operand.hbm [shape: bf16[128,4096], index: 1, kind: input, shape index: {}]
  %s2 = inlined_call_operand.hbm [shape: f32[1,4096], index: 2, kind: input, shape index: {}]
  %s3 = inlined_call_operand.hbm [shape: bf16[4096,640], index: 3, kind: input, shape index: {}]
  %s4 = inlined_call_operand.hbm [shape: f32[1,640], index: 4, kind: input, shape index: {}]
  %s5 = inlined_call_operand.vmem [shape: f32[8,640], index: 5, kind: output, shape index: {}]
  %s6 = sld [smem:[#allocation0]]
  $region46: #{dnn_forward.1} parent=0
    _
  %s8 = ssub.s32 1, %s6
  %s9 = scalar_select 0, %s8, %s6
  $region1: #{dnn_forward.1} parent=0
    #allocation2 [shape = 'u8[1048576]{0}', space=vmem, size = 0x100000, scoped, tag = 'input window, operand 1, single buffered']
    #allocation3 [shape = 's32[1]{0}', space=sflag, size = 0x4, scoped, tag = 'scoped memory for dnn_forward.1']
    #allocation4 [shape = 'u8[16384]{0}', space=vmem, size = 0x4000, scoped, tag = 'input window, operand 2, single buffered']
    #allocation5 [shape = 's32[1]{0}', space=sflag, size = 0x4, scoped, tag = 'scoped memory for dnn_forward.1']
    #allocation6 [shape = 'u8[5242880]{0}', space=vmem, size = 0x500000, scoped, tag = 'input window, operand 3, single buffered']
    #allocation7 [shape = 'u8[2560]{0}', space=vmem, size = 0xc00, scoped, tag = 'input window, operand 4, single buffered']
    #allocation8 [shape = 's32[1]{0}', space=sflag, size = 0x4, scoped, tag = 'scoped memory for dnn_forward.1']
    %10 = vsyncpa [#allocation3], 0
    %11 = vsyncpa [#allocation5], 0
    %12 = vsyncpa [#allocation8], 0
    // Predicated region
    $region2: #{dnn_forward.1} parent=1 // pred_check
      _
    $region3: #{dnn_forward.1} parent=1 // pred_check_branch
      %14 = sbr.rel (0) target = $region5
    $region4: #{dnn_forward.1} parent=1 // pred_region
      _
    $region5: #{dnn_forward.1} parent=1 // pred_fallthru
      _
    // Predicated region
    $region6: #{dnn_forward.1} parent=1 // pred_check
      _
    $region7: #{dnn_forward.1} parent=1 // pred_check_branch
      %16 = sbr.rel (0) target = $region9
    $region8: #{dnn_forward.1} parent=1 // pred_region
      %s18 = ssub.s32 32768, 32768
      %19 = vsyncadd [#allocation3], %s18
      %s20 = sshll.u32 [#allocation2], 4
      %s21 = int_to_ptr.vmem [resolvable:$true] %s20
      %26 = dma.hbm_to_vmem [thread:$0]  %s1, 32768, %s21, [#allocation3], 2048, 2048, 128
    $region9: #{dnn_forward.1} parent=1 // pred_fallthru
      _
    // Predicated region
    $region10: #{dnn_forward.1} parent=1 // pred_check
      _
    $region11: #{dnn_forward.1} parent=1 // pred_check_branch
      %28 = sbr.rel (0) target = $region13
    $region12: #{dnn_forward.1} parent=1 // pred_region
      %s30 = ssub.s32 512, 512
      %31 = vsyncadd [#allocation5], %s30
      %s33 = sshll.u32 [#allocation4], 4
      %s34 = int_to_ptr.vmem [resolvable:$true] %s33
      %36 = dma.hbm_to_vmem [thread:$0]  %s2, 512, %s34, [#allocation5]
    $region13: #{dnn_forward.1} parent=1 // pred_fallthru
      _
    // Predicated region
    $region14: #{dnn_forward.1} parent=1 // pred_check
      _
    $region15: #{dnn_forward.1} parent=1 // pred_check_branch
      %38 = sbr.rel (0) target = $region17
    $region16: #{dnn_forward.1} parent=1 // pred_region
      %s40 = ssub.s32 163840, 163840
      %41 = vsyncadd [#allocation5], %s40
      %s42 = sshll.u32 [#allocation6], 4
      %s43 = int_to_ptr.vmem [resolvable:$true] %s42
      %48 = dma.hbm_to_vmem [thread:$0]  %s3, 163840, %s43, [#allocation5], 320, 320, 20
    $region17: #{dnn_forward.1} parent=1 // pred_fallthru
      _
    // Predicated region
    $region18: #{dnn_forward.1} parent=1 // pred_check
      _
    $region19: #{dnn_forward.1} parent=1 // pred_check_branch
      %50 = sbr.rel (0) target = $region21
    $region20: #{dnn_forward.1} parent=1 // pred_region
      %s52 = ssub.s32 80, 80
      %53 = vsyncadd [#allocation8], %s52
      %s55 = sshll.u32 [#allocation7], 4
      %s56 = int_to_ptr.vmem [resolvable:$true] %s55
      %58 = dma.hbm_to_vmem [thread:$0]  %s4, 80, %s56, [#allocation8]
    $region21: #{dnn_forward.1} parent=1 // pred_fallthru
      _
    // Predicated region
    $region22: #{dnn_forward.1} parent=1 // pred_check
      _
    $region23: #{dnn_forward.1} parent=1 // pred_check_branch
      %60 = sbr.rel (0) target = $region25
    $region24: #{dnn_forward.1} parent=1 // pred_region
      %61 = dma.done [#allocation3], 32768
    $region25: #{dnn_forward.1} parent=1 // pred_fallthru
      _
    // Predicated region
    $region26: #{dnn_forward.1} parent=1 // pred_check
      _
    $region27: #{dnn_forward.1} parent=1 // pred_check_branch
      %63 = sbr.rel (0) target = $region29
    $region28: #{dnn_forward.1} parent=1 // pred_region
      %64 = dma.done [#allocation5], 512
    $region29: #{dnn_forward.1} parent=1 // pred_fallthru
      _
    // Predicated region
    $region30: #{dnn_forward.1} parent=1 // pred_check
      _
    $region31: #{dnn_forward.1} parent=1 // pred_check_branch
      %66 = sbr.rel (0) target = $region33
    $region32: #{dnn_forward.1} parent=1 // pred_region
      %67 = dma.done [#allocation5], 163840
    $region33: #{dnn_forward.1} parent=1 // pred_fallthru
      _
    // Predicated region
    $region34: #{dnn_forward.1} parent=1 // pred_check
      _
    $region35: #{dnn_forward.1} parent=1 // pred_check_branch
      %69 = sbr.rel (0) target = $region37
    $region36: #{dnn_forward.1} parent=1 // pred_region
      %70 = dma.done [#allocation8], 80
    $region37: #{dnn_forward.1} parent=1 // pred_fallthru
      _
    %v72 = vld [vmem:[%s0] sm:$0xff]
    %v73 = vpack.c.bf16 %v72, %v72
    %v74 = vld [vmem:[#allocation2] sm:$0xff]
    %v75 = vld [vmem:[#allocation2 + $0x8] sm:$0xff]
    %v76 = vld [vmem:[#allocation2 + $0x10] sm:$0xff]
    %v77 = vld [vmem:[#allocation2 + $0x18] sm:$0xff]
    %v78 = vld [vmem:[#allocation2 + $0x20] sm:$0xff]
    %v79 = vld [vmem:[#allocation2 + $0x28] sm:$0xff]
    %v80 = vld [vmem:[#allocation2 + $0x30] sm:$0xff]
    %v81 = vld [vmem:[#allocation2 + $0x38] sm:$0xff]
    %v82 = vld [vmem:[#allocation2 + $0x40] sm:$0xff]
    %v83 = vld [vmem:[#allocation2 + $0x48] sm:$0xff]
    %v84 = vld [vmem:[#allocation2 + $0x50] sm:$0xff]
    %v85 = vld [vmem:[#allocation2 + $0x58] sm:$0xff]
    %v86 = vld [vmem:[#allocation2 + $0x60] sm:$0xff]
    %v87 = vld [vmem:[#allocation2 + $0x68] sm:$0xff]
    %v88 = vld [vmem:[#allocation2 + $0x70] sm:$0xff]
    %v89 = vld [vmem:[#allocation2 + $0x78] sm:$0xff]
    %v90 = vld [vmem:[#allocation2 + $0x80] sm:$0xff]
    %v91 = vld [vmem:[#allocation2 + $0x88] sm:$0xff]
    %v92 = vld [vmem:[#allocation2 + $0x90] sm:$0xff]
    %v93 = vld [vmem:[#allocation2 + $0x98] sm:$0xff]
    %v94 = vld [vmem:[#allocation2 + $0xa0] sm:$0xff]
    %v95 = vld [vmem:[#allocation2 + $0xa8] sm:$0xff]
    %v96 = vld [vmem:[#allocation2 + $0xb0] sm:$0xff]
    %v97 = vld [vmem:[#allocation2 + $0xb8] sm:$0xff]
    %v98 = vld [vmem:[#allocation2 + $0xc0] sm:$0xff]
    %v99 = vld [vmem:[#allocation2 + $0xc8] sm:$0xff]
    %v100 = vld [vmem:[#allocation2 + $0xd0] sm:$0xff]
    %v101 = vld [vmem:[#allocation2 + $0xd8] sm:$0xff]
    %v102 = vld [vmem:[#allocation2 + $0xe0] sm:$0xff]
    %v103 = vld [vmem:[#allocation2 + $0xe8] sm:$0xff]
    %v104 = vld [vmem:[#allocation2 + $0xf0] sm:$0xff]
    %v105 = vld [vmem:[#allocation2 + $0xf8] sm:$0xff]
    %v106 = vld [vmem:[#allocation2 + $0x100] sm:$0xff]
    %v107 = vld [vmem:[#allocation2 + $0x108] sm:$0xff]
    %v108 = vld [vmem:[#allocation2 + $0x110] sm:$0xff]
    %v109 = vld [vmem:[#allocation2 + $0x118] sm:$0xff]
    %v110 = vld [vmem:[#allocation2 + $0x120] sm:$0xff]
    %v111 = vld [vmem:[#allocation2 + $0x128] sm:$0xff]
    %v112 = vld [vmem:[#allocation2 + $0x130] sm:$0xff]
    %v113 = vld [vmem:[#allocation2 + $0x138] sm:$0xff]
    %v114 = vld [vmem:[#allocation2 + $0x140] sm:$0xff]
    %v115 = vld [vmem:[#allocation2 + $0x148] sm:$0xff]
    %v116 = vld [vmem:[#allocation2 + $0x150] sm:$0xff]
    %v117 = vld [vmem:[#allocation2 + $0x158] sm:$0xff]
    %v118 = vld [vmem:[#allocation2 + $0x160] sm:$0xff]
    %v119 = vld [vmem:[#allocation2 + $0x168] sm:$0xff]
    %v120 = vld [vmem:[#allocation2 + $0x170] sm:$0xff]
    %v121 = vld [vmem:[#allocation2 + $0x178] sm:$0xff]
    %v122 = vld [vmem:[#allocation2 + $0x180] sm:$0xff]
    %v123 = vld [vmem:[#allocation2 + $0x188] sm:$0xff]
    %v124 = vld [vmem:[#allocation2 + $0x190] sm:$0xff]
    %v125 = vld [vmem:[#allocation2 + $0x198] sm:$0xff]
    %v126 = vld [vmem:[#allocation2 + $0x1a0] sm:$0xff]
    %v127 = vld [vmem:[#allocation2 + $0x1a8] sm:$0xff]
    %v128 = vld [vmem:[#allocation2 + $0x1b0] sm:$0xff]
    %v129 = vld [vmem:[#allocation2 + $0x1b8] sm:$0xff]
    %v130 = vld [vmem:[#allocation2 + $0x1c0] sm:$0xff]
    %v131 = vld [vmem:[#allocation2 + $0x1c8] sm:$0xff]
    %v132 = vld [vmem:[#allocation2 + $0x1d0] sm:$0xff]
    %v133 = vld [vmem:[#allocation2 + $0x1d8] sm:$0xff]
    %v134 = vld [vmem:[#allocation2 + $0x1e0] sm:$0xff]
    %v135 = vld [vmem:[#allocation2 + $0x1e8] sm:$0xff]
    %v136 = vld [vmem:[#allocation2 + $0x1f0] sm:$0xff]
    %v137 = vld [vmem:[#allocation2 + $0x1f8] sm:$0xff]
    %v138 = vld [vmem:[#allocation2 + $0x200] sm:$0xff]
    %v139 = vld [vmem:[#allocation2 + $0x208] sm:$0xff]
    %v140 = vld [vmem:[#allocation2 + $0x210] sm:$0xff]
    %v141 = vld [vmem:[#allocation2 + $0x218] sm:$0xff]
    %v142 = vld [vmem:[#allocation2 + $0x220] sm:$0xff]
    %v143 = vld [vmem:[#allocation2 + $0x228] sm:$0xff]
    %v144 = vld [vmem:[#allocation2 + $0x230] sm:$0xff]
    %v145 = vld [vmem:[#allocation2 + $0x238] sm:$0xff]
    %v146 = vld [vmem:[#allocation2 + $0x240] sm:$0xff]
    %v147 = vld [vmem:[#allocation2 + $0x248] sm:$0xff]
    %v148 = vld [vmem:[#allocation2 + $0x250] sm:$0xff]
    %v149 = vld [vmem:[#allocation2 + $0x258] sm:$0xff]
    %v150 = vld [vmem:[#allocation2 + $0x260] sm:$0xff]
    %v151 = vld [vmem:[#allocation2 + $0x268] sm:$0xff]
    %v152 = vld [vmem:[#allocation2 + $0x270] sm:$0xff]
    %v153 = vld [vmem:[#allocation2 + $0x278] sm:$0xff]
    %v154 = vld [vmem:[#allocation2 + $0x280] sm:$0xff]
    %v155 = vld [vmem:[#allocation2 + $0x288] sm:$0xff]
    %v156 = vld [vmem:[#allocation2 + $0x290] sm:$0xff]
    %v157 = vld [vmem:[#allocation2 + $0x298] sm:$0xff]
    %v158 = vld [vmem:[#allocation2 + $0x2a0] sm:$0xff]
    %v159 = vld [vmem:[#allocation2 + $0x2a8] sm:$0xff]
    %v160 = vld [vmem:[#allocation2 + $0x2b0] sm:$0xff]
    %v161 = vld [vmem:[#allocation2 + $0x2b8] sm:$0xff]
    %v162 = vld [vmem:[#allocation2 + $0x2c0] sm:$0xff]
    %v163 = vld [vmem:[#allocation2 + $0x2c8] sm:$0xff]
    %v164 = vld [vmem:[#allocation2 + $0x2d0] sm:$0xff]
    %v165 = vld [vmem:[#allocation2 + $0x2d8] sm:$0xff]
    %v166 = vld [vmem:[#allocation2 + $0x2e0] sm:$0xff]
    %v167 = vld [vmem:[#allocation2 + $0x2e8] sm:$0xff]
    %v168 = vld [vmem:[#allocation2 + $0x2f0] sm:$0xff]
    %v169 = vld [vmem:[#allocation2 + $0x2f8] sm:$0xff]
    %v170 = vld [vmem:[#allocation2 + $0x300] sm:$0xff]
    %v171 = vld [vmem:[#allocation2 + $0x308] sm:$0xff]
    %v172 = vld [vmem:[#allocation2 + $0x310] sm:$0xff]
    %v173 = vld [vmem:[#allocation2 + $0x318] sm:$0xff]
    %v174 = vld [vmem:[#allocation2 + $0x320] sm:$0xff]
    %v175 = vld [vmem:[#allocation2 + $0x328] sm:$0xff]
    %v176 = vld [vmem:[#allocation2 + $0x330] sm:$0xff]
    %v177 = vld [vmem:[#allocation2 + $0x338] sm:$0xff]
    %v178 = vld [vmem:[#allocation2 + $0x340] sm:$0xff]
    %v179 = vld [vmem:[#allocation2 + $0x348] sm:$0xff]
    %v180 = vld [vmem:[#allocation2 + $0x350] sm:$0xff]
    %v181 = vld [vmem:[#allocation2 + $0x358] sm:$0xff]
    %v182 = vld [vmem:[#allocation2 + $0x360] sm:$0xff]
    %v183 = vld [vmem:[#allocation2 + $0x368] sm:$0xff]
    %v184 = vld [vmem:[#allocation2 + $0x370] sm:$0xff]
    %v185 = vld [vmem:[#allocation2 + $0x378] sm:$0xff]
    %v186 = vld [vmem:[#allocation2 + $0x380] sm:$0xff]
    %v187 = vld [vmem:[#allocation2 + $0x388] sm:$0xff]
    %v188 = vld [vmem:[#allocation2 + $0x390] sm:$0xff]
    %v189 = vld [vmem:[#allocation2 + $0x398] sm:$0xff]
    %v190 = vld [vmem:[#allocation2 + $0x3a0] sm:$0xff]
    %v191 = vld [vmem:[#allocation2 + $0x3a8] sm:$0xff]
    %v192 = vld [vmem:[#allocation2 + $0x3b0] sm:$0xff]
    %v193 = vld [vmem:[#allocation2 + $0x3b8] sm:$0xff]
    %v194 = vld [vmem:[#allocation2 + $0x3c0] sm:$0xff]
    %v195 = vld [vmem:[#allocation2 + $0x3c8] sm:$0xff]
    %v196 = vld [vmem:[#allocation2 + $0x3d0] sm:$0xff]
    %v197 = vld [vmem:[#allocation2 + $0x3d8] sm:$0xff]
    %v198 = vld [vmem:[#allocation2 + $0x3e0] sm:$0xff]
    %v199 = vld [vmem:[#allocation2 + $0x3e8] sm:$0xff]
    %v200 = vld [vmem:[#allocation2 + $0x3f0] sm:$0xff]
    %v201 = vld [vmem:[#allocation2 + $0x3f8] sm:$0xff]
    %v202 = vld [vmem:[#allocation2 + $0x400] sm:$0xff]
    %v203 = vld [vmem:[#allocation2 + $0x408] sm:$0xff]
    %v204 = vld [vmem:[#allocation2 + $0x410] sm:$0xff]
    %v205 = vld [vmem:[#allocation2 + $0x418] sm:$0xff]
    %v206 = vld [vmem:[#allocation2 + $0x420] sm:$0xff]
    %v207 = vld [vmem:[#allocation2 + $0x428] sm:$0xff]
    %v208 = vld [vmem:[#allocation2 + $0x430] sm:$0xff]
    %v209 = vld [vmem:[#allocation2 + $0x438] sm:$0xff]
    %v210 = vld [vmem:[#allocation2 + $0x440] sm:$0xff]
    %v211 = vld [vmem:[#allocation2 + $0x448] sm:$0xff]
    %v212 = vld [vmem:[#allocation2 + $0x450] sm:$0xff]
    %v213 = vld [vmem:[#allocation2 + $0x458] sm:$0xff]
    %v214 = vld [vmem:[#allocation2 + $0x460] sm:$0xff]
    %v215 = vld [vmem:[#allocation2 + $0x468] sm:$0xff]
    %v216 = vld [vmem:[#allocation2 + $0x470] sm:$0xff]
    %v217 = vld [vmem:[#allocation2 + $0x478] sm:$0xff]
    %v218 = vld [vmem:[#allocation2 + $0x480] sm:$0xff]
    %v219 = vld [vmem:[#allocation2 + $0x488] sm:$0xff]
    %v220 = vld [vmem:[#allocation2 + $0x490] sm:$0xff]
    %v221 = vld [vmem:[#allocation2 + $0x498] sm:$0xff]
    %v222 = vld [vmem:[#allocation2 + $0x4a0] sm:$0xff]
    %v223 = vld [vmem:[#allocation2 + $0x4a8] sm:$0xff]
    %v224 = vld [vmem:[#allocation2 + $0x4b0] sm:$0xff]
    %v225 = vld [vmem:[#allocation2 + $0x4b8] sm:$0xff]
    %v226 = vld [vmem:[#allocation2 + $0x4c0] sm:$0xff]
    %v227 = vld [vmem:[#allocation2 + $0x4c8] sm:$0xff]
    %v228 = vld [vmem:[#allocation2 + $0x4d0] sm:$0xff]
    %v229 = vld [vmem:[#allocation2 + $0x4d8] sm:$0xff]
    %v230 = vld [vmem:[#allocation2 + $0x4e0] sm:$0xff]
    %v231 = vld [vmem:[#allocation2 + $0x4e8] sm:$0xff]
    %v232 = vld [vmem:[#allocation2 + $0x4f0] sm:$0xff]
    %v233 = vld [vmem:[#allocation2 + $0x4f8] sm:$0xff]
    %v234 = vld [vmem:[#allocation2 + $0x500] sm:$0xff]
    %v235 = vld [vmem:[#allocation2 + $0x508] sm:$0xff]
    %v236 = vld [vmem:[#allocation2 + $0x510] sm:$0xff]
    %v237 = vld [vmem:[#allocation2 + $0x518] sm:$0xff]
    %v238 = vld [vmem:[#allocation2 + $0x520] sm:$0xff]
    %v239 = vld [vmem:[#allocation2 + $0x528] sm:$0xff]
    %v240 = vld [vmem:[#allocation2 + $0x530] sm:$0xff]
    %v241 = vld [vmem:[#allocation2 + $0x538] sm:$0xff]
    %v242 = vld [vmem:[#allocation2 + $0x540] sm:$0xff]
    %v243 = vld [vmem:[#allocation2 + $0x548] sm:$0xff]
    %v244 = vld [vmem:[#allocation2 + $0x550] sm:$0xff]
    %v245 = vld [vmem:[#allocation2 + $0x558] sm:$0xff]
    %v246 = vld [vmem:[#allocation2 + $0x560] sm:$0xff]
    %v247 = vld [vmem:[#allocation2 + $0x568] sm:$0xff]
    %v248 = vld [vmem:[#allocation2 + $0x570] sm:$0xff]
    %v249 = vld [vmem:[#allocation2 + $0x578] sm:$0xff]
    %v250 = vld [vmem:[#allocation2 + $0x580] sm:$0xff]
    %v251 = vld [vmem:[#allocation2 + $0x588] sm:$0xff]
    %v252 = vld [vmem:[#allocation2 + $0x590] sm:$0xff]
    %v253 = vld [vmem:[#allocation2 + $0x598] sm:$0xff]
    %v254 = vld [vmem:[#allocation2 + $0x5a0] sm:$0xff]
    %v255 = vld [vmem:[#allocation2 + $0x5a8] sm:$0xff]
    %v256 = vld [vmem:[#allocation2 + $0x5b0] sm:$0xff]
    %v257 = vld [vmem:[#allocation2 + $0x5b8] sm:$0xff]
    %v258 = vld [vmem:[#allocation2 + $0x5c0] sm:$0xff]
    %v259 = vld [vmem:[#allocation2 + $0x5c8] sm:$0xff]
    %v260 = vld [vmem:[#allocation2 + $0x5d0] sm:$0xff]
    %v261 = vld [vmem:[#allocation2 + $0x5d8] sm:$0xff]
    %v262 = vld [vmem:[#allocation2 + $0x5e0] sm:$0xff]
    %v263 = vld [vmem:[#allocation2 + $0x5e8] sm:$0xff]
    %v264 = vld [vmem:[#allocation2 + $0x5f0] sm:$0xff]
    %v265 = vld [vmem:[#allocation2 + $0x5f8] sm:$0xff]
    %v266 = vld [vmem:[#allocation2 + $0x600] sm:$0xff]
    %v267 = vld [vmem:[#allocation2 + $0x608] sm:$0xff]
    %v268 = vld [vmem:[#allocation2 + $0x610] sm:$0xff]
    %v269 = vld [vmem:[#allocation2 + $0x618] sm:$0xff]
    %v270 = vld [vmem:[#allocation2 + $0x620] sm:$0xff]
    %v271 = vld [vmem:[#allocation2 + $0x628] sm:$0xff]
    %v272 = vld [vmem:[#allocation2 + $0x630] sm:$0xff]
    %v273 = vld [vmem:[#allocation2 + $0x638] sm:$0xff]
    %v274 = vld [vmem:[#allocation2 + $0x640] sm:$0xff]
    %v275 = vld [vmem:[#allocation2 + $0x648] sm:$0xff]
    %v276 = vld [vmem:[#allocation2 + $0x650] sm:$0xff]
    %v277 = vld [vmem:[#allocation2 + $0x658] sm:$0xff]
    %v278 = vld [vmem:[#allocation2 + $0x660] sm:$0xff]
    %v279 = vld [vmem:[#allocation2 + $0x668] sm:$0xff]
    %v280 = vld [vmem:[#allocation2 + $0x670] sm:$0xff]
    %v281 = vld [vmem:[#allocation2 + $0x678] sm:$0xff]
    %v282 = vld [vmem:[#allocation2 + $0x680] sm:$0xff]
    %v283 = vld [vmem:[#allocation2 + $0x688] sm:$0xff]
    %v284 = vld [vmem:[#allocation2 + $0x690] sm:$0xff]
    %v285 = vld [vmem:[#allocation2 + $0x698] sm:$0xff]
    %v286 = vld [vmem:[#allocation2 + $0x6a0] sm:$0xff]
    %v287 = vld [vmem:[#allocation2 + $0x6a8] sm:$0xff]
    %v288 = vld [vmem:[#allocation2 + $0x6b0] sm:$0xff]
    %v289 = vld [vmem:[#allocation2 + $0x6b8] sm:$0xff]
    %v290 = vld [vmem:[#allocation2 + $0x6c0] sm:$0xff]
    %v291 = vld [vmem:[#allocation2 + $0x6c8] sm:$0xff]
    %v292 = vld [vmem:[#allocation2 + $0x6d0] sm:$0xff]
    %v293 = vld [vmem:[#allocation2 + $0x6d8] sm:$0xff]
    %v294 = vld [vmem:[#allocation2 + $0x6e0] sm:$0xff]
    %v295 = vld [vmem:[#allocation2 + $0x6e8] sm:$0xff]
    %v296 = vld [vmem:[#allocation2 + $0x6f0] sm:$0xff]
    %v297 = vld [vmem:[#allocation2 + $0x6f8] sm:$0xff]
    %v298 = vld [vmem:[#allocation2 + $0x700] sm:$0xff]
    %v299 = vld [vmem:[#allocation2 + $0x708] sm:$0xff]
    %v300 = vld [vmem:[#allocation2 + $0x710] sm:$0xff]
    %v301 = vld [vmem:[#allocation2 + $0x718] sm:$0xff]
    %v302 = vld [vmem:[#allocation2 + $0x720] sm:$0xff]
    %v303 = vld [vmem:[#allocation2 + $0x728] sm:$0xff]
    %v304 = vld [vmem:[#allocation2 + $0x730] sm:$0xff]
    %v305 = vld [vmem:[#allocation2 + $0x738] sm:$0xff]
    %v306 = vld [vmem:[#allocation2 + $0x740] sm:$0xff]
    %v307 = vld [vmem:[#allocation2 + $0x748] sm:$0xff]
    %v308 = vld [vmem:[#allocation2 + $0x750] sm:$0xff]
    %v309 = vld [vmem:[#allocation2 + $0x758] sm:$0xff]
    %v310 = vld [vmem:[#allocation2 + $0x760] sm:$0xff]
    %v311 = vld [vmem:[#allocation2 + $0x768] sm:$0xff]
    %v312 = vld [vmem:[#allocation2 + $0x770] sm:$0xff]
    %v313 = vld [vmem:[#allocation2 + $0x778] sm:$0xff]
    %v314 = vld [vmem:[#allocation2 + $0x780] sm:$0xff]
    %v315 = vld [vmem:[#allocation2 + $0x788] sm:$0xff]
    %v316 = vld [vmem:[#allocation2 + $0x790] sm:$0xff]
    %v317 = vld [vmem:[#allocation2 + $0x798] sm:$0xff]
    %v318 = vld [vmem:[#allocation2 + $0x7a0] sm:$0xff]
    %v319 = vld [vmem:[#allocation2 + $0x7a8] sm:$0xff]
    %v320 = vld [vmem:[#allocation2 + $0x7b0] sm:$0xff]
    %v321 = vld [vmem:[#allocation2 + $0x7b8] sm:$0xff]
    %v322 = vld [vmem:[#allocation2 + $0x7c0] sm:$0xff]
    %v323 = vld [vmem:[#allocation2 + $0x7c8] sm:$0xff]
    %v324 = vld [vmem:[#allocation2 + $0x7d0] sm:$0xff]
    %v325 = vld [vmem:[#allocation2 + $0x7d8] sm:$0xff]
    %v326 = vld [vmem:[#allocation2 + $0x7e0] sm:$0xff]
    %v327 = vld [vmem:[#allocation2 + $0x7e8] sm:$0xff]
    %v328 = vld [vmem:[#allocation2 + $0x7f0] sm:$0xff]
    %v329 = vld [vmem:[#allocation2 + $0x7f8] sm:$0xff]
    %v330 = vld [vmem:[#allocation4] sm:$0xff]
    %v331 = vld [vmem:[#allocation4 + $0x8] sm:$0xff]
    %v332 = vld [vmem:[#allocation4 + $0x10] sm:$0xff]
    %v333 = vld [vmem:[#allocation4 + $0x18] sm:$0xff]
    %v338 = vlaneseq
    %v339 = vshrl.u32 %v338, 7
    %v340 = vsub.s32 0, %v339
    %v341 = vrot.slane %v330, %v340
    %v342 = vlaneseq
    %v343 = vshrl.u32 %v342, 7
    %v344 = vsub.s32 1, %v343
    %v345 = vrot.slane %v330, %v344
    %v346 = vlaneseq
    %v347 = vshrl.u32 %v346, 7
    %v348 = vsub.s32 2, %v347
    %v349 = vrot.slane %v330, %v348
    %v350 = vlaneseq
    %v351 = vshrl.u32 %v350, 7
    %v352 = vsub.s32 3, %v351
    %v353 = vrot.slane %v330, %v352
    %v354 = vlaneseq
    %v355 = vshrl.u32 %v354, 7
    %v356 = vsub.s32 4, %v355
    %v357 = vrot.slane %v330, %v356
    %v358 = vlaneseq
    %v359 = vshrl.u32 %v358, 7
    %v360 = vsub.s32 5, %v359
    %v361 = vrot.slane %v330, %v360
    %v362 = vlaneseq
    %v363 = vshrl.u32 %v362, 7
    %v364 = vsub.s32 6, %v363
    %v365 = vrot.slane %v330, %v364
    %v366 = vlaneseq
    %v367 = vshrl.u32 %v366, 7
    %v368 = vsub.s32 7, %v367
    %v369 = vrot.slane %v330, %v368
    %v370 = vlaneseq
    %v371 = vshrl.u32 %v370, 7
    %v372 = vsub.s32 0, %v371
    %v373 = vrot.slane %v331, %v372
    %v374 = vlaneseq
    %v375 = vshrl.u32 %v374, 7
    %v376 = vsub.s32 1, %v375
    %v377 = vrot.slane %v331, %v376
    %v378 = vlaneseq
    %v379 = vshrl.u32 %v378, 7
    %v380 = vsub.s32 2, %v379
    %v381 = vrot.slane %v331, %v380
    %v382 = vlaneseq
    %v383 = vshrl.u32 %v382, 7
    %v384 = vsub.s32 3, %v383
    %v385 = vrot.slane %v331, %v384
    %v386 = vlaneseq
    %v387 = vshrl.u32 %v386, 7
    %v388 = vsub.s32 4, %v387
    %v389 = vrot.slane %v331, %v388
    %v390 = vlaneseq
    %v391 = vshrl.u32 %v390, 7
    %v392 = vsub.s32 5, %v391
    %v393 = vrot.slane %v331, %v392
    %v394 = vlaneseq
    %v395 = vshrl.u32 %v394, 7
    %v396 = vsub.s32 6, %v395
    %v397 = vrot.slane %v331, %v396
    %v398 = vlaneseq
    %v399 = vshrl.u32 %v398, 7
    %v400 = vsub.s32 7, %v399
    %v401 = vrot.slane %v331, %v400
    %v402 = vlaneseq
    %v403 = vshrl.u32 %v402, 7
    %v404 = vsub.s32 0, %v403
    %v405 = vrot.slane %v332, %v404
    %v406 = vlaneseq
    %v407 = vshrl.u32 %v406, 7
    %v408 = vsub.s32 1, %v407
    %v409 = vrot.slane %v332, %v408
    %v410 = vlaneseq
    %v411 = vshrl.u32 %v410, 7
    %v412 = vsub.s32 2, %v411
    %v413 = vrot.slane %v332, %v412
    %v414 = vlaneseq
    %v415 = vshrl.u32 %v414, 7
    %v416 = vsub.s32 3, %v415
    %v417 = vrot.slane %v332, %v416
    %v418 = vlaneseq
    %v419 = vshrl.u32 %v418, 7
    %v420 = vsub.s32 4, %v419
    %v421 = vrot.slane %v332, %v420
    %v422 = vlaneseq
    %v423 = vshrl.u32 %v422, 7
    %v424 = vsub.s32 5, %v423
    %v425 = vrot.slane %v332, %v424
    %v426 = vlaneseq
    %v427 = vshrl.u32 %v426, 7
    %v428 = vsub.s32 6, %v427
    %v429 = vrot.slane %v332, %v428
    %v430 = vlaneseq
    %v431 = vshrl.u32 %v430, 7
    %v432 = vsub.s32 7, %v431
    %v433 = vrot.slane %v332, %v432
    %v434 = vlaneseq
    %v435 = vshrl.u32 %v434, 7
    %v436 = vsub.s32 0, %v435
    %v437 = vrot.slane %v333, %v436
    %v438 = vlaneseq
    %v439 = vshrl.u32 %v438, 7
    %v440 = vsub.s32 1, %v439
    %v441 = vrot.slane %v333, %v440
    %v442 = vlaneseq
    %v443 = vshrl.u32 %v442, 7
    %v444 = vsub.s32 2, %v443
    %v445 = vrot.slane %v333, %v444
    %v446 = vlaneseq
    %v447 = vshrl.u32 %v446, 7
    %v448 = vsub.s32 3, %v447
    %v449 = vrot.slane %v333, %v448
    %v450 = vlaneseq
    %v451 = vshrl.u32 %v450, 7
    %v452 = vsub.s32 4, %v451
    %v453 = vrot.slane %v333, %v452
    %v454 = vlaneseq
    %v455 = vshrl.u32 %v454, 7
    %v456 = vsub.s32 5, %v455
    %v457 = vrot.slane %v333, %v456
    %v458 = vlaneseq
    %v459 = vshrl.u32 %v458, 7
    %v460 = vsub.s32 6, %v459
    %v461 = vrot.slane %v333, %v460
    %v462 = vlaneseq
    %v463 = vshrl.u32 %v462, 7
    %v464 = vsub.s32 7, %v463
    %v465 = vrot.slane %v333, %v464
    %v754 = vunpack.c.l.b16 %v74
    %v755 = vunpack.c.h.b16 %v74
    %v756 = vunpack.c.l.b16 %v75
    %v757 = vunpack.c.h.b16 %v75
    %v758 = vunpack.c.l.b16 %v76
    %v759 = vunpack.c.h.b16 %v76
    %v760 = vunpack.c.l.b16 %v77
    %v761 = vunpack.c.h.b16 %v77
    %v762 = vunpack.c.l.b16 %v78
    %v763 = vunpack.c.h.b16 %v78
    %v764 = vunpack.c.l.b16 %v79
    %v765 = vunpack.c.h.b16 %v79
    %v766 = vunpack.c.l.b16 %v80
    %v767 = vunpack.c.h.b16 %v80
    %v768 = vunpack.c.l.b16 %v81
    %v769 = vunpack.c.h.b16 %v81
    %v770 = vunpack.c.l.b16 %v82
    %v771 = vunpack.c.h.b16 %v82
    %v772 = vunpack.c.l.b16 %v83
    %v773 = vunpack.c.h.b16 %v83
    %v774 = vunpack.c.l.b16 %v84
    %v775 = vunpack.c.h.b16 %v84
    %v776 = vunpack.c.l.b16 %v85
    %v777 = vunpack.c.h.b16 %v85
    %v778 = vunpack.c.l.b16 %v86
    %v779 = vunpack.c.h.b16 %v86
    %v780 = vunpack.c.l.b16 %v87
    %v781 = vunpack.c.h.b16 %v87
    %v782 = vunpack.c.l.b16 %v88
    %v783 = vunpack.c.h.b16 %v88
    %v784 = vunpack.c.l.b16 %v89
    %v785 = vunpack.c.h.b16 %v89
    %v786 = vunpack.c.l.b16 %v90
    %v787 = vunpack.c.h.b16 %v90
    %v788 = vunpack.c.l.b16 %v91
    %v789 = vunpack.c.h.b16 %v91
    %v790 = vunpack.c.l.b16 %v92
    %v791 = vunpack.c.h.b16 %v92
    %v792 = vunpack.c.l.b16 %v93
    %v793 = vunpack.c.h.b16 %v93
    %v794 = vunpack.c.l.b16 %v94
    %v795 = vunpack.c.h.b16 %v94
    %v796 = vunpack.c.l.b16 %v95
    %v797 = vunpack.c.h.b16 %v95
    %v798 = vunpack.c.l.b16 %v96
    %v799 = vunpack.c.h.b16 %v96
    %v800 = vunpack.c.l.b16 %v97
    %v801 = vunpack.c.h.b16 %v97
    %v802 = vunpack.c.l.b16 %v98
    %v803 = vunpack.c.h.b16 %v98
    %v804 = vunpack.c.l.b16 %v99
    %v805 = vunpack.c.h.b16 %v99
    %v806 = vunpack.c.l.b16 %v100
    %v807 = vunpack.c.h.b16 %v100
    %v808 = vunpack.c.l.b16 %v101
    %v809 = vunpack.c.h.b16 %v101
    %v810 = vunpack.c.l.b16 %v102
    %v811 = vunpack.c.h.b16 %v102
    %v812 = vunpack.c.l.b16 %v103
    %v813 = vunpack.c.h.b16 %v103
    %v814 = vunpack.c.l.b16 %v104
    %v815 = vunpack.c.h.b16 %v104
    %v816 = vunpack.c.l.b16 %v105
    %v817 = vunpack.c.h.b16 %v105
    %v818 = vunpack.c.l.b16 %v106
    %v819 = vunpack.c.h.b16 %v106
    %v820 = vunpack.c.l.b16 %v107
    %v821 = vunpack.c.h.b16 %v107
    %v822 = vunpack.c.l.b16 %v108
    %v823 = vunpack.c.h.b16 %v108
    %v824 = vunpack.c.l.b16 %v109
    %v825 = vunpack.c.h.b16 %v109
    %v826 = vunpack.c.l.b16 %v110
    %v827 = vunpack.c.h.b16 %v110
    %v828 = vunpack.c.l.b16 %v111
    %v829 = vunpack.c.h.b16 %v111
    %v830 = vunpack.c.l.b16 %v112
    %v831 = vunpack.c.h.b16 %v112
    %v832 = vunpack.c.l.b16 %v113
    %v833 = vunpack.c.h.b16 %v113
    %v834 = vunpack.c.l.b16 %v114
    %v835 = vunpack.c.h.b16 %v114
    %v836 = vunpack.c.l.b16 %v115
    %v837 = vunpack.c.h.b16 %v115
    %v838 = vunpack.c.l.b16 %v116
    %v839 = vunpack.c.h.b16 %v116
    %v840 = vunpack.c.l.b16 %v117
    %v841 = vunpack.c.h.b16 %v117
    %v842 = vunpack.c.l.b16 %v118
    %v843 = vunpack.c.h.b16 %v118
    %v844 = vunpack.c.l.b16 %v119
    %v845 = vunpack.c.h.b16 %v119
    %v846 = vunpack.c.l.b16 %v120
    %v847 = vunpack.c.h.b16 %v120
    %v848 = vunpack.c.l.b16 %v121
    %v849 = vunpack.c.h.b16 %v121
    %v850 = vunpack.c.l.b16 %v122
    %v851 = vunpack.c.h.b16 %v122
    %v852 = vunpack.c.l.b16 %v123
    %v853 = vunpack.c.h.b16 %v123
    %v854 = vunpack.c.l.b16 %v124
    %v855 = vunpack.c.h.b16 %v124
    %v856 = vunpack.c.l.b16 %v125
    %v857 = vunpack.c.h.b16 %v125
    %v858 = vunpack.c.l.b16 %v126
    %v859 = vunpack.c.h.b16 %v126
    %v860 = vunpack.c.l.b16 %v127
    %v861 = vunpack.c.h.b16 %v127
    %v862 = vunpack.c.l.b16 %v128
    %v863 = vunpack.c.h.b16 %v128
    %v864 = vunpack.c.l.b16 %v129
    %v865 = vunpack.c.h.b16 %v129
    %v866 = vunpack.c.l.b16 %v130
    %v867 = vunpack.c.h.b16 %v130
    %v868 = vunpack.c.l.b16 %v131
    %v869 = vunpack.c.h.b16 %v131
    %v870 = vunpack.c.l.b16 %v132
    %v871 = vunpack.c.h.b16 %v132
    %v872 = vunpack.c.l.b16 %v133
    %v873 = vunpack.c.h.b16 %v133
    %v874 = vunpack.c.l.b16 %v134
    %v875 = vunpack.c.h.b16 %v134
    %v876 = vunpack.c.l.b16 %v135
    %v877 = vunpack.c.h.b16 %v135
    %v878 = vunpack.c.l.b16 %v136
    %v879 = vunpack.c.h.b16 %v136
    %v880 = vunpack.c.l.b16 %v137
    %v881 = vunpack.c.h.b16 %v137
    %v882 = vunpack.c.l.b16 %v138
    %v883 = vunpack.c.h.b16 %v138
    %v884 = vunpack.c.l.b16 %v139
    %v885 = vunpack.c.h.b16 %v139
    %v886 = vunpack.c.l.b16 %v140
    %v887 = vunpack.c.h.b16 %v140
    %v888 = vunpack.c.l.b16 %v141
    %v889 = vunpack.c.h.b16 %v141
    %v890 = vunpack.c.l.b16 %v142
    %v891 = vunpack.c.h.b16 %v142
    %v892 = vunpack.c.l.b16 %v143
    %v893 = vunpack.c.h.b16 %v143
    %v894 = vunpack.c.l.b16 %v144
    %v895 = vunpack.c.h.b16 %v144
    %v896 = vunpack.c.l.b16 %v145
    %v897 = vunpack.c.h.b16 %v145
    %v898 = vunpack.c.l.b16 %v146
    %v899 = vunpack.c.h.b16 %v146
    %v900 = vunpack.c.l.b16 %v147
    %v901 = vunpack.c.h.b16 %v147
    %v902 = vunpack.c.l.b16 %v148
    %v903 = vunpack.c.h.b16 %v148
    %v904 = vunpack.c.l.b16 %v149
    %v905 = vunpack.c.h.b16 %v149
    %v906 = vunpack.c.l.b16 %v150
    %v907 = vunpack.c.h.b16 %v150
    %v908 = vunpack.c.l.b16 %v151
    %v909 = vunpack.c.h.b16 %v151
    %v910 = vunpack.c.l.b16 %v152
    %v911 = vunpack.c.h.b16 %v152
    %v912 = vunpack.c.l.b16 %v153
    %v913 = vunpack.c.h.b16 %v153
    %v914 = vunpack.c.l.b16 %v154
    %v915 = vunpack.c.h.b16 %v154
    %v916 = vunpack.c.l.b16 %v155
    %v917 = vunpack.c.h.b16 %v155
    %v918 = vunpack.c.l.b16 %v156
    %v919 = vunpack.c.h.b16 %v156
    %v920 = vunpack.c.l.b16 %v157
    %v921 = vunpack.c.h.b16 %v157
    %v922 = vunpack.c.l.b16 %v158
    %v923 = vunpack.c.h.b16 %v158
    %v924 = vunpack.c.l.b16 %v159
    %v925 = vunpack.c.h.b16 %v159
    %v926 = vunpack.c.l.b16 %v160
    %v927 = vunpack.c.h.b16 %v160
    %v928 = vunpack.c.l.b16 %v161
    %v929 = vunpack.c.h.b16 %v161
    %v930 = vunpack.c.l.b16 %v162
    %v931 = vunpack.c.h.b16 %v162
    %v932 = vunpack.c.l.b16 %v163
    %v933 = vunpack.c.h.b16 %v163
    %v934 = vunpack.c.l.b16 %v164
    %v935 = vunpack.c.h.b16 %v164
    %v936 = vunpack.c.l.b16 %v165
    %v937 = vunpack.c.h.b16 %v165
    %v938 = vunpack.c.l.b16 %v166
    %v939 = vunpack.c.h.b16 %v166
    %v940 = vunpack.c.l.b16 %v167
    %v941 = vunpack.c.h.b16 %v167
    %v942 = vunpack.c.l.b16 %v168
    %v943 = vunpack.c.h.b16 %v168
    %v944 = vunpack.c.l.b16 %v169
    %v945 = vunpack.c.h.b16 %v169
    %v946 = vunpack.c.l.b16 %v170
    %v947 = vunpack.c.h.b16 %v170
    %v948 = vunpack.c.l.b16 %v171
    %v949 = vunpack.c.h.b16 %v171
    %v950 = vunpack.c.l.b16 %v172
    %v951 = vunpack.c.h.b16 %v172
    %v952 = vunpack.c.l.b16 %v173
    %v953 = vunpack.c.h.b16 %v173
    %v954 = vunpack.c.l.b16 %v174
    %v955 = vunpack.c.h.b16 %v174
    %v956 = vunpack.c.l.b16 %v175
    %v957 = vunpack.c.h.b16 %v175
    %v958 = vunpack.c.l.b16 %v176
    %v959 = vunpack.c.h.b16 %v176
    %v960 = vunpack.c.l.b16 %v177
    %v961 = vunpack.c.h.b16 %v177
    %v962 = vunpack.c.l.b16 %v178
    %v963 = vunpack.c.h.b16 %v178
    %v964 = vunpack.c.l.b16 %v179
    %v965 = vunpack.c.h.b16 %v179
    %v966 = vunpack.c.l.b16 %v180
    %v967 = vunpack.c.h.b16 %v180
    %v968 = vunpack.c.l.b16 %v181
    %v969 = vunpack.c.h.b16 %v181
    %v970 = vunpack.c.l.b16 %v182
    %v971 = vunpack.c.h.b16 %v182
    %v972 = vunpack.c.l.b16 %v183
    %v973 = vunpack.c.h.b16 %v183
    %v974 = vunpack.c.l.b16 %v184
    %v975 = vunpack.c.h.b16 %v184
    %v976 = vunpack.c.l.b16 %v185
    %v977 = vunpack.c.h.b16 %v185
    %v978 = vunpack.c.l.b16 %v186
    %v979 = vunpack.c.h.b16 %v186
    %v980 = vunpack.c.l.b16 %v187
    %v981 = vunpack.c.h.b16 %v187
    %v982 = vunpack.c.l.b16 %v188
    %v983 = vunpack.c.h.b16 %v188
    %v984 = vunpack.c.l.b16 %v189
    %v985 = vunpack.c.h.b16 %v189
    %v986 = vunpack.c.l.b16 %v190
    %v987 = vunpack.c.h.b16 %v190
    %v988 = vunpack.c.l.b16 %v191
    %v989 = vunpack.c.h.b16 %v191
    %v990 = vunpack.c.l.b16 %v192
    %v991 = vunpack.c.h.b16 %v192
    %v992 = vunpack.c.l.b16 %v193
    %v993 = vunpack.c.h.b16 %v193
    %v994 = vunpack.c.l.b16 %v194
    %v995 = vunpack.c.h.b16 %v194
    %v996 = vunpack.c.l.b16 %v195
    %v997 = vunpack.c.h.b16 %v195
    %v998 = vunpack.c.l.b16 %v196
    %v999 = vunpack.c.h.b16 %v196
    %v1000 = vunpack.c.l.b16 %v197
    %v1001 = vunpack.c.h.b16 %v197
    %v1002 = vunpack.c.l.b16 %v198
    %v1003 = vunpack.c.h.b16 %v198
    %v1004 = vunpack.c.l.b16 %v199
    %v1005 = vunpack.c.h.b16 %v199
    %v1006 = vunpack.c.l.b16 %v200
    %v1007 = vunpack.c.h.b16 %v200
    %v1008 = vunpack.c.l.b16 %v201
    %v1009 = vunpack.c.h.b16 %v201
    %v1010 = vunpack.c.l.b16 %v202
    %v1011 = vunpack.c.h.b16 %v202
    %v1012 = vunpack.c.l.b16 %v203
    %v1013 = vunpack.c.h.b16 %v203
    %v1014 = vunpack.c.l.b16 %v204
    %v1015 = vunpack.c.h.b16 %v204
    %v1016 = vunpack.c.l.b16 %v205
    %v1017 = vunpack.c.h.b16 %v205
    %v1018 = vunpack.c.l.b16 %v206
    %v1019 = vunpack.c.h.b16 %v206
    %v1020 = vunpack.c.l.b16 %v207
    %v1021 = vunpack.c.h.b16 %v207
    %v1022 = vunpack.c.l.b16 %v208
    %v1023 = vunpack.c.h.b16 %v208
    %v1024 = vunpack.c.l.b16 %v209
    %v1025 = vunpack.c.h.b16 %v209
    %v1026 = vunpack.c.l.b16 %v210
    %v1027 = vunpack.c.h.b16 %v210
    %v1028 = vunpack.c.l.b16 %v211
    %v1029 = vunpack.c.h.b16 %v211
    %v1030 = vunpack.c.l.b16 %v212
    %v1031 = vunpack.c.h.b16 %v212
    %v1032 = vunpack.c.l.b16 %v213
    %v1033 = vunpack.c.h.b16 %v213
    %v1034 = vunpack.c.l.b16 %v214
    %v1035 = vunpack.c.h.b16 %v214
    %v1036 = vunpack.c.l.b16 %v215
    %v1037 = vunpack.c.h.b16 %v215
    %v1038 = vunpack.c.l.b16 %v216
    %v1039 = vunpack.c.h.b16 %v216
    %v1040 = vunpack.c.l.b16 %v217
    %v1041 = vunpack.c.h.b16 %v217
    %v1042 = vunpack.c.l.b16 %v218
    %v1043 = vunpack.c.h.b16 %v218
    %v1044 = vunpack.c.l.b16 %v219
    %v1045 = vunpack.c.h.b16 %v219
    %v1046 = vunpack.c.l.b16 %v220
    %v1047 = vunpack.c.h.b16 %v220
    %v1048 = vunpack.c.l.b16 %v221
    %v1049 = vunpack.c.h.b16 %v221
    %v1050 = vunpack.c.l.b16 %v222
    %v1051 = vunpack.c.h.b16 %v222
    %v1052 = vunpack.c.l.b16 %v223
    %v1053 = vunpack.c.h.b16 %v223
    %v1054 = vunpack.c.l.b16 %v224
    %v1055 = vunpack.c.h.b16 %v224
    %v1056 = vunpack.c.l.b16 %v225
    %v1057 = vunpack.c.h.b16 %v225
    %v1058 = vunpack.c.l.b16 %v226
    %v1059 = vunpack.c.h.b16 %v226
    %v1060 = vunpack.c.l.b16 %v227
    %v1061 = vunpack.c.h.b16 %v227
    %v1062 = vunpack.c.l.b16 %v228
    %v1063 = vunpack.c.h.b16 %v228
    %v1064 = vunpack.c.l.b16 %v229
    %v1065 = vunpack.c.h.b16 %v229
    %v1066 = vunpack.c.l.b16 %v230
    %v1067 = vunpack.c.h.b16 %v230
    %v1068 = vunpack.c.l.b16 %v231
    %v1069 = vunpack.c.h.b16 %v231
    %v1070 = vunpack.c.l.b16 %v232
    %v1071 = vunpack.c.h.b16 %v232
    %v1072 = vunpack.c.l.b16 %v233
    %v1073 = vunpack.c.h.b16 %v233
    %v1074 = vunpack.c.l.b16 %v234
    %v1075 = vunpack.c.h.b16 %v234
    %v1076 = vunpack.c.l.b16 %v235
    %v1077 = vunpack.c.h.b16 %v235
    %v1078 = vunpack.c.l.b16 %v236
    %v1079 = vunpack.c.h.b16 %v236
    %v1080 = vunpack.c.l.b16 %v237
    %v1081 = vunpack.c.h.b16 %v237
    %v1082 = vunpack.c.l.b16 %v238
    %v1083 = vunpack.c.h.b16 %v238
    %v1084 = vunpack.c.l.b16 %v239
    %v1085 = vunpack.c.h.b16 %v239
    %v1086 = vunpack.c.l.b16 %v240
    %v1087 = vunpack.c.h.b16 %v240
    %v1088 = vunpack.c.l.b16 %v241
    %v1089 = vunpack.c.h.b16 %v241
    %v1090 = vunpack.c.l.b16 %v242
    %v1091 = vunpack.c.h.b16 %v242
    %v1092 = vunpack.c.l.b16 %v243
    %v1093 = vunpack.c.h.b16 %v243
    %v1094 = vunpack.c.l.b16 %v244
    %v1095 = vunpack.c.h.b16 %v244
    %v1096 = vunpack.c.l.b16 %v245
    %v1097 = vunpack.c.h.b16 %v245
    %v1098 = vunpack.c.l.b16 %v246
    %v1099 = vunpack.c.h.b16 %v246
    %v1100 = vunpack.c.l.b16 %v247
    %v1101 = vunpack.c.h.b16 %v247
    %v1102 = vunpack.c.l.b16 %v248
    %v1103 = vunpack.c.h.b16 %v248
    %v1104 = vunpack.c.l.b16 %v249
    %v1105 = vunpack.c.h.b16 %v249
    %v1106 = vunpack.c.l.b16 %v250
    %v1107 = vunpack.c.h.b16 %v250
    %v1108 = vunpack.c.l.b16 %v251
    %v1109 = vunpack.c.h.b16 %v251
    %v1110 = vunpack.c.l.b16 %v252
    %v1111 = vunpack.c.h.b16 %v252
    %v1112 = vunpack.c.l.b16 %v253
    %v1113 = vunpack.c.h.b16 %v253
    %v1114 = vunpack.c.l.b16 %v254
    %v1115 = vunpack.c.h.b16 %v254
    %v1116 = vunpack.c.l.b16 %v255
    %v1117 = vunpack.c.h.b16 %v255
    %v1118 = vunpack.c.l.b16 %v256
    %v1119 = vunpack.c.h.b16 %v256
    %v1120 = vunpack.c.l.b16 %v257
    %v1121 = vunpack.c.h.b16 %v257
    %v1122 = vunpack.c.l.b16 %v258
    %v1123 = vunpack.c.h.b16 %v258
    %v1124 = vunpack.c.l.b16 %v259
    %v1125 = vunpack.c.h.b16 %v259
    %v1126 = vunpack.c.l.b16 %v260
    %v1127 = vunpack.c.h.b16 %v260
    %v1128 = vunpack.c.l.b16 %v261
    %v1129 = vunpack.c.h.b16 %v261
    %v1130 = vunpack.c.l.b16 %v262
    %v1131 = vunpack.c.h.b16 %v262
    %v1132 = vunpack.c.l.b16 %v263
    %v1133 = vunpack.c.h.b16 %v263
    %v1134 = vunpack.c.l.b16 %v264
    %v1135 = vunpack.c.h.b16 %v264
    %v1136 = vunpack.c.l.b16 %v265
    %v1137 = vunpack.c.h.b16 %v265
    %v1138 = vunpack.c.l.b16 %v266
    %v1139 = vunpack.c.h.b16 %v266
    %v1140 = vunpack.c.l.b16 %v267
    %v1141 = vunpack.c.h.b16 %v267
    %v1142 = vunpack.c.l.b16 %v268
    %v1143 = vunpack.c.h.b16 %v268
    %v1144 = vunpack.c.l.b16 %v269
    %v1145 = vunpack.c.h.b16 %v269
    %v1146 = vunpack.c.l.b16 %v270
    %v1147 = vunpack.c.h.b16 %v270
    %v1148 = vunpack.c.l.b16 %v271
    %v1149 = vunpack.c.h.b16 %v271
    %v1150 = vunpack.c.l.b16 %v272
    %v1151 = vunpack.c.h.b16 %v272
    %v1152 = vunpack.c.l.b16 %v273
    %v1153 = vunpack.c.h.b16 %v273
    %v1154 = vunpack.c.l.b16 %v274
    %v1155 = vunpack.c.h.b16 %v274
    %v1156 = vunpack.c.l.b16 %v275
    %v1157 = vunpack.c.h.b16 %v275
    %v1158 = vunpack.c.l.b16 %v276
    %v1159 = vunpack.c.h.b16 %v276
    %v1160 = vunpack.c.l.b16 %v277
    %v1161 = vunpack.c.h.b16 %v277
    %v1162 = vunpack.c.l.b16 %v278
    %v1163 = vunpack.c.h.b16 %v278
    %v1164 = vunpack.c.l.b16 %v279
    %v1165 = vunpack.c.h.b16 %v279
    %v1166 = vunpack.c.l.b16 %v280
    %v1167 = vunpack.c.h.b16 %v280
    %v1168 = vunpack.c.l.b16 %v281
    %v1169 = vunpack.c.h.b16 %v281
    %v1170 = vunpack.c.l.b16 %v282
    %v1171 = vunpack.c.h.b16 %v282
    %v1172 = vunpack.c.l.b16 %v283
    %v1173 = vunpack.c.h.b16 %v283
    %v1174 = vunpack.c.l.b16 %v284
    %v1175 = vunpack.c.h.b16 %v284
    %v1176 = vunpack.c.l.b16 %v285
    %v1177 = vunpack.c.h.b16 %v285
    %v1178 = vunpack.c.l.b16 %v286
    %v1179 = vunpack.c.h.b16 %v286
    %v1180 = vunpack.c.l.b16 %v287
    %v1181 = vunpack.c.h.b16 %v287
    %v1182 = vunpack.c.l.b16 %v288
    %v1183 = vunpack.c.h.b16 %v288
    %v1184 = vunpack.c.l.b16 %v289
    %v1185 = vunpack.c.h.b16 %v289
    %v1186 = vunpack.c.l.b16 %v290
    %v1187 = vunpack.c.h.b16 %v290
    %v1188 = vunpack.c.l.b16 %v291
    %v1189 = vunpack.c.h.b16 %v291
    %v1190 = vunpack.c.l.b16 %v292
    %v1191 = vunpack.c.h.b16 %v292
    %v1192 = vunpack.c.l.b16 %v293
    %v1193 = vunpack.c.h.b16 %v293
    %v1194 = vunpack.c.l.b16 %v294
    %v1195 = vunpack.c.h.b16 %v294
    %v1196 = vunpack.c.l.b16 %v295
    %v1197 = vunpack.c.h.b16 %v295
    %v1198 = vunpack.c.l.b16 %v296
    %v1199 = vunpack.c.h.b16 %v296
    %v1200 = vunpack.c.l.b16 %v297
    %v1201 = vunpack.c.h.b16 %v297
    %v1202 = vunpack.c.l.b16 %v298
    %v1203 = vunpack.c.h.b16 %v298
    %v1204 = vunpack.c.l.b16 %v299
    %v1205 = vunpack.c.h.b16 %v299
    %v1206 = vunpack.c.l.b16 %v300
    %v1207 = vunpack.c.h.b16 %v300
    %v1208 = vunpack.c.l.b16 %v301
    %v1209 = vunpack.c.h.b16 %v301
    %v1210 = vunpack.c.l.b16 %v302
    %v1211 = vunpack.c.h.b16 %v302
    %v1212 = vunpack.c.l.b16 %v303
    %v1213 = vunpack.c.h.b16 %v303
    %v1214 = vunpack.c.l.b16 %v304
    %v1215 = vunpack.c.h.b16 %v304
    %v1216 = vunpack.c.l.b16 %v305
    %v1217 = vunpack.c.h.b16 %v305
    %v1218 = vunpack.c.l.b16 %v306
    %v1219 = vunpack.c.h.b16 %v306
    %v1220 = vunpack.c.l.b16 %v307
    %v1221 = vunpack.c.h.b16 %v307
    %v1222 = vunpack.c.l.b16 %v308
    %v1223 = vunpack.c.h.b16 %v308
    %v1224 = vunpack.c.l.b16 %v309
    %v1225 = vunpack.c.h.b16 %v309
    %v1226 = vunpack.c.l.b16 %v310
    %v1227 = vunpack.c.h.b16 %v310
    %v1228 = vunpack.c.l.b16 %v311
    %v1229 = vunpack.c.h.b16 %v311
    %v1230 = vunpack.c.l.b16 %v312
    %v1231 = vunpack.c.h.b16 %v312
    %v1232 = vunpack.c.l.b16 %v313
    %v1233 = vunpack.c.h.b16 %v313
    %v1234 = vunpack.c.l.b16 %v314
    %v1235 = vunpack.c.h.b16 %v314
    %v1236 = vunpack.c.l.b16 %v315
    %v1237 = vunpack.c.h.b16 %v315
    %v1238 = vunpack.c.l.b16 %v316
    %v1239 = vunpack.c.h.b16 %v316
    %v1240 = vunpack.c.l.b16 %v317
    %v1241 = vunpack.c.h.b16 %v317
    %v1242 = vunpack.c.l.b16 %v318
    %v1243 = vunpack.c.h.b16 %v318
    %v1244 = vunpack.c.l.b16 %v319
    %v1245 = vunpack.c.h.b16 %v319
    %v1246 = vunpack.c.l.b16 %v320
    %v1247 = vunpack.c.h.b16 %v320
    %v1248 = vunpack.c.l.b16 %v321
    %v1249 = vunpack.c.h.b16 %v321
    %v1250 = vunpack.c.l.b16 %v322
    %v1251 = vunpack.c.h.b16 %v322
    %v1252 = vunpack.c.l.b16 %v323
    %v1253 = vunpack.c.h.b16 %v323
    %v1254 = vunpack.c.l.b16 %v324
    %v1255 = vunpack.c.h.b16 %v324
    %v1256 = vunpack.c.l.b16 %v325
    %v1257 = vunpack.c.h.b16 %v325
    %v1258 = vunpack.c.l.b16 %v326
    %v1259 = vunpack.c.h.b16 %v326
    %v1260 = vunpack.c.l.b16 %v327
    %v1261 = vunpack.c.h.b16 %v327
    %v1262 = vunpack.c.l.b16 %v328
    %v1263 = vunpack.c.h.b16 %v328
    %v1264 = vunpack.c.l.b16 %v329
    %v1265 = vunpack.c.h.b16 %v329
    %v1266 = vpack.c.b16 %v786, %v754
    %v1267 = vpack.c.b16 %v787, %v755
    %v1268 = vpack.c.b16 %v788, %v756
    %v1269 = vpack.c.b16 %v789, %v757
    %v1270 = vpack.c.b16 %v790, %v758
    %v1271 = vpack.c.b16 %v791, %v759
    %v1272 = vpack.c.b16 %v792, %v760
    %v1273 = vpack.c.b16 %v793, %v761
    %v1274 = vpack.c.b16 %v794, %v762
    %v1275 = vpack.c.b16 %v795, %v763
    %v1276 = vpack.c.b16 %v796, %v764
    %v1277 = vpack.c.b16 %v797, %v765
    %v1278 = vpack.c.b16 %v798, %v766
    %v1279 = vpack.c.b16 %v799, %v767
    %v1280 = vpack.c.b16 %v800, %v768
    %v1281 = vpack.c.b16 %v801, %v769
    %v1282 = vpack.c.b16 %v802, %v770
    %v1283 = vpack.c.b16 %v803, %v771
    %v1284 = vpack.c.b16 %v804, %v772
    %v1285 = vpack.c.b16 %v805, %v773
    %v1286 = vpack.c.b16 %v806, %v774
    %v1287 = vpack.c.b16 %v807, %v775
    %v1288 = vpack.c.b16 %v808, %v776
    %v1289 = vpack.c.b16 %v809, %v777
    %v1290 = vpack.c.b16 %v810, %v778
    %v1291 = vpack.c.b16 %v811, %v779
    %v1292 = vpack.c.b16 %v812, %v780
    %v1293 = vpack.c.b16 %v813, %v781
    %v1294 = vpack.c.b16 %v814, %v782
    %v1295 = vpack.c.b16 %v815, %v783
    %v1296 = vpack.c.b16 %v816, %v784
    %v1297 = vpack.c.b16 %v817, %v785
    %v1298 = vpack.c.b16 %v850, %v818
    %v1299 = vpack.c.b16 %v851, %v819
    %v1300 = vpack.c.b16 %v852, %v820
    %v1301 = vpack.c.b16 %v853, %v821
    %v1302 = vpack.c.b16 %v854, %v822
    %v1303 = vpack.c.b16 %v855, %v823
    %v1304 = vpack.c.b16 %v856, %v824
    %v1305 = vpack.c.b16 %v857, %v825
    %v1306 = vpack.c.b16 %v858, %v826
    %v1307 = vpack.c.b16 %v859, %v827
    %v1308 = vpack.c.b16 %v860, %v828
    %v1309 = vpack.c.b16 %v861, %v829
    %v1310 = vpack.c.b16 %v862, %v830
    %v1311 = vpack.c.b16 %v863, %v831
    %v1312 = vpack.c.b16 %v864, %v832
    %v1313 = vpack.c.b16 %v865, %v833
    %v1314 = vpack.c.b16 %v866, %v834
    %v1315 = vpack.c.b16 %v867, %v835
    %v1316 = vpack.c.b16 %v868, %v836
    %v1317 = vpack.c.b16 %v869, %v837
    %v1318 = vpack.c.b16 %v870, %v838
    %v1319 = vpack.c.b16 %v871, %v839
    %v1320 = vpack.c.b16 %v872, %v840
    %v1321 = vpack.c.b16 %v873, %v841
    %v1322 = vpack.c.b16 %v874, %v842
    %v1323 = vpack.c.b16 %v875, %v843
    %v1324 = vpack.c.b16 %v876, %v844
    %v1325 = vpack.c.b16 %v877, %v845
    %v1326 = vpack.c.b16 %v878, %v846
    %v1327 = vpack.c.b16 %v879, %v847
    %v1328 = vpack.c.b16 %v880, %v848
    %v1329 = vpack.c.b16 %v881, %v849
    %v1330 = vpack.c.b16 %v914, %v882
    %v1331 = vpack.c.b16 %v915, %v883
    %v1332 = vpack.c.b16 %v916, %v884
    %v1333 = vpack.c.b16 %v917, %v885
    %v1334 = vpack.c.b16 %v918, %v886
    %v1335 = vpack.c.b16 %v919, %v887
    %v1336 = vpack.c.b16 %v920, %v888
    %v1337 = vpack.c.b16 %v921, %v889
    %v1338 = vpack.c.b16 %v922, %v890
    %v1339 = vpack.c.b16 %v923, %v891
    %v1340 = vpack.c.b16 %v924, %v892
    %v1341 = vpack.c.b16 %v925, %v893
    %v1342 = vpack.c.b16 %v926, %v894
    %v1343 = vpack.c.b16 %v927, %v895
    %v1344 = vpack.c.b16 %v928, %v896
    %v1345 = vpack.c.b16 %v929, %v897
    %v1346 = vpack.c.b16 %v930, %v898
    %v1347 = vpack.c.b16 %v931, %v899
    %v1348 = vpack.c.b16 %v932, %v900
    %v1349 = vpack.c.b16 %v933, %v901
    %v1350 = vpack.c.b16 %v934, %v902
    %v1351 = vpack.c.b16 %v935, %v903
    %v1352 = vpack.c.b16 %v936, %v904
    %v1353 = vpack.c.b16 %v937, %v905
    %v1354 = vpack.c.b16 %v938, %v906
    %v1355 = vpack.c.b16 %v939, %v907
    %v1356 = vpack.c.b16 %v940, %v908
    %v1357 = vpack.c.b16 %v941, %v909
    %v1358 = vpack.c.b16 %v942, %v910
    %v1359 = vpack.c.b16 %v943, %v911
    %v1360 = vpack.c.b16 %v944, %v912
    %v1361 = vpack.c.b16 %v945, %v913
    %v1362 = vpack.c.b16 %v978, %v946
    %v1363 = vpack.c.b16 %v979, %v947
    %v1364 = vpack.c.b16 %v980, %v948
    %v1365 = vpack.c.b16 %v981, %v949
    %v1366 = vpack.c.b16 %v982, %v950
    %v1367 = vpack.c.b16 %v983, %v951
    %v1368 = vpack.c.b16 %v984, %v952
    %v1369 = vpack.c.b16 %v985, %v953
    %v1370 = vpack.c.b16 %v986, %v954
    %v1371 = vpack.c.b16 %v987, %v955
    %v1372 = vpack.c.b16 %v988, %v956
    %v1373 = vpack.c.b16 %v989, %v957
    %v1374 = vpack.c.b16 %v990, %v958
    %v1375 = vpack.c.b16 %v991, %v959
    %v1376 = vpack.c.b16 %v992, %v960
    %v1377 = vpack.c.b16 %v993, %v961
    %v1378 = vpack.c.b16 %v994, %v962
    %v1379 = vpack.c.b16 %v995, %v963
    %v1380 = vpack.c.b16 %v996, %v964
    %v1381 = vpack.c.b16 %v997, %v965
    %v1382 = vpack.c.b16 %v998, %v966
    %v1383 = vpack.c.b16 %v999, %v967
    %v1384 = vpack.c.b16 %v1000, %v968
    %v1385 = vpack.c.b16 %v1001, %v969
    %v1386 = vpack.c.b16 %v1002, %v970
    %v1387 = vpack.c.b16 %v1003, %v971
    %v1388 = vpack.c.b16 %v1004, %v972
    %v1389 = vpack.c.b16 %v1005, %v973
    %v1390 = vpack.c.b16 %v1006, %v974
    %v1391 = vpack.c.b16 %v1007, %v975
    %v1392 = vpack.c.b16 %v1008, %v976
    %v1393 = vpack.c.b16 %v1009, %v977
    %v1394 = vpack.c.b16 %v1042, %v1010
    %v1395 = vpack.c.b16 %v1043, %v1011
    %v1396 = vpack.c.b16 %v1044, %v1012
    %v1397 = vpack.c.b16 %v1045, %v1013
    %v1398 = vpack.c.b16 %v1046, %v1014
    %v1399 = vpack.c.b16 %v1047, %v1015
    %v1400 = vpack.c.b16 %v1048, %v1016
    %v1401 = vpack.c.b16 %v1049, %v1017
    %v1402 = vpack.c.b16 %v1050, %v1018
    %v1403 = vpack.c.b16 %v1051, %v1019
    %v1404 = vpack.c.b16 %v1052, %v1020
    %v1405 = vpack.c.b16 %v1053, %v1021
    %v1406 = vpack.c.b16 %v1054, %v1022
    %v1407 = vpack.c.b16 %v1055, %v1023
    %v1408 = vpack.c.b16 %v1056, %v1024
    %v1409 = vpack.c.b16 %v1057, %v1025
    %v1410 = vpack.c.b16 %v1058, %v1026
    %v1411 = vpack.c.b16 %v1059, %v1027
    %v1412 = vpack.c.b16 %v1060, %v1028
    %v1413 = vpack.c.b16 %v1061, %v1029
    %v1414 = vpack.c.b16 %v1062, %v1030
    %v1415 = vpack.c.b16 %v1063, %v1031
    %v1416 = vpack.c.b16 %v1064, %v1032
    %v1417 = vpack.c.b16 %v1065, %v1033
    %v1418 = vpack.c.b16 %v1066, %v1034
    %v1419 = vpack.c.b16 %v1067, %v1035
    %v1420 = vpack.c.b16 %v1068, %v1036
    %v1421 = vpack.c.b16 %v1069, %v1037
    %v1422 = vpack.c.b16 %v1070, %v1038
    %v1423 = vpack.c.b16 %v1071, %v1039
    %v1424 = vpack.c.b16 %v1072, %v1040
    %v1425 = vpack.c.b16 %v1073, %v1041
    %v1426 = vpack.c.b16 %v1106, %v1074
    %v1427 = vpack.c.b16 %v1107, %v1075
    %v1428 = vpack.c.b16 %v1108, %v1076
    %v1429 = vpack.c.b16 %v1109, %v1077
    %v1430 = vpack.c.b16 %v1110, %v1078
    %v1431 = vpack.c.b16 %v1111, %v1079
    %v1432 = vpack.c.b16 %v1112, %v1080
    %v1433 = vpack.c.b16 %v1113, %v1081
    %v1434 = vpack.c.b16 %v1114, %v1082
    %v1435 = vpack.c.b16 %v1115, %v1083
    %v1436 = vpack.c.b16 %v1116, %v1084
    %v1437 = vpack.c.b16 %v1117, %v1085
    %v1438 = vpack.c.b16 %v1118, %v1086
    %v1439 = vpack.c.b16 %v1119, %v1087
    %v1440 = vpack.c.b16 %v1120, %v1088
    %v1441 = vpack.c.b16 %v1121, %v1089
    %v1442 = vpack.c.b16 %v1122, %v1090
    %v1443 = vpack.c.b16 %v1123, %v1091
    %v1444 = vpack.c.b16 %v1124, %v1092
    %v1445 = vpack.c.b16 %v1125, %v1093
    %v1446 = vpack.c.b16 %v1126, %v1094
    %v1447 = vpack.c.b16 %v1127, %v1095
    %v1448 = vpack.c.b16 %v1128, %v1096
    %v1449 = vpack.c.b16 %v1129, %v1097
    %v1450 = vpack.c.b16 %v1130, %v1098
    %v1451 = vpack.c.b16 %v1131, %v1099
    %v1452 = vpack.c.b16 %v1132, %v1100
    %v1453 = vpack.c.b16 %v1133, %v1101
    %v1454 = vpack.c.b16 %v1134, %v1102
    %v1455 = vpack.c.b16 %v1135, %v1103
    %v1456 = vpack.c.b16 %v1136, %v1104
    %v1457 = vpack.c.b16 %v1137, %v1105
    %v1458 = vpack.c.b16 %v1170, %v1138
    %v1459 = vpack.c.b16 %v1171, %v1139
    %v1460 = vpack.c.b16 %v1172, %v1140
    %v1461 = vpack.c.b16 %v1173, %v1141
    %v1462 = vpack.c.b16 %v1174, %v1142
    %v1463 = vpack.c.b16 %v1175, %v1143
    %v1464 = vpack.c.b16 %v1176, %v1144
    %v1465 = vpack.c.b16 %v1177, %v1145
    %v1466 = vpack.c.b16 %v1178, %v1146
    %v1467 = vpack.c.b16 %v1179, %v1147
    %v1468 = vpack.c.b16 %v1180, %v1148
    %v1469 = vpack.c.b16 %v1181, %v1149
    %v1470 = vpack.c.b16 %v1182, %v1150
    %v1471 = vpack.c.b16 %v1183, %v1151
    %v1472 = vpack.c.b16 %v1184, %v1152
    %v1473 = vpack.c.b16 %v1185, %v1153
    %v1474 = vpack.c.b16 %v1186, %v1154
    %v1475 = vpack.c.b16 %v1187, %v1155
    %v1476 = vpack.c.b16 %v1188, %v1156
    %v1477 = vpack.c.b16 %v1189, %v1157
    %v1478 = vpack.c.b16 %v1190, %v1158
    %v1479 = vpack.c.b16 %v1191, %v1159
    %v1480 = vpack.c.b16 %v1192, %v1160
    %v1481 = vpack.c.b16 %v1193, %v1161
    %v1482 = vpack.c.b16 %v1194, %v1162
    %v1483 = vpack.c.b16 %v1195, %v1163
    %v1484 = vpack.c.b16 %v1196, %v1164
    %v1485 = vpack.c.b16 %v1197, %v1165
    %v1486 = vpack.c.b16 %v1198, %v1166
    %v1487 = vpack.c.b16 %v1199, %v1167
    %v1488 = vpack.c.b16 %v1200, %v1168
    %v1489 = vpack.c.b16 %v1201, %v1169
    %v1490 = vpack.c.b16 %v1234, %v1202
    %v1491 = vpack.c.b16 %v1235, %v1203
    %v1492 = vpack.c.b16 %v1236, %v1204
    %v1493 = vpack.c.b16 %v1237, %v1205
    %v1494 = vpack.c.b16 %v1238, %v1206
    %v1495 = vpack.c.b16 %v1239, %v1207
    %v1496 = vpack.c.b16 %v1240, %v1208
    %v1497 = vpack.c.b16 %v1241, %v1209
    %v1498 = vpack.c.b16 %v1242, %v1210
    %v1499 = vpack.c.b16 %v1243, %v1211
    %v1500 = vpack.c.b16 %v1244, %v1212
    %v1501 = vpack.c.b16 %v1245, %v1213
    %v1502 = vpack.c.b16 %v1246, %v1214
    %v1503 = vpack.c.b16 %v1247, %v1215
    %v1504 = vpack.c.b16 %v1248, %v1216
    %v1505 = vpack.c.b16 %v1249, %v1217
    %v1506 = vpack.c.b16 %v1250, %v1218
    %v1507 = vpack.c.b16 %v1251, %v1219
    %v1508 = vpack.c.b16 %v1252, %v1220
    %v1509 = vpack.c.b16 %v1253, %v1221
    %v1510 = vpack.c.b16 %v1254, %v1222
    %v1511 = vpack.c.b16 %v1255, %v1223
    %v1512 = vpack.c.b16 %v1256, %v1224
    %v1513 = vpack.c.b16 %v1257, %v1225
    %v1514 = vpack.c.b16 %v1258, %v1226
    %v1515 = vpack.c.b16 %v1259, %v1227
    %v1516 = vpack.c.b16 %v1260, %v1228
    %v1517 = vpack.c.b16 %v1261, %v1229
    %v1518 = vpack.c.b16 %v1262, %v1230
    %v1519 = vpack.c.b16 %v1263, %v1231
    %v1520 = vpack.c.b16 %v1264, %v1232
    %v1521 = vpack.c.b16 %v1265, %v1233
    %1778 = vmatprep.subr.bf16.mxu0 %v1267
    %1779 = vmatpush1.bf16.msra.mxu0 %v1266
    %1780 = vmatprep.subr.bf16.mxu0 %v1299
    %1781 = vmatpush1.bf16.msra.mxu0 %v1298
    %1782 = vmatprep.subr.bf16.mxu0 %v1331
    %1783 = vmatpush1.bf16.msra.mxu0 %v1330
    %1784 = vmatprep.subr.bf16.mxu0 %v1363
    %1785 = vmatpush1.bf16.msra.mxu0 %v1362
    %1786 = vmatprep.subr.bf16.mxu0 %v1395
    %1787 = vmatpush1.bf16.msra.mxu0 %v1394
    %1788 = vmatprep.subr.bf16.mxu0 %v1427
    %1789 = vmatpush1.bf16.msra.mxu0 %v1426
    %1790 = vmatprep.subr.bf16.mxu0 %v1459
    %1791 = vmatpush1.bf16.msra.mxu0 %v1458
    %1792 = vmatprep.subr.bf16.mxu0 %v1491
    %1793 = vmatpush1.bf16.msra.mxu0 %v1490
    %1794 = vmatprep.subr.bf16.mxu0 0
    %1795 = vmatpush1.bf16.msra.mxu0 0
    %1796 = vmatprep.subr.bf16.mxu0 0
    %1797 = vmatpush1.bf16.msra.mxu0 0
    %1798 = vmatprep.subr.bf16.mxu0 0
    %1799 = vmatpush1.bf16.msra.mxu0 0
    %1800 = vmatprep.subr.bf16.mxu0 0
    %1801 = vmatpush1.bf16.msra.mxu0 0
    %1802 = vmatprep.subr.bf16.mxu0 0
    %1803 = vmatpush1.bf16.msra.mxu0 0
    %1804 = vmatprep.subr.bf16.mxu0 0
    %1805 = vmatpush1.bf16.msra.mxu0 0
    %1806 = vmatprep.subr.bf16.mxu0 0
    %1807 = vmatpush1.bf16.msra.mxu0 0
    %1808 = vmatprep.subr.bf16.mxu0 0
    %1809 = vmatpush1.bf16.msra.mxu0 0
    %1810 = vmatprep.mubr.bf16.mxu0 0
    %1811 = vmatmul.mubr.bf16.gmra.mrb[0].mxu0 %v73
    %v1812 = vpop.f32.mrb[0].mxu0
    %v1813 = vadd.f32 %v341, %v1812
    %v1814 = vpop.f32.mrb[0].mxu0
    %v1815 = vadd.f32 %v345, %v1814
    %v1816 = vpop.f32.mrb[0].mxu0
    %v1817 = vpop.f32.mrb[0].mxu0
    %1818 = vdwg.mxu0
    %1819 = vmatprep.subr.bf16.mxu0 %v1269
    %1820 = vmatpush1.bf16.msra.mxu0 %v1268
    %1821 = vmatprep.subr.bf16.mxu0 %v1301
    %1822 = vmatpush1.bf16.msra.mxu0 %v1300
    %1823 = vmatprep.subr.bf16.mxu0 %v1333
    %1824 = vmatpush1.bf16.msra.mxu0 %v1332
    %1825 = vmatprep.subr.bf16.mxu0 %v1365
    %1826 = vmatpush1.bf16.msra.mxu0 %v1364
    %1827 = vmatprep.subr.bf16.mxu0 %v1397
    %1828 = vmatpush1.bf16.msra.mxu0 %v1396
    %1829 = vmatprep.subr.bf16.mxu0 %v1429
    %1830 = vmatpush1.bf16.msra.mxu0 %v1428
    %1831 = vmatprep.subr.bf16.mxu0 %v1461
    %1832 = vmatpush1.bf16.msra.mxu0 %v1460
    %1833 = vmatprep.subr.bf16.mxu0 %v1493
    %1834 = vmatpush1.bf16.msra.mxu0 %v1492
    %1835 = vmatprep.subr.bf16.mxu0 0
    %1836 = vmatpush1.bf16.msra.mxu0 0
    %1837 = vmatprep.subr.bf16.mxu0 0
    %1838 = vmatpush1.bf16.msra.mxu0 0
    %1839 = vmatprep.subr.bf16.mxu0 0
    %1840 = vmatpush1.bf16.msra.mxu0 0
    %1841 = vmatprep.subr.bf16.mxu0 0
    %1842 = vmatpush1.bf16.msra.mxu0 0
    %1843 = vmatprep.subr.bf16.mxu0 0
    %1844 = vmatpush1.bf16.msra.mxu0 0
    %1845 = vmatprep.subr.bf16.mxu0 0
    %1846 = vmatpush1.bf16.msra.mxu0 0
    %1847 = vmatprep.subr.bf16.mxu0 0
    %1848 = vmatpush1.bf16.msra.mxu0 0
    %1849 = vmatprep.subr.bf16.mxu0 0
    %1850 = vmatpush1.bf16.msra.mxu0 0
    %1851 = vmatprep.mubr.bf16.mxu0 0
    %1852 = vmatmul.mubr.bf16.gmra.mrb[0].mxu0 %v73
    %v1853 = vpop.f32.mrb[0].mxu0
    %v1854 = vadd.f32 %v349, %v1853
    %v1855 = vpop.f32.mrb[0].mxu0
    %v1856 = vadd.f32 %v353, %v1855
    %v1857 = vpop.f32.mrb[0].mxu0
    %v1858 = vpop.f32.mrb[0].mxu0
    %1859 = vdwg.mxu0
    %1860 = vmatprep.subr.bf16.mxu0 %v1271
    %1861 = vmatpush1.bf16.msra.mxu0 %v1270
    %1862 = vmatprep.subr.bf16.mxu0 %v1303
    %1863 = vmatpush1.bf16.msra.mxu0 %v1302
    %1864 = vmatprep.subr.bf16.mxu0 %v1335
    %1865 = vmatpush1.bf16.msra.mxu0 %v1334
    %1866 = vmatprep.subr.bf16.mxu0 %v1367
    %1867 = vmatpush1.bf16.msra.mxu0 %v1366
    %1868 = vmatprep.subr.bf16.mxu0 %v1399
    %1869 = vmatpush1.bf16.msra.mxu0 %v1398
    %1870 = vmatprep.subr.bf16.mxu0 %v1431
    %1871 = vmatpush1.bf16.msra.mxu0 %v1430
    %1872 = vmatprep.subr.bf16.mxu0 %v1463
    %1873 = vmatpush1.bf16.msra.mxu0 %v1462
    %1874 = vmatprep.subr.bf16.mxu0 %v1495
    %1875 = vmatpush1.bf16.msra.mxu0 %v1494
    %1876 = vmatprep.subr.bf16.mxu0 0
    %1877 = vmatpush1.bf16.msra.mxu0 0
    %1878 = vmatprep.subr.bf16.mxu0 0
    %1879 = vmatpush1.bf16.msra.mxu0 0
    %1880 = vmatprep.subr.bf16.mxu0 0
    %1881 = vmatpush1.bf16.msra.mxu0 0
    %1882 = vmatprep.subr.bf16.mxu0 0
    %1883 = vmatpush1.bf16.msra.mxu0 0
    %1884 = vmatprep.subr.bf16.mxu0 0
    %1885 = vmatpush1.bf16.msra.mxu0 0
    %1886 = vmatprep.subr.bf16.mxu0 0
    %1887 = vmatpush1.bf16.msra.mxu0 0
    %1888 = vmatprep.subr.bf16.mxu0 0
    %1889 = vmatpush1.bf16.msra.mxu0 0
    %1890 = vmatprep.subr.bf16.mxu0 0
    %1891 = vmatpush1.bf16.msra.mxu0 0
    %1892 = vmatprep.mubr.bf16.mxu0 0
    %1893 = vmatmul.mubr.bf16.gmra.mrb[0].mxu0 %v73
    %v1894 = vpop.f32.mrb[0].mxu0
    %v1895 = vadd.f32 %v357, %v1894
    %v1896 = vpop.f32.mrb[0].mxu0
    %v1897 = vadd.f32 %v361, %v1896
    %v1898 = vpop.f32.mrb[0].mxu0
    %v1899 = vpop.f32.mrb[0].mxu0
    %1900 = vdwg.mxu0
    %1901 = vmatprep.subr.bf16.mxu0 %v1273
    %1902 = vmatpush1.bf16.msra.mxu0 %v1272
    %1903 = vmatprep.subr.bf16.mxu0 %v1305
    %1904 = vmatpush1.bf16.msra.mxu0 %v1304
    %1905 = vmatprep.subr.bf16.mxu0 %v1337
    %1906 = vmatpush1.bf16.msra.mxu0 %v1336
    %1907 = vmatprep.subr.bf16.mxu0 %v1369
    %1908 = vmatpush1.bf16.msra.mxu0 %v1368
    %1909 = vmatprep.subr.bf16.mxu0 %v1401
    %1910 = vmatpush1.bf16.msra.mxu0 %v1400
    %1911 = vmatprep.subr.bf16.mxu0 %v1433
    %1912 = vmatpush1.bf16.msra.mxu0 %v1432
    %1913 = vmatprep.subr.bf16.mxu0 %v1465
    %1914 = vmatpush1.bf16.msra.mxu0 %v1464
    %1915 = vmatprep.subr.bf16.mxu0 %v1497
    %1916 = vmatpush1.bf16.msra.mxu0 %v1496
    %1917 = vmatprep.subr.bf16.mxu0 0
    %1918 = vmatpush1.bf16.msra.mxu0 0
    %1919 = vmatprep.subr.bf16.mxu0 0
    %1920 = vmatpush1.bf16.msra.mxu0 0
    %1921 = vmatprep.subr.bf16.mxu0 0
    %1922 = vmatpush1.bf16.msra.mxu0 0
    %1923 = vmatprep.subr.bf16.mxu0 0
    %1924 = vmatpush1.bf16.msra.mxu0 0
    %1925 = vmatprep.subr.bf16.mxu0 0
    %1926 = vmatpush1.bf16.msra.mxu0 0
    %1927 = vmatprep.subr.bf16.mxu0 0
    %1928 = vmatpush1.bf16.msra.mxu0 0
    %1929 = vmatprep.subr.bf16.mxu0 0
    %1930 = vmatpush1.bf16.msra.mxu0 0
    %1931 = vmatprep.subr.bf16.mxu0 0
    %1932 = vmatpush1.bf16.msra.mxu0 0
    %1933 = vmatprep.mubr.bf16.mxu0 0
    %1934 = vmatmul.mubr.bf16.gmra.mrb[0].mxu0 %v73
    %v1935 = vpop.f32.mrb[0].mxu0
    %v1936 = vadd.f32 %v365, %v1935
    %v1937 = vpop.f32.mrb[0].mxu0
    %v1938 = vadd.f32 %v369, %v1937
    %v1939 = vpop.f32.mrb[0].mxu0
    %v1940 = vpop.f32.mrb[0].mxu0
    %1941 = vdwg.mxu0
    %1942 = vmatprep.subr.bf16.mxu0 %v1275
    %1943 = vmatpush1.bf16.msra.mxu0 %v1274
    %1944 = vmatprep.subr.bf16.mxu0 %v1307
    %1945 = vmatpush1.bf16.msra.mxu0 %v1306
    %1946 = vmatprep.subr.bf16.mxu0 %v1339
    %1947 = vmatpush1.bf16.msra.mxu0 %v1338
    %1948 = vmatprep.subr.bf16.mxu0 %v1371
    %1949 = vmatpush1.bf16.msra.mxu0 %v1370
    %1950 = vmatprep.subr.bf16.mxu0 %v1403
    %1951 = vmatpush1.bf16.msra.mxu0 %v1402
    %1952 = vmatprep.subr.bf16.mxu0 %v1435
    %1953 = vmatpush1.bf16.msra.mxu0 %v1434
    %1954 = vmatprep.subr.bf16.mxu0 %v1467
    %1955 = vmatpush1.bf16.msra.mxu0 %v1466
    %1956 = vmatprep.subr.bf16.mxu0 %v1499
    %1957 = vmatpush1.bf16.msra.mxu0 %v1498
    %1958 = vmatprep.subr.bf16.mxu0 0
    %1959 = vmatpush1.bf16.msra.mxu0 0
    %1960 = vmatprep.subr.bf16.mxu0 0
    %1961 = vmatpush1.bf16.msra.mxu0 0
    %1962 = vmatprep.subr.bf16.mxu0 0
    %1963 = vmatpush1.bf16.msra.mxu0 0
    %1964 = vmatprep.subr.bf16.mxu0 0
    %1965 = vmatpush1.bf16.msra.mxu0 0
    %1966 = vmatprep.subr.bf16.mxu0 0
    %1967 = vmatpush1.bf16.msra.mxu0 0
    %1968 = vmatprep.subr.bf16.mxu0 0
    %1969 = vmatpush1.bf16.msra.mxu0 0
    %1970 = vmatprep.subr.bf16.mxu0 0
    %1971 = vmatpush1.bf16.msra.mxu0 0
    %1972 = vmatprep.subr.bf16.mxu0 0
    %1973 = vmatpush1.bf16.msra.mxu0 0
    %1974 = vmatprep.mubr.bf16.mxu0 0
    %1975 = vmatmul.mubr.bf16.gmra.mrb[0].mxu0 %v73
    %v1976 = vpop.f32.mrb[0].mxu0
    %v1977 = vadd.f32 %v373, %v1976
    %v1978 = vpop.f32.mrb[0].mxu0
    %v1979 = vadd.f32 %v377, %v1978
    %v1980 = vpop.f32.mrb[0].mxu0
    %v1981 = vpop.f32.mrb[0].mxu0
    %1982 = vdwg.mxu0
    %1983 = vmatprep.subr.bf16.mxu0 %v1277
    %1984 = vmatpush1.bf16.msra.mxu0 %v1276
    %1985 = vmatprep.subr.bf16.mxu0 %v1309
    %1986 = vmatpush1.bf16.msra.mxu0 %v1308
    %1987 = vmatprep.subr.bf16.mxu0 %v1341
    %1988 = vmatpush1.bf16.msra.mxu0 %v1340
    %1989 = vmatprep.subr.bf16.mxu0 %v1373
    %1990 = vmatpush1.bf16.msra.mxu0 %v1372
    %1991 = vmatprep.subr.bf16.mxu0 %v1405
    %1992 = vmatpush1.bf16.msra.mxu0 %v1404
    %1993 = vmatprep.subr.bf16.mxu0 %v1437
    %1994 = vmatpush1.bf16.msra.mxu0 %v1436
    %1995 = vmatprep.subr.bf16.mxu0 %v1469
    %1996 = vmatpush1.bf16.msra.mxu0 %v1468
    %1997 = vmatprep.subr.bf16.mxu0 %v1501
    %1998 = vmatpush1.bf16.msra.mxu0 %v1500
    %1999 = vmatprep.subr.bf16.mxu0 0
    %2000 = vmatpush1.bf16.msra.mxu0 0
    %2001 = vmatprep.subr.bf16.mxu0 0
    %2002 = vmatpush1.bf16.msra.mxu0 0
    %2003 = vmatprep.subr.bf16.mxu0 0
    %2004 = vmatpush1.bf16.msra.mxu0 0
    %2005 = vmatprep.subr.bf16.mxu0 0
    %2006 = vmatpush1.bf16.msra.mxu0 0
    %2007 = vmatprep.subr.bf16.mxu0 0
    %2008 = vmatpush1.bf16.msra.mxu0 0
    %2009 = vmatprep.subr.bf16.mxu0 0
    %2010 = vmatpush1.bf16.msra.mxu0 0
    %2011 = vmatprep.subr.bf16.mxu0 0
    %2012 = vmatpush1.bf16.msra.mxu0 0
    %2013 = vmatprep.subr.bf16.mxu0 0
    %2014 = vmatpush1.bf16.msra.mxu0 0
    %2015 = vmatprep.mubr.bf16.mxu0 0
    %2016 = vmatmul.mubr.bf16.gmra.mrb[0].mxu0 %v73
    %v2017 = vpop.f32.mrb[0].mxu0
    %v2018 = vadd.f32 %v381, %v2017
    %v2019 = vpop.f32.mrb[0].mxu0
    %v2020 = vadd.f32 %v385, %v2019
    %v2021 = vpop.f32.mrb[0].mxu0
    %v2022 = vpop.f32.mrb[0].mxu0
    %2023 = vdwg.mxu0
    %2024 = vmatprep.subr.bf16.mxu0 %v1279
    %2025 = vmatpush1.bf16.msra.mxu0 %v1278
    %2026 = vmatprep.subr.bf16.mxu0 %v1311
    %2027 = vmatpush1.bf16.msra.mxu0 %v1310
    %2028 = vmatprep.subr.bf16.mxu0 %v1343
    %2029 = vmatpush1.bf16.msra.mxu0 %v1342
    %2030 = vmatprep.subr.bf16.mxu0 %v1375
    %2031 = vmatpush1.bf16.msra.mxu0 %v1374
    %2032 = vmatprep.subr.bf16.mxu0 %v1407
    %2033 = vmatpush1.bf16.msra.mxu0 %v1406
    %2034 = vmatprep.subr.bf16.mxu0 %v1439
    %2035 = vmatpush1.bf16.msra.mxu0 %v1438
    %2036 = vmatprep.subr.bf16.mxu0 %v1471
    %2037 = vmatpush1.bf16.msra.mxu0 %v1470
    %2038 = vmatprep.subr.bf16.mxu0 %v1503
    %2039 = vmatpush1.bf16.msra.mxu0 %v1502
    %2040 = vmatprep.subr.bf16.mxu0 0
    %2041 = vmatpush1.bf16.msra.mxu0 0
    %2042 = vmatprep.subr.bf16.mxu0 0
    %2043 = vmatpush1.bf16.msra.mxu0 0
    %2044 = vmatprep.subr.bf16.mxu0 0
    %2045 = vmatpush1.bf16.msra.mxu0 0
    %2046 = vmatprep.subr.bf16.mxu0 0
    %2047 = vmatpush1.bf16.msra.mxu0 0
    %2048 = vmatprep.subr.bf16.mxu0 0
    %2049 = vmatpush1.bf16.msra.mxu0 0
    %2050 = vmatprep.subr.bf16.mxu0 0
    %2051 = vmatpush1.bf16.msra.mxu0 0
    %2052 = vmatprep.subr.bf16.mxu0 0
    %2053 = vmatpush1.bf16.msra.mxu0 0
    %2054 = vmatprep.subr.bf16.mxu0 0
    %2055 = vmatpush1.bf16.msra.mxu0 0
    %2056 = vmatprep.mubr.bf16.mxu0 0
    %2057 = vmatmul.mubr.bf16.gmra.mrb[0].mxu0 %v73
    %v2058 = vpop.f32.mrb[0].mxu0
    %v2059 = vadd.f32 %v389, %v2058
    %v2060 = vpop.f32.mrb[0].mxu0
    %v2061 = vadd.f32 %v393, %v2060
    %v2062 = vpop.f32.mrb[0].mxu0
    %v2063 = vpop.f32.mrb[0].mxu0
    %2064 = vdwg.mxu0
    %2065 = vmatprep.subr.bf16.mxu0 %v1281
    %2066 = vmatpush1.bf16.msra.mxu0 %v1280
    %2067 = vmatprep.subr.bf16.mxu0 %v1313
    %2068 = vmatpush1.bf16.msra.mxu0 %v1312
    %2069 = vmatprep.subr.bf16.mxu0 %v1345
    %2070 = vmatpush1.bf16.msra.mxu0 %v1344
    %2071 = vmatprep.subr.bf16.mxu0 %v1377
    %2072 = vmatpush1.bf16.msra.mxu0 %v1376
    %2073 = vmatprep.subr.bf16.mxu0 %v1409
    %2074 = vmatpush1.bf16.msra.mxu0 %v1408
    %2075 = vmatprep.subr.bf16.mxu0 %v1441
    %2076 = vmatpush1.bf16.msra.mxu0 %v1440
    %2077 = vmatprep.subr.bf16.mxu0 %v1473
    %2078 = vmatpush1.bf16.msra.mxu0 %v1472
    %2079 = vmatprep.subr.bf16.mxu0 %v1505
    %2080 = vmatpush1.bf16.msra.mxu0 %v1504
    %2081 = vmatprep.subr.bf16.mxu0 0
    %2082 = vmatpush1.bf16.msra.mxu0 0
    %2083 = vmatprep.subr.bf16.mxu0 0
    %2084 = vmatpush1.bf16.msra.mxu0 0
    %2085 = vmatprep.subr.bf16.mxu0 0
    %2086 = vmatpush1.bf16.msra.mxu0 0
    %2087 = vmatprep.subr.bf16.mxu0 0
    %2088 = vmatpush1.bf16.msra.mxu0 0
    %2089 = vmatprep.subr.bf16.mxu0 0
    %2090 = vmatpush1.bf16.msra.mxu0 0
    %2091 = vmatprep.subr.bf16.mxu0 0
    %2092 = vmatpush1.bf16.msra.mxu0 0
    %2093 = vmatprep.subr.bf16.mxu0 0
    %2094 = vmatpush1.bf16.msra.mxu0 0
    %2095 = vmatprep.subr.bf16.mxu0 0
    %2096 = vmatpush1.bf16.msra.mxu0 0
    %2097 = vmatprep.mubr.bf16.mxu0 0
    %2098 = vmatmul.mubr.bf16.gmra.mrb[0].mxu0 %v73
    %v2099 = vpop.f32.mrb[0].mxu0
    %v2100 = vadd.f32 %v397, %v2099
    %v2101 = vpop.f32.mrb[0].mxu0
    %v2102 = vadd.f32 %v401, %v2101
    %v2103 = vpop.f32.mrb[0].mxu0
    %v2104 = vpop.f32.mrb[0].mxu0
    %2105 = vdwg.mxu0
    %2106 = vmatprep.subr.bf16.mxu0 %v1283
    %2107 = vmatpush1.bf16.msra.mxu0 %v1282
    %2108 = vmatprep.subr.bf16.mxu0 %v1315
    %2109 = vmatpush1.bf16.msra.mxu0 %v1314
    %2110 = vmatprep.subr.bf16.mxu0 %v1347
    %2111 = vmatpush1.bf16.msra.mxu0 %v1346
    %2112 = vmatprep.subr.bf16.mxu0 %v1379
    %2113 = vmatpush1.bf16.msra.mxu0 %v1378
    %2114 = vmatprep.subr.bf16.mxu0 %v1411
    %2115 = vmatpush1.bf16.msra.mxu0 %v1410
    %2116 = vmatprep.subr.bf16.mxu0 %v1443
    %2117 = vmatpush1.bf16.msra.mxu0 %v1442
    %2118 = vmatprep.subr.bf16.mxu0 %v1475
    %2119 = vmatpush1.bf16.msra.mxu0 %v1474
    %2120 = vmatprep.subr.bf16.mxu0 %v1507
    %2121 = vmatpush1.bf16.msra.mxu0 %v1506
    %2122 = vmatprep.subr.bf16.mxu0 0
    %2123 = vmatpush1.bf16.msra.mxu0 0
    %2124 = vmatprep.subr.bf16.mxu0 0
    %2125 = vmatpush1.bf16.msra.mxu0 0
    %2126 = vmatprep.subr.bf16.mxu0 0
    %2127 = vmatpush1.bf16.msra.mxu0 0
    %2128 = vmatprep.subr.bf16.mxu0 0
    %2129 = vmatpush1.bf16.msra.mxu0 0
    %2130 = vmatprep.subr.bf16.mxu0 0
    %2131 = vmatpush1.bf16.msra.mxu0 0
    %2132 = vmatprep.subr.bf16.mxu0 0
    %2133 = vmatpush1.bf16.msra.mxu0 0
    %2134 = vmatprep.subr.bf16.mxu0 0
    %2135 = vmatpush1.bf16.msra.mxu0 0
    %2136 = vmatprep.subr.bf16.mxu0 0
    %2137 = vmatpush1.bf16.msra.mxu0 0
    %2138 = vmatprep.mubr.bf16.mxu0 0
    %2139 = vmatmul.mubr.bf16.gmra.mrb[0].mxu0 %v73
    %v2140 = vpop.f32.mrb[0].mxu0
    %v2141 = vadd.f32 %v405, %v2140
    %v2142 = vpop.f32.mrb[0].mxu0
    %v2143 = vadd.f32 %v409, %v2142
    %v2144 = vpop.f32.mrb[0].mxu0
    %v2145 = vpop.f32.mrb[0].mxu0
    %2146 = vdwg.mxu0
    %2147 = vmatprep.subr.bf16.mxu0 %v1285
    %2148 = vmatpush1.bf16.msra.mxu0 %v1284
    %2149 = vmatprep.subr.bf16.mxu0 %v1317
    %2150 = vmatpush1.bf16.msra.mxu0 %v1316
    %2151 = vmatprep.subr.bf16.mxu0 %v1349
    %2152 = vmatpush1.bf16.msra.mxu0 %v1348
    %2153 = vmatprep.subr.bf16.mxu0 %v1381
    %2154 = vmatpush1.bf16.msra.mxu0 %v1380
    %2155 = vmatprep.subr.bf16.mxu0 %v1413
    %2156 = vmatpush1.bf16.msra.mxu0 %v1412
    %2157 = vmatprep.subr.bf16.mxu0 %v1445
    %2158 = vmatpush1.bf16.msra.mxu0 %v1444
    %2159 = vmatprep.subr.bf16.mxu0 %v1477
    %2160 = vmatpush1.bf16.msra.mxu0 %v1476
    %2161 = vmatprep.subr.bf16.mxu0 %v1509
    %2162 = vmatpush1.bf16.msra.mxu0 %v1508
    %2163 = vmatprep.subr.bf16.mxu0 0
    %2164 = vmatpush1.bf16.msra.mxu0 0
    %2165 = vmatprep.subr.bf16.mxu0 0
    %2166 = vmatpush1.bf16.msra.mxu0 0
    %2167 = vmatprep.subr.bf16.mxu0 0
    %2168 = vmatpush1.bf16.msra.mxu0 0
    %2169 = vmatprep.subr.bf16.mxu0 0
    %2170 = vmatpush1.bf16.msra.mxu0 0
    %2171 = vmatprep.subr.bf16.mxu0 0
    %2172 = vmatpush1.bf16.msra.mxu0 0
    %2173 = vmatprep.subr.bf16.mxu0 0
    %2174 = vmatpush1.bf16.msra.mxu0 0
    %2175 = vmatprep.subr.bf16.mxu0 0
    %2176 = vmatpush1.bf16.msra.mxu0 0
    %2177 = vmatprep.subr.bf16.mxu0 0
    %2178 = vmatpush1.bf16.msra.mxu0 0
    %2179 = vmatprep.mubr.bf16.mxu0 0
    %2180 = vmatmul.mubr.bf16.gmra.mrb[0].mxu0 %v73
    %v2181 = vpop.f32.mrb[0].mxu0
    %v2182 = vadd.f32 %v413, %v2181
    %v2183 = vpop.f32.mrb[0].mxu0
    %v2184 = vadd.f32 %v417, %v2183
    %v2185 = vpop.f32.mrb[0].mxu0
    %v2186 = vpop.f32.mrb[0].mxu0
    %2187 = vdwg.mxu0
    %2188 = vmatprep.subr.bf16.mxu0 %v1287
    %2189 = vmatpush1.bf16.msra.mxu0 %v1286
    %2190 = vmatprep.subr.bf16.mxu0 %v1319
    %2191 = vmatpush1.bf16.msra.mxu0 %v1318
    %2192 = vmatprep.subr.bf16.mxu0 %v1351
    %2193 = vmatpush1.bf16.msra.mxu0 %v1350
    %2194 = vmatprep.subr.bf16.mxu0 %v1383
    %2195 = vmatpush1.bf16.msra.mxu0 %v1382
    %2196 = vmatprep.subr.bf16.mxu0 %v1415
    %2197 = vmatpush1.bf16.msra.mxu0 %v1414
    %2198 = vmatprep.subr.bf16.mxu0 %v1447
    %2199 = vmatpush1.bf16.msra.mxu0 %v1446
    %2200 = vmatprep.subr.bf16.mxu0 %v1479
    %2201 = vmatpush1.bf16.msra.mxu0 %v1478
    %2202 = vmatprep.subr.bf16.mxu0 %v1511
    %2203 = vmatpush1.bf16.msra.mxu0 %v1510
    %2204 = vmatprep.subr.bf16.mxu0 0
    %2205 = vmatpush1.bf16.msra.mxu0 0
    %2206 = vmatprep.subr.bf16.mxu0 0
    %2207 = vmatpush1.bf16.msra.mxu0 0
    %2208 = vmatprep.subr.bf16.mxu0 0
    %2209 = vmatpush1.bf16.msra.mxu0 0
    %2210 = vmatprep.subr.bf16.mxu0 0
    %2211 = vmatpush1.bf16.msra.mxu0 0
    %2212 = vmatprep.subr.bf16.mxu0 0
    %2213 = vmatpush1.bf16.msra.mxu0 0
    %2214 = vmatprep.subr.bf16.mxu0 0
    %2215 = vmatpush1.bf16.msra.mxu0 0
    %2216 = vmatprep.subr.bf16.mxu0 0
    %2217 = vmatpush1.bf16.msra.mxu0 0
    %2218 = vmatprep.subr.bf16.mxu0 0
    %2219 = vmatpush1.bf16.msra.mxu0 0
    %2220 = vmatprep.mubr.bf16.mxu0 0
    %2221 = vmatmul.mubr.bf16.gmra.mrb[0].mxu0 %v73
    %v2222 = vpop.f32.mrb[0].mxu0
    %v2223 = vadd.f32 %v421, %v2222
    %v2224 = vpop.f32.mrb[0].mxu0
    %v2225 = vadd.f32 %v425, %v2224
    %v2226 = vpop.f32.mrb[0].mxu0
    %v2227 = vpop.f32.mrb[0].mxu0
    %2228 = vdwg.mxu0
    %2229 = vmatprep.subr.bf16.mxu0 %v1289
    %2230 = vmatpush1.bf16.msra.mxu0 %v1288
    %2231 = vmatprep.subr.bf16.mxu0 %v1321
    %2232 = vmatpush1.bf16.msra.mxu0 %v1320
    %2233 = vmatprep.subr.bf16.mxu0 %v1353
    %2234 = vmatpush1.bf16.msra.mxu0 %v1352
    %2235 = vmatprep.subr.bf16.mxu0 %v1385
    %2236 = vmatpush1.bf16.msra.mxu0 %v1384
    %2237 = vmatprep.subr.bf16.mxu0 %v1417
    %2238 = vmatpush1.bf16.msra.mxu0 %v1416
    %2239 = vmatprep.subr.bf16.mxu0 %v1449
    %2240 = vmatpush1.bf16.msra.mxu0 %v1448
    %2241 = vmatprep.subr.bf16.mxu0 %v1481
    %2242 = vmatpush1.bf16.msra.mxu0 %v1480
    %2243 = vmatprep.subr.bf16.mxu0 %v1513
    %2244 = vmatpush1.bf16.msra.mxu0 %v1512
    %2245 = vmatprep.subr.bf16.mxu0 0
    %2246 = vmatpush1.bf16.msra.mxu0 0
    %2247 = vmatprep.subr.bf16.mxu0 0
    %2248 = vmatpush1.bf16.msra.mxu0 0
    %2249 = vmatprep.subr.bf16.mxu0 0
    %2250 = vmatpush1.bf16.msra.mxu0 0
    %2251 = vmatprep.subr.bf16.mxu0 0
    %2252 = vmatpush1.bf16.msra.mxu0 0
    %2253 = vmatprep.subr.bf16.mxu0 0
    %2254 = vmatpush1.bf16.msra.mxu0 0
    %2255 = vmatprep.subr.bf16.mxu0 0
    %2256 = vmatpush1.bf16.msra.mxu0 0
    %2257 = vmatprep.subr.bf16.mxu0 0
    %2258 = vmatpush1.bf16.msra.mxu0 0
    %2259 = vmatprep.subr.bf16.mxu0 0
    %2260 = vmatpush1.bf16.msra.mxu0 0
    %2261 = vmatprep.mubr.bf16.mxu0 0
    %2262 = vmatmul.mubr.bf16.gmra.mrb[0].mxu0 %v73
    %v2263 = vpop.f32.mrb[0].mxu0
    %v2264 = vadd.f32 %v429, %v2263
    %v2265 = vpop.f32.mrb[0].mxu0
    %v2266 = vadd.f32 %v433, %v2265
    %v2267 = vpop.f32.mrb[0].mxu0
    %v2268 = vpop.f32.mrb[0].mxu0
    %2269 = vdwg.mxu0
    %2270 = vmatprep.subr.bf16.mxu0 %v1291
    %2271 = vmatpush1.bf16.msra.mxu0 %v1290
    %2272 = vmatprep.subr.bf16.mxu0 %v1323
    %2273 = vmatpush1.bf16.msra.mxu0 %v1322
    %2274 = vmatprep.subr.bf16.mxu0 %v1355
    %2275 = vmatpush1.bf16.msra.mxu0 %v1354
    %2276 = vmatprep.subr.bf16.mxu0 %v1387
    %2277 = vmatpush1.bf16.msra.mxu0 %v1386
    %2278 = vmatprep.subr.bf16.mxu0 %v1419
    %2279 = vmatpush1.bf16.msra.mxu0 %v1418
    %2280 = vmatprep.subr.bf16.mxu0 %v1451
    %2281 = vmatpush1.bf16.msra.mxu0 %v1450
    %2282 = vmatprep.subr.bf16.mxu0 %v1483
    %2283 = vmatpush1.bf16.msra.mxu0 %v1482
    %2284 = vmatprep.subr.bf16.mxu0 %v1515
    %2285 = vmatpush1.bf16.msra.mxu0 %v1514
    %2286 = vmatprep.subr.bf16.mxu0 0
    %2287 = vmatpush1.bf16.msra.mxu0 0
    %2288 = vmatprep.subr.bf16.mxu0 0
    %2289 = vmatpush1.bf16.msra.mxu0 0
    %2290 = vmatprep.subr.bf16.mxu0 0
    %2291 = vmatpush1.bf16.msra.mxu0 0
    %2292 = vmatprep.subr.bf16.mxu0 0
    %2293 = vmatpush1.bf16.msra.mxu0 0
    %2294 = vmatprep.subr.bf16.mxu0 0
    %2295 = vmatpush1.bf16.msra.mxu0 0
    %2296 = vmatprep.subr.bf16.mxu0 0
    %2297 = vmatpush1.bf16.msra.mxu0 0
    %2298 = vmatprep.subr.bf16.mxu0 0
    %2299 = vmatpush1.bf16.msra.mxu0 0
    %2300 = vmatprep.subr.bf16.mxu0 0
    %2301 = vmatpush1.bf16.msra.mxu0 0
    %2302 = vmatprep.mubr.bf16.mxu0 0
    %2303 = vmatmul.mubr.bf16.gmra.mrb[0].mxu0 %v73
    %v2304 = vpop.f32.mrb[0].mxu0
    %v2305 = vadd.f32 %v437, %v2304
    %v2306 = vpop.f32.mrb[0].mxu0
    %v2307 = vadd.f32 %v441, %v2306
    %v2308 = vpop.f32.mrb[0].mxu0
    %v2309 = vpop.f32.mrb[0].mxu0
    %2310 = vdwg.mxu0
    %2311 = vmatprep.subr.bf16.mxu0 %v1293
    %2312 = vmatpush1.bf16.msra.mxu0 %v1292
    %2313 = vmatprep.subr.bf16.mxu0 %v1325
    %2314 = vmatpush1.bf16.msra.mxu0 %v1324
    %2315 = vmatprep.subr.bf16.mxu0 %v1357
    %2316 = vmatpush1.bf16.msra.mxu0 %v1356
    %2317 = vmatprep.subr.bf16.mxu0 %v1389
    %2318 = vmatpush1.bf16.msra.mxu0 %v1388
    %2319 = vmatprep.subr.bf16.mxu0 %v1421
    %2320 = vmatpush1.bf16.msra.mxu0 %v1420
    %2321 = vmatprep.subr.bf16.mxu0 %v1453
    %2322 = vmatpush1.bf16.msra.mxu0 %v1452
    %2323 = vmatprep.subr.bf16.mxu0 %v1485
    %2324 = vmatpush1.bf16.msra.mxu0 %v1484
    %2325 = vmatprep.subr.bf16.mxu0 %v1517
    %2326 = vmatpush1.bf16.msra.mxu0 %v1516
    %2327 = vmatprep.subr.bf16.mxu0 0
    %2328 = vmatpush1.bf16.msra.mxu0 0
    %2329 = vmatprep.subr.bf16.mxu0 0
    %2330 = vmatpush1.bf16.msra.mxu0 0
    %2331 = vmatprep.subr.bf16.mxu0 0
    %2332 = vmatpush1.bf16.msra.mxu0 0
    %2333 = vmatprep.subr.bf16.mxu0 0
    %2334 = vmatpush1.bf16.msra.mxu0 0
    %2335 = vmatprep.subr.bf16.mxu0 0
    %2336 = vmatpush1.bf16.msra.mxu0 0
    %2337 = vmatprep.subr.bf16.mxu0 0
    %2338 = vmatpush1.bf16.msra.mxu0 0
    %2339 = vmatprep.subr.bf16.mxu0 0
    %2340 = vmatpush1.bf16.msra.mxu0 0
    %2341 = vmatprep.subr.bf16.mxu0 0
    %2342 = vmatpush1.bf16.msra.mxu0 0
    %2343 = vmatprep.mubr.bf16.mxu0 0
    %2344 = vmatmul.mubr.bf16.gmra.mrb[0].mxu0 %v73
    %v2345 = vpop.f32.mrb[0].mxu0
    %v2346 = vadd.f32 %v445, %v2345
    %v2347 = vpop.f32.mrb[0].mxu0
    %v2348 = vadd.f32 %v449, %v2347
    %v2349 = vpop.f32.mrb[0].mxu0
    %v2350 = vpop.f32.mrb[0].mxu0
    %2351 = vdwg.mxu0
    %2352 = vmatprep.subr.bf16.mxu0 %v1295
    %2353 = vmatpush1.bf16.msra.mxu0 %v1294
    %2354 = vmatprep.subr.bf16.mxu0 %v1327
    %2355 = vmatpush1.bf16.msra.mxu0 %v1326
    %2356 = vmatprep.subr.bf16.mxu0 %v1359
    %2357 = vmatpush1.bf16.msra.mxu0 %v1358
    %2358 = vmatprep.subr.bf16.mxu0 %v1391
    %2359 = vmatpush1.bf16.msra.mxu0 %v1390
    %2360 = vmatprep.subr.bf16.mxu0 %v1423
    %2361 = vmatpush1.bf16.msra.mxu0 %v1422
    %2362 = vmatprep.subr.bf16.mxu0 %v1455
    %2363 = vmatpush1.bf16.msra.mxu0 %v1454
    %2364 = vmatprep.subr.bf16.mxu0 %v1487
    %2365 = vmatpush1.bf16.msra.mxu0 %v1486
    %2366 = vmatprep.subr.bf16.mxu0 %v1519
    %2367 = vmatpush1.bf16.msra.mxu0 %v1518
    %2368 = vmatprep.subr.bf16.mxu0 0
    %2369 = vmatpush1.bf16.msra.mxu0 0
    %2370 = vmatprep.subr.bf16.mxu0 0
    %2371 = vmatpush1.bf16.msra.mxu0 0
    %2372 = vmatprep.subr.bf16.mxu0 0
    %2373 = vmatpush1.bf16.msra.mxu0 0
    %2374 = vmatprep.subr.bf16.mxu0 0
    %2375 = vmatpush1.bf16.msra.mxu0 0
    %2376 = vmatprep.subr.bf16.mxu0 0
    %2377 = vmatpush1.bf16.msra.mxu0 0
    %2378 = vmatprep.subr.bf16.mxu0 0
    %2379 = vmatpush1.bf16.msra.mxu0 0
    %2380 = vmatprep.subr.bf16.mxu0 0
    %2381 = vmatpush1.bf16.msra.mxu0 0
    %2382 = vmatprep.subr.bf16.mxu0 0
    %2383 = vmatpush1.bf16.msra.mxu0 0
    %2384 = vmatprep.mubr.bf16.mxu0 0
    %2385 = vmatmul.mubr.bf16.gmra.mrb[0].mxu0 %v73
    %v2386 = vpop.f32.mrb[0].mxu0
    %v2387 = vadd.f32 %v453, %v2386
    %v2388 = vpop.f32.mrb[0].mxu0
    %v2389 = vadd.f32 %v457, %v2388
    %v2390 = vpop.f32.mrb[0].mxu0
    %v2391 = vpop.f32.mrb[0].mxu0
    %2392 = vdwg.mxu0
    %2393 = vmatprep.subr.bf16.mxu0 %v1297
    %2394 = vmatpush1.bf16.msra.mxu0 %v1296
    %2395 = vmatprep.subr.bf16.mxu0 %v1329
    %2396 = vmatpush1.bf16.msra.mxu0 %v1328
    %2397 = vmatprep.subr.bf16.mxu0 %v1361
    %2398 = vmatpush1.bf16.msra.mxu0 %v1360
    %2399 = vmatprep.subr.bf16.mxu0 %v1393
    %2400 = vmatpush1.bf16.msra.mxu0 %v1392
    %2401 = vmatprep.subr.bf16.mxu0 %v1425
    %2402 = vmatpush1.bf16.msra.mxu0 %v1424
    %2403 = vmatprep.subr.bf16.mxu0 %v1457
    %2404 = vmatpush1.bf16.msra.mxu0 %v1456
    %2405 = vmatprep.subr.bf16.mxu0 %v1489
    %2406 = vmatpush1.bf16.msra.mxu0 %v1488
    %2407 = vmatprep.subr.bf16.mxu0 %v1521
    %2408 = vmatpush1.bf16.msra.mxu0 %v1520
    %2409 = vmatprep.subr.bf16.mxu0 0
    %2410 = vmatpush1.bf16.msra.mxu0 0
    %2411 = vmatprep.subr.bf16.mxu0 0
    %2412 = vmatpush1.bf16.msra.mxu0 0
    %2413 = vmatprep.subr.bf16.mxu0 0
    %2414 = vmatpush1.bf16.msra.mxu0 0
    %2415 = vmatprep.subr.bf16.mxu0 0
    %2416 = vmatpush1.bf16.msra.mxu0 0
    %2417 = vmatprep.subr.bf16.mxu0 0
    %2418 = vmatpush1.bf16.msra.mxu0 0
    %2419 = vmatprep.subr.bf16.mxu0 0
    %2420 = vmatpush1.bf16.msra.mxu0 0
    %2421 = vmatprep.subr.bf16.mxu0 0
    %2422 = vmatpush1.bf16.msra.mxu0 0
    %2423 = vmatprep.subr.bf16.mxu0 0
    %2424 = vmatpush1.bf16.msra.mxu0 0
    %2425 = vmatprep.mubr.bf16.mxu0 0
    %2426 = vmatmul.mubr.bf16.gmra.mrb[0].mxu0 %v73
    %v2427 = vpop.f32.mrb[0].mxu0
    %v2428 = vadd.f32 %v461, %v2427
    %v2429 = vpop.f32.mrb[0].mxu0
    %v2430 = vadd.f32 %v465, %v2429
    %v2431 = vpop.f32.mrb[0].mxu0
    %v2432 = vpop.f32.mrb[0].mxu0
    %2433 = vdwg.mxu0
    %v2434 = vmax.f32 %v1813, 0.0
    %v2435 = vmax.f32 %v1815, 0.0
    %v2436 = vmax.f32 %v1854, 0.0
    %v2437 = vmax.f32 %v1856, 0.0
    %v2438 = vmax.f32 %v1895, 0.0
    %v2439 = vmax.f32 %v1897, 0.0
    %v2440 = vmax.f32 %v1936, 0.0
    %v2441 = vmax.f32 %v1938, 0.0
    %v2442 = vmax.f32 %v1977, 0.0
    %v2443 = vmax.f32 %v1979, 0.0
    %v2444 = vmax.f32 %v2018, 0.0
    %v2445 = vmax.f32 %v2020, 0.0
    %v2446 = vmax.f32 %v2059, 0.0
    %v2447 = vmax.f32 %v2061, 0.0
    %v2448 = vmax.f32 %v2100, 0.0
    %v2449 = vmax.f32 %v2102, 0.0
    %v2450 = vmax.f32 %v2141, 0.0
    %v2451 = vmax.f32 %v2143, 0.0
    %v2452 = vmax.f32 %v2182, 0.0
    %v2453 = vmax.f32 %v2184, 0.0
    %v2454 = vmax.f32 %v2223, 0.0
    %v2455 = vmax.f32 %v2225, 0.0
    %v2456 = vmax.f32 %v2264, 0.0
    %v2457 = vmax.f32 %v2266, 0.0
    %v2458 = vmax.f32 %v2305, 0.0
    %v2459 = vmax.f32 %v2307, 0.0
    %v2460 = vmax.f32 %v2346, 0.0
    %v2461 = vmax.f32 %v2348, 0.0
    %v2462 = vmax.f32 %v2387, 0.0
    %v2463 = vmax.f32 %v2389, 0.0
    %v2464 = vmax.f32 %v2428, 0.0
    %v2465 = vmax.f32 %v2430, 0.0
    %v2466 = vpack.c.bf16 %v2434, %v2434
    %v2467 = vpack.c.bf16 %v2435, %v2435
    %v2468 = vpack.c.bf16 %v2436, %v2436
    %v2469 = vpack.c.bf16 %v2437, %v2437
    %v2470 = vpack.c.bf16 %v2438, %v2438
    %v2471 = vpack.c.bf16 %v2439, %v2439
    %v2472 = vpack.c.bf16 %v2440, %v2440
    %v2473 = vpack.c.bf16 %v2441, %v2441
    %v2474 = vpack.c.bf16 %v2442, %v2442
    %v2475 = vpack.c.bf16 %v2443, %v2443
    %v2476 = vpack.c.bf16 %v2444, %v2444
    %v2477 = vpack.c.bf16 %v2445, %v2445
    %v2478 = vpack.c.bf16 %v2446, %v2446
    %v2479 = vpack.c.bf16 %v2447, %v2447
    %v2480 = vpack.c.bf16 %v2448, %v2448
    %v2481 = vpack.c.bf16 %v2449, %v2449
    %v2482 = vpack.c.bf16 %v2450, %v2450
    %v2483 = vpack.c.bf16 %v2451, %v2451
    %v2484 = vpack.c.bf16 %v2452, %v2452
    %v2485 = vpack.c.bf16 %v2453, %v2453
    %v2486 = vpack.c.bf16 %v2454, %v2454
    %v2487 = vpack.c.bf16 %v2455, %v2455
    %v2488 = vpack.c.bf16 %v2456, %v2456
    %v2489 = vpack.c.bf16 %v2457, %v2457
    %v2490 = vpack.c.bf16 %v2458, %v2458
    %v2491 = vpack.c.bf16 %v2459, %v2459
    %v2492 = vpack.c.bf16 %v2460, %v2460
    %v2493 = vpack.c.bf16 %v2461, %v2461
    %v2494 = vpack.c.bf16 %v2462, %v2462
    %v2495 = vpack.c.bf16 %v2463, %v2463
    %v2496 = vpack.c.bf16 %v2464, %v2464
    %v2497 = vpack.c.bf16 %v2465, %v2465
    %v2498 = vld [vmem:[#allocation6] sm:$0xff]
    %v2499 = vld [vmem:[#allocation6 + $0x8] sm:$0xff]
    %v2500 = vld [vmem:[#allocation6 + $0x10] sm:$0xf]
    %v2501 = vld [vmem:[#allocation6 + $0x14] sm:$0xff]
    %v2502 = vld [vmem:[#allocation6 + $0x1c] sm:$0xff]
    %v2503 = vld [vmem:[#allocation6 + $0x24] sm:$0xf]
    %v2504 = vld [vmem:[#allocation6 + $0x28] sm:$0xff]
    %v2505 = vld [vmem:[#allocation6 + $0x30] sm:$0xff]
    %v2506 = vld [vmem:[#allocation6 + $0x38] sm:$0xf]
    %v2507 = vld [vmem:[#allocation6 + $0x3c] sm:$0xff]
    %v2508 = vld [vmem:[#allocation6 + $0x44] sm:$0xff]
    %v2509 = vld [vmem:[#allocation6 + $0x4c] sm:$0xf]
    %v2510 = vld [vmem:[#allocation6 + $0x50] sm:$0xff]
    %v2511 = vld [vmem:[#allocation6 + $0x58] sm:$0xff]
    %v2512 = vld [vmem:[#allocation6 + $0x60] sm:$0xf]
    %v2513 = vld [vmem:[#allocation6 + $0x64] sm:$0xff]
    %v2514 = vld [vmem:[#allocation6 + $0x6c] sm:$0xff]
    %v2515 = vld [vmem:[#allocation6 + $0x74] sm:$0xf]
    %v2516 = vld [vmem:[#allocation6 + $0x78] sm:$0xff]
    %v2517 = vld [vmem:[#allocation6 + $0x80] sm:$0xff]
    %v2518 = vld [vmem:[#allocation6 + $0x88] sm:$0xf]
    %v2519 = vld [vmem:[#allocation6 + $0x8c] sm:$0xff]
    %v2520 = vld [vmem:[#allocation6 + $0x94] sm:$0xff]
    %v2521 = vld [vmem:[#allocation6 + $0x9c] sm:$0xf]
    %v2522 = vld [vmem:[#allocation6 + $0xa0] sm:$0xff]
    %v2523 = vld [vmem:[#allocation6 + $0xa8] sm:$0xff]
    %v2524 = vld [vmem:[#allocation6 + $0xb0] sm:$0xf]
    %v2525 = vld [vmem:[#allocation6 + $0xb4] sm:$0xff]
    %v2526 = vld [vmem:[#allocation6 + $0xbc] sm:$0xff]
    %v2527 = vld [vmem:[#allocation6 + $0xc4] sm:$0xf]
    %v2528 = vld [vmem:[#allocation6 + $0xc8] sm:$0xff]
    %v2529 = vld [vmem:[#allocation6 + $0xd0] sm:$0xff]
    %v2530 = vld [vmem:[#allocation6 + $0xd8] sm:$0xf]
    %v2531 = vld [vmem:[#allocation6 + $0xdc] sm:$0xff]
    %v2532 = vld [vmem:[#allocation6 + $0xe4] sm:$0xff]
    %v2533 = vld [vmem:[#allocation6 + $0xec] sm:$0xf]
    %v2534 = vld [vmem:[#allocation6 + $0xf0] sm:$0xff]
    %v2535 = vld [vmem:[#allocation6 + $0xf8] sm:$0xff]
    %v2536 = vld [vmem:[#allocation6 + $0x100] sm:$0xf]
    %v2537 = vld [vmem:[#allocation6 + $0x104] sm:$0xff]
    %v2538 = vld [vmem:[#allocation6 + $0x10c] sm:$0xff]
    %v2539 = vld [vmem:[#allocation6 + $0x114] sm:$0xf]
    %v2540 = vld [vmem:[#allocation6 + $0x118] sm:$0xff]
    %v2541 = vld [vmem:[#allocation6 + $0x120] sm:$0xff]
    %v2542 = vld [vmem:[#allocation6 + $0x128] sm:$0xf]
    %v2543 = vld [vmem:[#allocation6 + $0x12c] sm:$0xff]
    %v2544 = vld [vmem:[#allocation6 + $0x134] sm:$0xff]
    %v2545 = vld [vmem:[#allocation6 + $0x13c] sm:$0xf]
    %v2546 = vld [vmem:[#allocation6 + $0x140] sm:$0xff]
    %v2547 = vld [vmem:[#allocation6 + $0x148] sm:$0xff]
    %v2548 = vld [vmem:[#allocation6 + $0x150] sm:$0xf]
    %v2549 = vld [vmem:[#allocation6 + $0x154] sm:$0xff]
    %v2550 = vld [vmem:[#allocation6 + $0x15c] sm:$0xff]
    %v2551 = vld [vmem:[#allocation6 + $0x164] sm:$0xf]
    %v2552 = vld [vmem:[#allocation6 + $0x168] sm:$0xff]
    %v2553 = vld [vmem:[#allocation6 + $0x170] sm:$0xff]
    %v2554 = vld [vmem:[#allocation6 + $0x178] sm:$0xf]
    %v2555 = vld [vmem:[#allocation6 + $0x17c] sm:$0xff]
    %v2556 = vld [vmem:[#allocation6 + $0x184] sm:$0xff]
    %v2557 = vld [vmem:[#allocation6 + $0x18c] sm:$0xf]
    %v2558 = vld [vmem:[#allocation6 + $0x190] sm:$0xff]
    %v2559 = vld [vmem:[#allocation6 + $0x198] sm:$0xff]
    %v2560 = vld [vmem:[#allocation6 + $0x1a0] sm:$0xf]
    %v2561 = vld [vmem:[#allocation6 + $0x1a4] sm:$0xff]
    %v2562 = vld [vmem:[#allocation6 + $0x1ac] sm:$0xff]
    %v2563 = vld [vmem:[#allocation6 + $0x1b4] sm:$0xf]
    %v2564 = vld [vmem:[#allocation6 + $0x1b8] sm:$0xff]
    %v2565 = vld [vmem:[#allocation6 + $0x1c0] sm:$0xff]
    %v2566 = vld [vmem:[#allocation6 + $0x1c8] sm:$0xf]
    %v2567 = vld [vmem:[#allocation6 + $0x1cc] sm:$0xff]
    %v2568 = vld [vmem:[#allocation6 + $0x1d4] sm:$0xff]
    %v2569 = vld [vmem:[#allocation6 + $0x1dc] sm:$0xf]
    %v2570 = vld [vmem:[#allocation6 + $0x1e0] sm:$0xff]
    %v2571 = vld [vmem:[#allocation6 + $0x1e8] sm:$0xff]
    %v2572 = vld [vmem:[#allocation6 + $0x1f0] sm:$0xf]
    %v2573 = vld [vmem:[#allocation6 + $0x1f4] sm:$0xff]
    %v2574 = vld [vmem:[#allocation6 + $0x1fc] sm:$0xff]
    %v2575 = vld [vmem:[#allocation6 + $0x204] sm:$0xf]
    %v2576 = vld [vmem:[#allocation6 + $0x208] sm:$0xff]
    %v2577 = vld [vmem:[#allocation6 + $0x210] sm:$0xff]
    %v2578 = vld [vmem:[#allocation6 + $0x218] sm:$0xf]
    %v2579 = vld [vmem:[#allocation6 + $0x21c] sm:$0xff]
    %v2580 = vld [vmem:[#allocation6 + $0x224] sm:$0xff]
    %v2581 = vld [vmem:[#allocation6 + $0x22c] sm:$0xf]
    %v2582 = vld [vmem:[#allocation6 + $0x230] sm:$0xff]
    %v2583 = vld [vmem:[#allocation6 + $0x238] sm:$0xff]
    %v2584 = vld [vmem:[#allocation6 + $0x240] sm:$0xf]
    %v2585 = vld [vmem:[#allocation6 + $0x244] sm:$0xff]
    %v2586 = vld [vmem:[#allocation6 + $0x24c] sm:$0xff]
    %v2587 = vld [vmem:[#allocation6 + $0x254] sm:$0xf]
    %v2588 = vld [vmem:[#allocation6 + $0x258] sm:$0xff]
    %v2589 = vld [vmem:[#allocation6 + $0x260] sm:$0xff]
    %v2590 = vld [vmem:[#allocation6 + $0x268] sm:$0xf]
    %v2591 = vld [vmem:[#allocation6 + $0x26c] sm:$0xff]
    %v2592 = vld [vmem:[#allocation6 + $0x274] sm:$0xff]
    %v2593 = vld [vmem:[#allocation6 + $0x27c] sm:$0xf]
    %v2594 = vld [vmem:[#allocation6 + $0x280] sm:$0xff]
    %v2595 = vld [vmem:[#allocation6 + $0x288] sm:$0xff]
    %v2596 = vld [vmem:[#allocation6 + $0x290] sm:$0xf]
    %v2597 = vld [vmem:[#allocation6 + $0x294] sm:$0xff]
    %v2598 = vld [vmem:[#allocation6 + $0x29c] sm:$0xff]
    %v2599 = vld [vmem:[#allocation6 + $0x2a4] sm:$0xf]
    %v2600 = vld [vmem:[#allocation6 + $0x2a8] sm:$0xff]
    %v2601 = vld [vmem:[#allocation6 + $0x2b0] sm:$0xff]
    %v2602 = vld [vmem:[#allocation6 + $0x2b8] sm:$0xf]
    %v2603 = vld [vmem:[#allocation6 + $0x2bc] sm:$0xff]
    %v2604 = vld [vmem:[#allocation6 + $0x2c4] sm:$0xff]
    %v2605 = vld [vmem:[#allocation6 + $0x2cc] sm:$0xf]
    %v2606 = vld [vmem:[#allocation6 + $0x2d0] sm:$0xff]
    %v2607 = vld [vmem:[#allocation6 + $0x2d8] sm:$0xff]
    %v2608 = vld [vmem:[#allocation6 + $0x2e0] sm:$0xf]
    %v2609 = vld [vmem:[#allocation6 + $0x2e4] sm:$0xff]
    %v2610 = vld [vmem:[#allocation6 + $0x2ec] sm:$0xff]
    %v2611 = vld [vmem:[#allocation6 + $0x2f4] sm:$0xf]
    %v2612 = vld [vmem:[#allocation6 + $0x2f8] sm:$0xff]
    %v2613 = vld [vmem:[#allocation6 + $0x300] sm:$0xff]
    %v2614 = vld [vmem:[#allocation6 + $0x308] sm:$0xf]
    %v2615 = vld [vmem:[#allocation6 + $0x30c] sm:$0xff]
    %v2616 = vld [vmem:[#allocation6 + $0x314] sm:$0xff]
    %v2617 = vld [vmem:[#allocation6 + $0x31c] sm:$0xf]
    %v2618 = vld [vmem:[#allocation6 + $0x320] sm:$0xff]
    %v2619 = vld [vmem:[#allocation6 + $0x328] sm:$0xff]
    %v2620 = vld [vmem:[#allocation6 + $0x330] sm:$0xf]
    %v2621 = vld [vmem:[#allocation6 + $0x334] sm:$0xff]
    %v2622 = vld [vmem:[#allocation6 + $0x33c] sm:$0xff]
    %v2623 = vld [vmem:[#allocation6 + $0x344] sm:$0xf]
    %v2624 = vld [vmem:[#allocation6 + $0x348] sm:$0xff]
    %v2625 = vld [vmem:[#allocation6 + $0x350] sm:$0xff]
    %v2626 = vld [vmem:[#allocation6 + $0x358] sm:$0xf]
    %v2627 = vld [vmem:[#allocation6 + $0x35c] sm:$0xff]
    %v2628 = vld [vmem:[#allocation6 + $0x364] sm:$0xff]
    %v2629 = vld [vmem:[#allocation6 + $0x36c] sm:$0xf]
    %v2630 = vld [vmem:[#allocation6 + $0x370] sm:$0xff]
    %v2631 = vld [vmem:[#allocation6 + $0x378] sm:$0xff]
    %v2632 = vld [vmem:[#allocation6 + $0x380] sm:$0xf]
    %v2633 = vld [vmem:[#allocation6 + $0x384] sm:$0xff]
    %v2634 = vld [vmem:[#allocation6 + $0x38c] sm:$0xff]
    %v2635 = vld [vmem:[#allocation6 + $0x394] sm:$0xf]
    %v2636 = vld [vmem:[#allocation6 + $0x398] sm:$0xff]
    %v2637 = vld [vmem:[#allocation6 + $0x3a0] sm:$0xff]
    %v2638 = vld [vmem:[#allocation6 + $0x3a8] sm:$0xf]
    %v2639 = vld [vmem:[#allocation6 + $0x3ac] sm:$0xff]
    %v2640 = vld [vmem:[#allocation6 + $0x3b4] sm:$0xff]
    %v2641 = vld [vmem:[#allocation6 + $0x3bc] sm:$0xf]
    %v2642 = vld [vmem:[#allocation6 + $0x3c0] sm:$0xff]
    %v2643 = vld [vmem:[#allocation6 + $0x3c8] sm:$0xff]
    %v2644 = vld [vmem:[#allocation6 + $0x3d0] sm:$0xf]
    %v2645 = vld [vmem:[#allocation6 + $0x3d4] sm:$0xff]
    %v2646 = vld [vmem:[#allocation6 + $0x3dc] sm:$0xff]
    %v2647 = vld [vmem:[#allocation6 + $0x3e4] sm:$0xf]
    %v2648 = vld [vmem:[#allocation6 + $0x3e8] sm:$0xff]
    %v2649 = vld [vmem:[#allocation6 + $0x3f0] sm:$0xff]
    %v2650 = vld [vmem:[#allocation6 + $0x3f8] sm:$0xf]
    %v2651 = vld [vmem:[#allocation6 + $0x3fc] sm:$0xff]
    %v2652 = vld [vmem:[#allocation6 + $0x404] sm:$0xff]
    %v2653 = vld [vmem:[#allocation6 + $0x40c] sm:$0xf]
    %v2654 = vld [vmem:[#allocation6 + $0x410] sm:$0xff]
    %v2655 = vld [vmem:[#allocation6 + $0x418] sm:$0xff]
    %v2656 = vld [vmem:[#allocation6 + $0x420] sm:$0xf]
    %v2657 = vld [vmem:[#allocation6 + $0x424] sm:$0xff]
    %v2658 = vld [vmem:[#allocation6 + $0x42c] sm:$0xff]
    %v2659 = vld [vmem:[#allocation6 + $0x434] sm:$0xf]
    %v2660 = vld [vmem:[#allocation6 + $0x438] sm:$0xff]
    %v2661 = vld [vmem:[#allocation6 + $0x440] sm:$0xff]
    %v2662 = vld [vmem:[#allocation6 + $0x448] sm:$0xf]
    %v2663 = vld [vmem:[#allocation6 + $0x44c] sm:$0xff]
    %v2664 = vld [vmem:[#allocation6 + $0x454] sm:$0xff]
    %v2665 = vld [vmem:[#allocation6 + $0x45c] sm:$0xf]
    %v2666 = vld [vmem:[#allocation6 + $0x460] sm:$0xff]
    %v2667 = vld [vmem:[#allocation6 + $0x468] sm:$0xff]
    %v2668 = vld [vmem:[#allocation6 + $0x470] sm:$0xf]
    %v2669 = vld [vmem:[#allocation6 + $0x474] sm:$0xff]
    %v2670 = vld [vmem:[#allocation6 + $0x47c] sm:$0xff]
    %v2671 = vld [vmem:[#allocation6 + $0x484] sm:$0xf]
    %v2672 = vld [vmem:[#allocation6 + $0x488] sm:$0xff]
    %v2673 = vld [vmem:[#allocation6 + $0x490] sm:$0xff]
    %v2674 = vld [vmem:[#allocation6 + $0x498] sm:$0xf]
    %v2675 = vld [vmem:[#allocation6 + $0x49c] sm:$0xff]
    %v2676 = vld [vmem:[#allocation6 + $0x4a4] sm:$0xff]
    %v2677 = vld [vmem:[#allocation6 + $0x4ac] sm:$0xf]
    %v2678 = vld [vmem:[#allocation6 + $0x4b0] sm:$0xff]
    %v2679 = vld [vmem:[#allocation6 + $0x4b8] sm:$0xff]
    %v2680 = vld [vmem:[#allocation6 + $0x4c0] sm:$0xf]
    %v2681 = vld [vmem:[#allocation6 + $0x4c4] sm:$0xff]
    %v2682 = vld [vmem:[#allocation6 + $0x4cc] sm:$0xff]
    %v2683 = vld [vmem:[#allocation6 + $0x4d4] sm:$0xf]
    %v2684 = vld [vmem:[#allocation6 + $0x4d8] sm:$0xff]
    %v2685 = vld [vmem:[#allocation6 + $0x4e0] sm:$0xff]
    %v2686 = vld [vmem:[#allocation6 + $0x4e8] sm:$0xf]
    %v2687 = vld [vmem:[#allocation6 + $0x4ec] sm:$0xff]
    %v2688 = vld [vmem:[#allocation6 + $0x4f4] sm:$0xff]
    %v2689 = vld [vmem:[#allocation6 + $0x4fc] sm:$0xf]
    %v2690 = vld [vmem:[#allocation6 + $0x500] sm:$0xff]
    %v2691 = vld [vmem:[#allocation6 + $0x508] sm:$0xff]
    %v2692 = vld [vmem:[#allocation6 + $0x510] sm:$0xf]
    %v2693 = vld [vmem:[#allocation6 + $0x514] sm:$0xff]
    %v2694 = vld [vmem:[#allocation6 + $0x51c] sm:$0xff]
    %v2695 = vld [vmem:[#allocation6 + $0x524] sm:$0xf]
    %v2696 = vld [vmem:[#allocation6 + $0x528] sm:$0xff]
    %v2697 = vld [vmem:[#allocation6 + $0x530] sm:$0xff]
    %v2698 = vld [vmem:[#allocation6 + $0x538] sm:$0xf]
    %v2699 = vld [vmem:[#allocation6 + $0x53c] sm:$0xff]
    %v2700 = vld [vmem:[#allocation6 + $0x544] sm:$0xff]
    %v2701 = vld [vmem:[#allocation6 + $0x54c] sm:$0xf]
    %v2702 = vld [vmem:[#allocation6 + $0x550] sm:$0xff]
    %v2703 = vld [vmem:[#allocation6 + $0x558] sm:$0xff]
    %v2704 = vld [vmem:[#allocation6 + $0x560] sm:$0xf]
    %v2705 = vld [vmem:[#allocation6 + $0x564] sm:$0xff]
    %v2706 = vld [vmem:[#allocation6 + $0x56c] sm:$0xff]
    %v2707 = vld [vmem:[#allocation6 + $0x574] sm:$0xf]
    %v2708 = vld [vmem:[#allocation6 + $0x578] sm:$0xff]
    %v2709 = vld [vmem:[#allocation6 + $0x580] sm:$0xff]
    %v2710 = vld [vmem:[#allocation6 + $0x588] sm:$0xf]
    %v2711 = vld [vmem:[#allocation6 + $0x58c] sm:$0xff]
    %v2712 = vld [vmem:[#allocation6 + $0x594] sm:$0xff]
    %v2713 = vld [vmem:[#allocation6 + $0x59c] sm:$0xf]
    %v2714 = vld [vmem:[#allocation6 + $0x5a0] sm:$0xff]
    %v2715 = vld [vmem:[#allocation6 + $0x5a8] sm:$0xff]
    %v2716 = vld [vmem:[#allocation6 + $0x5b0] sm:$0xf]
    %v2717 = vld [vmem:[#allocation6 + $0x5b4] sm:$0xff]
    %v2718 = vld [vmem:[#allocation6 + $0x5bc] sm:$0xff]
    %v2719 = vld [vmem:[#allocation6 + $0x5c4] sm:$0xf]
    %v2720 = vld [vmem:[#allocation6 + $0x5c8] sm:$0xff]
    %v2721 = vld [vmem:[#allocation6 + $0x5d0] sm:$0xff]
    %v2722 = vld [vmem:[#allocation6 + $0x5d8] sm:$0xf]
    %v2723 = vld [vmem:[#allocation6 + $0x5dc] sm:$0xff]
    %v2724 = vld [vmem:[#allocation6 + $0x5e4] sm:$0xff]
    %v2725 = vld [vmem:[#allocation6 + $0x5ec] sm:$0xf]
    %v2726 = vld [vmem:[#allocation6 + $0x5f0] sm:$0xff]
    %v2727 = vld [vmem:[#allocation6 + $0x5f8] sm:$0xff]
    %v2728 = vld [vmem:[#allocation6 + $0x600] sm:$0xf]
    %v2729 = vld [vmem:[#allocation6 + $0x604] sm:$0xff]
    %v2730 = vld [vmem:[#allocation6 + $0x60c] sm:$0xff]
    %v2731 = vld [vmem:[#allocation6 + $0x614] sm:$0xf]
    %v2732 = vld [vmem:[#allocation6 + $0x618] sm:$0xff]
    %v2733 = vld [vmem:[#allocation6 + $0x620] sm:$0xff]
    %v2734 = vld [vmem:[#allocation6 + $0x628] sm:$0xf]
    %v2735 = vld [vmem:[#allocation6 + $0x62c] sm:$0xff]
    %v2736 = vld [vmem:[#allocation6 + $0x634] sm:$0xff]
    %v2737 = vld [vmem:[#allocation6 + $0x63c] sm:$0xf]
    %v2738 = vld [vmem:[#allocation6 + $0x640] sm:$0xff]
    %v2739 = vld [vmem:[#allocation6 + $0x648] sm:$0xff]
    %v2740 = vld [vmem:[#allocation6 + $0x650] sm:$0xf]
    %v2741 = vld [vmem:[#allocation6 + $0x654] sm:$0xff]
    %v2742 = vld [vmem:[#allocation6 + $0x65c] sm:$0xff]
    %v2743 = vld [vmem:[#allocation6 + $0x664] sm:$0xf]
    %v2744 = vld [vmem:[#allocation6 + $0x668] sm:$0xff]
    %v2745 = vld [vmem:[#allocation6 + $0x670] sm:$0xff]
    %v2746 = vld [vmem:[#allocation6 + $0x678] sm:$0xf]
    %v2747 = vld [vmem:[#allocation6 + $0x67c] sm:$0xff]
    %v2748 = vld [vmem:[#allocation6 + $0x684] sm:$0xff]
    %v2749 = vld [vmem:[#allocation6 + $0x68c] sm:$0xf]
    %v2750 = vld [vmem:[#allocation6 + $0x690] sm:$0xff]
    %v2751 = vld [vmem:[#allocation6 + $0x698] sm:$0xff]
    %v2752 = vld [vmem:[#allocation6 + $0x6a0] sm:$0xf]
    %v2753 = vld [vmem:[#allocation6 + $0x6a4] sm:$0xff]
    %v2754 = vld [vmem:[#allocation6 + $0x6ac] sm:$0xff]
    %v2755 = vld [vmem:[#allocation6 + $0x6b4] sm:$0xf]
    %v2756 = vld [vmem:[#allocation6 + $0x6b8] sm:$0xff]
    %v2757 = vld [vmem:[#allocation6 + $0x6c0] sm:$0xff]
    %v2758 = vld [vmem:[#allocation6 + $0x6c8] sm:$0xf]
    %v2759 = vld [vmem:[#allocation6 + $0x6cc] sm:$0xff]
    %v2760 = vld [vmem:[#allocation6 + $0x6d4] sm:$0xff]
    %v2761 = vld [vmem:[#allocation6 + $0x6dc] sm:$0xf]
    %v2762 = vld [vmem:[#allocation6 + $0x6e0] sm:$0xff]
    %v2763 = vld [vmem:[#allocation6 + $0x6e8] sm:$0xff]
    %v2764 = vld [vmem:[#allocation6 + $0x6f0] sm:$0xf]
    %v2765 = vld [vmem:[#allocation6 + $0x6f4] sm:$0xff]
    %v2766 = vld [vmem:[#allocation6 + $0x6fc] sm:$0xff]
    %v2767 = vld [vmem:[#allocation6 + $0x704] sm:$0xf]
    %v2768 = vld [vmem:[#allocation6 + $0x708] sm:$0xff]
    %v2769 = vld [vmem:[#allocation6 + $0x710] sm:$0xff]
    %v2770 = vld [vmem:[#allocation6 + $0x718] sm:$0xf]
    %v2771 = vld [vmem:[#allocation6 + $0x71c] sm:$0xff]
    %v2772 = vld [vmem:[#allocation6 + $0x724] sm:$0xff]
    %v2773 = vld [vmem:[#allocation6 + $0x72c] sm:$0xf]
    %v2774 = vld [vmem:[#allocation6 + $0x730] sm:$0xff]
    %v2775 = vld [vmem:[#allocation6 + $0x738] sm:$0xff]
    %v2776 = vld [vmem:[#allocation6 + $0x740] sm:$0xf]
    %v2777 = vld [vmem:[#allocation6 + $0x744] sm:$0xff]
    %v2778 = vld [vmem:[#allocation6 + $0x74c] sm:$0xff]
    %v2779 = vld [vmem:[#allocation6 + $0x754] sm:$0xf]
    %v2780 = vld [vmem:[#allocation6 + $0x758] sm:$0xff]
    %v2781 = vld [vmem:[#allocation6 + $0x760] sm:$0xff]
    %v2782 = vld [vmem:[#allocation6 + $0x768] sm:$0xf]
    %v2783 = vld [vmem:[#allocation6 + $0x76c] sm:$0xff]
    %v2784 = vld [vmem:[#allocation6 + $0x774] sm:$0xff]
    %v2785 = vld [vmem:[#allocation6 + $0x77c] sm:$0xf]
    %v2786 = vld [vmem:[#allocation6 + $0x780] sm:$0xff]
    %v2787 = vld [vmem:[#allocation6 + $0x788] sm:$0xff]
    %v2788 = vld [vmem:[#allocation6 + $0x790] sm:$0xf]
    %v2789 = vld [vmem:[#allocation6 + $0x794] sm:$0xff]
    %v2790 = vld [vmem:[#allocation6 + $0x79c] sm:$0xff]
    %v2791 = vld [vmem:[#allocation6 + $0x7a4] sm:$0xf]
    %v2792 = vld [vmem:[#allocation6 + $0x7a8] sm:$0xff]
    %v2793 = vld [vmem:[#allocation6 + $0x7b0] sm:$0xff]
    %v2794 = vld [vmem:[#allocation6 + $0x7b8] sm:$0xf]
    %v2795 = vld [vmem:[#allocation6 + $0x7bc] sm:$0xff]
    %v2796 = vld [vmem:[#allocation6 + $0x7c4] sm:$0xff]
    %v2797 = vld [vmem:[#allocation6 + $0x7cc] sm:$0xf]
    %v2798 = vld [vmem:[#allocation6 + $0x7d0] sm:$0xff]
    %v2799 = vld [vmem:[#allocation6 + $0x7d8] sm:$0xff]
    %v2800 = vld [vmem:[#allocation6 + $0x7e0] sm:$0xf]
    %v2801 = vld [vmem:[#allocation6 + $0x7e4] sm:$0xff]
    %v2802 = vld [vmem:[#allocation6 + $0x7ec] sm:$0xff]
    %v2803 = vld [vmem:[#allocation6 + $0x7f4] sm:$0xf]
    %v2804 = vld [vmem:[#allocation6 + $0x7f8] sm:$0xff]
    %v2805 = vld [vmem:[#allocation6 + $0x800] sm:$0xff]
    %v2806 = vld [vmem:[#allocation6 + $0x808] sm:$0xf]
    %v2807 = vld [vmem:[#allocation6 + $0x80c] sm:$0xff]
    %v2808 = vld [vmem:[#allocation6 + $0x814] sm:$0xff]
    %v2809 = vld [vmem:[#allocation6 + $0x81c] sm:$0xf]
    %v2810 = vld [vmem:[#allocation6 + $0x820] sm:$0xff]
    %v2811 = vld [vmem:[#allocation6 + $0x828] sm:$0xff]
    %v2812 = vld [vmem:[#allocation6 + $0x830] sm:$0xf]
    %v2813 = vld [vmem:[#allocation6 + $0x834] sm:$0xff]
    %v2814 = vld [vmem:[#allocation6 + $0x83c] sm:$0xff]
    %v2815 = vld [vmem:[#allocation6 + $0x844] sm:$0xf]
    %v2816 = vld [vmem:[#allocation6 + $0x848] sm:$0xff]
    %v2817 = vld [vmem:[#allocation6 + $0x850] sm:$0xff]
    %v2818 = vld [vmem:[#allocation6 + $0x858] sm:$0xf]
    %v2819 = vld [vmem:[#allocation6 + $0x85c] sm:$0xff]
    %v2820 = vld [vmem:[#allocation6 + $0x864] sm:$0xff]
    %v2821 = vld [vmem:[#allocation6 + $0x86c] sm:$0xf]
    %v2822 = vld [vmem:[#allocation6 + $0x870] sm:$0xff]
    %v2823 = vld [vmem:[#allocation6 + $0x878] sm:$0xff]
    %v2824 = vld [vmem:[#allocation6 + $0x880] sm:$0xf]
    %v2825 = vld [vmem:[#allocation6 + $0x884] sm:$0xff]
    %v2826 = vld [vmem:[#allocation6 + $0x88c] sm:$0xff]
    %v2827 = vld [vmem:[#allocation6 + $0x894] sm:$0xf]
    %v2828 = vld [vmem:[#allocation6 + $0x898] sm:$0xff]
    %v2829 = vld [vmem:[#allocation6 + $0x8a0] sm:$0xff]
    %v2830 = vld [vmem:[#allocation6 + $0x8a8] sm:$0xf]
    %v2831 = vld [vmem:[#allocation6 + $0x8ac] sm:$0xff]
    %v2832 = vld [vmem:[#allocation6 + $0x8b4] sm:$0xff]
    %v2833 = vld [vmem:[#allocation6 + $0x8bc] sm:$0xf]
    %v2834 = vld [vmem:[#allocation6 + $0x8c0] sm:$0xff]
    %v2835 = vld [vmem:[#allocation6 + $0x8c8] sm:$0xff]
    %v2836 = vld [vmem:[#allocation6 + $0x8d0] sm:$0xf]
    %v2837 = vld [vmem:[#allocation6 + $0x8d4] sm:$0xff]
    %v2838 = vld [vmem:[#allocation6 + $0x8dc] sm:$0xff]
    %v2839 = vld [vmem:[#allocation6 + $0x8e4] sm:$0xf]
    %v2840 = vld [vmem:[#allocation6 + $0x8e8] sm:$0xff]
    %v2841 = vld [vmem:[#allocation6 + $0x8f0] sm:$0xff]
    %v2842 = vld [vmem:[#allocation6 + $0x8f8] sm:$0xf]
    %v2843 = vld [vmem:[#allocation6 + $0x8fc] sm:$0xff]
    %v2844 = vld [vmem:[#allocation6 + $0x904] sm:$0xff]
    %v2845 = vld [vmem:[#allocation6 + $0x90c] sm:$0xf]
    %v2846 = vld [vmem:[#allocation6 + $0x910] sm:$0xff]
    %v2847 = vld [vmem:[#allocation6 + $0x918] sm:$0xff]
    %v2848 = vld [vmem:[#allocation6 + $0x920] sm:$0xf]
    %v2849 = vld [vmem:[#allocation6 + $0x924] sm:$0xff]
    %v2850 = vld [vmem:[#allocation6 + $0x92c] sm:$0xff]
    %v2851 = vld [vmem:[#allocation6 + $0x934] sm:$0xf]
    %v2852 = vld [vmem:[#allocation6 + $0x938] sm:$0xff]
    %v2853 = vld [vmem:[#allocation6 + $0x940] sm:$0xff]
    %v2854 = vld [vmem:[#allocation6 + $0x948] sm:$0xf]
    %v2855 = vld [vmem:[#allocation6 + $0x94c] sm:$0xff]
    %v2856 = vld [vmem:[#allocation6 + $0x954] sm:$0xff]
    %v2857 = vld [vmem:[#allocation6 + $0x95c] sm:$0xf]
    %v2858 = vld [vmem:[#allocation6 + $0x960] sm:$0xff]
    %v2859 = vld [vmem:[#allocation6 + $0x968] sm:$0xff]
    %v2860 = vld [vmem:[#allocation6 + $0x970] sm:$0xf]
    %v2861 = vld [vmem:[#allocation6 + $0x974] sm:$0xff]
    %v2862 = vld [vmem:[#allocation6 + $0x97c] sm:$0xff]
    %v2863 = vld [vmem:[#allocation6 + $0x984] sm:$0xf]
    %v2864 = vld [vmem:[#allocation6 + $0x988] sm:$0xff]
    %v2865 = vld [vmem:[#allocation6 + $0x990] sm:$0xff]
    %v2866 = vld [vmem:[#allocation6 + $0x998] sm:$0xf]
    %v2867 = vld [vmem:[#allocation6 + $0x99c] sm:$0xff]
    %v2868 = vld [vmem:[#allocation6 + $0x9a4] sm:$0xff]
    %v2869 = vld [vmem:[#allocation6 + $0x9ac] sm:$0xf]
    %v2870 = vld [vmem:[#allocation6 + $0x9b0] sm:$0xff]
    %v2871 = vld [vmem:[#allocation6 + $0x9b8] sm:$0xff]
    %v2872 = vld [vmem:[#allocation6 + $0x9c0] sm:$0xf]
    %v2873 = vld [vmem:[#allocation6 + $0x9c4] sm:$0xff]
    %v2874 = vld [vmem:[#allocation6 + $0x9cc] sm:$0xff]
    %v2875 = vld [vmem:[#allocation6 + $0x9d4] sm:$0xf]
    %v2876 = vld [vmem:[#allocation6 + $0x9d8] sm:$0xff]
    %v2877 = vld [vmem:[#allocation6 + $0x9e0] sm:$0xff]
    %v2878 = vld [vmem:[#allocation6 + $0x9e8] sm:$0xf]
    %v2879 = vld [vmem:[#allocation6 + $0x9ec] sm:$0xff]
    %v2880 = vld [vmem:[#allocation6 + $0x9f4] sm:$0xff]
    %v2881 = vld [vmem:[#allocation6 + $0x9fc] sm:$0xf]
    %v2882 = vld [vmem:[#allocation6 + $0xa00] sm:$0xff]
    %v2883 = vld [vmem:[#allocation6 + $0xa08] sm:$0xff]
    %v2884 = vld [vmem:[#allocation6 + $0xa10] sm:$0xf]
    %v2885 = vld [vmem:[#allocation6 + $0xa14] sm:$0xff]
    %v2886 = vld [vmem:[#allocation6 + $0xa1c] sm:$0xff]
    %v2887 = vld [vmem:[#allocation6 + $0xa24] sm:$0xf]
    %v2888 = vld [vmem:[#allocation6 + $0xa28] sm:$0xff]
    %v2889 = vld [vmem:[#allocation6 + $0xa30] sm:$0xff]
    %v2890 = vld [vmem:[#allocation6 + $0xa38] sm:$0xf]
    %v2891 = vld [vmem:[#allocation6 + $0xa3c] sm:$0xff]
    %v2892 = vld [vmem:[#allocation6 + $0xa44] sm:$0xff]
    %v2893 = vld [vmem:[#allocation6 + $0xa4c] sm:$0xf]
    %v2894 = vld [vmem:[#allocation6 + $0xa50] sm:$0xff]
    %v2895 = vld [vmem:[#allocation6 + $0xa58] sm:$0xff]
    %v2896 = vld [vmem:[#allocation6 + $0xa60] sm:$0xf]
    %v2897 = vld [vmem:[#allocation6 + $0xa64] sm:$0xff]
    %v2898 = vld [vmem:[#allocation6 + $0xa6c] sm:$0xff]
    %v2899 = vld [vmem:[#allocation6 + $0xa74] sm:$0xf]
    %v2900 = vld [vmem:[#allocation6 + $0xa78] sm:$0xff]
    %v2901 = vld [vmem:[#allocation6 + $0xa80] sm:$0xff]
    %v2902 = vld [vmem:[#allocation6 + $0xa88] sm:$0xf]
    %v2903 = vld [vmem:[#allocation6 + $0xa8c] sm:$0xff]
    %v2904 = vld [vmem:[#allocation6 + $0xa94] sm:$0xff]
    %v2905 = vld [vmem:[#allocation6 + $0xa9c] sm:$0xf]
    %v2906 = vld [vmem:[#allocation6 + $0xaa0] sm:$0xff]
    %v2907 = vld [vmem:[#allocation6 + $0xaa8] sm:$0xff]
    %v2908 = vld [vmem:[#allocation6 + $0xab0] sm:$0xf]
    %v2909 = vld [vmem:[#allocation6 + $0xab4] sm:$0xff]
    %v2910 = vld [vmem:[#allocation6 + $0xabc] sm:$0xff]
    %v2911 = vld [vmem:[#allocation6 + $0xac4] sm:$0xf]
    %v2912 = vld [vmem:[#allocation6 + $0xac8] sm:$0xff]
    %v2913 = vld [vmem:[#allocation6 + $0xad0] sm:$0xff]
    %v2914 = vld [vmem:[#allocation6 + $0xad8] sm:$0xf]
    %v2915 = vld [vmem:[#allocation6 + $0xadc] sm:$0xff]
    %v2916 = vld [vmem:[#allocation6 + $0xae4] sm:$0xff]
    %v2917 = vld [vmem:[#allocation6 + $0xaec] sm:$0xf]
    %v2918 = vld [vmem:[#allocation6 + $0xaf0] sm:$0xff]
    %v2919 = vld [vmem:[#allocation6 + $0xaf8] sm:$0xff]
    %v2920 = vld [vmem:[#allocation6 + $0xb00] sm:$0xf]
    %v2921 = vld [vmem:[#allocation6 + $0xb04] sm:$0xff]
    %v2922 = vld [vmem:[#allocation6 + $0xb0c] sm:$0xff]
    %v2923 = vld [vmem:[#allocation6 + $0xb14] sm:$0xf]
    %v2924 = vld [vmem:[#allocation6 + $0xb18] sm:$0xff]
    %v2925 = vld [vmem:[#allocation6 + $0xb20] sm:$0xff]
    %v2926 = vld [vmem:[#allocation6 + $0xb28] sm:$0xf]
    %v2927 = vld [vmem:[#allocation6 + $0xb2c] sm:$0xff]
    %v2928 = vld [vmem:[#allocation6 + $0xb34] sm:$0xff]
    %v2929 = vld [vmem:[#allocation6 + $0xb3c] sm:$0xf]
    %v2930 = vld [vmem:[#allocation6 + $0xb40] sm:$0xff]
    %v2931 = vld [vmem:[#allocation6 + $0xb48] sm:$0xff]
    %v2932 = vld [vmem:[#allocation6 + $0xb50] sm:$0xf]
    %v2933 = vld [vmem:[#allocation6 + $0xb54] sm:$0xff]
    %v2934 = vld [vmem:[#allocation6 + $0xb5c] sm:$0xff]
    %v2935 = vld [vmem:[#allocation6 + $0xb64] sm:$0xf]
    %v2936 = vld [vmem:[#allocation6 + $0xb68] sm:$0xff]
    %v2937 = vld [vmem:[#allocation6 + $0xb70] sm:$0xff]
    %v2938 = vld [vmem:[#allocation6 + $0xb78] sm:$0xf]
    %v2939 = vld [vmem:[#allocation6 + $0xb7c] sm:$0xff]
    %v2940 = vld [vmem:[#allocation6 + $0xb84] sm:$0xff]
    %v2941 = vld [vmem:[#allocation6 + $0xb8c] sm:$0xf]
    %v2942 = vld [vmem:[#allocation6 + $0xb90] sm:$0xff]
    %v2943 = vld [vmem:[#allocation6 + $0xb98] sm:$0xff]
    %v2944 = vld [vmem:[#allocation6 + $0xba0] sm:$0xf]
    %v2945 = vld [vmem:[#allocation6 + $0xba4] sm:$0xff]
    %v2946 = vld [vmem:[#allocation6 + $0xbac] sm:$0xff]
    %v2947 = vld [vmem:[#allocation6 + $0xbb4] sm:$0xf]
    %v2948 = vld [vmem:[#allocation6 + $0xbb8] sm:$0xff]
    %v2949 = vld [vmem:[#allocation6 + $0xbc0] sm:$0xff]
    %v2950 = vld [vmem:[#allocation6 + $0xbc8] sm:$0xf]
    %v2951 = vld [vmem:[#allocation6 + $0xbcc] sm:$0xff]
    %v2952 = vld [vmem:[#allocation6 + $0xbd4] sm:$0xff]
    %v2953 = vld [vmem:[#allocation6 + $0xbdc] sm:$0xf]
    %v2954 = vld [vmem:[#allocation6 + $0xbe0] sm:$0xff]
    %v2955 = vld [vmem:[#allocation6 + $0xbe8] sm:$0xff]
    %v2956 = vld [vmem:[#allocation6 + $0xbf0] sm:$0xf]
    %v2957 = vld [vmem:[#allocation6 + $0xbf4] sm:$0xff]
    %v2958 = vld [vmem:[#allocation6 + $0xbfc] sm:$0xff]
    %v2959 = vld [vmem:[#allocation6 + $0xc04] sm:$0xf]
    %v2960 = vld [vmem:[#allocation6 + $0xc08] sm:$0xff]
    %v2961 = vld [vmem:[#allocation6 + $0xc10] sm:$0xff]
    %v2962 = vld [vmem:[#allocation6 + $0xc18] sm:$0xf]
    %v2963 = vld [vmem:[#allocation6 + $0xc1c] sm:$0xff]
    %v2964 = vld [vmem:[#allocation6 + $0xc24] sm:$0xff]
    %v2965 = vld [vmem:[#allocation6 + $0xc2c] sm:$0xf]
    %v2966 = vld [vmem:[#allocation6 + $0xc30] sm:$0xff]
    %v2967 = vld [vmem:[#allocation6 + $0xc38] sm:$0xff]
    %v2968 = vld [vmem:[#allocation6 + $0xc40] sm:$0xf]
    %v2969 = vld [vmem:[#allocation6 + $0xc44] sm:$0xff]
    %v2970 = vld [vmem:[#allocation6 + $0xc4c] sm:$0xff]
    %v2971 = vld [vmem:[#allocation6 + $0xc54] sm:$0xf]
    %v2972 = vld [vmem:[#allocation6 + $0xc58] sm:$0xff]
    %v2973 = vld [vmem:[#allocation6 + $0xc60] sm:$0xff]
    %v2974 = vld [vmem:[#allocation6 + $0xc68] sm:$0xf]
    %v2975 = vld [vmem:[#allocation6 + $0xc6c] sm:$0xff]
    %v2976 = vld [vmem:[#allocation6 + $0xc74] sm:$0xff]
    %v2977 = vld [vmem:[#allocation6 + $0xc7c] sm:$0xf]
    %v2978 = vld [vmem:[#allocation6 + $0xc80] sm:$0xff]
    %v2979 = vld [vmem:[#allocation6 + $0xc88] sm:$0xff]
    %v2980 = vld [vmem:[#allocation6 + $0xc90] sm:$0xf]
    %v2981 = vld [vmem:[#allocation6 + $0xc94] sm:$0xff]
    %v2982 = vld [vmem:[#allocation6 + $0xc9c] sm:$0xff]
    %v2983 = vld [vmem:[#allocation6 + $0xca4] sm:$0xf]
    %v2984 = vld [vmem:[#allocation6 + $0xca8] sm:$0xff]
    %v2985 = vld [vmem:[#allocation6 + $0xcb0] sm:$0xff]
    %v2986 = vld [vmem:[#allocation6 + $0xcb8] sm:$0xf]
    %v2987 = vld [vmem:[#allocation6 + $0xcbc] sm:$0xff]
    %v2988 = vld [vmem:[#allocation6 + $0xcc4] sm:$0xff]
    %v2989 = vld [vmem:[#allocation6 + $0xccc] sm:$0xf]
    %v2990 = vld [vmem:[#allocation6 + $0xcd0] sm:$0xff]
    %v2991 = vld [vmem:[#allocation6 + $0xcd8] sm:$0xff]
    %v2992 = vld [vmem:[#allocation6 + $0xce0] sm:$0xf]
    %v2993 = vld [vmem:[#allocation6 + $0xce4] sm:$0xff]
    %v2994 = vld [vmem:[#allocation6 + $0xcec] sm:$0xff]
    %v2995 = vld [vmem:[#allocation6 + $0xcf4] sm:$0xf]
    %v2996 = vld [vmem:[#allocation6 + $0xcf8] sm:$0xff]
    %v2997 = vld [vmem:[#allocation6 + $0xd00] sm:$0xff]
    %v2998 = vld [vmem:[#allocation6 + $0xd08] sm:$0xf]
    %v2999 = vld [vmem:[#allocation6 + $0xd0c] sm:$0xff]
    %v3000 = vld [vmem:[#allocation6 + $0xd14] sm:$0xff]
    %v3001 = vld [vmem:[#allocation6 + $0xd1c] sm:$0xf]
    %v3002 = vld [vmem:[#allocation6 + $0xd20] sm:$0xff]
    %v3003 = vld [vmem:[#allocation6 + $0xd28] sm:$0xff]
    %v3004 = vld [vmem:[#allocation6 + $0xd30] sm:$0xf]
    %v3005 = vld [vmem:[#allocation6 + $0xd34] sm:$0xff]
    %v3006 = vld [vmem:[#allocation6 + $0xd3c] sm:$0xff]
    %v3007 = vld [vmem:[#allocation6 + $0xd44] sm:$0xf]
    %v3008 = vld [vmem:[#allocation6 + $0xd48] sm:$0xff]
    %v3009 = vld [vmem:[#allocation6 + $0xd50] sm:$0xff]
    %v3010 = vld [vmem:[#allocation6 + $0xd58] sm:$0xf]
    %v3011 = vld [vmem:[#allocation6 + $0xd5c] sm:$0xff]
    %v3012 = vld [vmem:[#allocation6 + $0xd64] sm:$0xff]
    %v3013 = vld [vmem:[#allocation6 + $0xd6c] sm:$0xf]
    %v3014 = vld [vmem:[#allocation6 + $0xd70] sm:$0xff]
    %v3015 = vld [vmem:[#allocation6 + $0xd78] sm:$0xff]
    %v3016 = vld [vmem:[#allocation6 + $0xd80] sm:$0xf]
    %v3017 = vld [vmem:[#allocation6 + $0xd84] sm:$0xff]
    %v3018 = vld [vmem:[#allocation6 + $0xd8c] sm:$0xff]
    %v3019 = vld [vmem:[#allocation6 + $0xd94] sm:$0xf]
    %v3020 = vld [vmem:[#allocation6 + $0xd98] sm:$0xff]
    %v3021 = vld [vmem:[#allocation6 + $0xda0] sm:$0xff]
    %v3022 = vld [vmem:[#allocation6 + $0xda8] sm:$0xf]
    %v3023 = vld [vmem:[#allocation6 + $0xdac] sm:$0xff]
    %v3024 = vld [vmem:[#allocation6 + $0xdb4] sm:$0xff]
    %v3025 = vld [vmem:[#allocation6 + $0xdbc] sm:$0xf]
    %v3026 = vld [vmem:[#allocation6 + $0xdc0] sm:$0xff]
    %v3027 = vld [vmem:[#allocation6 + $0xdc8] sm:$0xff]
    %v3028 = vld [vmem:[#allocation6 + $0xdd0] sm:$0xf]
    %v3029 = vld [vmem:[#allocation6 + $0xdd4] sm:$0xff]
    %v3030 = vld [vmem:[#allocation6 + $0xddc] sm:$0xff]
    %v3031 = vld [vmem:[#allocation6 + $0xde4] sm:$0xf]
    %v3032 = vld [vmem:[#allocation6 + $0xde8] sm:$0xff]
    %v3033 = vld [vmem:[#allocation6 + $0xdf0] sm:$0xff]
    %v3034 = vld [vmem:[#allocation6 + $0xdf8] sm:$0xf]
    %v3035 = vld [vmem:[#allocation6 + $0xdfc] sm:$0xff]
    %v3036 = vld [vmem:[#allocation6 + $0xe04] sm:$0xff]
    %v3037 = vld [vmem:[#allocation6 + $0xe0c] sm:$0xf]
    %v3038 = vld [vmem:[#allocation6 + $0xe10] sm:$0xff]
    %v3039 = vld [vmem:[#allocation6 + $0xe18] sm:$0xff]
    %v3040 = vld [vmem:[#allocation6 + $0xe20] sm:$0xf]
    %v3041 = vld [vmem:[#allocation6 + $0xe24] sm:$0xff]
    %v3042 = vld [vmem:[#allocation6 + $0xe2c] sm:$0xff]
    %v3043 = vld [vmem:[#allocation6 + $0xe34] sm:$0xf]
    %v3044 = vld [vmem:[#allocation6 + $0xe38] sm:$0xff]
    %v3045 = vld [vmem:[#allocation6 + $0xe40] sm:$0xff]
    %v3046 = vld [vmem:[#allocation6 + $0xe48] sm:$0xf]
    %v3047 = vld [vmem:[#allocation6 + $0xe4c] sm:$0xff]
    %v3048 = vld [vmem:[#allocation6 + $0xe54] sm:$0xff]
    %v3049 = vld [vmem:[#allocation6 + $0xe5c] sm:$0xf]
    %v3050 = vld [vmem:[#allocation6 + $0xe60] sm:$0xff]
    %v3051 = vld [vmem:[#allocation6 + $0xe68] sm:$0xff]
    %v3052 = vld [vmem:[#allocation6 + $0xe70] sm:$0xf]
    %v3053 = vld [vmem:[#allocation6 + $0xe74] sm:$0xff]
    %v3054 = vld [vmem:[#allocation6 + $0xe7c] sm:$0xff]
    %v3055 = vld [vmem:[#allocation6 + $0xe84] sm:$0xf]
    %v3056 = vld [vmem:[#allocation6 + $0xe88] sm:$0xff]
    %v3057 = vld [vmem:[#allocation6 + $0xe90] sm:$0xff]
    %v3058 = vld [vmem:[#allocation6 + $0xe98] sm:$0xf]
    %v3059 = vld [vmem:[#allocation6 + $0xe9c] sm:$0xff]
    %v3060 = vld [vmem:[#allocation6 + $0xea4] sm:$0xff]
    %v3061 = vld [vmem:[#allocation6 + $0xeac] sm:$0xf]
    %v3062 = vld [vmem:[#allocation6 + $0xeb0] sm:$0xff]
    %v3063 = vld [vmem:[#allocation6 + $0xeb8] sm:$0xff]
    %v3064 = vld [vmem:[#allocation6 + $0xec0] sm:$0xf]
    %v3065 = vld [vmem:[#allocation6 + $0xec4] sm:$0xff]
    %v3066 = vld [vmem:[#allocation6 + $0xecc] sm:$0xff]
    %v3067 = vld [vmem:[#allocation6 + $0xed4] sm:$0xf]
    %v3068 = vld [vmem:[#allocation6 + $0xed8] sm:$0xff]
    %v3069 = vld [vmem:[#allocation6 + $0xee0] sm:$0xff]
    %v3070 = vld [vmem:[#allocation6 + $0xee8] sm:$0xf]
    %v3071 = vld [vmem:[#allocation6 + $0xeec] sm:$0xff]
    %v3072 = vld [vmem:[#allocation6 + $0xef4] sm:$0xff]
    %v3073 = vld [vmem:[#allocation6 + $0xefc] sm:$0xf]
    %v3074 = vld [vmem:[#allocation6 + $0xf00] sm:$0xff]
    %v3075 = vld [vmem:[#allocation6 + $0xf08] sm:$0xff]
    %v3076 = vld [vmem:[#allocation6 + $0xf10] sm:$0xf]
    %v3077 = vld [vmem:[#allocation6 + $0xf14] sm:$0xff]
    %v3078 = vld [vmem:[#allocation6 + $0xf1c] sm:$0xff]
    %v3079 = vld [vmem:[#allocation6 + $0xf24] sm:$0xf]
    %v3080 = vld [vmem:[#allocation6 + $0xf28] sm:$0xff]
    %v3081 = vld [vmem:[#allocation6 + $0xf30] sm:$0xff]
    %v3082 = vld [vmem:[#allocation6 + $0xf38] sm:$0xf]
    %v3083 = vld [vmem:[#allocation6 + $0xf3c] sm:$0xff]
    %v3084 = vld [vmem:[#allocation6 + $0xf44] sm:$0xff]
    %v3085 = vld [vmem:[#allocation6 + $0xf4c] sm:$0xf]
    %v3086 = vld [vmem:[#allocation6 + $0xf50] sm:$0xff]
    %v3087 = vld [vmem:[#allocation6 + $0xf58] sm:$0xff]
    %v3088 = vld [vmem:[#allocation6 + $0xf60] sm:$0xf]
    %v3089 = vld [vmem:[#allocation6 + $0xf64] sm:$0xff]
    %v3090 = vld [vmem:[#allocation6 + $0xf6c] sm:$0xff]
    %v3091 = vld [vmem:[#allocation6 + $0xf74] sm:$0xf]
    %v3092 = vld [vmem:[#allocation6 + $0xf78] sm:$0xff]
    %v3093 = vld [vmem:[#allocation6 + $0xf80] sm:$0xff]
    %v3094 = vld [vmem:[#allocation6 + $0xf88] sm:$0xf]
    %v3095 = vld [vmem:[#allocation6 + $0xf8c] sm:$0xff]
    %v3096 = vld [vmem:[#allocation6 + $0xf94] sm:$0xff]
    %v3097 = vld [vmem:[#allocation6 + $0xf9c] sm:$0xf]
    %v3098 = vld [vmem:[#allocation6 + $0xfa0] sm:$0xff]
    %v3099 = vld [vmem:[#allocation6 + $0xfa8] sm:$0xff]
    %v3100 = vld [vmem:[#allocation6 + $0xfb0] sm:$0xf]
    %v3101 = vld [vmem:[#allocation6 + $0xfb4] sm:$0xff]
    %v3102 = vld [vmem:[#allocation6 + $0xfbc] sm:$0xff]
    %v3103 = vld [vmem:[#allocation6 + $0xfc4] sm:$0xf]
    %v3104 = vld [vmem:[#allocation6 + $0xfc8] sm:$0xff]
    %v3105 = vld [vmem:[#allocation6 + $0xfd0] sm:$0xff]
    %v3106 = vld [vmem:[#allocation6 + $0xfd8] sm:$0xf]
    %v3107 = vld [vmem:[#allocation6 + $0xfdc] sm:$0xff]
    %v3108 = vld [vmem:[#allocation6 + $0xfe4] sm:$0xff]
    %v3109 = vld [vmem:[#allocation6 + $0xfec] sm:$0xf]
    %v3110 = vld [vmem:[#allocation6 + $0xff0] sm:$0xff]
    %v3111 = vld [vmem:[#allocation6 + $0xff8] sm:$0xff]
    %v3112 = vld [vmem:[#allocation6 + $0x1000] sm:$0xf]
    %v3113 = vld [vmem:[#allocation6 + $0x1004] sm:$0xff]
    %v3114 = vld [vmem:[#allocation6 + $0x100c] sm:$0xff]
    %v3115 = vld [vmem:[#allocation6 + $0x1014] sm:$0xf]
    %v3116 = vld [vmem:[#allocation6 + $0x1018] sm:$0xff]
    %v3117 = vld [vmem:[#allocation6 + $0x1020] sm:$0xff]
    %v3118 = vld [vmem:[#allocation6 + $0x1028] sm:$0xf]
    %v3119 = vld [vmem:[#allocation6 + $0x102c] sm:$0xff]
    %v3120 = vld [vmem:[#allocation6 + $0x1034] sm:$0xff]
    %v3121 = vld [vmem:[#allocation6 + $0x103c] sm:$0xf]
    %v3122 = vld [vmem:[#allocation6 + $0x1040] sm:$0xff]
    %v3123 = vld [vmem:[#allocation6 + $0x1048] sm:$0xff]
    %v3124 = vld [vmem:[#allocation6 + $0x1050] sm:$0xf]
    %v3125 = vld [vmem:[#allocation6 + $0x1054] sm:$0xff]
    %v3126 = vld [vmem:[#allocation6 + $0x105c] sm:$0xff]
    %v3127 = vld [vmem:[#allocation6 + $0x1064] sm:$0xf]
    %v3128 = vld [vmem:[#allocation6 + $0x1068] sm:$0xff]
    %v3129 = vld [vmem:[#allocation6 + $0x1070] sm:$0xff]
    %v3130 = vld [vmem:[#allocation6 + $0x1078] sm:$0xf]
    %v3131 = vld [vmem:[#allocation6 + $0x107c] sm:$0xff]
    %v3132 = vld [vmem:[#allocation6 + $0x1084] sm:$0xff]
    %v3133 = vld [vmem:[#allocation6 + $0x108c] sm:$0xf]
    %v3134 = vld [vmem:[#allocation6 + $0x1090] sm:$0xff]
    %v3135 = vld [vmem:[#allocation6 + $0x1098] sm:$0xff]
    %v3136 = vld [vmem:[#allocation6 + $0x10a0] sm:$0xf]
    %v3137 = vld [vmem:[#allocation6 + $0x10a4] sm:$0xff]
    %v3138 = vld [vmem:[#allocation6 + $0x10ac] sm:$0xff]
    %v3139 = vld [vmem:[#allocation6 + $0x10b4] sm:$0xf]
    %v3140 = vld [vmem:[#allocation6 + $0x10b8] sm:$0xff]
    %v3141 = vld [vmem:[#allocation6 + $0x10c0] sm:$0xff]
    %v3142 = vld [vmem:[#allocation6 + $0x10c8] sm:$0xf]
    %v3143 = vld [vmem:[#allocation6 + $0x10cc] sm:$0xff]
    %v3144 = vld [vmem:[#allocation6 + $0x10d4] sm:$0xff]
    %v3145 = vld [vmem:[#allocation6 + $0x10dc] sm:$0xf]
    %v3146 = vld [vmem:[#allocation6 + $0x10e0] sm:$0xff]
    %v3147 = vld [vmem:[#allocation6 + $0x10e8] sm:$0xff]
    %v3148 = vld [vmem:[#allocation6 + $0x10f0] sm:$0xf]
    %v3149 = vld [vmem:[#allocation6 + $0x10f4] sm:$0xff]
    %v3150 = vld [vmem:[#allocation6 + $0x10fc] sm:$0xff]
    %v3151 = vld [vmem:[#allocation6 + $0x1104] sm:$0xf]
    %v3152 = vld [vmem:[#allocation6 + $0x1108] sm:$0xff]
    %v3153 = vld [vmem:[#allocation6 + $0x1110] sm:$0xff]
    %v3154 = vld [vmem:[#allocation6 + $0x1118] sm:$0xf]
    %v3155 = vld [vmem:[#allocation6 + $0x111c] sm:$0xff]
    %v3156 = vld [vmem:[#allocation6 + $0x1124] sm:$0xff]
    %v3157 = vld [vmem:[#allocation6 + $0x112c] sm:$0xf]
    %v3158 = vld [vmem:[#allocation6 + $0x1130] sm:$0xff]
    %v3159 = vld [vmem:[#allocation6 + $0x1138] sm:$0xff]
    %v3160 = vld [vmem:[#allocation6 + $0x1140] sm:$0xf]
    %v3161 = vld [vmem:[#allocation6 + $0x1144] sm:$0xff]
    %v3162 = vld [vmem:[#allocation6 + $0x114c] sm:$0xff]
    %v3163 = vld [vmem:[#allocation6 + $0x1154] sm:$0xf]
    %v3164 = vld [vmem:[#allocation6 + $0x1158] sm:$0xff]
    %v3165 = vld [vmem:[#allocation6 + $0x1160] sm:$0xff]
    %v3166 = vld [vmem:[#allocation6 + $0x1168] sm:$0xf]
    %v3167 = vld [vmem:[#allocation6 + $0x116c] sm:$0xff]
    %v3168 = vld [vmem:[#allocation6 + $0x1174] sm:$0xff]
    %v3169 = vld [vmem:[#allocation6 + $0x117c] sm:$0xf]
    %v3170 = vld [vmem:[#allocation6 + $0x1180] sm:$0xff]
    %v3171 = vld [vmem:[#allocation6 + $0x1188] sm:$0xff]
    %v3172 = vld [vmem:[#allocation6 + $0x1190] sm:$0xf]
    %v3173 = vld [vmem:[#allocation6 + $0x1194] sm:$0xff]
    %v3174 = vld [vmem:[#allocation6 + $0x119c] sm:$0xff]
    %v3175 = vld [vmem:[#allocation6 + $0x11a4] sm:$0xf]
    %v3176 = vld [vmem:[#allocation6 + $0x11a8] sm:$0xff]
    %v3177 = vld [vmem:[#allocation6 + $0x11b0] sm:$0xff]
    %v3178 = vld [vmem:[#allocation6 + $0x11b8] sm:$0xf]
    %v3179 = vld [vmem:[#allocation6 + $0x11bc] sm:$0xff]
    %v3180 = vld [vmem:[#allocation6 + $0x11c4] sm:$0xff]
    %v3181 = vld [vmem:[#allocation6 + $0x11cc] sm:$0xf]
    %v3182 = vld [vmem:[#allocation6 + $0x11d0] sm:$0xff]
    %v3183 = vld [vmem:[#allocation6 + $0x11d8] sm:$0xff]
    %v3184 = vld [vmem:[#allocation6 + $0x11e0] sm:$0xf]
    %v3185 = vld [vmem:[#allocation6 + $0x11e4] sm:$0xff]
    %v3186 = vld [vmem:[#allocation6 + $0x11ec] sm:$0xff]
    %v3187 = vld [vmem:[#allocation6 + $0x11f4] sm:$0xf]
    %v3188 = vld [vmem:[#allocation6 + $0x11f8] sm:$0xff]
    %v3189 = vld [vmem:[#allocation6 + $0x1200] sm:$0xff]
    %v3190 = vld [vmem:[#allocation6 + $0x1208] sm:$0xf]
    %v3191 = vld [vmem:[#allocation6 + $0x120c] sm:$0xff]
    %v3192 = vld [vmem:[#allocation6 + $0x1214] sm:$0xff]
    %v3193 = vld [vmem:[#allocation6 + $0x121c] sm:$0xf]
    %v3194 = vld [vmem:[#allocation6 + $0x1220] sm:$0xff]
    %v3195 = vld [vmem:[#allocation6 + $0x1228] sm:$0xff]
    %v3196 = vld [vmem:[#allocation6 + $0x1230] sm:$0xf]
    %v3197 = vld [vmem:[#allocation6 + $0x1234] sm:$0xff]
    %v3198 = vld [vmem:[#allocation6 + $0x123c] sm:$0xff]
    %v3199 = vld [vmem:[#allocation6 + $0x1244] sm:$0xf]
    %v3200 = vld [vmem:[#allocation6 + $0x1248] sm:$0xff]
    %v3201 = vld [vmem:[#allocation6 + $0x1250] sm:$0xff]
    %v3202 = vld [vmem:[#allocation6 + $0x1258] sm:$0xf]
    %v3203 = vld [vmem:[#allocation6 + $0x125c] sm:$0xff]
    %v3204 = vld [vmem:[#allocation6 + $0x1264] sm:$0xff]
    %v3205 = vld [vmem:[#allocation6 + $0x126c] sm:$0xf]
    %v3206 = vld [vmem:[#allocation6 + $0x1270] sm:$0xff]
    %v3207 = vld [vmem:[#allocation6 + $0x1278] sm:$0xff]
    %v3208 = vld [vmem:[#allocation6 + $0x1280] sm:$0xf]
    %v3209 = vld [vmem:[#allocation6 + $0x1284] sm:$0xff]
    %v3210 = vld [vmem:[#allocation6 + $0x128c] sm:$0xff]
    %v3211 = vld [vmem:[#allocation6 + $0x1294] sm:$0xf]
    %v3212 = vld [vmem:[#allocation6 + $0x1298] sm:$0xff]
    %v3213 = vld [vmem:[#allocation6 + $0x12a0] sm:$0xff]
    %v3214 = vld [vmem:[#allocation6 + $0x12a8] sm:$0xf]
    %v3215 = vld [vmem:[#allocation6 + $0x12ac] sm:$0xff]
    %v3216 = vld [vmem:[#allocation6 + $0x12b4] sm:$0xff]
    %v3217 = vld [vmem:[#allocation6 + $0x12bc] sm:$0xf]
    %v3218 = vld [vmem:[#allocation6 + $0x12c0] sm:$0xff]
    %v3219 = vld [vmem:[#allocation6 + $0x12c8] sm:$0xff]
    %v3220 = vld [vmem:[#allocation6 + $0x12d0] sm:$0xf]
    %v3221 = vld [vmem:[#allocation6 + $0x12d4] sm:$0xff]
    %v3222 = vld [vmem:[#allocation6 + $0x12dc] sm:$0xff]
    %v3223 = vld [vmem:[#allocation6 + $0x12e4] sm:$0xf]
    %v3224 = vld [vmem:[#allocation6 + $0x12e8] sm:$0xff]
    %v3225 = vld [vmem:[#allocation6 + $0x12f0] sm:$0xff]
    %v3226 = vld [vmem:[#allocation6 + $0x12f8] sm:$0xf]
    %v3227 = vld [vmem:[#allocation6 + $0x12fc] sm:$0xff]
    %v3228 = vld [vmem:[#allocation6 + $0x1304] sm:$0xff]
    %v3229 = vld [vmem:[#allocation6 + $0x130c] sm:$0xf]
    %v3230 = vld [vmem:[#allocation6 + $0x1310] sm:$0xff]
    %v3231 = vld [vmem:[#allocation6 + $0x1318] sm:$0xff]
    %v3232 = vld [vmem:[#allocation6 + $0x1320] sm:$0xf]
    %v3233 = vld [vmem:[#allocation6 + $0x1324] sm:$0xff]
    %v3234 = vld [vmem:[#allocation6 + $0x132c] sm:$0xff]
    %v3235 = vld [vmem:[#allocation6 + $0x1334] sm:$0xf]
    %v3236 = vld [vmem:[#allocation6 + $0x1338] sm:$0xff]
    %v3237 = vld [vmem:[#allocation6 + $0x1340] sm:$0xff]
    %v3238 = vld [vmem:[#allocation6 + $0x1348] sm:$0xf]
    %v3239 = vld [vmem:[#allocation6 + $0x134c] sm:$0xff]
    %v3240 = vld [vmem:[#allocation6 + $0x1354] sm:$0xff]
    %v3241 = vld [vmem:[#allocation6 + $0x135c] sm:$0xf]
    %v3242 = vld [vmem:[#allocation6 + $0x1360] sm:$0xff]
    %v3243 = vld [vmem:[#allocation6 + $0x1368] sm:$0xff]
    %v3244 = vld [vmem:[#allocation6 + $0x1370] sm:$0xf]
    %v3245 = vld [vmem:[#allocation6 + $0x1374] sm:$0xff]
    %v3246 = vld [vmem:[#allocation6 + $0x137c] sm:$0xff]
    %v3247 = vld [vmem:[#allocation6 + $0x1384] sm:$0xf]
    %v3248 = vld [vmem:[#allocation6 + $0x1388] sm:$0xff]
    %v3249 = vld [vmem:[#allocation6 + $0x1390] sm:$0xff]
    %v3250 = vld [vmem:[#allocation6 + $0x1398] sm:$0xf]
    %v3251 = vld [vmem:[#allocation6 + $0x139c] sm:$0xff]
    %v3252 = vld [vmem:[#allocation6 + $0x13a4] sm:$0xff]
    %v3253 = vld [vmem:[#allocation6 + $0x13ac] sm:$0xf]
    %v3254 = vld [vmem:[#allocation6 + $0x13b0] sm:$0xff]
    %v3255 = vld [vmem:[#allocation6 + $0x13b8] sm:$0xff]
    %v3256 = vld [vmem:[#allocation6 + $0x13c0] sm:$0xf]
    %v3257 = vld [vmem:[#allocation6 + $0x13c4] sm:$0xff]
    %v3258 = vld [vmem:[#allocation6 + $0x13cc] sm:$0xff]
    %v3259 = vld [vmem:[#allocation6 + $0x13d4] sm:$0xf]
    %v3260 = vld [vmem:[#allocation6 + $0x13d8] sm:$0xff]
    %v3261 = vld [vmem:[#allocation6 + $0x13e0] sm:$0xff]
    %v3262 = vld [vmem:[#allocation6 + $0x13e8] sm:$0xf]
    %v3263 = vld [vmem:[#allocation6 + $0x13ec] sm:$0xff]
    %v3264 = vld [vmem:[#allocation6 + $0x13f4] sm:$0xff]
    %v3265 = vld [vmem:[#allocation6 + $0x13fc] sm:$0xf]
    %v3266 = vld [vmem:[#allocation6 + $0x1400] sm:$0xff]
    %v3267 = vld [vmem:[#allocation6 + $0x1408] sm:$0xff]
    %v3268 = vld [vmem:[#allocation6 + $0x1410] sm:$0xf]
    %v3269 = vld [vmem:[#allocation6 + $0x1414] sm:$0xff]
    %v3270 = vld [vmem:[#allocation6 + $0x141c] sm:$0xff]
    %v3271 = vld [vmem:[#allocation6 + $0x1424] sm:$0xf]
    %v3272 = vld [vmem:[#allocation6 + $0x1428] sm:$0xff]
    %v3273 = vld [vmem:[#allocation6 + $0x1430] sm:$0xff]
    %v3274 = vld [vmem:[#allocation6 + $0x1438] sm:$0xf]
    %v3275 = vld [vmem:[#allocation6 + $0x143c] sm:$0xff]
    %v3276 = vld [vmem:[#allocation6 + $0x1444] sm:$0xff]
    %v3277 = vld [vmem:[#allocation6 + $0x144c] sm:$0xf]
    %v3278 = vld [vmem:[#allocation6 + $0x1450] sm:$0xff]
    %v3279 = vld [vmem:[#allocation6 + $0x1458] sm:$0xff]
    %v3280 = vld [vmem:[#allocation6 + $0x1460] sm:$0xf]
    %v3281 = vld [vmem:[#allocation6 + $0x1464] sm:$0xff]
    %v3282 = vld [vmem:[#allocation6 + $0x146c] sm:$0xff]
    %v3283 = vld [vmem:[#allocation6 + $0x1474] sm:$0xf]
    %v3284 = vld [vmem:[#allocation6 + $0x1478] sm:$0xff]
    %v3285 = vld [vmem:[#allocation6 + $0x1480] sm:$0xff]
    %v3286 = vld [vmem:[#allocation6 + $0x1488] sm:$0xf]
    %v3287 = vld [vmem:[#allocation6 + $0x148c] sm:$0xff]
    %v3288 = vld [vmem:[#allocation6 + $0x1494] sm:$0xff]
    %v3289 = vld [vmem:[#allocation6 + $0x149c] sm:$0xf]
    %v3290 = vld [vmem:[#allocation6 + $0x14a0] sm:$0xff]
    %v3291 = vld [vmem:[#allocation6 + $0x14a8] sm:$0xff]
    %v3292 = vld [vmem:[#allocation6 + $0x14b0] sm:$0xf]
    %v3293 = vld [vmem:[#allocation6 + $0x14b4] sm:$0xff]
    %v3294 = vld [vmem:[#allocation6 + $0x14bc] sm:$0xff]
    %v3295 = vld [vmem:[#allocation6 + $0x14c4] sm:$0xf]
    %v3296 = vld [vmem:[#allocation6 + $0x14c8] sm:$0xff]
    %v3297 = vld [vmem:[#allocation6 + $0x14d0] sm:$0xff]
    %v3298 = vld [vmem:[#allocation6 + $0x14d8] sm:$0xf]
    %v3299 = vld [vmem:[#allocation6 + $0x14dc] sm:$0xff]
    %v3300 = vld [vmem:[#allocation6 + $0x14e4] sm:$0xff]
    %v3301 = vld [vmem:[#allocation6 + $0x14ec] sm:$0xf]
    %v3302 = vld [vmem:[#allocation6 + $0x14f0] sm:$0xff]
    %v3303 = vld [vmem:[#allocation6 + $0x14f8] sm:$0xff]
    %v3304 = vld [vmem:[#allocation6 + $0x1500] sm:$0xf]
    %v3305 = vld [vmem:[#allocation6 + $0x1504] sm:$0xff]
    %v3306 = vld [vmem:[#allocation6 + $0x150c] sm:$0xff]
    %v3307 = vld [vmem:[#allocation6 + $0x1514] sm:$0xf]
    %v3308 = vld [vmem:[#allocation6 + $0x1518] sm:$0xff]
    %v3309 = vld [vmem:[#allocation6 + $0x1520] sm:$0xff]
    %v3310 = vld [vmem:[#allocation6 + $0x1528] sm:$0xf]
    %v3311 = vld [vmem:[#allocation6 + $0x152c] sm:$0xff]
    %v3312 = vld [vmem:[#allocation6 + $0x1534] sm:$0xff]
    %v3313 = vld [vmem:[#allocation6 + $0x153c] sm:$0xf]
    %v3314 = vld [vmem:[#allocation6 + $0x1540] sm:$0xff]
    %v3315 = vld [vmem:[#allocation6 + $0x1548] sm:$0xff]
    %v3316 = vld [vmem:[#allocation6 + $0x1550] sm:$0xf]
    %v3317 = vld [vmem:[#allocation6 + $0x1554] sm:$0xff]
    %v3318 = vld [vmem:[#allocation6 + $0x155c] sm:$0xff]
    %v3319 = vld [vmem:[#allocation6 + $0x1564] sm:$0xf]
    %v3320 = vld [vmem:[#allocation6 + $0x1568] sm:$0xff]
    %v3321 = vld [vmem:[#allocation6 + $0x1570] sm:$0xff]
    %v3322 = vld [vmem:[#allocation6 + $0x1578] sm:$0xf]
    %v3323 = vld [vmem:[#allocation6 + $0x157c] sm:$0xff]
    %v3324 = vld [vmem:[#allocation6 + $0x1584] sm:$0xff]
    %v3325 = vld [vmem:[#allocation6 + $0x158c] sm:$0xf]
    %v3326 = vld [vmem:[#allocation6 + $0x1590] sm:$0xff]
    %v3327 = vld [vmem:[#allocation6 + $0x1598] sm:$0xff]
    %v3328 = vld [vmem:[#allocation6 + $0x15a0] sm:$0xf]
    %v3329 = vld [vmem:[#allocation6 + $0x15a4] sm:$0xff]
    %v3330 = vld [vmem:[#allocation6 + $0x15ac] sm:$0xff]
    %v3331 = vld [vmem:[#allocation6 + $0x15b4] sm:$0xf]
    %v3332 = vld [vmem:[#allocation6 + $0x15b8] sm:$0xff]
    %v3333 = vld [vmem:[#allocation6 + $0x15c0] sm:$0xff]
    %v3334 = vld [vmem:[#allocation6 + $0x15c8] sm:$0xf]
    %v3335 = vld [vmem:[#allocation6 + $0x15cc] sm:$0xff]
    %v3336 = vld [vmem:[#allocation6 + $0x15d4] sm:$0xff]
    %v3337 = vld [vmem:[#allocation6 + $0x15dc] sm:$0xf]
    %v3338 = vld [vmem:[#allocation6 + $0x15e0] sm:$0xff]
    %v3339 = vld [vmem:[#allocation6 + $0x15e8] sm:$0xff]
    %v3340 = vld [vmem:[#allocation6 + $0x15f0] sm:$0xf]
    %v3341 = vld [vmem:[#allocation6 + $0x15f4] sm:$0xff]
    %v3342 = vld [vmem:[#allocation6 + $0x15fc] sm:$0xff]
    %v3343 = vld [vmem:[#allocation6 + $0x1604] sm:$0xf]
    %v3344 = vld [vmem:[#allocation6 + $0x1608] sm:$0xff]
    %v3345 = vld [vmem:[#allocation6 + $0x1610] sm:$0xff]
    %v3346 = vld [vmem:[#allocation6 + $0x1618] sm:$0xf]
    %v3347 = vld [vmem:[#allocation6 + $0x161c] sm:$0xff]
    %v3348 = vld [vmem:[#allocation6 + $0x1624] sm:$0xff]
    %v3349 = vld [vmem:[#allocation6 + $0x162c] sm:$0xf]
    %v3350 = vld [vmem:[#allocation6 + $0x1630] sm:$0xff]
    %v3351 = vld [vmem:[#allocation6 + $0x1638] sm:$0xff]
    %v3352 = vld [vmem:[#allocation6 + $0x1640] sm:$0xf]
    %v3353 = vld [vmem:[#allocation6 + $0x1644] sm:$0xff]
    %v3354 = vld [vmem:[#allocation6 + $0x164c] sm:$0xff]
    %v3355 = vld [vmem:[#allocation6 + $0x1654] sm:$0xf]
    %v3356 = vld [vmem:[#allocation6 + $0x1658] sm:$0xff]
    %v3357 = vld [vmem:[#allocation6 + $0x1660] sm:$0xff]
    %v3358 = vld [vmem:[#allocation6 + $0x1668] sm:$0xf]
    %v3359 = vld [vmem:[#allocation6 + $0x166c] sm:$0xff]
    %v3360 = vld [vmem:[#allocation6 + $0x1674] sm:$0xff]
    %v3361 = vld [vmem:[#allocation6 + $0x167c] sm:$0xf]
    %v3362 = vld [vmem:[#allocation6 + $0x1680] sm:$0xff]
    %v3363 = vld [vmem:[#allocation6 + $0x1688] sm:$0xff]
    %v3364 = vld [vmem:[#allocation6 + $0x1690] sm:$0xf]
    %v3365 = vld [vmem:[#allocation6 + $0x1694] sm:$0xff]
    %v3366 = vld [vmem:[#allocation6 + $0x169c] sm:$0xff]
    %v3367 = vld [vmem:[#allocation6 + $0x16a4] sm:$0xf]
    %v3368 = vld [vmem:[#allocation6 + $0x16a8] sm:$0xff]
    %v3369 = vld [vmem:[#allocation6 + $0x16b0] sm:$0xff]
    %v3370 = vld [vmem:[#allocation6 + $0x16b8] sm:$0xf]
    %v3371 = vld [vmem:[#allocation6 + $0x16bc] sm:$0xff]
    %v3372 = vld [vmem:[#allocation6 + $0x16c4] sm:$0xff]
    %v3373 = vld [vmem:[#allocation6 + $0x16cc] sm:$0xf]
    %v3374 = vld [vmem:[#allocation6 + $0x16d0] sm:$0xff]
    %v3375 = vld [vmem:[#allocation6 + $0x16d8] sm:$0xff]
    %v3376 = vld [vmem:[#allocation6 + $0x16e0] sm:$0xf]
    %v3377 = vld [vmem:[#allocation6 + $0x16e4] sm:$0xff]
    %v3378 = vld [vmem:[#allocation6 + $0x16ec] sm:$0xff]
    %v3379 = vld [vmem:[#allocation6 + $0x16f4] sm:$0xf]
    %v3380 = vld [vmem:[#allocation6 + $0x16f8] sm:$0xff]
    %v3381 = vld [vmem:[#allocation6 + $0x1700] sm:$0xff]
    %v3382 = vld [vmem:[#allocation6 + $0x1708] sm:$0xf]
    %v3383 = vld [vmem:[#allocation6 + $0x170c] sm:$0xff]
    %v3384 = vld [vmem:[#allocation6 + $0x1714] sm:$0xff]
    %v3385 = vld [vmem:[#allocation6 + $0x171c] sm:$0xf]
    %v3386 = vld [vmem:[#allocation6 + $0x1720] sm:$0xff]
    %v3387 = vld [vmem:[#allocation6 + $0x1728] sm:$0xff]
    %v3388 = vld [vmem:[#allocation6 + $0x1730] sm:$0xf]
    %v3389 = vld [vmem:[#allocation6 + $0x1734] sm:$0xff]
    %v3390 = vld [vmem:[#allocation6 + $0x173c] sm:$0xff]
    %v3391 = vld [vmem:[#allocation6 + $0x1744] sm:$0xf]
    %v3392 = vld [vmem:[#allocation6 + $0x1748] sm:$0xff]
    %v3393 = vld [vmem:[#allocation6 + $0x1750] sm:$0xff]
    %v3394 = vld [vmem:[#allocation6 + $0x1758] sm:$0xf]
    %v3395 = vld [vmem:[#allocation6 + $0x175c] sm:$0xff]
    %v3396 = vld [vmem:[#allocation6 + $0x1764] sm:$0xff]
    %v3397 = vld [vmem:[#allocation6 + $0x176c] sm:$0xf]
    %v3398 = vld [vmem:[#allocation6 + $0x1770] sm:$0xff]
    %v3399 = vld [vmem:[#allocation6 + $0x1778] sm:$0xff]
    %v3400 = vld [vmem:[#allocation6 + $0x1780] sm:$0xf]
    %v3401 = vld [vmem:[#allocation6 + $0x1784] sm:$0xff]
    %v3402 = vld [vmem:[#allocation6 + $0x178c] sm:$0xff]
    %v3403 = vld [vmem:[#allocation6 + $0x1794] sm:$0xf]
    %v3404 = vld [vmem:[#allocation6 + $0x1798] sm:$0xff]
    %v3405 = vld [vmem:[#allocation6 + $0x17a0] sm:$0xff]
    %v3406 = vld [vmem:[#allocation6 + $0x17a8] sm:$0xf]
    %v3407 = vld [vmem:[#allocation6 + $0x17ac] sm:$0xff]
    %v3408 = vld [vmem:[#allocation6 + $0x17b4] sm:$0xff]
    %v3409 = vld [vmem:[#allocation6 + $0x17bc] sm:$0xf]
    %v3410 = vld [vmem:[#allocation6 + $0x17c0] sm:$0xff]
    %v3411 = vld [vmem:[#allocation6 + $0x17c8] sm:$0xff]
    %v3412 = vld [vmem:[#allocation6 + $0x17d0] sm:$0xf]
    %v3413 = vld [vmem:[#allocation6 + $0x17d4] sm:$0xff]
    %v3414 = vld [vmem:[#allocation6 + $0x17dc] sm:$0xff]
    %v3415 = vld [vmem:[#allocation6 + $0x17e4] sm:$0xf]
    %v3416 = vld [vmem:[#allocation6 + $0x17e8] sm:$0xff]
    %v3417 = vld [vmem:[#allocation6 + $0x17f0] sm:$0xff]
    %v3418 = vld [vmem:[#allocation6 + $0x17f8] sm:$0xf]
    %v3419 = vld [vmem:[#allocation6 + $0x17fc] sm:$0xff]
    %v3420 = vld [vmem:[#allocation6 + $0x1804] sm:$0xff]
    %v3421 = vld [vmem:[#allocation6 + $0x180c] sm:$0xf]
    %v3422 = vld [vmem:[#allocation6 + $0x1810] sm:$0xff]
    %v3423 = vld [vmem:[#allocation6 + $0x1818] sm:$0xff]
    %v3424 = vld [vmem:[#allocation6 + $0x1820] sm:$0xf]
    %v3425 = vld [vmem:[#allocation6 + $0x1824] sm:$0xff]
    %v3426 = vld [vmem:[#allocation6 + $0x182c] sm:$0xff]
    %v3427 = vld [vmem:[#allocation6 + $0x1834] sm:$0xf]
    %v3428 = vld [vmem:[#allocation6 + $0x1838] sm:$0xff]
    %v3429 = vld [vmem:[#allocation6 + $0x1840] sm:$0xff]
    %v3430 = vld [vmem:[#allocation6 + $0x1848] sm:$0xf]
    %v3431 = vld [vmem:[#allocation6 + $0x184c] sm:$0xff]
    %v3432 = vld [vmem:[#allocation6 + $0x1854] sm:$0xff]
    %v3433 = vld [vmem:[#allocation6 + $0x185c] sm:$0xf]
    %v3434 = vld [vmem:[#allocation6 + $0x1860] sm:$0xff]
    %v3435 = vld [vmem:[#allocation6 + $0x1868] sm:$0xff]
    %v3436 = vld [vmem:[#allocation6 + $0x1870] sm:$0xf]
    %v3437 = vld [vmem:[#allocation6 + $0x1874] sm:$0xff]
    %v3438 = vld [vmem:[#allocation6 + $0x187c] sm:$0xff]
    %v3439 = vld [vmem:[#allocation6 + $0x1884] sm:$0xf]
    %v3440 = vld [vmem:[#allocation6 + $0x1888] sm:$0xff]
    %v3441 = vld [vmem:[#allocation6 + $0x1890] sm:$0xff]
    %v3442 = vld [vmem:[#allocation6 + $0x1898] sm:$0xf]
    %v3443 = vld [vmem:[#allocation6 + $0x189c] sm:$0xff]
    %v3444 = vld [vmem:[#allocation6 + $0x18a4] sm:$0xff]
    %v3445 = vld [vmem:[#allocation6 + $0x18ac] sm:$0xf]
    %v3446 = vld [vmem:[#allocation6 + $0x18b0] sm:$0xff]
    %v3447 = vld [vmem:[#allocation6 + $0x18b8] sm:$0xff]
    %v3448 = vld [vmem:[#allocation6 + $0x18c0] sm:$0xf]
    %v3449 = vld [vmem:[#allocation6 + $0x18c4] sm:$0xff]
    %v3450 = vld [vmem:[#allocation6 + $0x18cc] sm:$0xff]
    %v3451 = vld [vmem:[#allocation6 + $0x18d4] sm:$0xf]
    %v3452 = vld [vmem:[#allocation6 + $0x18d8] sm:$0xff]
    %v3453 = vld [vmem:[#allocation6 + $0x18e0] sm:$0xff]
    %v3454 = vld [vmem:[#allocation6 + $0x18e8] sm:$0xf]
    %v3455 = vld [vmem:[#allocation6 + $0x18ec] sm:$0xff]
    %v3456 = vld [vmem:[#allocation6 + $0x18f4] sm:$0xff]
    %v3457 = vld [vmem:[#allocation6 + $0x18fc] sm:$0xf]
    %v3458 = vld [vmem:[#allocation6 + $0x1900] sm:$0xff]
    %v3459 = vld [vmem:[#allocation6 + $0x1908] sm:$0xff]
    %v3460 = vld [vmem:[#allocation6 + $0x1910] sm:$0xf]
    %v3461 = vld [vmem:[#allocation6 + $0x1914] sm:$0xff]
    %v3462 = vld [vmem:[#allocation6 + $0x191c] sm:$0xff]
    %v3463 = vld [vmem:[#allocation6 + $0x1924] sm:$0xf]
    %v3464 = vld [vmem:[#allocation6 + $0x1928] sm:$0xff]
    %v3465 = vld [vmem:[#allocation6 + $0x1930] sm:$0xff]
    %v3466 = vld [vmem:[#allocation6 + $0x1938] sm:$0xf]
    %v3467 = vld [vmem:[#allocation6 + $0x193c] sm:$0xff]
    %v3468 = vld [vmem:[#allocation6 + $0x1944] sm:$0xff]
    %v3469 = vld [vmem:[#allocation6 + $0x194c] sm:$0xf]
    %v3470 = vld [vmem:[#allocation6 + $0x1950] sm:$0xff]
    %v3471 = vld [vmem:[#allocation6 + $0x1958] sm:$0xff]
    %v3472 = vld [vmem:[#allocation6 + $0x1960] sm:$0xf]
    %v3473 = vld [vmem:[#allocation6 + $0x1964] sm:$0xff]
    %v3474 = vld [vmem:[#allocation6 + $0x196c] sm:$0xff]
    %v3475 = vld [vmem:[#allocation6 + $0x1974] sm:$0xf]
    %v3476 = vld [vmem:[#allocation6 + $0x1978] sm:$0xff]
    %v3477 = vld [vmem:[#allocation6 + $0x1980] sm:$0xff]
    %v3478 = vld [vmem:[#allocation6 + $0x1988] sm:$0xf]
    %v3479 = vld [vmem:[#allocation6 + $0x198c] sm:$0xff]
    %v3480 = vld [vmem:[#allocation6 + $0x1994] sm:$0xff]
    %v3481 = vld [vmem:[#allocation6 + $0x199c] sm:$0xf]
    %v3482 = vld [vmem:[#allocation6 + $0x19a0] sm:$0xff]
    %v3483 = vld [vmem:[#allocation6 + $0x19a8] sm:$0xff]
    %v3484 = vld [vmem:[#allocation6 + $0x19b0] sm:$0xf]
    %v3485 = vld [vmem:[#allocation6 + $0x19b4] sm:$0xff]
    %v3486 = vld [vmem:[#allocation6 + $0x19bc] sm:$0xff]
    %v3487 = vld [vmem:[#allocation6 + $0x19c4] sm:$0xf]
    %v3488 = vld [vmem:[#allocation6 + $0x19c8] sm:$0xff]
    %v3489 = vld [vmem:[#allocation6 + $0x19d0] sm:$0xff]
    %v3490 = vld [vmem:[#allocation6 + $0x19d8] sm:$0xf]
    %v3491 = vld [vmem:[#allocation6 + $0x19dc] sm:$0xff]
    %v3492 = vld [vmem:[#allocation6 + $0x19e4] sm:$0xff]
    %v3493 = vld [vmem:[#allocation6 + $0x19ec] sm:$0xf]
    %v3494 = vld [vmem:[#allocation6 + $0x19f0] sm:$0xff]
    %v3495 = vld [vmem:[#allocation6 + $0x19f8] sm:$0xff]
    %v3496 = vld [vmem:[#allocation6 + $0x1a00] sm:$0xf]
    %v3497 = vld [vmem:[#allocation6 + $0x1a04] sm:$0xff]
    %v3498 = vld [vmem:[#allocation6 + $0x1a0c] sm:$0xff]
    %v3499 = vld [vmem:[#allocation6 + $0x1a14] sm:$0xf]
    %v3500 = vld [vmem:[#allocation6 + $0x1a18] sm:$0xff]
    %v3501 = vld [vmem:[#allocation6 + $0x1a20] sm:$0xff]
    %v3502 = vld [vmem:[#allocation6 + $0x1a28] sm:$0xf]
    %v3503 = vld [vmem:[#allocation6 + $0x1a2c] sm:$0xff]
    %v3504 = vld [vmem:[#allocation6 + $0x1a34] sm:$0xff]
    %v3505 = vld [vmem:[#allocation6 + $0x1a3c] sm:$0xf]
    %v3506 = vld [vmem:[#allocation6 + $0x1a40] sm:$0xff]
    %v3507 = vld [vmem:[#allocation6 + $0x1a48] sm:$0xff]
    %v3508 = vld [vmem:[#allocation6 + $0x1a50] sm:$0xf]
    %v3509 = vld [vmem:[#allocation6 + $0x1a54] sm:$0xff]
    %v3510 = vld [vmem:[#allocation6 + $0x1a5c] sm:$0xff]
    %v3511 = vld [vmem:[#allocation6 + $0x1a64] sm:$0xf]
    %v3512 = vld [vmem:[#allocation6 + $0x1a68] sm:$0xff]
    %v3513 = vld [vmem:[#allocation6 + $0x1a70] sm:$0xff]
    %v3514 = vld [vmem:[#allocation6 + $0x1a78] sm:$0xf]
    %v3515 = vld [vmem:[#allocation6 + $0x1a7c] sm:$0xff]
    %v3516 = vld [vmem:[#allocation6 + $0x1a84] sm:$0xff]
    %v3517 = vld [vmem:[#allocation6 + $0x1a8c] sm:$0xf]
    %v3518 = vld [vmem:[#allocation6 + $0x1a90] sm:$0xff]
    %v3519 = vld [vmem:[#allocation6 + $0x1a98] sm:$0xff]
    %v3520 = vld [vmem:[#allocation6 + $0x1aa0] sm:$0xf]
    %v3521 = vld [vmem:[#allocation6 + $0x1aa4] sm:$0xff]
    %v3522 = vld [vmem:[#allocation6 + $0x1aac] sm:$0xff]
    %v3523 = vld [vmem:[#allocation6 + $0x1ab4] sm:$0xf]
    %v3524 = vld [vmem:[#allocation6 + $0x1ab8] sm:$0xff]
    %v3525 = vld [vmem:[#allocation6 + $0x1ac0] sm:$0xff]
    %v3526 = vld [vmem:[#allocation6 + $0x1ac8] sm:$0xf]
    %v3527 = vld [vmem:[#allocation6 + $0x1acc] sm:$0xff]
    %v3528 = vld [vmem:[#allocation6 + $0x1ad4] sm:$0xff]
    %v3529 = vld [vmem:[#allocation6 + $0x1adc] sm:$0xf]
    %v3530 = vld [vmem:[#allocation6 + $0x1ae0] sm:$0xff]
    %v3531 = vld [vmem:[#allocation6 + $0x1ae8] sm:$0xff]
    %v3532 = vld [vmem:[#allocation6 + $0x1af0] sm:$0xf]
    %v3533 = vld [vmem:[#allocation6 + $0x1af4] sm:$0xff]
    %v3534 = vld [vmem:[#allocation6 + $0x1afc] sm:$0xff]
    %v3535 = vld [vmem:[#allocation6 + $0x1b04] sm:$0xf]
    %v3536 = vld [vmem:[#allocation6 + $0x1b08] sm:$0xff]
    %v3537 = vld [vmem:[#allocation6 + $0x1b10] sm:$0xff]
    %v3538 = vld [vmem:[#allocation6 + $0x1b18] sm:$0xf]
    %v3539 = vld [vmem:[#allocation6 + $0x1b1c] sm:$0xff]
    %v3540 = vld [vmem:[#allocation6 + $0x1b24] sm:$0xff]
    %v3541 = vld [vmem:[#allocation6 + $0x1b2c] sm:$0xf]
    %v3542 = vld [vmem:[#allocation6 + $0x1b30] sm:$0xff]
    %v3543 = vld [vmem:[#allocation6 + $0x1b38] sm:$0xff]
    %v3544 = vld [vmem:[#allocation6 + $0x1b40] sm:$0xf]
    %v3545 = vld [vmem:[#allocation6 + $0x1b44] sm:$0xff]
    %v3546 = vld [vmem:[#allocation6 + $0x1b4c] sm:$0xff]
    %v3547 = vld [vmem:[#allocation6 + $0x1b54] sm:$0xf]
    %v3548 = vld [vmem:[#allocation6 + $0x1b58] sm:$0xff]
    %v3549 = vld [vmem:[#allocation6 + $0x1b60] sm:$0xff]
    %v3550 = vld [vmem:[#allocation6 + $0x1b68] sm:$0xf]
    %v3551 = vld [vmem:[#allocation6 + $0x1b6c] sm:$0xff]
    %v3552 = vld [vmem:[#allocation6 + $0x1b74] sm:$0xff]
    %v3553 = vld [vmem:[#allocation6 + $0x1b7c] sm:$0xf]
    %v3554 = vld [vmem:[#allocation6 + $0x1b80] sm:$0xff]
    %v3555 = vld [vmem:[#allocation6 + $0x1b88] sm:$0xff]
    %v3556 = vld [vmem:[#allocation6 + $0x1b90] sm:$0xf]
    %v3557 = vld [vmem:[#allocation6 + $0x1b94] sm:$0xff]
    %v3558 = vld [vmem:[#allocation6 + $0x1b9c] sm:$0xff]
    %v3559 = vld [vmem:[#allocation6 + $0x1ba4] sm:$0xf]
    %v3560 = vld [vmem:[#allocation6 + $0x1ba8] sm:$0xff]
    %v3561 = vld [vmem:[#allocation6 + $0x1bb0] sm:$0xff]
    %v3562 = vld [vmem:[#allocation6 + $0x1bb8] sm:$0xf]
    %v3563 = vld [vmem:[#allocation6 + $0x1bbc] sm:$0xff]
    %v3564 = vld [vmem:[#allocation6 + $0x1bc4] sm:$0xff]
    %v3565 = vld [vmem:[#allocation6 + $0x1bcc] sm:$0xf]
    %v3566 = vld [vmem:[#allocation6 + $0x1bd0] sm:$0xff]
    %v3567 = vld [vmem:[#allocation6 + $0x1bd8] sm:$0xff]
    %v3568 = vld [vmem:[#allocation6 + $0x1be0] sm:$0xf]
    %v3569 = vld [vmem:[#allocation6 + $0x1be4] sm:$0xff]
    %v3570 = vld [vmem:[#allocation6 + $0x1bec] sm:$0xff]
    %v3571 = vld [vmem:[#allocation6 + $0x1bf4] sm:$0xf]
    %v3572 = vld [vmem:[#allocation6 + $0x1bf8] sm:$0xff]
    %v3573 = vld [vmem:[#allocation6 + $0x1c00] sm:$0xff]
    %v3574 = vld [vmem:[#allocation6 + $0x1c08] sm:$0xf]
    %v3575 = vld [vmem:[#allocation6 + $0x1c0c] sm:$0xff]
    %v3576 = vld [vmem:[#allocation6 + $0x1c14] sm:$0xff]
    %v3577 = vld [vmem:[#allocation6 + $0x1c1c] sm:$0xf]
    %v3578 = vld [vmem:[#allocation6 + $0x1c20] sm:$0xff]
    %v3579 = vld [vmem:[#allocation6 + $0x1c28] sm:$0xff]
    %v3580 = vld [vmem:[#allocation6 + $0x1c30] sm:$0xf]
    %v3581 = vld [vmem:[#allocation6 + $0x1c34] sm:$0xff]
    %v3582 = vld [vmem:[#allocation6 + $0x1c3c] sm:$0xff]
    %v3583 = vld [vmem:[#allocation6 + $0x1c44] sm:$0xf]
    %v3584 = vld [vmem:[#allocation6 + $0x1c48] sm:$0xff]
    %v3585 = vld [vmem:[#allocation6 + $0x1c50] sm:$0xff]
    %v3586 = vld [vmem:[#allocation6 + $0x1c58] sm:$0xf]
    %v3587 = vld [vmem:[#allocation6 + $0x1c5c] sm:$0xff]
    %v3588 = vld [vmem:[#allocation6 + $0x1c64] sm:$0xff]
    %v3589 = vld [vmem:[#allocation6 + $0x1c6c] sm:$0xf]
    %v3590 = vld [vmem:[#allocation6 + $0x1c70] sm:$0xff]
    %v3591 = vld [vmem:[#allocation6 + $0x1c78] sm:$0xff]
    %v3592 = vld [vmem:[#allocation6 + $0x1c80] sm:$0xf]
    %v3593 = vld [vmem:[#allocation6 + $0x1c84] sm:$0xff]
    %v3594 = vld [vmem:[#allocation6 + $0x1c8c] sm:$0xff]
    %v3595 = vld [vmem:[#allocation6 + $0x1c94] sm:$0xf]
    %v3596 = vld [vmem:[#allocation6 + $0x1c98] sm:$0xff]
    %v3597 = vld [vmem:[#allocation6 + $0x1ca0] sm:$0xff]
    %v3598 = vld [vmem:[#allocation6 + $0x1ca8] sm:$0xf]
    %v3599 = vld [vmem:[#allocation6 + $0x1cac] sm:$0xff]
    %v3600 = vld [vmem:[#allocation6 + $0x1cb4] sm:$0xff]
    %v3601 = vld [vmem:[#allocation6 + $0x1cbc] sm:$0xf]
    %v3602 = vld [vmem:[#allocation6 + $0x1cc0] sm:$0xff]
    %v3603 = vld [vmem:[#allocation6 + $0x1cc8] sm:$0xff]
    %v3604 = vld [vmem:[#allocation6 + $0x1cd0] sm:$0xf]
    %v3605 = vld [vmem:[#allocation6 + $0x1cd4] sm:$0xff]
    %v3606 = vld [vmem:[#allocation6 + $0x1cdc] sm:$0xff]
    %v3607 = vld [vmem:[#allocation6 + $0x1ce4] sm:$0xf]
    %v3608 = vld [vmem:[#allocation6 + $0x1ce8] sm:$0xff]
    %v3609 = vld [vmem:[#allocation6 + $0x1cf0] sm:$0xff]
    %v3610 = vld [vmem:[#allocation6 + $0x1cf8] sm:$0xf]
    %v3611 = vld [vmem:[#allocation6 + $0x1cfc] sm:$0xff]
    %v3612 = vld [vmem:[#allocation6 + $0x1d04] sm:$0xff]
    %v3613 = vld [vmem:[#allocation6 + $0x1d0c] sm:$0xf]
    %v3614 = vld [vmem:[#allocation6 + $0x1d10] sm:$0xff]
    %v3615 = vld [vmem:[#allocation6 + $0x1d18] sm:$0xff]
    %v3616 = vld [vmem:[#allocation6 + $0x1d20] sm:$0xf]
    %v3617 = vld [vmem:[#allocation6 + $0x1d24] sm:$0xff]
    %v3618 = vld [vmem:[#allocation6 + $0x1d2c] sm:$0xff]
    %v3619 = vld [vmem:[#allocation6 + $0x1d34] sm:$0xf]
    %v3620 = vld [vmem:[#allocation6 + $0x1d38] sm:$0xff]
    %v3621 = vld [vmem:[#allocation6 + $0x1d40] sm:$0xff]
    %v3622 = vld [vmem:[#allocation6 + $0x1d48] sm:$0xf]
    %v3623 = vld [vmem:[#allocation6 + $0x1d4c] sm:$0xff]
    %v3624 = vld [vmem:[#allocation6 + $0x1d54] sm:$0xff]
    %v3625 = vld [vmem:[#allocation6 + $0x1d5c] sm:$0xf]
    %v3626 = vld [vmem:[#allocation6 + $0x1d60] sm:$0xff]
    %v3627 = vld [vmem:[#allocation6 + $0x1d68] sm:$0xff]
    %v3628 = vld [vmem:[#allocation6 + $0x1d70] sm:$0xf]
    %v3629 = vld [vmem:[#allocation6 + $0x1d74] sm:$0xff]
    %v3630 = vld [vmem:[#allocation6 + $0x1d7c] sm:$0xff]
    %v3631 = vld [vmem:[#allocation6 + $0x1d84] sm:$0xf]
    %v3632 = vld [vmem:[#allocation6 + $0x1d88] sm:$0xff]
    %v3633 = vld [vmem:[#allocation6 + $0x1d90] sm:$0xff]
    %v3634 = vld [vmem:[#allocation6 + $0x1d98] sm:$0xf]
    %v3635 = vld [vmem:[#allocation6 + $0x1d9c] sm:$0xff]
    %v3636 = vld [vmem:[#allocation6 + $0x1da4] sm:$0xff]
    %v3637 = vld [vmem:[#allocation6 + $0x1dac] sm:$0xf]
    %v3638 = vld [vmem:[#allocation6 + $0x1db0] sm:$0xff]
    %v3639 = vld [vmem:[#allocation6 + $0x1db8] sm:$0xff]
    %v3640 = vld [vmem:[#allocation6 + $0x1dc0] sm:$0xf]
    %v3641 = vld [vmem:[#allocation6 + $0x1dc4] sm:$0xff]
    %v3642 = vld [vmem:[#allocation6 + $0x1dcc] sm:$0xff]
    %v3643 = vld [vmem:[#allocation6 + $0x1dd4] sm:$0xf]
    %v3644 = vld [vmem:[#allocation6 + $0x1dd8] sm:$0xff]
    %v3645 = vld [vmem:[#allocation6 + $0x1de0] sm:$0xff]
    %v3646 = vld [vmem:[#allocation6 + $0x1de8] sm:$0xf]
    %v3647 = vld [vmem:[#allocation6 + $0x1dec] sm:$0xff]
    %v3648 = vld [vmem:[#allocation6 + $0x1df4] sm:$0xff]
    %v3649 = vld [vmem:[#allocation6 + $0x1dfc] sm:$0xf]
    %v3650 = vld [vmem:[#allocation6 + $0x1e00] sm:$0xff]
    %v3651 = vld [vmem:[#allocation6 + $0x1e08] sm:$0xff]
    %v3652 = vld [vmem:[#allocation6 + $0x1e10] sm:$0xf]
    %v3653 = vld [vmem:[#allocation6 + $0x1e14] sm:$0xff]
    %v3654 = vld [vmem:[#allocation6 + $0x1e1c] sm:$0xff]
    %v3655 = vld [vmem:[#allocation6 + $0x1e24] sm:$0xf]
    %v3656 = vld [vmem:[#allocation6 + $0x1e28] sm:$0xff]
    %v3657 = vld [vmem:[#allocation6 + $0x1e30] sm:$0xff]
    %v3658 = vld [vmem:[#allocation6 + $0x1e38] sm:$0xf]
    %v3659 = vld [vmem:[#allocation6 + $0x1e3c] sm:$0xff]
    %v3660 = vld [vmem:[#allocation6 + $0x1e44] sm:$0xff]
    %v3661 = vld [vmem:[#allocation6 + $0x1e4c] sm:$0xf]
    %v3662 = vld [vmem:[#allocation6 + $0x1e50] sm:$0xff]
    %v3663 = vld [vmem:[#allocation6 + $0x1e58] sm:$0xff]
    %v3664 = vld [vmem:[#allocation6 + $0x1e60] sm:$0xf]
    %v3665 = vld [vmem:[#allocation6 + $0x1e64] sm:$0xff]
    %v3666 = vld [vmem:[#allocation6 + $0x1e6c] sm:$0xff]
    %v3667 = vld [vmem:[#allocation6 + $0x1e74] sm:$0xf]
    %v3668 = vld [vmem:[#allocation6 + $0x1e78] sm:$0xff]
    %v3669 = vld [vmem:[#allocation6 + $0x1e80] sm:$0xff]
    %v3670 = vld [vmem:[#allocation6 + $0x1e88] sm:$0xf]
    %v3671 = vld [vmem:[#allocation6 + $0x1e8c] sm:$0xff]
    %v3672 = vld [vmem:[#allocation6 + $0x1e94] sm:$0xff]
    %v3673 = vld [vmem:[#allocation6 + $0x1e9c] sm:$0xf]
    %v3674 = vld [vmem:[#allocation6 + $0x1ea0] sm:$0xff]
    %v3675 = vld [vmem:[#allocation6 + $0x1ea8] sm:$0xff]
    %v3676 = vld [vmem:[#allocation6 + $0x1eb0] sm:$0xf]
    %v3677 = vld [vmem:[#allocation6 + $0x1eb4] sm:$0xff]
    %v3678 = vld [vmem:[#allocation6 + $0x1ebc] sm:$0xff]
    %v3679 = vld [vmem:[#allocation6 + $0x1ec4] sm:$0xf]
    %v3680 = vld [vmem:[#allocation6 + $0x1ec8] sm:$0xff]
    %v3681 = vld [vmem:[#allocation6 + $0x1ed0] sm:$0xff]
    %v3682 = vld [vmem:[#allocation6 + $0x1ed8] sm:$0xf]
    %v3683 = vld [vmem:[#allocation6 + $0x1edc] sm:$0xff]
    %v3684 = vld [vmem:[#allocation6 + $0x1ee4] sm:$0xff]
    %v3685 = vld [vmem:[#allocation6 + $0x1eec] sm:$0xf]
    %v3686 = vld [vmem:[#allocation6 + $0x1ef0] sm:$0xff]
    %v3687 = vld [vmem:[#allocation6 + $0x1ef8] sm:$0xff]
    %v3688 = vld [vmem:[#allocation6 + $0x1f00] sm:$0xf]
    %v3689 = vld [vmem:[#allocation6 + $0x1f04] sm:$0xff]
    %v3690 = vld [vmem:[#allocation6 + $0x1f0c] sm:$0xff]
    %v3691 = vld [vmem:[#allocation6 + $0x1f14] sm:$0xf]
    %v3692 = vld [vmem:[#allocation6 + $0x1f18] sm:$0xff]
    %v3693 = vld [vmem:[#allocation6 + $0x1f20] sm:$0xff]
    %v3694 = vld [vmem:[#allocation6 + $0x1f28] sm:$0xf]
    %v3695 = vld [vmem:[#allocation6 + $0x1f2c] sm:$0xff]
    %v3696 = vld [vmem:[#allocation6 + $0x1f34] sm:$0xff]
    %v3697 = vld [vmem:[#allocation6 + $0x1f3c] sm:$0xf]
    %v3698 = vld [vmem:[#allocation6 + $0x1f40] sm:$0xff]
    %v3699 = vld [vmem:[#allocation6 + $0x1f48] sm:$0xff]
    %v3700 = vld [vmem:[#allocation6 + $0x1f50] sm:$0xf]
    %v3701 = vld [vmem:[#allocation6 + $0x1f54] sm:$0xff]
    %v3702 = vld [vmem:[#allocation6 + $0x1f5c] sm:$0xff]
    %v3703 = vld [vmem:[#allocation6 + $0x1f64] sm:$0xf]
    %v3704 = vld [vmem:[#allocation6 + $0x1f68] sm:$0xff]
    %v3705 = vld [vmem:[#allocation6 + $0x1f70] sm:$0xff]
    %v3706 = vld [vmem:[#allocation6 + $0x1f78] sm:$0xf]
    %v3707 = vld [vmem:[#allocation6 + $0x1f7c] sm:$0xff]
    %v3708 = vld [vmem:[#allocation6 + $0x1f84] sm:$0xff]
    %v3709 = vld [vmem:[#allocation6 + $0x1f8c] sm:$0xf]
    %v3710 = vld [vmem:[#allocation6 + $0x1f90] sm:$0xff]
    %v3711 = vld [vmem:[#allocation6 + $0x1f98] sm:$0xff]
    %v3712 = vld [vmem:[#allocation6 + $0x1fa0] sm:$0xf]
    %v3713 = vld [vmem:[#allocation6 + $0x1fa4] sm:$0xff]
    %v3714 = vld [vmem:[#allocation6 + $0x1fac] sm:$0xff]
    %v3715 = vld [vmem:[#allocation6 + $0x1fb4] sm:$0xf]
    %v3716 = vld [vmem:[#allocation6 + $0x1fb8] sm:$0xff]
    %v3717 = vld [vmem:[#allocation6 + $0x1fc0] sm:$0xff]
    %v3718 = vld [vmem:[#allocation6 + $0x1fc8] sm:$0xf]
    %v3719 = vld [vmem:[#allocation6 + $0x1fcc] sm:$0xff]
    %v3720 = vld [vmem:[#allocation6 + $0x1fd4] sm:$0xff]
    %v3721 = vld [vmem:[#allocation6 + $0x1fdc] sm:$0xf]
    %v3722 = vld [vmem:[#allocation6 + $0x1fe0] sm:$0xff]
    %v3723 = vld [vmem:[#allocation6 + $0x1fe8] sm:$0xff]
    %v3724 = vld [vmem:[#allocation6 + $0x1ff0] sm:$0xf]
    %v3725 = vld [vmem:[#allocation6 + $0x1ff4] sm:$0xff]
    %v3726 = vld [vmem:[#allocation6 + $0x1ffc] sm:$0xff]
    %v3727 = vld [vmem:[#allocation6 + $0x2004] sm:$0xf]
    %v3728 = vld [vmem:[#allocation6 + $0x2008] sm:$0xff]
    %v3729 = vld [vmem:[#allocation6 + $0x2010] sm:$0xff]
    %v3730 = vld [vmem:[#allocation6 + $0x2018] sm:$0xf]
    %v3731 = vld [vmem:[#allocation6 + $0x201c] sm:$0xff]
    %v3732 = vld [vmem:[#allocation6 + $0x2024] sm:$0xff]
    %v3733 = vld [vmem:[#allocation6 + $0x202c] sm:$0xf]
    %v3734 = vld [vmem:[#allocation6 + $0x2030] sm:$0xff]
    %v3735 = vld [vmem:[#allocation6 + $0x2038] sm:$0xff]
    %v3736 = vld [vmem:[#allocation6 + $0x2040] sm:$0xf]
    %v3737 = vld [vmem:[#allocation6 + $0x2044] sm:$0xff]
    %v3738 = vld [vmem:[#allocation6 + $0x204c] sm:$0xff]
    %v3739 = vld [vmem:[#allocation6 + $0x2054] sm:$0xf]
    %v3740 = vld [vmem:[#allocation6 + $0x2058] sm:$0xff]
    %v3741 = vld [vmem:[#allocation6 + $0x2060] sm:$0xff]
    %v3742 = vld [vmem:[#allocation6 + $0x2068] sm:$0xf]
    %v3743 = vld [vmem:[#allocation6 + $0x206c] sm:$0xff]
    %v3744 = vld [vmem:[#allocation6 + $0x2074] sm:$0xff]
    %v3745 = vld [vmem:[#allocation6 + $0x207c] sm:$0xf]
    %v3746 = vld [vmem:[#allocation6 + $0x2080] sm:$0xff]
    %v3747 = vld [vmem:[#allocation6 + $0x2088] sm:$0xff]
    %v3748 = vld [vmem:[#allocation6 + $0x2090] sm:$0xf]
    %v3749 = vld [vmem:[#allocation6 + $0x2094] sm:$0xff]
    %v3750 = vld [vmem:[#allocation6 + $0x209c] sm:$0xff]
    %v3751 = vld [vmem:[#allocation6 + $0x20a4] sm:$0xf]
    %v3752 = vld [vmem:[#allocation6 + $0x20a8] sm:$0xff]
    %v3753 = vld [vmem:[#allocation6 + $0x20b0] sm:$0xff]
    %v3754 = vld [vmem:[#allocation6 + $0x20b8] sm:$0xf]
    %v3755 = vld [vmem:[#allocation6 + $0x20bc] sm:$0xff]
    %v3756 = vld [vmem:[#allocation6 + $0x20c4] sm:$0xff]
    %v3757 = vld [vmem:[#allocation6 + $0x20cc] sm:$0xf]
    %v3758 = vld [vmem:[#allocation6 + $0x20d0] sm:$0xff]
    %v3759 = vld [vmem:[#allocation6 + $0x20d8] sm:$0xff]
    %v3760 = vld [vmem:[#allocation6 + $0x20e0] sm:$0xf]
    %v3761 = vld [vmem:[#allocation6 + $0x20e4] sm:$0xff]
    %v3762 = vld [vmem:[#allocation6 + $0x20ec] sm:$0xff]
    %v3763 = vld [vmem:[#allocation6 + $0x20f4] sm:$0xf]
    %v3764 = vld [vmem:[#allocation6 + $0x20f8] sm:$0xff]
    %v3765 = vld [vmem:[#allocation6 + $0x2100] sm:$0xff]
    %v3766 = vld [vmem:[#allocation6 + $0x2108] sm:$0xf]
    %v3767 = vld [vmem:[#allocation6 + $0x210c] sm:$0xff]
    %v3768 = vld [vmem:[#allocation6 + $0x2114] sm:$0xff]
    %v3769 = vld [vmem:[#allocation6 + $0x211c] sm:$0xf]
    %v3770 = vld [vmem:[#allocation6 + $0x2120] sm:$0xff]
    %v3771 = vld [vmem:[#allocation6 + $0x2128] sm:$0xff]
    %v3772 = vld [vmem:[#allocation6 + $0x2130] sm:$0xf]
    %v3773 = vld [vmem:[#allocation6 + $0x2134] sm:$0xff]
    %v3774 = vld [vmem:[#allocation6 + $0x213c] sm:$0xff]
    %v3775 = vld [vmem:[#allocation6 + $0x2144] sm:$0xf]
    %v3776 = vld [vmem:[#allocation6 + $0x2148] sm:$0xff]
    %v3777 = vld [vmem:[#allocation6 + $0x2150] sm:$0xff]
    %v3778 = vld [vmem:[#allocation6 + $0x2158] sm:$0xf]
    %v3779 = vld [vmem:[#allocation6 + $0x215c] sm:$0xff]
    %v3780 = vld [vmem:[#allocation6 + $0x2164] sm:$0xff]
    %v3781 = vld [vmem:[#allocation6 + $0x216c] sm:$0xf]
    %v3782 = vld [vmem:[#allocation6 + $0x2170] sm:$0xff]
    %v3783 = vld [vmem:[#allocation6 + $0x2178] sm:$0xff]
    %v3784 = vld [vmem:[#allocation6 + $0x2180] sm:$0xf]
    %v3785 = vld [vmem:[#allocation6 + $0x2184] sm:$0xff]
    %v3786 = vld [vmem:[#allocation6 + $0x218c] sm:$0xff]
    %v3787 = vld [vmem:[#allocation6 + $0x2194] sm:$0xf]
    %v3788 = vld [vmem:[#allocation6 + $0x2198] sm:$0xff]
    %v3789 = vld [vmem:[#allocation6 + $0x21a0] sm:$0xff]
    %v3790 = vld [vmem:[#allocation6 + $0x21a8] sm:$0xf]
    %v3791 = vld [vmem:[#allocation6 + $0x21ac] sm:$0xff]
    %v3792 = vld [vmem:[#allocation6 + $0x21b4] sm:$0xff]
    %v3793 = vld [vmem:[#allocation6 + $0x21bc] sm:$0xf]
    %v3794 = vld [vmem:[#allocation6 + $0x21c0] sm:$0xff]
    %v3795 = vld [vmem:[#allocation6 + $0x21c8] sm:$0xff]
    %v3796 = vld [vmem:[#allocation6 + $0x21d0] sm:$0xf]
    %v3797 = vld [vmem:[#allocation6 + $0x21d4] sm:$0xff]
    %v3798 = vld [vmem:[#allocation6 + $0x21dc] sm:$0xff]
    %v3799 = vld [vmem:[#allocation6 + $0x21e4] sm:$0xf]
    %v3800 = vld [vmem:[#allocation6 + $0x21e8] sm:$0xff]
    %v3801 = vld [vmem:[#allocation6 + $0x21f0] sm:$0xff]
    %v3802 = vld [vmem:[#allocation6 + $0x21f8] sm:$0xf]
    %v3803 = vld [vmem:[#allocation6 + $0x21fc] sm:$0xff]
    %v3804 = vld [vmem:[#allocation6 + $0x2204] sm:$0xff]
    %v3805 = vld [vmem:[#allocation6 + $0x220c] sm:$0xf]
    %v3806 = vld [vmem:[#allocation6 + $0x2210] sm:$0xff]
    %v3807 = vld [vmem:[#allocation6 + $0x2218] sm:$0xff]
    %v3808 = vld [vmem:[#allocation6 + $0x2220] sm:$0xf]
    %v3809 = vld [vmem:[#allocation6 + $0x2224] sm:$0xff]
    %v3810 = vld [vmem:[#allocation6 + $0x222c] sm:$0xff]
    %v3811 = vld [vmem:[#allocation6 + $0x2234] sm:$0xf]
    %v3812 = vld [vmem:[#allocation6 + $0x2238] sm:$0xff]
    %v3813 = vld [vmem:[#allocation6 + $0x2240] sm:$0xff]
    %v3814 = vld [vmem:[#allocation6 + $0x2248] sm:$0xf]
    %v3815 = vld [vmem:[#allocation6 + $0x224c] sm:$0xff]
    %v3816 = vld [vmem:[#allocation6 + $0x2254] sm:$0xff]
    %v3817 = vld [vmem:[#allocation6 + $0x225c] sm:$0xf]
    %v3818 = vld [vmem:[#allocation6 + $0x2260] sm:$0xff]
    %v3819 = vld [vmem:[#allocation6 + $0x2268] sm:$0xff]
    %v3820 = vld [vmem:[#allocation6 + $0x2270] sm:$0xf]
    %v3821 = vld [vmem:[#allocation6 + $0x2274] sm:$0xff]
    %v3822 = vld [vmem:[#allocation6 + $0x227c] sm:$0xff]
    %v3823 = vld [vmem:[#allocation6 + $0x2284] sm:$0xf]
    %v3824 = vld [vmem:[#allocation6 + $0x2288] sm:$0xff]
    %v3825 = vld [vmem:[#allocation6 + $0x2290] sm:$0xff]
    %v3826 = vld [vmem:[#allocation6 + $0x2298] sm:$0xf]
    %v3827 = vld [vmem:[#allocation6 + $0x229c] sm:$0xff]
    %v3828 = vld [vmem:[#allocation6 + $0x22a4] sm:$0xff]
    %v3829 = vld [vmem:[#allocation6 + $0x22ac] sm:$0xf]
    %v3830 = vld [vmem:[#allocation6 + $0x22b0] sm:$0xff]
    %v3831 = vld [vmem:[#allocation6 + $0x22b8] sm:$0xff]
    %v3832 = vld [vmem:[#allocation6 + $0x22c0] sm:$0xf]
    %v3833 = vld [vmem:[#allocation6 + $0x22c4] sm:$0xff]
    %v3834 = vld [vmem:[#allocation6 + $0x22cc] sm:$0xff]
    %v3835 = vld [vmem:[#allocation6 + $0x22d4] sm:$0xf]
    %v3836 = vld [vmem:[#allocation6 + $0x22d8] sm:$0xff]
    %v3837 = vld [vmem:[#allocation6 + $0x22e0] sm:$0xff]
    %v3838 = vld [vmem:[#allocation6 + $0x22e8] sm:$0xf]
    %v3839 = vld [vmem:[#allocation6 + $0x22ec] sm:$0xff]
    %v3840 = vld [vmem:[#allocation6 + $0x22f4] sm:$0xff]
    %v3841 = vld [vmem:[#allocation6 + $0x22fc] sm:$0xf]
    %v3842 = vld [vmem:[#allocation6 + $0x2300] sm:$0xff]
    %v3843 = vld [vmem:[#allocation6 + $0x2308] sm:$0xff]
    %v3844 = vld [vmem:[#allocation6 + $0x2310] sm:$0xf]
    %v3845 = vld [vmem:[#allocation6 + $0x2314] sm:$0xff]
    %v3846 = vld [vmem:[#allocation6 + $0x231c] sm:$0xff]
    %v3847 = vld [vmem:[#allocation6 + $0x2324] sm:$0xf]
    %v3848 = vld [vmem:[#allocation6 + $0x2328] sm:$0xff]
    %v3849 = vld [vmem:[#allocation6 + $0x2330] sm:$0xff]
    %v3850 = vld [vmem:[#allocation6 + $0x2338] sm:$0xf]
    %v3851 = vld [vmem:[#allocation6 + $0x233c] sm:$0xff]
    %v3852 = vld [vmem:[#allocation6 + $0x2344] sm:$0xff]
    %v3853 = vld [vmem:[#allocation6 + $0x234c] sm:$0xf]
    %v3854 = vld [vmem:[#allocation6 + $0x2350] sm:$0xff]
    %v3855 = vld [vmem:[#allocation6 + $0x2358] sm:$0xff]
    %v3856 = vld [vmem:[#allocation6 + $0x2360] sm:$0xf]
    %v3857 = vld [vmem:[#allocation6 + $0x2364] sm:$0xff]
    %v3858 = vld [vmem:[#allocation6 + $0x236c] sm:$0xff]
    %v3859 = vld [vmem:[#allocation6 + $0x2374] sm:$0xf]
    %v3860 = vld [vmem:[#allocation6 + $0x2378] sm:$0xff]
    %v3861 = vld [vmem:[#allocation6 + $0x2380] sm:$0xff]
    %v3862 = vld [vmem:[#allocation6 + $0x2388] sm:$0xf]
    %v3863 = vld [vmem:[#allocation6 + $0x238c] sm:$0xff]
    %v3864 = vld [vmem:[#allocation6 + $0x2394] sm:$0xff]
    %v3865 = vld [vmem:[#allocation6 + $0x239c] sm:$0xf]
    %v3866 = vld [vmem:[#allocation6 + $0x23a0] sm:$0xff]
    %v3867 = vld [vmem:[#allocation6 + $0x23a8] sm:$0xff]
    %v3868 = vld [vmem:[#allocation6 + $0x23b0] sm:$0xf]
    %v3869 = vld [vmem:[#allocation6 + $0x23b4] sm:$0xff]
    %v3870 = vld [vmem:[#allocation6 + $0x23bc] sm:$0xff]
    %v3871 = vld [vmem:[#allocation6 + $0x23c4] sm:$0xf]
    %v3872 = vld [vmem:[#allocation6 + $0x23c8] sm:$0xff]
    %v3873 = vld [vmem:[#allocation6 + $0x23d0] sm:$0xff]
    %v3874 = vld [vmem:[#allocation6 + $0x23d8] sm:$0xf]
    %v3875 = vld [vmem:[#allocation6 + $0x23dc] sm:$0xff]
    %v3876 = vld [vmem:[#allocation6 + $0x23e4] sm:$0xff]
    %v3877 = vld [vmem:[#allocation6 + $0x23ec] sm:$0xf]
    %v3878 = vld [vmem:[#allocation6 + $0x23f0] sm:$0xff]
    %v3879 = vld [vmem:[#allocation6 + $0x23f8] sm:$0xff]
    %v3880 = vld [vmem:[#allocation6 + $0x2400] sm:$0xf]
    %v3881 = vld [vmem:[#allocation6 + $0x2404] sm:$0xff]
    %v3882 = vld [vmem:[#allocation6 + $0x240c] sm:$0xff]
    %v3883 = vld [vmem:[#allocation6 + $0x2414] sm:$0xf]
    %v3884 = vld [vmem:[#allocation6 + $0x2418] sm:$0xff]
    %v3885 = vld [vmem:[#allocation6 + $0x2420] sm:$0xff]
    %v3886 = vld [vmem:[#allocation6 + $0x2428] sm:$0xf]
    %v3887 = vld [vmem:[#allocation6 + $0x242c] sm:$0xff]
    %v3888 = vld [vmem:[#allocation6 + $0x2434] sm:$0xff]
    %v3889 = vld [vmem:[#allocation6 + $0x243c] sm:$0xf]
    %v3890 = vld [vmem:[#allocation6 + $0x2440] sm:$0xff]
    %v3891 = vld [vmem:[#allocation6 + $0x2448] sm:$0xff]
    %v3892 = vld [vmem:[#allocation6 + $0x2450] sm:$0xf]
    %v3893 = vld [vmem:[#allocation6 + $0x2454] sm:$0xff]
    %v3894 = vld [vmem:[#allocation6 + $0x245c] sm:$0xff]
    %v3895 = vld [vmem:[#allocation6 + $0x2464] sm:$0xf]
    %v3896 = vld [vmem:[#allocation6 + $0x2468] sm:$0xff]
    %v3897 = vld [vmem:[#allocation6 + $0x2470] sm:$0xff]
    %v3898 = vld [vmem:[#allocation6 + $0x2478] sm:$0xf]
    %v3899 = vld [vmem:[#allocation6 + $0x247c] sm:$0xff]
    %v3900 = vld [vmem:[#allocation6 + $0x2484] sm:$0xff]
    %v3901 = vld [vmem:[#allocation6 + $0x248c] sm:$0xf]
    %v3902 = vld [vmem:[#allocation6 + $0x2490] sm:$0xff]
    %v3903 = vld [vmem:[#allocation6 + $0x2498] sm:$0xff]
    %v3904 = vld [vmem:[#allocation6 + $0x24a0] sm:$0xf]
    %v3905 = vld [vmem:[#allocation6 + $0x24a4] sm:$0xff]
    %v3906 = vld [vmem:[#allocation6 + $0x24ac] sm:$0xff]
    %v3907 = vld [vmem:[#allocation6 + $0x24b4] sm:$0xf]
    %v3908 = vld [vmem:[#allocation6 + $0x24b8] sm:$0xff]
    %v3909 = vld [vmem:[#allocation6 + $0x24c0] sm:$0xff]
    %v3910 = vld [vmem:[#allocation6 + $0x24c8] sm:$0xf]
    %v3911 = vld [vmem:[#allocation6 + $0x24cc] sm:$0xff]
    %v3912 = vld [vmem:[#allocation6 + $0x24d4] sm:$0xff]
    %v3913 = vld [vmem:[#allocation6 + $0x24dc] sm:$0xf]
    %v3914 = vld [vmem:[#allocation6 + $0x24e0] sm:$0xff]
    %v3915 = vld [vmem:[#allocation6 + $0x24e8] sm:$0xff]
    %v3916 = vld [vmem:[#allocation6 + $0x24f0] sm:$0xf]
    %v3917 = vld [vmem:[#allocation6 + $0x24f4] sm:$0xff]
    %v3918 = vld [vmem:[#allocation6 + $0x24fc] sm:$0xff]
    %v3919 = vld [vmem:[#allocation6 + $0x2504] sm:$0xf]
    %v3920 = vld [vmem:[#allocation6 + $0x2508] sm:$0xff]
    %v3921 = vld [vmem:[#allocation6 + $0x2510] sm:$0xff]
    %v3922 = vld [vmem:[#allocation6 + $0x2518] sm:$0xf]
    %v3923 = vld [vmem:[#allocation6 + $0x251c] sm:$0xff]
    %v3924 = vld [vmem:[#allocation6 + $0x2524] sm:$0xff]
    %v3925 = vld [vmem:[#allocation6 + $0x252c] sm:$0xf]
    %v3926 = vld [vmem:[#allocation6 + $0x2530] sm:$0xff]
    %v3927 = vld [vmem:[#allocation6 + $0x2538] sm:$0xff]
    %v3928 = vld [vmem:[#allocation6 + $0x2540] sm:$0xf]
    %v3929 = vld [vmem:[#allocation6 + $0x2544] sm:$0xff]
    %v3930 = vld [vmem:[#allocation6 + $0x254c] sm:$0xff]
    %v3931 = vld [vmem:[#allocation6 + $0x2554] sm:$0xf]
    %v3932 = vld [vmem:[#allocation6 + $0x2558] sm:$0xff]
    %v3933 = vld [vmem:[#allocation6 + $0x2560] sm:$0xff]
    %v3934 = vld [vmem:[#allocation6 + $0x2568] sm:$0xf]
    %v3935 = vld [vmem:[#allocation6 + $0x256c] sm:$0xff]
    %v3936 = vld [vmem:[#allocation6 + $0x2574] sm:$0xff]
    %v3937 = vld [vmem:[#allocation6 + $0x257c] sm:$0xf]
    %v3938 = vld [vmem:[#allocation6 + $0x2580] sm:$0xff]
    %v3939 = vld [vmem:[#allocation6 + $0x2588] sm:$0xff]
    %v3940 = vld [vmem:[#allocation6 + $0x2590] sm:$0xf]
    %v3941 = vld [vmem:[#allocation6 + $0x2594] sm:$0xff]
    %v3942 = vld [vmem:[#allocation6 + $0x259c] sm:$0xff]
    %v3943 = vld [vmem:[#allocation6 + $0x25a4] sm:$0xf]
    %v3944 = vld [vmem:[#allocation6 + $0x25a8] sm:$0xff]
    %v3945 = vld [vmem:[#allocation6 + $0x25b0] sm:$0xff]
    %v3946 = vld [vmem:[#allocation6 + $0x25b8] sm:$0xf]
    %v3947 = vld [vmem:[#allocation6 + $0x25bc] sm:$0xff]
    %v3948 = vld [vmem:[#allocation6 + $0x25c4] sm:$0xff]
    %v3949 = vld [vmem:[#allocation6 + $0x25cc] sm:$0xf]
    %v3950 = vld [vmem:[#allocation6 + $0x25d0] sm:$0xff]
    %v3951 = vld [vmem:[#allocation6 + $0x25d8] sm:$0xff]
    %v3952 = vld [vmem:[#allocation6 + $0x25e0] sm:$0xf]
    %v3953 = vld [vmem:[#allocation6 + $0x25e4] sm:$0xff]
    %v3954 = vld [vmem:[#allocation6 + $0x25ec] sm:$0xff]
    %v3955 = vld [vmem:[#allocation6 + $0x25f4] sm:$0xf]
    %v3956 = vld [vmem:[#allocation6 + $0x25f8] sm:$0xff]
    %v3957 = vld [vmem:[#allocation6 + $0x2600] sm:$0xff]
    %v3958 = vld [vmem:[#allocation6 + $0x2608] sm:$0xf]
    %v3959 = vld [vmem:[#allocation6 + $0x260c] sm:$0xff]
    %v3960 = vld [vmem:[#allocation6 + $0x2614] sm:$0xff]
    %v3961 = vld [vmem:[#allocation6 + $0x261c] sm:$0xf]
    %v3962 = vld [vmem:[#allocation6 + $0x2620] sm:$0xff]
    %v3963 = vld [vmem:[#allocation6 + $0x2628] sm:$0xff]
    %v3964 = vld [vmem:[#allocation6 + $0x2630] sm:$0xf]
    %v3965 = vld [vmem:[#allocation6 + $0x2634] sm:$0xff]
    %v3966 = vld [vmem:[#allocation6 + $0x263c] sm:$0xff]
    %v3967 = vld [vmem:[#allocation6 + $0x2644] sm:$0xf]
    %v3968 = vld [vmem:[#allocation6 + $0x2648] sm:$0xff]
    %v3969 = vld [vmem:[#allocation6 + $0x2650] sm:$0xff]
    %v3970 = vld [vmem:[#allocation6 + $0x2658] sm:$0xf]
    %v3971 = vld [vmem:[#allocation6 + $0x265c] sm:$0xff]
    %v3972 = vld [vmem:[#allocation6 + $0x2664] sm:$0xff]
    %v3973 = vld [vmem:[#allocation6 + $0x266c] sm:$0xf]
    %v3974 = vld [vmem:[#allocation6 + $0x2670] sm:$0xff]
    %v3975 = vld [vmem:[#allocation6 + $0x2678] sm:$0xff]
    %v3976 = vld [vmem:[#allocation6 + $0x2680] sm:$0xf]
    %v3977 = vld [vmem:[#allocation6 + $0x2684] sm:$0xff]
    %v3978 = vld [vmem:[#allocation6 + $0x268c] sm:$0xff]
    %v3979 = vld [vmem:[#allocation6 + $0x2694] sm:$0xf]
    %v3980 = vld [vmem:[#allocation6 + $0x2698] sm:$0xff]
    %v3981 = vld [vmem:[#allocation6 + $0x26a0] sm:$0xff]
    %v3982 = vld [vmem:[#allocation6 + $0x26a8] sm:$0xf]
    %v3983 = vld [vmem:[#allocation6 + $0x26ac] sm:$0xff]
    %v3984 = vld [vmem:[#allocation6 + $0x26b4] sm:$0xff]
    %v3985 = vld [vmem:[#allocation6 + $0x26bc] sm:$0xf]
    %v3986 = vld [vmem:[#allocation6 + $0x26c0] sm:$0xff]
    %v3987 = vld [vmem:[#allocation6 + $0x26c8] sm:$0xff]
    %v3988 = vld [vmem:[#allocation6 + $0x26d0] sm:$0xf]
    %v3989 = vld [vmem:[#allocation6 + $0x26d4] sm:$0xff]
    %v3990 = vld [vmem:[#allocation6 + $0x26dc] sm:$0xff]
    %v3991 = vld [vmem:[#allocation6 + $0x26e4] sm:$0xf]
    %v3992 = vld [vmem:[#allocation6 + $0x26e8] sm:$0xff]
    %v3993 = vld [vmem:[#allocation6 + $0x26f0] sm:$0xff]
    %v3994 = vld [vmem:[#allocation6 + $0x26f8] sm:$0xf]
    %v3995 = vld [vmem:[#allocation6 + $0x26fc] sm:$0xff]
    %v3996 = vld [vmem:[#allocation6 + $0x2704] sm:$0xff]
    %v3997 = vld [vmem:[#allocation6 + $0x270c] sm:$0xf]
    %v3998 = vld [vmem:[#allocation6 + $0x2710] sm:$0xff]
    %v3999 = vld [vmem:[#allocation6 + $0x2718] sm:$0xff]
    %v4000 = vld [vmem:[#allocation6 + $0x2720] sm:$0xf]
    %v4001 = vld [vmem:[#allocation6 + $0x2724] sm:$0xff]
    %v4002 = vld [vmem:[#allocation6 + $0x272c] sm:$0xff]
    %v4003 = vld [vmem:[#allocation6 + $0x2734] sm:$0xf]
    %v4004 = vld [vmem:[#allocation6 + $0x2738] sm:$0xff]
    %v4005 = vld [vmem:[#allocation6 + $0x2740] sm:$0xff]
    %v4006 = vld [vmem:[#allocation6 + $0x2748] sm:$0xf]
    %v4007 = vld [vmem:[#allocation6 + $0x274c] sm:$0xff]
    %v4008 = vld [vmem:[#allocation6 + $0x2754] sm:$0xff]
    %v4009 = vld [vmem:[#allocation6 + $0x275c] sm:$0xf]
    %v4010 = vld [vmem:[#allocation6 + $0x2760] sm:$0xff]
    %v4011 = vld [vmem:[#allocation6 + $0x2768] sm:$0xff]
    %v4012 = vld [vmem:[#allocation6 + $0x2770] sm:$0xf]
    %v4013 = vld [vmem:[#allocation6 + $0x2774] sm:$0xff]
    %v4014 = vld [vmem:[#allocation6 + $0x277c] sm:$0xff]
    %v4015 = vld [vmem:[#allocation6 + $0x2784] sm:$0xf]
    %v4016 = vld [vmem:[#allocation6 + $0x2788] sm:$0xff]
    %v4017 = vld [vmem:[#allocation6 + $0x2790] sm:$0xff]
    %v4018 = vld [vmem:[#allocation6 + $0x2798] sm:$0xf]
    %v4019 = vld [vmem:[#allocation6 + $0x279c] sm:$0xff]
    %v4020 = vld [vmem:[#allocation6 + $0x27a4] sm:$0xff]
    %v4021 = vld [vmem:[#allocation6 + $0x27ac] sm:$0xf]
    %v4022 = vld [vmem:[#allocation6 + $0x27b0] sm:$0xff]
    %v4023 = vld [vmem:[#allocation6 + $0x27b8] sm:$0xff]
    %v4024 = vld [vmem:[#allocation6 + $0x27c0] sm:$0xf]
    %v4025 = vld [vmem:[#allocation6 + $0x27c4] sm:$0xff]
    %v4026 = vld [vmem:[#allocation6 + $0x27cc] sm:$0xff]
    %v4027 = vld [vmem:[#allocation6 + $0x27d4] sm:$0xf]
    %v4028 = vld [vmem:[#allocation6 + $0x27d8] sm:$0xff]
    %v4029 = vld [vmem:[#allocation6 + $0x27e0] sm:$0xff]
    %v4030 = vld [vmem:[#allocation6 + $0x27e8] sm:$0xf]
    %v4031 = vld [vmem:[#allocation6 + $0x27ec] sm:$0xff]
    %v4032 = vld [vmem:[#allocation6 + $0x27f4] sm:$0xff]
    %v4033 = vld [vmem:[#allocation6 + $0x27fc] sm:$0xf]
    %v4034 = vld [vmem:[#allocation7] sm:$0x1f]
    %v4036 = vlaneseq
    %v4037 = vshrl.u32 %v4036, 7
    %v4038 = vsub.s32 0, %v4037
    %v4039 = vrot.slane %v4034, %v4038
    %v4040 = vlaneseq
    %v4041 = vshrl.u32 %v4040, 7
    %v4042 = vsub.s32 1, %v4041
    %v4043 = vrot.slane %v4034, %v4042
    %v4044 = vlaneseq
    %v4045 = vshrl.u32 %v4044, 7
    %v4046 = vsub.s32 2, %v4045
    %v4047 = vrot.slane %v4034, %v4046
    %v4048 = vlaneseq
    %v4049 = vshrl.u32 %v4048, 7
    %v4050 = vsub.s32 3, %v4049
    %v4051 = vrot.slane %v4034, %v4050
    %v4052 = vlaneseq
    %v4053 = vshrl.u32 %v4052, 7
    %v4054 = vsub.s32 4, %v4053
    %v4055 = vrot.slane %v4034, %v4054
    %v5597 = vunpack.c.l.b16 %v2498
    %v5598 = vunpack.c.h.b16 %v2498
    %v5599 = vunpack.c.l.b16 %v2499
    %v5600 = vunpack.c.h.b16 %v2499
    %v5601 = vunpack.c.l.b16 %v2500
    %v5602 = vunpack.c.l.b16 %v2501
    %v5603 = vunpack.c.h.b16 %v2501
    %v5604 = vunpack.c.l.b16 %v2502
    %v5605 = vunpack.c.h.b16 %v2502
    %v5606 = vunpack.c.l.b16 %v2503
    %v5607 = vunpack.c.l.b16 %v2504
    %v5608 = vunpack.c.h.b16 %v2504
    %v5609 = vunpack.c.l.b16 %v2505
    %v5610 = vunpack.c.h.b16 %v2505
    %v5611 = vunpack.c.l.b16 %v2506
    %v5612 = vunpack.c.l.b16 %v2507
    %v5613 = vunpack.c.h.b16 %v2507
    %v5614 = vunpack.c.l.b16 %v2508
    %v5615 = vunpack.c.h.b16 %v2508
    %v5616 = vunpack.c.l.b16 %v2509
    %v5617 = vunpack.c.l.b16 %v2510
    %v5618 = vunpack.c.h.b16 %v2510
    %v5619 = vunpack.c.l.b16 %v2511
    %v5620 = vunpack.c.h.b16 %v2511
    %v5621 = vunpack.c.l.b16 %v2512
    %v5622 = vunpack.c.l.b16 %v2513
    %v5623 = vunpack.c.h.b16 %v2513
    %v5624 = vunpack.c.l.b16 %v2514
    %v5625 = vunpack.c.h.b16 %v2514
    %v5626 = vunpack.c.l.b16 %v2515
    %v5627 = vunpack.c.l.b16 %v2516
    %v5628 = vunpack.c.h.b16 %v2516
    %v5629 = vunpack.c.l.b16 %v2517
    %v5630 = vunpack.c.h.b16 %v2517
    %v5631 = vunpack.c.l.b16 %v2518
    %v5632 = vunpack.c.l.b16 %v2519
    %v5633 = vunpack.c.h.b16 %v2519
    %v5634 = vunpack.c.l.b16 %v2520
    %v5635 = vunpack.c.h.b16 %v2520
    %v5636 = vunpack.c.l.b16 %v2521
    %v5637 = vunpack.c.l.b16 %v2522
    %v5638 = vunpack.c.h.b16 %v2522
    %v5639 = vunpack.c.l.b16 %v2523
    %v5640 = vunpack.c.h.b16 %v2523
    %v5641 = vunpack.c.l.b16 %v2524
    %v5642 = vunpack.c.l.b16 %v2525
    %v5643 = vunpack.c.h.b16 %v2525
    %v5644 = vunpack.c.l.b16 %v2526
    %v5645 = vunpack.c.h.b16 %v2526
    %v5646 = vunpack.c.l.b16 %v2527
    %v5647 = vunpack.c.l.b16 %v2528
    %v5648 = vunpack.c.h.b16 %v2528
    %v5649 = vunpack.c.l.b16 %v2529
    %v5650 = vunpack.c.h.b16 %v2529
    %v5651 = vunpack.c.l.b16 %v2530
    %v5652 = vunpack.c.l.b16 %v2531
    %v5653 = vunpack.c.h.b16 %v2531
    %v5654 = vunpack.c.l.b16 %v2532
    %v5655 = vunpack.c.h.b16 %v2532
    %v5656 = vunpack.c.l.b16 %v2533
    %v5657 = vunpack.c.l.b16 %v2534
    %v5658 = vunpack.c.h.b16 %v2534
    %v5659 = vunpack.c.l.b16 %v2535
    %v5660 = vunpack.c.h.b16 %v2535
    %v5661 = vunpack.c.l.b16 %v2536
    %v5662 = vunpack.c.l.b16 %v2537
    %v5663 = vunpack.c.h.b16 %v2537
    %v5664 = vunpack.c.l.b16 %v2538
    %v5665 = vunpack.c.h.b16 %v2538
    %v5666 = vunpack.c.l.b16 %v2539
    %v5667 = vunpack.c.l.b16 %v2540
    %v5668 = vunpack.c.h.b16 %v2540
    %v5669 = vunpack.c.l.b16 %v2541
    %v5670 = vunpack.c.h.b16 %v2541
    %v5671 = vunpack.c.l.b16 %v2542
    %v5672 = vunpack.c.l.b16 %v2543
    %v5673 = vunpack.c.h.b16 %v2543
    %v5674 = vunpack.c.l.b16 %v2544
    %v5675 = vunpack.c.h.b16 %v2544
    %v5676 = vunpack.c.l.b16 %v2545
    %v5677 = vunpack.c.l.b16 %v2546
    %v5678 = vunpack.c.h.b16 %v2546
    %v5679 = vunpack.c.l.b16 %v2547
    %v5680 = vunpack.c.h.b16 %v2547
    %v5681 = vunpack.c.l.b16 %v2548
    %v5682 = vunpack.c.l.b16 %v2549
    %v5683 = vunpack.c.h.b16 %v2549
    %v5684 = vunpack.c.l.b16 %v2550
    %v5685 = vunpack.c.h.b16 %v2550
    %v5686 = vunpack.c.l.b16 %v2551
    %v5687 = vunpack.c.l.b16 %v2552
    %v5688 = vunpack.c.h.b16 %v2552
    %v5689 = vunpack.c.l.b16 %v2553
    %v5690 = vunpack.c.h.b16 %v2553
    %v5691 = vunpack.c.l.b16 %v2554
    %v5692 = vunpack.c.l.b16 %v2555
    %v5693 = vunpack.c.h.b16 %v2555
    %v5694 = vunpack.c.l.b16 %v2556
    %v5695 = vunpack.c.h.b16 %v2556
    %v5696 = vunpack.c.l.b16 %v2557
    %v5697 = vunpack.c.l.b16 %v2558
    %v5698 = vunpack.c.h.b16 %v2558
    %v5699 = vunpack.c.l.b16 %v2559
    %v5700 = vunpack.c.h.b16 %v2559
    %v5701 = vunpack.c.l.b16 %v2560
    %v5702 = vunpack.c.l.b16 %v2561
    %v5703 = vunpack.c.h.b16 %v2561
    %v5704 = vunpack.c.l.b16 %v2562
    %v5705 = vunpack.c.h.b16 %v2562
    %v5706 = vunpack.c.l.b16 %v2563
    %v5707 = vunpack.c.l.b16 %v2564
    %v5708 = vunpack.c.h.b16 %v2564
    %v5709 = vunpack.c.l.b16 %v2565
    %v5710 = vunpack.c.h.b16 %v2565
    %v5711 = vunpack.c.l.b16 %v2566
    %v5712 = vunpack.c.l.b16 %v2567
    %v5713 = vunpack.c.h.b16 %v2567
    %v5714 = vunpack.c.l.b16 %v2568
    %v5715 = vunpack.c.h.b16 %v2568
    %v5716 = vunpack.c.l.b16 %v2569
    %v5717 = vunpack.c.l.b16 %v2570
    %v5718 = vunpack.c.h.b16 %v2570
    %v5719 = vunpack.c.l.b16 %v2571
    %v5720 = vunpack.c.h.b16 %v2571
    %v5721 = vunpack.c.l.b16 %v2572
    %v5722 = vunpack.c.l.b16 %v2573
    %v5723 = vunpack.c.h.b16 %v2573
    %v5724 = vunpack.c.l.b16 %v2574
    %v5725 = vunpack.c.h.b16 %v2574
    %v5726 = vunpack.c.l.b16 %v2575
    %v5727 = vunpack.c.l.b16 %v2576
    %v5728 = vunpack.c.h.b16 %v2576
    %v5729 = vunpack.c.l.b16 %v2577
    %v5730 = vunpack.c.h.b16 %v2577
    %v5731 = vunpack.c.l.b16 %v2578
    %v5732 = vunpack.c.l.b16 %v2579
    %v5733 = vunpack.c.h.b16 %v2579
    %v5734 = vunpack.c.l.b16 %v2580
    %v5735 = vunpack.c.h.b16 %v2580
    %v5736 = vunpack.c.l.b16 %v2581
    %v5737 = vunpack.c.l.b16 %v2582
    %v5738 = vunpack.c.h.b16 %v2582
    %v5739 = vunpack.c.l.b16 %v2583
    %v5740 = vunpack.c.h.b16 %v2583
    %v5741 = vunpack.c.l.b16 %v2584
    %v5742 = vunpack.c.l.b16 %v2585
    %v5743 = vunpack.c.h.b16 %v2585
    %v5744 = vunpack.c.l.b16 %v2586
    %v5745 = vunpack.c.h.b16 %v2586
    %v5746 = vunpack.c.l.b16 %v2587
    %v5747 = vunpack.c.l.b16 %v2588
    %v5748 = vunpack.c.h.b16 %v2588
    %v5749 = vunpack.c.l.b16 %v2589
    %v5750 = vunpack.c.h.b16 %v2589
    %v5751 = vunpack.c.l.b16 %v2590
    %v5752 = vunpack.c.l.b16 %v2591
    %v5753 = vunpack.c.h.b16 %v2591
    %v5754 = vunpack.c.l.b16 %v2592
    %v5755 = vunpack.c.h.b16 %v2592
    %v5756 = vunpack.c.l.b16 %v2593
    %v5757 = vunpack.c.l.b16 %v2594
    %v5758 = vunpack.c.h.b16 %v2594
    %v5759 = vunpack.c.l.b16 %v2595
    %v5760 = vunpack.c.h.b16 %v2595
    %v5761 = vunpack.c.l.b16 %v2596
    %v5762 = vunpack.c.l.b16 %v2597
    %v5763 = vunpack.c.h.b16 %v2597
    %v5764 = vunpack.c.l.b16 %v2598
    %v5765 = vunpack.c.h.b16 %v2598
    %v5766 = vunpack.c.l.b16 %v2599
    %v5767 = vunpack.c.l.b16 %v2600
    %v5768 = vunpack.c.h.b16 %v2600
    %v5769 = vunpack.c.l.b16 %v2601
    %v5770 = vunpack.c.h.b16 %v2601
    %v5771 = vunpack.c.l.b16 %v2602
    %v5772 = vunpack.c.l.b16 %v2603
    %v5773 = vunpack.c.h.b16 %v2603
    %v5774 = vunpack.c.l.b16 %v2604
    %v5775 = vunpack.c.h.b16 %v2604
    %v5776 = vunpack.c.l.b16 %v2605
    %v5777 = vunpack.c.l.b16 %v2606
    %v5778 = vunpack.c.h.b16 %v2606
    %v5779 = vunpack.c.l.b16 %v2607
    %v5780 = vunpack.c.h.b16 %v2607
    %v5781 = vunpack.c.l.b16 %v2608
    %v5782 = vunpack.c.l.b16 %v2609
    %v5783 = vunpack.c.h.b16 %v2609
    %v5784 = vunpack.c.l.b16 %v2610
    %v5785 = vunpack.c.h.b16 %v2610
    %v5786 = vunpack.c.l.b16 %v2611
    %v5787 = vunpack.c.l.b16 %v2612
    %v5788 = vunpack.c.h.b16 %v2612
    %v5789 = vunpack.c.l.b16 %v2613
    %v5790 = vunpack.c.h.b16 %v2613
    %v5791 = vunpack.c.l.b16 %v2614
    %v5792 = vunpack.c.l.b16 %v2615
    %v5793 = vunpack.c.h.b16 %v2615
    %v5794 = vunpack.c.l.b16 %v2616
    %v5795 = vunpack.c.h.b16 %v2616
    %v5796 = vunpack.c.l.b16 %v2617
    %v5797 = vunpack.c.l.b16 %v2618
    %v5798 = vunpack.c.h.b16 %v2618
    %v5799 = vunpack.c.l.b16 %v2619
    %v5800 = vunpack.c.h.b16 %v2619
    %v5801 = vunpack.c.l.b16 %v2620
    %v5802 = vunpack.c.l.b16 %v2621
    %v5803 = vunpack.c.h.b16 %v2621
    %v5804 = vunpack.c.l.b16 %v2622
    %v5805 = vunpack.c.h.b16 %v2622
    %v5806 = vunpack.c.l.b16 %v2623
    %v5807 = vunpack.c.l.b16 %v2624
    %v5808 = vunpack.c.h.b16 %v2624
    %v5809 = vunpack.c.l.b16 %v2625
    %v5810 = vunpack.c.h.b16 %v2625
    %v5811 = vunpack.c.l.b16 %v2626
    %v5812 = vunpack.c.l.b16 %v2627
    %v5813 = vunpack.c.h.b16 %v2627
    %v5814 = vunpack.c.l.b16 %v2628
    %v5815 = vunpack.c.h.b16 %v2628
    %v5816 = vunpack.c.l.b16 %v2629
    %v5817 = vunpack.c.l.b16 %v2630
    %v5818 = vunpack.c.h.b16 %v2630
    %v5819 = vunpack.c.l.b16 %v2631
    %v5820 = vunpack.c.h.b16 %v2631
    %v5821 = vunpack.c.l.b16 %v2632
    %v5822 = vunpack.c.l.b16 %v2633
    %v5823 = vunpack.c.h.b16 %v2633
    %v5824 = vunpack.c.l.b16 %v2634
    %v5825 = vunpack.c.h.b16 %v2634
    %v5826 = vunpack.c.l.b16 %v2635
    %v5827 = vunpack.c.l.b16 %v2636
    %v5828 = vunpack.c.h.b16 %v2636
    %v5829 = vunpack.c.l.b16 %v2637
    %v5830 = vunpack.c.h.b16 %v2637
    %v5831 = vunpack.c.l.b16 %v2638
    %v5832 = vunpack.c.l.b16 %v2639
    %v5833 = vunpack.c.h.b16 %v2639
    %v5834 = vunpack.c.l.b16 %v2640
    %v5835 = vunpack.c.h.b16 %v2640
    %v5836 = vunpack.c.l.b16 %v2641
    %v5837 = vunpack.c.l.b16 %v2642
    %v5838 = vunpack.c.h.b16 %v2642
    %v5839 = vunpack.c.l.b16 %v2643
    %v5840 = vunpack.c.h.b16 %v2643
    %v5841 = vunpack.c.l.b16 %v2644
    %v5842 = vunpack.c.l.b16 %v2645
    %v5843 = vunpack.c.h.b16 %v2645
    %v5844 = vunpack.c.l.b16 %v2646
    %v5845 = vunpack.c.h.b16 %v2646
    %v5846 = vunpack.c.l.b16 %v2647
    %v5847 = vunpack.c.l.b16 %v2648
    %v5848 = vunpack.c.h.b16 %v2648
    %v5849 = vunpack.c.l.b16 %v2649
    %v5850 = vunpack.c.h.b16 %v2649
    %v5851 = vunpack.c.l.b16 %v2650
    %v5852 = vunpack.c.l.b16 %v2651
    %v5853 = vunpack.c.h.b16 %v2651
    %v5854 = vunpack.c.l.b16 %v2652
    %v5855 = vunpack.c.h.b16 %v2652
    %v5856 = vunpack.c.l.b16 %v2653
    %v5857 = vunpack.c.l.b16 %v2654
    %v5858 = vunpack.c.h.b16 %v2654
    %v5859 = vunpack.c.l.b16 %v2655
    %v5860 = vunpack.c.h.b16 %v2655
    %v5861 = vunpack.c.l.b16 %v2656
    %v5862 = vunpack.c.l.b16 %v2657
    %v5863 = vunpack.c.h.b16 %v2657
    %v5864 = vunpack.c.l.b16 %v2658
    %v5865 = vunpack.c.h.b16 %v2658
    %v5866 = vunpack.c.l.b16 %v2659
    %v5867 = vunpack.c.l.b16 %v2660
    %v5868 = vunpack.c.h.b16 %v2660
    %v5869 = vunpack.c.l.b16 %v2661
    %v5870 = vunpack.c.h.b16 %v2661
    %v5871 = vunpack.c.l.b16 %v2662
    %v5872 = vunpack.c.l.b16 %v2663
    %v5873 = vunpack.c.h.b16 %v2663
    %v5874 = vunpack.c.l.b16 %v2664
    %v5875 = vunpack.c.h.b16 %v2664
    %v5876 = vunpack.c.l.b16 %v2665
    %v5877 = vunpack.c.l.b16 %v2666
    %v5878 = vunpack.c.h.b16 %v2666
    %v5879 = vunpack.c.l.b16 %v2667
    %v5880 = vunpack.c.h.b16 %v2667
    %v5881 = vunpack.c.l.b16 %v2668
    %v5882 = vunpack.c.l.b16 %v2669
    %v5883 = vunpack.c.h.b16 %v2669
    %v5884 = vunpack.c.l.b16 %v2670
    %v5885 = vunpack.c.h.b16 %v2670
    %v5886 = vunpack.c.l.b16 %v2671
    %v5887 = vunpack.c.l.b16 %v2672
    %v5888 = vunpack.c.h.b16 %v2672
    %v5889 = vunpack.c.l.b16 %v2673
    %v5890 = vunpack.c.h.b16 %v2673
    %v5891 = vunpack.c.l.b16 %v2674
    %v5892 = vunpack.c.l.b16 %v2675
    %v5893 = vunpack.c.h.b16 %v2675
    %v5894 = vunpack.c.l.b16 %v2676
    %v5895 = vunpack.c.h.b16 %v2676
    %v5896 = vunpack.c.l.b16 %v2677
    %v5897 = vunpack.c.l.b16 %v2678
    %v5898 = vunpack.c.h.b16 %v2678
    %v5899 = vunpack.c.l.b16 %v2679
    %v5900 = vunpack.c.h.b16 %v2679
    %v5901 = vunpack.c.l.b16 %v2680
    %v5902 = vunpack.c.l.b16 %v2681
    %v5903 = vunpack.c.h.b16 %v2681
    %v5904 = vunpack.c.l.b16 %v2682
    %v5905 = vunpack.c.h.b16 %v2682
    %v5906 = vunpack.c.l.b16 %v2683
    %v5907 = vunpack.c.l.b16 %v2684
    %v5908 = vunpack.c.h.b16 %v2684
    %v5909 = vunpack.c.l.b16 %v2685
    %v5910 = vunpack.c.h.b16 %v2685
    %v5911 = vunpack.c.l.b16 %v2686
    %v5912 = vunpack.c.l.b16 %v2687
    %v5913 = vunpack.c.h.b16 %v2687
    %v5914 = vunpack.c.l.b16 %v2688
    %v5915 = vunpack.c.h.b16 %v2688
    %v5916 = vunpack.c.l.b16 %v2689
    %v5917 = vunpack.c.l.b16 %v2690
    %v5918 = vunpack.c.h.b16 %v2690
    %v5919 = vunpack.c.l.b16 %v2691
    %v5920 = vunpack.c.h.b16 %v2691
    %v5921 = vunpack.c.l.b16 %v2692
    %v5922 = vunpack.c.l.b16 %v2693
    %v5923 = vunpack.c.h.b16 %v2693
    %v5924 = vunpack.c.l.b16 %v2694
    %v5925 = vunpack.c.h.b16 %v2694
    %v5926 = vunpack.c.l.b16 %v2695
    %v5927 = vunpack.c.l.b16 %v2696
    %v5928 = vunpack.c.h.b16 %v2696
    %v5929 = vunpack.c.l.b16 %v2697
    %v5930 = vunpack.c.h.b16 %v2697
    %v5931 = vunpack.c.l.b16 %v2698
    %v5932 = vunpack.c.l.b16 %v2699
    %v5933 = vunpack.c.h.b16 %v2699
    %v5934 = vunpack.c.l.b16 %v2700
    %v5935 = vunpack.c.h.b16 %v2700
    %v5936 = vunpack.c.l.b16 %v2701
    %v5937 = vunpack.c.l.b16 %v2702
    %v5938 = vunpack.c.h.b16 %v2702
    %v5939 = vunpack.c.l.b16 %v2703
    %v5940 = vunpack.c.h.b16 %v2703
    %v5941 = vunpack.c.l.b16 %v2704
    %v5942 = vunpack.c.l.b16 %v2705
    %v5943 = vunpack.c.h.b16 %v2705
    %v5944 = vunpack.c.l.b16 %v2706
    %v5945 = vunpack.c.h.b16 %v2706
    %v5946 = vunpack.c.l.b16 %v2707
    %v5947 = vunpack.c.l.b16 %v2708
    %v5948 = vunpack.c.h.b16 %v2708
    %v5949 = vunpack.c.l.b16 %v2709
    %v5950 = vunpack.c.h.b16 %v2709
    %v5951 = vunpack.c.l.b16 %v2710
    %v5952 = vunpack.c.l.b16 %v2711
    %v5953 = vunpack.c.h.b16 %v2711
    %v5954 = vunpack.c.l.b16 %v2712
    %v5955 = vunpack.c.h.b16 %v2712
    %v5956 = vunpack.c.l.b16 %v2713
    %v5957 = vunpack.c.l.b16 %v2714
    %v5958 = vunpack.c.h.b16 %v2714
    %v5959 = vunpack.c.l.b16 %v2715
    %v5960 = vunpack.c.h.b16 %v2715
    %v5961 = vunpack.c.l.b16 %v2716
    %v5962 = vunpack.c.l.b16 %v2717
    %v5963 = vunpack.c.h.b16 %v2717
    %v5964 = vunpack.c.l.b16 %v2718
    %v5965 = vunpack.c.h.b16 %v2718
    %v5966 = vunpack.c.l.b16 %v2719
    %v5967 = vunpack.c.l.b16 %v2720
    %v5968 = vunpack.c.h.b16 %v2720
    %v5969 = vunpack.c.l.b16 %v2721
    %v5970 = vunpack.c.h.b16 %v2721
    %v5971 = vunpack.c.l.b16 %v2722
    %v5972 = vunpack.c.l.b16 %v2723
    %v5973 = vunpack.c.h.b16 %v2723
    %v5974 = vunpack.c.l.b16 %v2724
    %v5975 = vunpack.c.h.b16 %v2724
    %v5976 = vunpack.c.l.b16 %v2725
    %v5977 = vunpack.c.l.b16 %v2726
    %v5978 = vunpack.c.h.b16 %v2726
    %v5979 = vunpack.c.l.b16 %v2727
    %v5980 = vunpack.c.h.b16 %v2727
    %v5981 = vunpack.c.l.b16 %v2728
    %v5982 = vunpack.c.l.b16 %v2729
    %v5983 = vunpack.c.h.b16 %v2729
    %v5984 = vunpack.c.l.b16 %v2730
    %v5985 = vunpack.c.h.b16 %v2730
    %v5986 = vunpack.c.l.b16 %v2731
    %v5987 = vunpack.c.l.b16 %v2732
    %v5988 = vunpack.c.h.b16 %v2732
    %v5989 = vunpack.c.l.b16 %v2733
    %v5990 = vunpack.c.h.b16 %v2733
    %v5991 = vunpack.c.l.b16 %v2734
    %v5992 = vunpack.c.l.b16 %v2735
    %v5993 = vunpack.c.h.b16 %v2735
    %v5994 = vunpack.c.l.b16 %v2736
    %v5995 = vunpack.c.h.b16 %v2736
    %v5996 = vunpack.c.l.b16 %v2737
    %v5997 = vunpack.c.l.b16 %v2738
    %v5998 = vunpack.c.h.b16 %v2738
    %v5999 = vunpack.c.l.b16 %v2739
    %v6000 = vunpack.c.h.b16 %v2739
    %v6001 = vunpack.c.l.b16 %v2740
    %v6002 = vunpack.c.l.b16 %v2741
    %v6003 = vunpack.c.h.b16 %v2741
    %v6004 = vunpack.c.l.b16 %v2742
    %v6005 = vunpack.c.h.b16 %v2742
    %v6006 = vunpack.c.l.b16 %v2743
    %v6007 = vunpack.c.l.b16 %v2744
    %v6008 = vunpack.c.h.b16 %v2744
    %v6009 = vunpack.c.l.b16 %v2745
    %v6010 = vunpack.c.h.b16 %v2745
    %v6011 = vunpack.c.l.b16 %v2746
    %v6012 = vunpack.c.l.b16 %v2747
    %v6013 = vunpack.c.h.b16 %v2747
    %v6014 = vunpack.c.l.b16 %v2748
    %v6015 = vunpack.c.h.b16 %v2748
    %v6016 = vunpack.c.l.b16 %v2749
    %v6017 = vunpack.c.l.b16 %v2750
    %v6018 = vunpack.c.h.b16 %v2750
    %v6019 = vunpack.c.l.b16 %v2751
    %v6020 = vunpack.c.h.b16 %v2751
    %v6021 = vunpack.c.l.b16 %v2752
    %v6022 = vunpack.c.l.b16 %v2753
    %v6023 = vunpack.c.h.b16 %v2753
    %v6024 = vunpack.c.l.b16 %v2754
    %v6025 = vunpack.c.h.b16 %v2754
    %v6026 = vunpack.c.l.b16 %v2755
    %v6027 = vunpack.c.l.b16 %v2756
    %v6028 = vunpack.c.h.b16 %v2756
    %v6029 = vunpack.c.l.b16 %v2757
    %v6030 = vunpack.c.h.b16 %v2757
    %v6031 = vunpack.c.l.b16 %v2758
    %v6032 = vunpack.c.l.b16 %v2759
    %v6033 = vunpack.c.h.b16 %v2759
    %v6034 = vunpack.c.l.b16 %v2760
    %v6035 = vunpack.c.h.b16 %v2760
    %v6036 = vunpack.c.l.b16 %v2761
    %v6037 = vunpack.c.l.b16 %v2762
    %v6038 = vunpack.c.h.b16 %v2762
    %v6039 = vunpack.c.l.b16 %v2763
    %v6040 = vunpack.c.h.b16 %v2763
    %v6041 = vunpack.c.l.b16 %v2764
    %v6042 = vunpack.c.l.b16 %v2765
    %v6043 = vunpack.c.h.b16 %v2765
    %v6044 = vunpack.c.l.b16 %v2766
    %v6045 = vunpack.c.h.b16 %v2766
    %v6046 = vunpack.c.l.b16 %v2767
    %v6047 = vunpack.c.l.b16 %v2768
    %v6048 = vunpack.c.h.b16 %v2768
    %v6049 = vunpack.c.l.b16 %v2769
    %v6050 = vunpack.c.h.b16 %v2769
    %v6051 = vunpack.c.l.b16 %v2770
    %v6052 = vunpack.c.l.b16 %v2771
    %v6053 = vunpack.c.h.b16 %v2771
    %v6054 = vunpack.c.l.b16 %v2772
    %v6055 = vunpack.c.h.b16 %v2772
    %v6056 = vunpack.c.l.b16 %v2773
    %v6057 = vunpack.c.l.b16 %v2774
    %v6058 = vunpack.c.h.b16 %v2774
    %v6059 = vunpack.c.l.b16 %v2775
    %v6060 = vunpack.c.h.b16 %v2775
    %v6061 = vunpack.c.l.b16 %v2776
    %v6062 = vunpack.c.l.b16 %v2777
    %v6063 = vunpack.c.h.b16 %v2777
    %v6064 = vunpack.c.l.b16 %v2778
    %v6065 = vunpack.c.h.b16 %v2778
    %v6066 = vunpack.c.l.b16 %v2779
    %v6067 = vunpack.c.l.b16 %v2780
    %v6068 = vunpack.c.h.b16 %v2780
    %v6069 = vunpack.c.l.b16 %v2781
    %v6070 = vunpack.c.h.b16 %v2781
    %v6071 = vunpack.c.l.b16 %v2782
    %v6072 = vunpack.c.l.b16 %v2783
    %v6073 = vunpack.c.h.b16 %v2783
    %v6074 = vunpack.c.l.b16 %v2784
    %v6075 = vunpack.c.h.b16 %v2784
    %v6076 = vunpack.c.l.b16 %v2785
    %v6077 = vunpack.c.l.b16 %v2786
    %v6078 = vunpack.c.h.b16 %v2786
    %v6079 = vunpack.c.l.b16 %v2787
    %v6080 = vunpack.c.h.b16 %v2787
    %v6081 = vunpack.c.l.b16 %v2788
    %v6082 = vunpack.c.l.b16 %v2789
    %v6083 = vunpack.c.h.b16 %v2789
    %v6084 = vunpack.c.l.b16 %v2790
    %v6085 = vunpack.c.h.b16 %v2790
    %v6086 = vunpack.c.l.b16 %v2791
    %v6087 = vunpack.c.l.b16 %v2792
    %v6088 = vunpack.c.h.b16 %v2792
    %v6089 = vunpack.c.l.b16 %v2793
    %v6090 = vunpack.c.h.b16 %v2793
    %v6091 = vunpack.c.l.b16 %v2794
    %v6092 = vunpack.c.l.b16 %v2795
    %v6093 = vunpack.c.h.b16 %v2795
    %v6094 = vunpack.c.l.b16 %v2796
    %v6095 = vunpack.c.h.b16 %v2796
    %v6096 = vunpack.c.l.b16 %v2797
    %v6097 = vunpack.c.l.b16 %v2798
    %v6098 = vunpack.c.h.b16 %v2798
    %v6099 = vunpack.c.l.b16 %v2799
    %v6100 = vunpack.c.h.b16 %v2799
    %v6101 = vunpack.c.l.b16 %v2800
    %v6102 = vunpack.c.l.b16 %v2801
    %v6103 = vunpack.c.h.b16 %v2801
    %v6104 = vunpack.c.l.b16 %v2802
    %v6105 = vunpack.c.h.b16 %v2802
    %v6106 = vunpack.c.l.b16 %v2803
    %v6107 = vunpack.c.l.b16 %v2804
    %v6108 = vunpack.c.h.b16 %v2804
    %v6109 = vunpack.c.l.b16 %v2805
    %v6110 = vunpack.c.h.b16 %v2805
    %v6111 = vunpack.c.l.b16 %v2806
    %v6112 = vunpack.c.l.b16 %v2807
    %v6113 = vunpack.c.h.b16 %v2807
    %v6114 = vunpack.c.l.b16 %v2808
    %v6115 = vunpack.c.h.b16 %v2808
    %v6116 = vunpack.c.l.b16 %v2809
    %v6117 = vunpack.c.l.b16 %v2810
    %v6118 = vunpack.c.h.b16 %v2810
    %v6119 = vunpack.c.l.b16 %v2811
    %v6120 = vunpack.c.h.b16 %v2811
    %v6121 = vunpack.c.l.b16 %v2812
    %v6122 = vunpack.c.l.b16 %v2813
    %v6123 = vunpack.c.h.b16 %v2813
    %v6124 = vunpack.c.l.b16 %v2814
    %v6125 = vunpack.c.h.b16 %v2814
    %v6126 = vunpack.c.l.b16 %v2815
    %v6127 = vunpack.c.l.b16 %v2816
    %v6128 = vunpack.c.h.b16 %v2816
    %v6129 = vunpack.c.l.b16 %v2817
    %v6130 = vunpack.c.h.b16 %v2817
    %v6131 = vunpack.c.l.b16 %v2818
    %v6132 = vunpack.c.l.b16 %v2819
    %v6133 = vunpack.c.h.b16 %v2819
    %v6134 = vunpack.c.l.b16 %v2820
    %v6135 = vunpack.c.h.b16 %v2820
    %v6136 = vunpack.c.l.b16 %v2821
    %v6137 = vunpack.c.l.b16 %v2822
    %v6138 = vunpack.c.h.b16 %v2822
    %v6139 = vunpack.c.l.b16 %v2823
    %v6140 = vunpack.c.h.b16 %v2823
    %v6141 = vunpack.c.l.b16 %v2824
    %v6142 = vunpack.c.l.b16 %v2825
    %v6143 = vunpack.c.h.b16 %v2825
    %v6144 = vunpack.c.l.b16 %v2826
    %v6145 = vunpack.c.h.b16 %v2826
    %v6146 = vunpack.c.l.b16 %v2827
    %v6147 = vunpack.c.l.b16 %v2828
    %v6148 = vunpack.c.h.b16 %v2828
    %v6149 = vunpack.c.l.b16 %v2829
    %v6150 = vunpack.c.h.b16 %v2829
    %v6151 = vunpack.c.l.b16 %v2830
    %v6152 = vunpack.c.l.b16 %v2831
    %v6153 = vunpack.c.h.b16 %v2831
    %v6154 = vunpack.c.l.b16 %v2832
    %v6155 = vunpack.c.h.b16 %v2832
    %v6156 = vunpack.c.l.b16 %v2833
    %v6157 = vunpack.c.l.b16 %v2834
    %v6158 = vunpack.c.h.b16 %v2834
    %v6159 = vunpack.c.l.b16 %v2835
    %v6160 = vunpack.c.h.b16 %v2835
    %v6161 = vunpack.c.l.b16 %v2836
    %v6162 = vunpack.c.l.b16 %v2837
    %v6163 = vunpack.c.h.b16 %v2837
    %v6164 = vunpack.c.l.b16 %v2838
    %v6165 = vunpack.c.h.b16 %v2838
    %v6166 = vunpack.c.l.b16 %v2839
    %v6167 = vunpack.c.l.b16 %v2840
    %v6168 = vunpack.c.h.b16 %v2840
    %v6169 = vunpack.c.l.b16 %v2841
    %v6170 = vunpack.c.h.b16 %v2841
    %v6171 = vunpack.c.l.b16 %v2842
    %v6172 = vunpack.c.l.b16 %v2843
    %v6173 = vunpack.c.h.b16 %v2843
    %v6174 = vunpack.c.l.b16 %v2844
    %v6175 = vunpack.c.h.b16 %v2844
    %v6176 = vunpack.c.l.b16 %v2845
    %v6177 = vunpack.c.l.b16 %v2846
    %v6178 = vunpack.c.h.b16 %v2846
    %v6179 = vunpack.c.l.b16 %v2847
    %v6180 = vunpack.c.h.b16 %v2847
    %v6181 = vunpack.c.l.b16 %v2848
    %v6182 = vunpack.c.l.b16 %v2849
    %v6183 = vunpack.c.h.b16 %v2849
    %v6184 = vunpack.c.l.b16 %v2850
    %v6185 = vunpack.c.h.b16 %v2850
    %v6186 = vunpack.c.l.b16 %v2851
    %v6187 = vunpack.c.l.b16 %v2852
    %v6188 = vunpack.c.h.b16 %v2852
    %v6189 = vunpack.c.l.b16 %v2853
    %v6190 = vunpack.c.h.b16 %v2853
    %v6191 = vunpack.c.l.b16 %v2854
    %v6192 = vunpack.c.l.b16 %v2855
    %v6193 = vunpack.c.h.b16 %v2855
    %v6194 = vunpack.c.l.b16 %v2856
    %v6195 = vunpack.c.h.b16 %v2856
    %v6196 = vunpack.c.l.b16 %v2857
    %v6197 = vunpack.c.l.b16 %v2858
    %v6198 = vunpack.c.h.b16 %v2858
    %v6199 = vunpack.c.l.b16 %v2859
    %v6200 = vunpack.c.h.b16 %v2859
    %v6201 = vunpack.c.l.b16 %v2860
    %v6202 = vunpack.c.l.b16 %v2861
    %v6203 = vunpack.c.h.b16 %v2861
    %v6204 = vunpack.c.l.b16 %v2862
    %v6205 = vunpack.c.h.b16 %v2862
    %v6206 = vunpack.c.l.b16 %v2863
    %v6207 = vunpack.c.l.b16 %v2864
    %v6208 = vunpack.c.h.b16 %v2864
    %v6209 = vunpack.c.l.b16 %v2865
    %v6210 = vunpack.c.h.b16 %v2865
    %v6211 = vunpack.c.l.b16 %v2866
    %v6212 = vunpack.c.l.b16 %v2867
    %v6213 = vunpack.c.h.b16 %v2867
    %v6214 = vunpack.c.l.b16 %v2868
    %v6215 = vunpack.c.h.b16 %v2868
    %v6216 = vunpack.c.l.b16 %v2869
    %v6217 = vunpack.c.l.b16 %v2870
    %v6218 = vunpack.c.h.b16 %v2870
    %v6219 = vunpack.c.l.b16 %v2871
    %v6220 = vunpack.c.h.b16 %v2871
    %v6221 = vunpack.c.l.b16 %v2872
    %v6222 = vunpack.c.l.b16 %v2873
    %v6223 = vunpack.c.h.b16 %v2873
    %v6224 = vunpack.c.l.b16 %v2874
    %v6225 = vunpack.c.h.b16 %v2874
    %v6226 = vunpack.c.l.b16 %v2875
    %v6227 = vunpack.c.l.b16 %v2876
    %v6228 = vunpack.c.h.b16 %v2876
    %v6229 = vunpack.c.l.b16 %v2877
    %v6230 = vunpack.c.h.b16 %v2877
    %v6231 = vunpack.c.l.b16 %v2878
    %v6232 = vunpack.c.l.b16 %v2879
    %v6233 = vunpack.c.h.b16 %v2879
    %v6234 = vunpack.c.l.b16 %v2880
    %v6235 = vunpack.c.h.b16 %v2880
    %v6236 = vunpack.c.l.b16 %v2881
    %v6237 = vunpack.c.l.b16 %v2882
    %v6238 = vunpack.c.h.b16 %v2882
    %v6239 = vunpack.c.l.b16 %v2883
    %v6240 = vunpack.c.h.b16 %v2883
    %v6241 = vunpack.c.l.b16 %v2884
    %v6242 = vunpack.c.l.b16 %v2885
    %v6243 = vunpack.c.h.b16 %v2885
    %v6244 = vunpack.c.l.b16 %v2886
    %v6245 = vunpack.c.h.b16 %v2886
    %v6246 = vunpack.c.l.b16 %v2887
    %v6247 = vunpack.c.l.b16 %v2888
    %v6248 = vunpack.c.h.b16 %v2888
    %v6249 = vunpack.c.l.b16 %v2889
    %v6250 = vunpack.c.h.b16 %v2889
    %v6251 = vunpack.c.l.b16 %v2890
    %v6252 = vunpack.c.l.b16 %v2891
    %v6253 = vunpack.c.h.b16 %v2891
    %v6254 = vunpack.c.l.b16 %v2892
    %v6255 = vunpack.c.h.b16 %v2892
    %v6256 = vunpack.c.l.b16 %v2893
    %v6257 = vunpack.c.l.b16 %v2894
    %v6258 = vunpack.c.h.b16 %v2894
    %v6259 = vunpack.c.l.b16 %v2895
    %v6260 = vunpack.c.h.b16 %v2895
    %v6261 = vunpack.c.l.b16 %v2896
    %v6262 = vunpack.c.l.b16 %v2897
    %v6263 = vunpack.c.h.b16 %v2897
    %v6264 = vunpack.c.l.b16 %v2898
    %v6265 = vunpack.c.h.b16 %v2898
    %v6266 = vunpack.c.l.b16 %v2899
    %v6267 = vunpack.c.l.b16 %v2900
    %v6268 = vunpack.c.h.b16 %v2900
    %v6269 = vunpack.c.l.b16 %v2901
    %v6270 = vunpack.c.h.b16 %v2901
    %v6271 = vunpack.c.l.b16 %v2902
    %v6272 = vunpack.c.l.b16 %v2903
    %v6273 = vunpack.c.h.b16 %v2903
    %v6274 = vunpack.c.l.b16 %v2904
    %v6275 = vunpack.c.h.b16 %v2904
    %v6276 = vunpack.c.l.b16 %v2905
    %v6277 = vunpack.c.l.b16 %v2906
    %v6278 = vunpack.c.h.b16 %v2906
    %v6279 = vunpack.c.l.b16 %v2907
    %v6280 = vunpack.c.h.b16 %v2907
    %v6281 = vunpack.c.l.b16 %v2908
    %v6282 = vunpack.c.l.b16 %v2909
    %v6283 = vunpack.c.h.b16 %v2909
    %v6284 = vunpack.c.l.b16 %v2910
    %v6285 = vunpack.c.h.b16 %v2910
    %v6286 = vunpack.c.l.b16 %v2911
    %v6287 = vunpack.c.l.b16 %v2912
    %v6288 = vunpack.c.h.b16 %v2912
    %v6289 = vunpack.c.l.b16 %v2913
    %v6290 = vunpack.c.h.b16 %v2913
    %v6291 = vunpack.c.l.b16 %v2914
    %v6292 = vunpack.c.l.b16 %v2915
    %v6293 = vunpack.c.h.b16 %v2915
    %v6294 = vunpack.c.l.b16 %v2916
    %v6295 = vunpack.c.h.b16 %v2916
    %v6296 = vunpack.c.l.b16 %v2917
    %v6297 = vunpack.c.l.b16 %v2918
    %v6298 = vunpack.c.h.b16 %v2918
    %v6299 = vunpack.c.l.b16 %v2919
    %v6300 = vunpack.c.h.b16 %v2919
    %v6301 = vunpack.c.l.b16 %v2920
    %v6302 = vunpack.c.l.b16 %v2921
    %v6303 = vunpack.c.h.b16 %v2921
    %v6304 = vunpack.c.l.b16 %v2922
    %v6305 = vunpack.c.h.b16 %v2922
    %v6306 = vunpack.c.l.b16 %v2923
    %v6307 = vunpack.c.l.b16 %v2924
    %v6308 = vunpack.c.h.b16 %v2924
    %v6309 = vunpack.c.l.b16 %v2925
    %v6310 = vunpack.c.h.b16 %v2925
    %v6311 = vunpack.c.l.b16 %v2926
    %v6312 = vunpack.c.l.b16 %v2927
    %v6313 = vunpack.c.h.b16 %v2927
    %v6314 = vunpack.c.l.b16 %v2928
    %v6315 = vunpack.c.h.b16 %v2928
    %v6316 = vunpack.c.l.b16 %v2929
    %v6317 = vunpack.c.l.b16 %v2930
    %v6318 = vunpack.c.h.b16 %v2930
    %v6319 = vunpack.c.l.b16 %v2931
    %v6320 = vunpack.c.h.b16 %v2931
    %v6321 = vunpack.c.l.b16 %v2932
    %v6322 = vunpack.c.l.b16 %v2933
    %v6323 = vunpack.c.h.b16 %v2933
    %v6324 = vunpack.c.l.b16 %v2934
    %v6325 = vunpack.c.h.b16 %v2934
    %v6326 = vunpack.c.l.b16 %v2935
    %v6327 = vunpack.c.l.b16 %v2936
    %v6328 = vunpack.c.h.b16 %v2936
    %v6329 = vunpack.c.l.b16 %v2937
    %v6330 = vunpack.c.h.b16 %v2937
    %v6331 = vunpack.c.l.b16 %v2938
    %v6332 = vunpack.c.l.b16 %v2939
    %v6333 = vunpack.c.h.b16 %v2939
    %v6334 = vunpack.c.l.b16 %v2940
    %v6335 = vunpack.c.h.b16 %v2940
    %v6336 = vunpack.c.l.b16 %v2941
    %v6337 = vunpack.c.l.b16 %v2942
    %v6338 = vunpack.c.h.b16 %v2942
    %v6339 = vunpack.c.l.b16 %v2943
    %v6340 = vunpack.c.h.b16 %v2943
    %v6341 = vunpack.c.l.b16 %v2944
    %v6342 = vunpack.c.l.b16 %v2945
    %v6343 = vunpack.c.h.b16 %v2945
    %v6344 = vunpack.c.l.b16 %v2946
    %v6345 = vunpack.c.h.b16 %v2946
    %v6346 = vunpack.c.l.b16 %v2947
    %v6347 = vunpack.c.l.b16 %v2948
    %v6348 = vunpack.c.h.b16 %v2948
    %v6349 = vunpack.c.l.b16 %v2949
    %v6350 = vunpack.c.h.b16 %v2949
    %v6351 = vunpack.c.l.b16 %v2950
    %v6352 = vunpack.c.l.b16 %v2951
    %v6353 = vunpack.c.h.b16 %v2951
    %v6354 = vunpack.c.l.b16 %v2952
    %v6355 = vunpack.c.h.b16 %v2952
    %v6356 = vunpack.c.l.b16 %v2953
    %v6357 = vunpack.c.l.b16 %v2954
    %v6358 = vunpack.c.h.b16 %v2954
    %v6359 = vunpack.c.l.b16 %v2955
    %v6360 = vunpack.c.h.b16 %v2955
    %v6361 = vunpack.c.l.b16 %v2956
    %v6362 = vunpack.c.l.b16 %v2957
    %v6363 = vunpack.c.h.b16 %v2957
    %v6364 = vunpack.c.l.b16 %v2958
    %v6365 = vunpack.c.h.b16 %v2958
    %v6366 = vunpack.c.l.b16 %v2959
    %v6367 = vunpack.c.l.b16 %v2960
    %v6368 = vunpack.c.h.b16 %v2960
    %v6369 = vunpack.c.l.b16 %v2961
    %v6370 = vunpack.c.h.b16 %v2961
    %v6371 = vunpack.c.l.b16 %v2962
    %v6372 = vunpack.c.l.b16 %v2963
    %v6373 = vunpack.c.h.b16 %v2963
    %v6374 = vunpack.c.l.b16 %v2964
    %v6375 = vunpack.c.h.b16 %v2964
    %v6376 = vunpack.c.l.b16 %v2965
    %v6377 = vunpack.c.l.b16 %v2966
    %v6378 = vunpack.c.h.b16 %v2966
    %v6379 = vunpack.c.l.b16 %v2967
    %v6380 = vunpack.c.h.b16 %v2967
    %v6381 = vunpack.c.l.b16 %v2968
    %v6382 = vunpack.c.l.b16 %v2969
    %v6383 = vunpack.c.h.b16 %v2969
    %v6384 = vunpack.c.l.b16 %v2970
    %v6385 = vunpack.c.h.b16 %v2970
    %v6386 = vunpack.c.l.b16 %v2971
    %v6387 = vunpack.c.l.b16 %v2972
    %v6388 = vunpack.c.h.b16 %v2972
    %v6389 = vunpack.c.l.b16 %v2973
    %v6390 = vunpack.c.h.b16 %v2973
    %v6391 = vunpack.c.l.b16 %v2974
    %v6392 = vunpack.c.l.b16 %v2975
    %v6393 = vunpack.c.h.b16 %v2975
    %v6394 = vunpack.c.l.b16 %v2976
    %v6395 = vunpack.c.h.b16 %v2976
    %v6396 = vunpack.c.l.b16 %v2977
    %v6397 = vunpack.c.l.b16 %v2978
    %v6398 = vunpack.c.h.b16 %v2978
    %v6399 = vunpack.c.l.b16 %v2979
    %v6400 = vunpack.c.h.b16 %v2979
    %v6401 = vunpack.c.l.b16 %v2980
    %v6402 = vunpack.c.l.b16 %v2981
    %v6403 = vunpack.c.h.b16 %v2981
    %v6404 = vunpack.c.l.b16 %v2982
    %v6405 = vunpack.c.h.b16 %v2982
    %v6406 = vunpack.c.l.b16 %v2983
    %v6407 = vunpack.c.l.b16 %v2984
    %v6408 = vunpack.c.h.b16 %v2984
    %v6409 = vunpack.c.l.b16 %v2985
    %v6410 = vunpack.c.h.b16 %v2985
    %v6411 = vunpack.c.l.b16 %v2986
    %v6412 = vunpack.c.l.b16 %v2987
    %v6413 = vunpack.c.h.b16 %v2987
    %v6414 = vunpack.c.l.b16 %v2988
    %v6415 = vunpack.c.h.b16 %v2988
    %v6416 = vunpack.c.l.b16 %v2989
    %v6417 = vunpack.c.l.b16 %v2990
    %v6418 = vunpack.c.h.b16 %v2990
    %v6419 = vunpack.c.l.b16 %v2991
    %v6420 = vunpack.c.h.b16 %v2991
    %v6421 = vunpack.c.l.b16 %v2992
    %v6422 = vunpack.c.l.b16 %v2993
    %v6423 = vunpack.c.h.b16 %v2993
    %v6424 = vunpack.c.l.b16 %v2994
    %v6425 = vunpack.c.h.b16 %v2994
    %v6426 = vunpack.c.l.b16 %v2995
    %v6427 = vunpack.c.l.b16 %v2996
    %v6428 = vunpack.c.h.b16 %v2996
    %v6429 = vunpack.c.l.b16 %v2997
    %v6430 = vunpack.c.h.b16 %v2997
    %v6431 = vunpack.c.l.b16 %v2998
    %v6432 = vunpack.c.l.b16 %v2999
    %v6433 = vunpack.c.h.b16 %v2999
    %v6434 = vunpack.c.l.b16 %v3000
    %v6435 = vunpack.c.h.b16 %v3000
    %v6436 = vunpack.c.l.b16 %v3001
    %v6437 = vunpack.c.l.b16 %v3002
    %v6438 = vunpack.c.h.b16 %v3002
    %v6439 = vunpack.c.l.b16 %v3003
    %v6440 = vunpack.c.h.b16 %v3003
    %v6441 = vunpack.c.l.b16 %v3004
    %v6442 = vunpack.c.l.b16 %v3005
    %v6443 = vunpack.c.h.b16 %v3005
    %v6444 = vunpack.c.l.b16 %v3006
    %v6445 = vunpack.c.h.b16 %v3006
    %v6446 = vunpack.c.l.b16 %v3007
    %v6447 = vunpack.c.l.b16 %v3008
    %v6448 = vunpack.c.h.b16 %v3008
    %v6449 = vunpack.c.l.b16 %v3009
    %v6450 = vunpack.c.h.b16 %v3009
    %v6451 = vunpack.c.l.b16 %v3010
    %v6452 = vunpack.c.l.b16 %v3011
    %v6453 = vunpack.c.h.b16 %v3011
    %v6454 = vunpack.c.l.b16 %v3012
    %v6455 = vunpack.c.h.b16 %v3012
    %v6456 = vunpack.c.l.b16 %v3013
    %v6457 = vunpack.c.l.b16 %v3014
    %v6458 = vunpack.c.h.b16 %v3014
    %v6459 = vunpack.c.l.b16 %v3015
    %v6460 = vunpack.c.h.b16 %v3015
    %v6461 = vunpack.c.l.b16 %v3016
    %v6462 = vunpack.c.l.b16 %v3017
    %v6463 = vunpack.c.h.b16 %v3017
    %v6464 = vunpack.c.l.b16 %v3018
    %v6465 = vunpack.c.h.b16 %v3018
    %v6466 = vunpack.c.l.b16 %v3019
    %v6467 = vunpack.c.l.b16 %v3020
    %v6468 = vunpack.c.h.b16 %v3020
    %v6469 = vunpack.c.l.b16 %v3021
    %v6470 = vunpack.c.h.b16 %v3021
    %v6471 = vunpack.c.l.b16 %v3022
    %v6472 = vunpack.c.l.b16 %v3023
    %v6473 = vunpack.c.h.b16 %v3023
    %v6474 = vunpack.c.l.b16 %v3024
    %v6475 = vunpack.c.h.b16 %v3024
    %v6476 = vunpack.c.l.b16 %v3025
    %v6477 = vunpack.c.l.b16 %v3026
    %v6478 = vunpack.c.h.b16 %v3026
    %v6479 = vunpack.c.l.b16 %v3027
    %v6480 = vunpack.c.h.b16 %v3027
    %v6481 = vunpack.c.l.b16 %v3028
    %v6482 = vunpack.c.l.b16 %v3029
    %v6483 = vunpack.c.h.b16 %v3029
    %v6484 = vunpack.c.l.b16 %v3030
    %v6485 = vunpack.c.h.b16 %v3030
    %v6486 = vunpack.c.l.b16 %v3031
    %v6487 = vunpack.c.l.b16 %v3032
    %v6488 = vunpack.c.h.b16 %v3032
    %v6489 = vunpack.c.l.b16 %v3033
    %v6490 = vunpack.c.h.b16 %v3033
    %v6491 = vunpack.c.l.b16 %v3034
    %v6492 = vunpack.c.l.b16 %v3035
    %v6493 = vunpack.c.h.b16 %v3035
    %v6494 = vunpack.c.l.b16 %v3036
    %v6495 = vunpack.c.h.b16 %v3036
    %v6496 = vunpack.c.l.b16 %v3037
    %v6497 = vunpack.c.l.b16 %v3038
    %v6498 = vunpack.c.h.b16 %v3038
    %v6499 = vunpack.c.l.b16 %v3039
    %v6500 = vunpack.c.h.b16 %v3039
    %v6501 = vunpack.c.l.b16 %v3040
    %v6502 = vunpack.c.l.b16 %v3041
    %v6503 = vunpack.c.h.b16 %v3041
    %v6504 = vunpack.c.l.b16 %v3042
    %v6505 = vunpack.c.h.b16 %v3042
    %v6506 = vunpack.c.l.b16 %v3043
    %v6507 = vunpack.c.l.b16 %v3044
    %v6508 = vunpack.c.h.b16 %v3044
    %v6509 = vunpack.c.l.b16 %v3045
    %v6510 = vunpack.c.h.b16 %v3045
    %v6511 = vunpack.c.l.b16 %v3046
    %v6512 = vunpack.c.l.b16 %v3047
    %v6513 = vunpack.c.h.b16 %v3047
    %v6514 = vunpack.c.l.b16 %v3048
    %v6515 = vunpack.c.h.b16 %v3048
    %v6516 = vunpack.c.l.b16 %v3049
    %v6517 = vunpack.c.l.b16 %v3050
    %v6518 = vunpack.c.h.b16 %v3050
    %v6519 = vunpack.c.l.b16 %v3051
    %v6520 = vunpack.c.h.b16 %v3051
    %v6521 = vunpack.c.l.b16 %v3052
    %v6522 = vunpack.c.l.b16 %v3053
    %v6523 = vunpack.c.h.b16 %v3053
    %v6524 = vunpack.c.l.b16 %v3054
    %v6525 = vunpack.c.h.b16 %v3054
    %v6526 = vunpack.c.l.b16 %v3055
    %v6527 = vunpack.c.l.b16 %v3056
    %v6528 = vunpack.c.h.b16 %v3056
    %v6529 = vunpack.c.l.b16 %v3057
    %v6530 = vunpack.c.h.b16 %v3057
    %v6531 = vunpack.c.l.b16 %v3058
    %v6532 = vunpack.c.l.b16 %v3059
    %v6533 = vunpack.c.h.b16 %v3059
    %v6534 = vunpack.c.l.b16 %v3060
    %v6535 = vunpack.c.h.b16 %v3060
    %v6536 = vunpack.c.l.b16 %v3061
    %v6537 = vunpack.c.l.b16 %v3062
    %v6538 = vunpack.c.h.b16 %v3062
    %v6539 = vunpack.c.l.b16 %v3063
    %v6540 = vunpack.c.h.b16 %v3063
    %v6541 = vunpack.c.l.b16 %v3064
    %v6542 = vunpack.c.l.b16 %v3065
    %v6543 = vunpack.c.h.b16 %v3065
    %v6544 = vunpack.c.l.b16 %v3066
    %v6545 = vunpack.c.h.b16 %v3066
    %v6546 = vunpack.c.l.b16 %v3067
    %v6547 = vunpack.c.l.b16 %v3068
    %v6548 = vunpack.c.h.b16 %v3068
    %v6549 = vunpack.c.l.b16 %v3069
    %v6550 = vunpack.c.h.b16 %v3069
    %v6551 = vunpack.c.l.b16 %v3070
    %v6552 = vunpack.c.l.b16 %v3071
    %v6553 = vunpack.c.h.b16 %v3071
    %v6554 = vunpack.c.l.b16 %v3072
    %v6555 = vunpack.c.h.b16 %v3072
    %v6556 = vunpack.c.l.b16 %v3073
    %v6557 = vunpack.c.l.b16 %v3074
    %v6558 = vunpack.c.h.b16 %v3074
    %v6559 = vunpack.c.l.b16 %v3075
    %v6560 = vunpack.c.h.b16 %v3075
    %v6561 = vunpack.c.l.b16 %v3076
    %v6562 = vunpack.c.l.b16 %v3077
    %v6563 = vunpack.c.h.b16 %v3077
    %v6564 = vunpack.c.l.b16 %v3078
    %v6565 = vunpack.c.h.b16 %v3078
    %v6566 = vunpack.c.l.b16 %v3079
    %v6567 = vunpack.c.l.b16 %v3080
    %v6568 = vunpack.c.h.b16 %v3080
    %v6569 = vunpack.c.l.b16 %v3081
    %v6570 = vunpack.c.h.b16 %v3081
    %v6571 = vunpack.c.l.b16 %v3082
    %v6572 = vunpack.c.l.b16 %v3083
    %v6573 = vunpack.c.h.b16 %v3083
    %v6574 = vunpack.c.l.b16 %v3084
    %v6575 = vunpack.c.h.b16 %v3084
    %v6576 = vunpack.c.l.b16 %v3085
    %v6577 = vunpack.c.l.b16 %v3086
    %v6578 = vunpack.c.h.b16 %v3086
    %v6579 = vunpack.c.l.b16 %v3087
    %v6580 = vunpack.c.h.b16 %v3087
    %v6581 = vunpack.c.l.b16 %v3088
    %v6582 = vunpack.c.l.b16 %v3089
    %v6583 = vunpack.c.h.b16 %v3089
    %v6584 = vunpack.c.l.b16 %v3090
    %v6585 = vunpack.c.h.b16 %v3090
    %v6586 = vunpack.c.l.b16 %v3091
    %v6587 = vunpack.c.l.b16 %v3092
    %v6588 = vunpack.c.h.b16 %v3092
    %v6589 = vunpack.c.l.b16 %v3093
    %v6590 = vunpack.c.h.b16 %v3093
    %v6591 = vunpack.c.l.b16 %v3094
    %v6592 = vunpack.c.l.b16 %v3095
    %v6593 = vunpack.c.h.b16 %v3095
    %v6594 = vunpack.c.l.b16 %v3096
    %v6595 = vunpack.c.h.b16 %v3096
    %v6596 = vunpack.c.l.b16 %v3097
    %v6597 = vunpack.c.l.b16 %v3098
    %v6598 = vunpack.c.h.b16 %v3098
    %v6599 = vunpack.c.l.b16 %v3099
    %v6600 = vunpack.c.h.b16 %v3099
    %v6601 = vunpack.c.l.b16 %v3100
    %v6602 = vunpack.c.l.b16 %v3101
    %v6603 = vunpack.c.h.b16 %v3101
    %v6604 = vunpack.c.l.b16 %v3102
    %v6605 = vunpack.c.h.b16 %v3102
    %v6606 = vunpack.c.l.b16 %v3103
    %v6607 = vunpack.c.l.b16 %v3104
    %v6608 = vunpack.c.h.b16 %v3104
    %v6609 = vunpack.c.l.b16 %v3105
    %v6610 = vunpack.c.h.b16 %v3105
    %v6611 = vunpack.c.l.b16 %v3106
    %v6612 = vunpack.c.l.b16 %v3107
    %v6613 = vunpack.c.h.b16 %v3107
    %v6614 = vunpack.c.l.b16 %v3108
    %v6615 = vunpack.c.h.b16 %v3108
    %v6616 = vunpack.c.l.b16 %v3109
    %v6617 = vunpack.c.l.b16 %v3110
    %v6618 = vunpack.c.h.b16 %v3110
    %v6619 = vunpack.c.l.b16 %v3111
    %v6620 = vunpack.c.h.b16 %v3111
    %v6621 = vunpack.c.l.b16 %v3112
    %v6622 = vunpack.c.l.b16 %v3113
    %v6623 = vunpack.c.h.b16 %v3113
    %v6624 = vunpack.c.l.b16 %v3114
    %v6625 = vunpack.c.h.b16 %v3114
    %v6626 = vunpack.c.l.b16 %v3115
    %v6627 = vunpack.c.l.b16 %v3116
    %v6628 = vunpack.c.h.b16 %v3116
    %v6629 = vunpack.c.l.b16 %v3117
    %v6630 = vunpack.c.h.b16 %v3117
    %v6631 = vunpack.c.l.b16 %v3118
    %v6632 = vunpack.c.l.b16 %v3119
    %v6633 = vunpack.c.h.b16 %v3119
    %v6634 = vunpack.c.l.b16 %v3120
    %v6635 = vunpack.c.h.b16 %v3120
    %v6636 = vunpack.c.l.b16 %v3121
    %v6637 = vunpack.c.l.b16 %v3122
    %v6638 = vunpack.c.h.b16 %v3122
    %v6639 = vunpack.c.l.b16 %v3123
    %v6640 = vunpack.c.h.b16 %v3123
    %v6641 = vunpack.c.l.b16 %v3124
    %v6642 = vunpack.c.l.b16 %v3125
    %v6643 = vunpack.c.h.b16 %v3125
    %v6644 = vunpack.c.l.b16 %v3126
    %v6645 = vunpack.c.h.b16 %v3126
    %v6646 = vunpack.c.l.b16 %v3127
    %v6647 = vunpack.c.l.b16 %v3128
    %v6648 = vunpack.c.h.b16 %v3128
    %v6649 = vunpack.c.l.b16 %v3129
    %v6650 = vunpack.c.h.b16 %v3129
    %v6651 = vunpack.c.l.b16 %v3130
    %v6652 = vunpack.c.l.b16 %v3131
    %v6653 = vunpack.c.h.b16 %v3131
    %v6654 = vunpack.c.l.b16 %v3132
    %v6655 = vunpack.c.h.b16 %v3132
    %v6656 = vunpack.c.l.b16 %v3133
    %v6657 = vunpack.c.l.b16 %v3134
    %v6658 = vunpack.c.h.b16 %v3134
    %v6659 = vunpack.c.l.b16 %v3135
    %v6660 = vunpack.c.h.b16 %v3135
    %v6661 = vunpack.c.l.b16 %v3136
    %v6662 = vunpack.c.l.b16 %v3137
    %v6663 = vunpack.c.h.b16 %v3137
    %v6664 = vunpack.c.l.b16 %v3138
    %v6665 = vunpack.c.h.b16 %v3138
    %v6666 = vunpack.c.l.b16 %v3139
    %v6667 = vunpack.c.l.b16 %v3140
    %v6668 = vunpack.c.h.b16 %v3140
    %v6669 = vunpack.c.l.b16 %v3141
    %v6670 = vunpack.c.h.b16 %v3141
    %v6671 = vunpack.c.l.b16 %v3142
    %v6672 = vunpack.c.l.b16 %v3143
    %v6673 = vunpack.c.h.b16 %v3143
    %v6674 = vunpack.c.l.b16 %v3144
    %v6675 = vunpack.c.h.b16 %v3144
    %v6676 = vunpack.c.l.b16 %v3145
    %v6677 = vunpack.c.l.b16 %v3146
    %v6678 = vunpack.c.h.b16 %v3146
    %v6679 = vunpack.c.l.b16 %v3147
    %v6680 = vunpack.c.h.b16 %v3147
    %v6681 = vunpack.c.l.b16 %v3148
    %v6682 = vunpack.c.l.b16 %v3149
    %v6683 = vunpack.c.h.b16 %v3149
    %v6684 = vunpack.c.l.b16 %v3150
    %v6685 = vunpack.c.h.b16 %v3150
    %v6686 = vunpack.c.l.b16 %v3151
    %v6687 = vunpack.c.l.b16 %v3152
    %v6688 = vunpack.c.h.b16 %v3152
    %v6689 = vunpack.c.l.b16 %v3153
    %v6690 = vunpack.c.h.b16 %v3153
    %v6691 = vunpack.c.l.b16 %v3154
    %v6692 = vunpack.c.l.b16 %v3155
    %v6693 = vunpack.c.h.b16 %v3155
    %v6694 = vunpack.c.l.b16 %v3156
    %v6695 = vunpack.c.h.b16 %v3156
    %v6696 = vunpack.c.l.b16 %v3157
    %v6697 = vunpack.c.l.b16 %v3158
    %v6698 = vunpack.c.h.b16 %v3158
    %v6699 = vunpack.c.l.b16 %v3159
    %v6700 = vunpack.c.h.b16 %v3159
    %v6701 = vunpack.c.l.b16 %v3160
    %v6702 = vunpack.c.l.b16 %v3161
    %v6703 = vunpack.c.h.b16 %v3161
    %v6704 = vunpack.c.l.b16 %v3162
    %v6705 = vunpack.c.h.b16 %v3162
    %v6706 = vunpack.c.l.b16 %v3163
    %v6707 = vunpack.c.l.b16 %v3164
    %v6708 = vunpack.c.h.b16 %v3164
    %v6709 = vunpack.c.l.b16 %v3165
    %v6710 = vunpack.c.h.b16 %v3165
    %v6711 = vunpack.c.l.b16 %v3166
    %v6712 = vunpack.c.l.b16 %v3167
    %v6713 = vunpack.c.h.b16 %v3167
    %v6714 = vunpack.c.l.b16 %v3168
    %v6715 = vunpack.c.h.b16 %v3168
    %v6716 = vunpack.c.l.b16 %v3169
    %v6717 = vunpack.c.l.b16 %v3170
    %v6718 = vunpack.c.h.b16 %v3170
    %v6719 = vunpack.c.l.b16 %v3171
    %v6720 = vunpack.c.h.b16 %v3171
    %v6721 = vunpack.c.l.b16 %v3172
    %v6722 = vunpack.c.l.b16 %v3173
    %v6723 = vunpack.c.h.b16 %v3173
    %v6724 = vunpack.c.l.b16 %v3174
    %v6725 = vunpack.c.h.b16 %v3174
    %v6726 = vunpack.c.l.b16 %v3175
    %v6727 = vunpack.c.l.b16 %v3176
    %v6728 = vunpack.c.h.b16 %v3176
    %v6729 = vunpack.c.l.b16 %v3177
    %v6730 = vunpack.c.h.b16 %v3177
    %v6731 = vunpack.c.l.b16 %v3178
    %v6732 = vunpack.c.l.b16 %v3179
    %v6733 = vunpack.c.h.b16 %v3179
    %v6734 = vunpack.c.l.b16 %v3180
    %v6735 = vunpack.c.h.b16 %v3180
    %v6736 = vunpack.c.l.b16 %v3181
    %v6737 = vunpack.c.l.b16 %v3182
    %v6738 = vunpack.c.h.b16 %v3182
    %v6739 = vunpack.c.l.b16 %v3183
    %v6740 = vunpack.c.h.b16 %v3183
    %v6741 = vunpack.c.l.b16 %v3184
    %v6742 = vunpack.c.l.b16 %v3185
    %v6743 = vunpack.c.h.b16 %v3185
    %v6744 = vunpack.c.l.b16 %v3186
    %v6745 = vunpack.c.h.b16 %v3186
    %v6746 = vunpack.c.l.b16 %v3187
    %v6747 = vunpack.c.l.b16 %v3188
    %v6748 = vunpack.c.h.b16 %v3188
    %v6749 = vunpack.c.l.b16 %v3189
    %v6750 = vunpack.c.h.b16 %v3189
    %v6751 = vunpack.c.l.b16 %v3190
    %v6752 = vunpack.c.l.b16 %v3191
    %v6753 = vunpack.c.h.b16 %v3191
    %v6754 = vunpack.c.l.b16 %v3192
    %v6755 = vunpack.c.h.b16 %v3192
    %v6756 = vunpack.c.l.b16 %v3193
    %v6757 = vunpack.c.l.b16 %v3194
    %v6758 = vunpack.c.h.b16 %v3194
    %v6759 = vunpack.c.l.b16 %v3195
    %v6760 = vunpack.c.h.b16 %v3195
    %v6761 = vunpack.c.l.b16 %v3196
    %v6762 = vunpack.c.l.b16 %v3197
    %v6763 = vunpack.c.h.b16 %v3197
    %v6764 = vunpack.c.l.b16 %v3198
    %v6765 = vunpack.c.h.b16 %v3198
    %v6766 = vunpack.c.l.b16 %v3199
    %v6767 = vunpack.c.l.b16 %v3200
    %v6768 = vunpack.c.h.b16 %v3200
    %v6769 = vunpack.c.l.b16 %v3201
    %v6770 = vunpack.c.h.b16 %v3201
    %v6771 = vunpack.c.l.b16 %v3202
    %v6772 = vunpack.c.l.b16 %v3203
    %v6773 = vunpack.c.h.b16 %v3203
    %v6774 = vunpack.c.l.b16 %v3204
    %v6775 = vunpack.c.h.b16 %v3204
    %v6776 = vunpack.c.l.b16 %v3205
    %v6777 = vunpack.c.l.b16 %v3206
    %v6778 = vunpack.c.h.b16 %v3206
    %v6779 = vunpack.c.l.b16 %v3207
    %v6780 = vunpack.c.h.b16 %v3207
    %v6781 = vunpack.c.l.b16 %v3208
    %v6782 = vunpack.c.l.b16 %v3209
    %v6783 = vunpack.c.h.b16 %v3209
    %v6784 = vunpack.c.l.b16 %v3210
    %v6785 = vunpack.c.h.b16 %v3210
    %v6786 = vunpack.c.l.b16 %v3211
    %v6787 = vunpack.c.l.b16 %v3212
    %v6788 = vunpack.c.h.b16 %v3212
    %v6789 = vunpack.c.l.b16 %v3213
    %v6790 = vunpack.c.h.b16 %v3213
    %v6791 = vunpack.c.l.b16 %v3214
    %v6792 = vunpack.c.l.b16 %v3215
    %v6793 = vunpack.c.h.b16 %v3215
    %v6794 = vunpack.c.l.b16 %v3216
    %v6795 = vunpack.c.h.b16 %v3216
    %v6796 = vunpack.c.l.b16 %v3217
    %v6797 = vunpack.c.l.b16 %v3218
    %v6798 = vunpack.c.h.b16 %v3218
    %v6799 = vunpack.c.l.b16 %v3219
    %v6800 = vunpack.c.h.b16 %v3219
    %v6801 = vunpack.c.l.b16 %v3220
    %v6802 = vunpack.c.l.b16 %v3221
    %v6803 = vunpack.c.h.b16 %v3221
    %v6804 = vunpack.c.l.b16 %v3222
    %v6805 = vunpack.c.h.b16 %v3222
    %v6806 = vunpack.c.l.b16 %v3223
    %v6807 = vunpack.c.l.b16 %v3224
    %v6808 = vunpack.c.h.b16 %v3224
    %v6809 = vunpack.c.l.b16 %v3225
    %v6810 = vunpack.c.h.b16 %v3225
    %v6811 = vunpack.c.l.b16 %v3226
    %v6812 = vunpack.c.l.b16 %v3227
    %v6813 = vunpack.c.h.b16 %v3227
    %v6814 = vunpack.c.l.b16 %v3228
    %v6815 = vunpack.c.h.b16 %v3228
    %v6816 = vunpack.c.l.b16 %v3229
    %v6817 = vunpack.c.l.b16 %v3230
    %v6818 = vunpack.c.h.b16 %v3230
    %v6819 = vunpack.c.l.b16 %v3231
    %v6820 = vunpack.c.h.b16 %v3231
    %v6821 = vunpack.c.l.b16 %v3232
    %v6822 = vunpack.c.l.b16 %v3233
    %v6823 = vunpack.c.h.b16 %v3233
    %v6824 = vunpack.c.l.b16 %v3234
    %v6825 = vunpack.c.h.b16 %v3234
    %v6826 = vunpack.c.l.b16 %v3235
    %v6827 = vunpack.c.l.b16 %v3236
    %v6828 = vunpack.c.h.b16 %v3236
    %v6829 = vunpack.c.l.b16 %v3237
    %v6830 = vunpack.c.h.b16 %v3237
    %v6831 = vunpack.c.l.b16 %v3238
    %v6832 = vunpack.c.l.b16 %v3239
    %v6833 = vunpack.c.h.b16 %v3239
    %v6834 = vunpack.c.l.b16 %v3240
    %v6835 = vunpack.c.h.b16 %v3240
    %v6836 = vunpack.c.l.b16 %v3241
    %v6837 = vunpack.c.l.b16 %v3242
    %v6838 = vunpack.c.h.b16 %v3242
    %v6839 = vunpack.c.l.b16 %v3243
    %v6840 = vunpack.c.h.b16 %v3243
    %v6841 = vunpack.c.l.b16 %v3244
    %v6842 = vunpack.c.l.b16 %v3245
    %v6843 = vunpack.c.h.b16 %v3245
    %v6844 = vunpack.c.l.b16 %v3246
    %v6845 = vunpack.c.h.b16 %v3246
    %v6846 = vunpack.c.l.b16 %v3247
    %v6847 = vunpack.c.l.b16 %v3248
    %v6848 = vunpack.c.h.b16 %v3248
    %v6849 = vunpack.c.l.b16 %v3249
    %v6850 = vunpack.c.h.b16 %v3249
    %v6851 = vunpack.c.l.b16 %v3250
    %v6852 = vunpack.c.l.b16 %v3251
    %v6853 = vunpack.c.h.b16 %v3251
    %v6854 = vunpack.c.l.b16 %v3252
    %v6855 = vunpack.c.h.b16 %v3252
    %v6856 = vunpack.c.l.b16 %v3253
    %v6857 = vunpack.c.l.b16 %v3254
    %v6858 = vunpack.c.h.b16 %v3254
    %v6859 = vunpack.c.l.b16 %v3255
    %v6860 = vunpack.c.h.b16 %v3255
    %v6861 = vunpack.c.l.b16 %v3256
    %v6862 = vunpack.c.l.b16 %v3257
    %v6863 = vunpack.c.h.b16 %v3257
    %v6864 = vunpack.c.l.b16 %v3258
    %v6865 = vunpack.c.h.b16 %v3258
    %v6866 = vunpack.c.l.b16 %v3259
    %v6867 = vunpack.c.l.b16 %v3260
    %v6868 = vunpack.c.h.b16 %v3260
    %v6869 = vunpack.c.l.b16 %v3261
    %v6870 = vunpack.c.h.b16 %v3261
    %v6871 = vunpack.c.l.b16 %v3262
    %v6872 = vunpack.c.l.b16 %v3263
    %v6873 = vunpack.c.h.b16 %v3263
    %v6874 = vunpack.c.l.b16 %v3264
    %v6875 = vunpack.c.h.b16 %v3264
    %v6876 = vunpack.c.l.b16 %v3265
    %v6877 = vunpack.c.l.b16 %v3266
    %v6878 = vunpack.c.h.b16 %v3266
    %v6879 = vunpack.c.l.b16 %v3267
    %v6880 = vunpack.c.h.b16 %v3267
    %v6881 = vunpack.c.l.b16 %v3268
    %v6882 = vunpack.c.l.b16 %v3269
    %v6883 = vunpack.c.h.b16 %v3269
    %v6884 = vunpack.c.l.b16 %v3270
    %v6885 = vunpack.c.h.b16 %v3270
    %v6886 = vunpack.c.l.b16 %v3271
    %v6887 = vunpack.c.l.b16 %v3272
    %v6888 = vunpack.c.h.b16 %v3272
    %v6889 = vunpack.c.l.b16 %v3273
    %v6890 = vunpack.c.h.b16 %v3273
    %v6891 = vunpack.c.l.b16 %v3274
    %v6892 = vunpack.c.l.b16 %v3275
    %v6893 = vunpack.c.h.b16 %v3275
    %v6894 = vunpack.c.l.b16 %v3276
    %v6895 = vunpack.c.h.b16 %v3276
    %v6896 = vunpack.c.l.b16 %v3277
    %v6897 = vunpack.c.l.b16 %v3278
    %v6898 = vunpack.c.h.b16 %v3278
    %v6899 = vunpack.c.l.b16 %v3279
    %v6900 = vunpack.c.h.b16 %v3279
    %v6901 = vunpack.c.l.b16 %v3280
    %v6902 = vunpack.c.l.b16 %v3281
    %v6903 = vunpack.c.h.b16 %v3281
    %v6904 = vunpack.c.l.b16 %v3282
    %v6905 = vunpack.c.h.b16 %v3282
    %v6906 = vunpack.c.l.b16 %v3283
    %v6907 = vunpack.c.l.b16 %v3284
    %v6908 = vunpack.c.h.b16 %v3284
    %v6909 = vunpack.c.l.b16 %v3285
    %v6910 = vunpack.c.h.b16 %v3285
    %v6911 = vunpack.c.l.b16 %v3286
    %v6912 = vunpack.c.l.b16 %v3287
    %v6913 = vunpack.c.h.b16 %v3287
    %v6914 = vunpack.c.l.b16 %v3288
    %v6915 = vunpack.c.h.b16 %v3288
    %v6916 = vunpack.c.l.b16 %v3289
    %v6917 = vunpack.c.l.b16 %v3290
    %v6918 = vunpack.c.h.b16 %v3290
    %v6919 = vunpack.c.l.b16 %v3291
    %v6920 = vunpack.c.h.b16 %v3291
    %v6921 = vunpack.c.l.b16 %v3292
    %v6922 = vunpack.c.l.b16 %v3293
    %v6923 = vunpack.c.h.b16 %v3293
    %v6924 = vunpack.c.l.b16 %v3294
    %v6925 = vunpack.c.h.b16 %v3294
    %v6926 = vunpack.c.l.b16 %v3295
    %v6927 = vunpack.c.l.b16 %v3296
    %v6928 = vunpack.c.h.b16 %v3296
    %v6929 = vunpack.c.l.b16 %v3297
    %v6930 = vunpack.c.h.b16 %v3297
    %v6931 = vunpack.c.l.b16 %v3298
    %v6932 = vunpack.c.l.b16 %v3299
    %v6933 = vunpack.c.h.b16 %v3299
    %v6934 = vunpack.c.l.b16 %v3300
    %v6935 = vunpack.c.h.b16 %v3300
    %v6936 = vunpack.c.l.b16 %v3301
    %v6937 = vunpack.c.l.b16 %v3302
    %v6938 = vunpack.c.h.b16 %v3302
    %v6939 = vunpack.c.l.b16 %v3303
    %v6940 = vunpack.c.h.b16 %v3303
    %v6941 = vunpack.c.l.b16 %v3304
    %v6942 = vunpack.c.l.b16 %v3305
    %v6943 = vunpack.c.h.b16 %v3305
    %v6944 = vunpack.c.l.b16 %v3306
    %v6945 = vunpack.c.h.b16 %v3306
    %v6946 = vunpack.c.l.b16 %v3307
    %v6947 = vunpack.c.l.b16 %v3308
    %v6948 = vunpack.c.h.b16 %v3308
    %v6949 = vunpack.c.l.b16 %v3309
    %v6950 = vunpack.c.h.b16 %v3309
    %v6951 = vunpack.c.l.b16 %v3310
    %v6952 = vunpack.c.l.b16 %v3311
    %v6953 = vunpack.c.h.b16 %v3311
    %v6954 = vunpack.c.l.b16 %v3312
    %v6955 = vunpack.c.h.b16 %v3312
    %v6956 = vunpack.c.l.b16 %v3313
    %v6957 = vunpack.c.l.b16 %v3314
    %v6958 = vunpack.c.h.b16 %v3314
    %v6959 = vunpack.c.l.b16 %v3315
    %v6960 = vunpack.c.h.b16 %v3315
    %v6961 = vunpack.c.l.b16 %v3316
    %v6962 = vunpack.c.l.b16 %v3317
    %v6963 = vunpack.c.h.b16 %v3317
    %v6964 = vunpack.c.l.b16 %v3318
    %v6965 = vunpack.c.h.b16 %v3318
    %v6966 = vunpack.c.l.b16 %v3319
    %v6967 = vunpack.c.l.b16 %v3320
    %v6968 = vunpack.c.h.b16 %v3320
    %v6969 = vunpack.c.l.b16 %v3321
    %v6970 = vunpack.c.h.b16 %v3321
    %v6971 = vunpack.c.l.b16 %v3322
    %v6972 = vunpack.c.l.b16 %v3323
    %v6973 = vunpack.c.h.b16 %v3323
    %v6974 = vunpack.c.l.b16 %v3324
    %v6975 = vunpack.c.h.b16 %v3324
    %v6976 = vunpack.c.l.b16 %v3325
    %v6977 = vunpack.c.l.b16 %v3326
    %v6978 = vunpack.c.h.b16 %v3326
    %v6979 = vunpack.c.l.b16 %v3327
    %v6980 = vunpack.c.h.b16 %v3327
    %v6981 = vunpack.c.l.b16 %v3328
    %v6982 = vunpack.c.l.b16 %v3329
    %v6983 = vunpack.c.h.b16 %v3329
    %v6984 = vunpack.c.l.b16 %v3330
    %v6985 = vunpack.c.h.b16 %v3330
    %v6986 = vunpack.c.l.b16 %v3331
    %v6987 = vunpack.c.l.b16 %v3332
    %v6988 = vunpack.c.h.b16 %v3332
    %v6989 = vunpack.c.l.b16 %v3333
    %v6990 = vunpack.c.h.b16 %v3333
    %v6991 = vunpack.c.l.b16 %v3334
    %v6992 = vunpack.c.l.b16 %v3335
    %v6993 = vunpack.c.h.b16 %v3335
    %v6994 = vunpack.c.l.b16 %v3336
    %v6995 = vunpack.c.h.b16 %v3336
    %v6996 = vunpack.c.l.b16 %v3337
    %v6997 = vunpack.c.l.b16 %v3338
    %v6998 = vunpack.c.h.b16 %v3338
    %v6999 = vunpack.c.l.b16 %v3339
    %v7000 = vunpack.c.h.b16 %v3339
    %v7001 = vunpack.c.l.b16 %v3340
    %v7002 = vunpack.c.l.b16 %v3341
    %v7003 = vunpack.c.h.b16 %v3341
    %v7004 = vunpack.c.l.b16 %v3342
    %v7005 = vunpack.c.h.b16 %v3342
    %v7006 = vunpack.c.l.b16 %v3343
    %v7007 = vunpack.c.l.b16 %v3344
    %v7008 = vunpack.c.h.b16 %v3344
    %v7009 = vunpack.c.l.b16 %v3345
    %v7010 = vunpack.c.h.b16 %v3345
    %v7011 = vunpack.c.l.b16 %v3346
    %v7012 = vunpack.c.l.b16 %v3347
    %v7013 = vunpack.c.h.b16 %v3347
    %v7014 = vunpack.c.l.b16 %v3348
    %v7015 = vunpack.c.h.b16 %v3348
    %v7016 = vunpack.c.l.b16 %v3349
    %v7017 = vunpack.c.l.b16 %v3350
    %v7018 = vunpack.c.h.b16 %v3350
    %v7019 = vunpack.c.l.b16 %v3351
    %v7020 = vunpack.c.h.b16 %v3351
    %v7021 = vunpack.c.l.b16 %v3352
    %v7022 = vunpack.c.l.b16 %v3353
    %v7023 = vunpack.c.h.b16 %v3353
    %v7024 = vunpack.c.l.b16 %v3354
    %v7025 = vunpack.c.h.b16 %v3354
    %v7026 = vunpack.c.l.b16 %v3355
    %v7027 = vunpack.c.l.b16 %v3356
    %v7028 = vunpack.c.h.b16 %v3356
    %v7029 = vunpack.c.l.b16 %v3357
    %v7030 = vunpack.c.h.b16 %v3357
    %v7031 = vunpack.c.l.b16 %v3358
    %v7032 = vunpack.c.l.b16 %v3359
    %v7033 = vunpack.c.h.b16 %v3359
    %v7034 = vunpack.c.l.b16 %v3360
    %v7035 = vunpack.c.h.b16 %v3360
    %v7036 = vunpack.c.l.b16 %v3361
    %v7037 = vunpack.c.l.b16 %v3362
    %v7038 = vunpack.c.h.b16 %v3362
    %v7039 = vunpack.c.l.b16 %v3363
    %v7040 = vunpack.c.h.b16 %v3363
    %v7041 = vunpack.c.l.b16 %v3364
    %v7042 = vunpack.c.l.b16 %v3365
    %v7043 = vunpack.c.h.b16 %v3365
    %v7044 = vunpack.c.l.b16 %v3366
    %v7045 = vunpack.c.h.b16 %v3366
    %v7046 = vunpack.c.l.b16 %v3367
    %v7047 = vunpack.c.l.b16 %v3368
    %v7048 = vunpack.c.h.b16 %v3368
    %v7049 = vunpack.c.l.b16 %v3369
    %v7050 = vunpack.c.h.b16 %v3369
    %v7051 = vunpack.c.l.b16 %v3370
    %v7052 = vunpack.c.l.b16 %v3371
    %v7053 = vunpack.c.h.b16 %v3371
    %v7054 = vunpack.c.l.b16 %v3372
    %v7055 = vunpack.c.h.b16 %v3372
    %v7056 = vunpack.c.l.b16 %v3373
    %v7057 = vunpack.c.l.b16 %v3374
    %v7058 = vunpack.c.h.b16 %v3374
    %v7059 = vunpack.c.l.b16 %v3375
    %v7060 = vunpack.c.h.b16 %v3375
    %v7061 = vunpack.c.l.b16 %v3376
    %v7062 = vunpack.c.l.b16 %v3377
    %v7063 = vunpack.c.h.b16 %v3377
    %v7064 = vunpack.c.l.b16 %v3378
    %v7065 = vunpack.c.h.b16 %v3378
    %v7066 = vunpack.c.l.b16 %v3379
    %v7067 = vunpack.c.l.b16 %v3380
    %v7068 = vunpack.c.h.b16 %v3380
    %v7069 = vunpack.c.l.b16 %v3381
    %v7070 = vunpack.c.h.b16 %v3381
    %v7071 = vunpack.c.l.b16 %v3382
    %v7072 = vunpack.c.l.b16 %v3383
    %v7073 = vunpack.c.h.b16 %v3383
    %v7074 = vunpack.c.l.b16 %v3384
    %v7075 = vunpack.c.h.b16 %v3384
    %v7076 = vunpack.c.l.b16 %v3385
    %v7077 = vunpack.c.l.b16 %v3386
    %v7078 = vunpack.c.h.b16 %v3386
    %v7079 = vunpack.c.l.b16 %v3387
    %v7080 = vunpack.c.h.b16 %v3387
    %v7081 = vunpack.c.l.b16 %v3388
    %v7082 = vunpack.c.l.b16 %v3389
    %v7083 = vunpack.c.h.b16 %v3389
    %v7084 = vunpack.c.l.b16 %v3390
    %v7085 = vunpack.c.h.b16 %v3390
    %v7086 = vunpack.c.l.b16 %v3391
    %v7087 = vunpack.c.l.b16 %v3392
    %v7088 = vunpack.c.h.b16 %v3392
    %v7089 = vunpack.c.l.b16 %v3393
    %v7090 = vunpack.c.h.b16 %v3393
    %v7091 = vunpack.c.l.b16 %v3394
    %v7092 = vunpack.c.l.b16 %v3395
    %v7093 = vunpack.c.h.b16 %v3395
    %v7094 = vunpack.c.l.b16 %v3396
    %v7095 = vunpack.c.h.b16 %v3396
    %v7096 = vunpack.c.l.b16 %v3397
    %v7097 = vunpack.c.l.b16 %v3398
    %v7098 = vunpack.c.h.b16 %v3398
    %v7099 = vunpack.c.l.b16 %v3399
    %v7100 = vunpack.c.h.b16 %v3399
    %v7101 = vunpack.c.l.b16 %v3400
    %v7102 = vunpack.c.l.b16 %v3401
    %v7103 = vunpack.c.h.b16 %v3401
    %v7104 = vunpack.c.l.b16 %v3402
    %v7105 = vunpack.c.h.b16 %v3402
    %v7106 = vunpack.c.l.b16 %v3403
    %v7107 = vunpack.c.l.b16 %v3404
    %v7108 = vunpack.c.h.b16 %v3404
    %v7109 = vunpack.c.l.b16 %v3405
    %v7110 = vunpack.c.h.b16 %v3405
    %v7111 = vunpack.c.l.b16 %v3406
    %v7112 = vunpack.c.l.b16 %v3407
    %v7113 = vunpack.c.h.b16 %v3407
    %v7114 = vunpack.c.l.b16 %v3408
    %v7115 = vunpack.c.h.b16 %v3408
    %v7116 = vunpack.c.l.b16 %v3409
    %v7117 = vunpack.c.l.b16 %v3410
    %v7118 = vunpack.c.h.b16 %v3410
    %v7119 = vunpack.c.l.b16 %v3411
    %v7120 = vunpack.c.h.b16 %v3411
    %v7121 = vunpack.c.l.b16 %v3412
    %v7122 = vunpack.c.l.b16 %v3413
    %v7123 = vunpack.c.h.b16 %v3413
    %v7124 = vunpack.c.l.b16 %v3414
    %v7125 = vunpack.c.h.b16 %v3414
    %v7126 = vunpack.c.l.b16 %v3415
    %v7127 = vunpack.c.l.b16 %v3416
    %v7128 = vunpack.c.h.b16 %v3416
    %v7129 = vunpack.c.l.b16 %v3417
    %v7130 = vunpack.c.h.b16 %v3417
    %v7131 = vunpack.c.l.b16 %v3418
    %v7132 = vunpack.c.l.b16 %v3419
    %v7133 = vunpack.c.h.b16 %v3419
    %v7134 = vunpack.c.l.b16 %v3420
    %v7135 = vunpack.c.h.b16 %v3420
    %v7136 = vunpack.c.l.b16 %v3421
    %v7137 = vunpack.c.l.b16 %v3422
    %v7138 = vunpack.c.h.b16 %v3422
    %v7139 = vunpack.c.l.b16 %v3423
    %v7140 = vunpack.c.h.b16 %v3423
    %v7141 = vunpack.c.l.b16 %v3424
    %v7142 = vunpack.c.l.b16 %v3425
    %v7143 = vunpack.c.h.b16 %v3425
    %v7144 = vunpack.c.l.b16 %v3426
    %v7145 = vunpack.c.h.b16 %v3426
    %v7146 = vunpack.c.l.b16 %v3427
    %v7147 = vunpack.c.l.b16 %v3428
    %v7148 = vunpack.c.h.b16 %v3428
    %v7149 = vunpack.c.l.b16 %v3429
    %v7150 = vunpack.c.h.b16 %v3429
    %v7151 = vunpack.c.l.b16 %v3430
    %v7152 = vunpack.c.l.b16 %v3431
    %v7153 = vunpack.c.h.b16 %v3431
    %v7154 = vunpack.c.l.b16 %v3432
    %v7155 = vunpack.c.h.b16 %v3432
    %v7156 = vunpack.c.l.b16 %v3433
    %v7157 = vunpack.c.l.b16 %v3434
    %v7158 = vunpack.c.h.b16 %v3434
    %v7159 = vunpack.c.l.b16 %v3435
    %v7160 = vunpack.c.h.b16 %v3435
    %v7161 = vunpack.c.l.b16 %v3436
    %v7162 = vunpack.c.l.b16 %v3437
    %v7163 = vunpack.c.h.b16 %v3437
    %v7164 = vunpack.c.l.b16 %v3438
    %v7165 = vunpack.c.h.b16 %v3438
    %v7166 = vunpack.c.l.b16 %v3439
    %v7167 = vunpack.c.l.b16 %v3440
    %v7168 = vunpack.c.h.b16 %v3440
    %v7169 = vunpack.c.l.b16 %v3441
    %v7170 = vunpack.c.h.b16 %v3441
    %v7171 = vunpack.c.l.b16 %v3442
    %v7172 = vunpack.c.l.b16 %v3443
    %v7173 = vunpack.c.h.b16 %v3443
    %v7174 = vunpack.c.l.b16 %v3444
    %v7175 = vunpack.c.h.b16 %v3444
    %v7176 = vunpack.c.l.b16 %v3445
    %v7177 = vunpack.c.l.b16 %v3446
    %v7178 = vunpack.c.h.b16 %v3446
    %v7179 = vunpack.c.l.b16 %v3447
    %v7180 = vunpack.c.h.b16 %v3447
    %v7181 = vunpack.c.l.b16 %v3448
    %v7182 = vunpack.c.l.b16 %v3449
    %v7183 = vunpack.c.h.b16 %v3449
    %v7184 = vunpack.c.l.b16 %v3450
    %v7185 = vunpack.c.h.b16 %v3450
    %v7186 = vunpack.c.l.b16 %v3451
    %v7187 = vunpack.c.l.b16 %v3452
    %v7188 = vunpack.c.h.b16 %v3452
    %v7189 = vunpack.c.l.b16 %v3453
    %v7190 = vunpack.c.h.b16 %v3453
    %v7191 = vunpack.c.l.b16 %v3454
    %v7192 = vunpack.c.l.b16 %v3455
    %v7193 = vunpack.c.h.b16 %v3455
    %v7194 = vunpack.c.l.b16 %v3456
    %v7195 = vunpack.c.h.b16 %v3456
    %v7196 = vunpack.c.l.b16 %v3457
    %v7197 = vunpack.c.l.b16 %v3458
    %v7198 = vunpack.c.h.b16 %v3458
    %v7199 = vunpack.c.l.b16 %v3459
    %v7200 = vunpack.c.h.b16 %v3459
    %v7201 = vunpack.c.l.b16 %v3460
    %v7202 = vunpack.c.l.b16 %v3461
    %v7203 = vunpack.c.h.b16 %v3461
    %v7204 = vunpack.c.l.b16 %v3462
    %v7205 = vunpack.c.h.b16 %v3462
    %v7206 = vunpack.c.l.b16 %v3463
    %v7207 = vunpack.c.l.b16 %v3464
    %v7208 = vunpack.c.h.b16 %v3464
    %v7209 = vunpack.c.l.b16 %v3465
    %v7210 = vunpack.c.h.b16 %v3465
    %v7211 = vunpack.c.l.b16 %v3466
    %v7212 = vunpack.c.l.b16 %v3467
    %v7213 = vunpack.c.h.b16 %v3467
    %v7214 = vunpack.c.l.b16 %v3468
    %v7215 = vunpack.c.h.b16 %v3468
    %v7216 = vunpack.c.l.b16 %v3469
    %v7217 = vunpack.c.l.b16 %v3470
    %v7218 = vunpack.c.h.b16 %v3470
    %v7219 = vunpack.c.l.b16 %v3471
    %v7220 = vunpack.c.h.b16 %v3471
    %v7221 = vunpack.c.l.b16 %v3472
    %v7222 = vunpack.c.l.b16 %v3473
    %v7223 = vunpack.c.h.b16 %v3473
    %v7224 = vunpack.c.l.b16 %v3474
    %v7225 = vunpack.c.h.b16 %v3474
    %v7226 = vunpack.c.l.b16 %v3475
    %v7227 = vunpack.c.l.b16 %v3476
    %v7228 = vunpack.c.h.b16 %v3476
    %v7229 = vunpack.c.l.b16 %v3477
    %v7230 = vunpack.c.h.b16 %v3477
    %v7231 = vunpack.c.l.b16 %v3478
    %v7232 = vunpack.c.l.b16 %v3479
    %v7233 = vunpack.c.h.b16 %v3479
    %v7234 = vunpack.c.l.b16 %v3480
    %v7235 = vunpack.c.h.b16 %v3480
    %v7236 = vunpack.c.l.b16 %v3481
    %v7237 = vunpack.c.l.b16 %v3482
    %v7238 = vunpack.c.h.b16 %v3482
    %v7239 = vunpack.c.l.b16 %v3483
    %v7240 = vunpack.c.h.b16 %v3483
    %v7241 = vunpack.c.l.b16 %v3484
    %v7242 = vunpack.c.l.b16 %v3485
    %v7243 = vunpack.c.h.b16 %v3485
    %v7244 = vunpack.c.l.b16 %v3486
    %v7245 = vunpack.c.h.b16 %v3486
    %v7246 = vunpack.c.l.b16 %v3487
    %v7247 = vunpack.c.l.b16 %v3488
    %v7248 = vunpack.c.h.b16 %v3488
    %v7249 = vunpack.c.l.b16 %v3489
    %v7250 = vunpack.c.h.b16 %v3489
    %v7251 = vunpack.c.l.b16 %v3490
    %v7252 = vunpack.c.l.b16 %v3491
    %v7253 = vunpack.c.h.b16 %v3491
    %v7254 = vunpack.c.l.b16 %v3492
    %v7255 = vunpack.c.h.b16 %v3492
    %v7256 = vunpack.c.l.b16 %v3493
    %v7257 = vunpack.c.l.b16 %v3494
    %v7258 = vunpack.c.h.b16 %v3494
    %v7259 = vunpack.c.l.b16 %v3495
    %v7260 = vunpack.c.h.b16 %v3495
    %v7261 = vunpack.c.l.b16 %v3496
    %v7262 = vunpack.c.l.b16 %v3497
    %v7263 = vunpack.c.h.b16 %v3497
    %v7264 = vunpack.c.l.b16 %v3498
    %v7265 = vunpack.c.h.b16 %v3498
    %v7266 = vunpack.c.l.b16 %v3499
    %v7267 = vunpack.c.l.b16 %v3500
    %v7268 = vunpack.c.h.b16 %v3500
    %v7269 = vunpack.c.l.b16 %v3501
    %v7270 = vunpack.c.h.b16 %v3501
    %v7271 = vunpack.c.l.b16 %v3502
    %v7272 = vunpack.c.l.b16 %v3503
    %v7273 = vunpack.c.h.b16 %v3503
    %v7274 = vunpack.c.l.b16 %v3504
    %v7275 = vunpack.c.h.b16 %v3504
    %v7276 = vunpack.c.l.b16 %v3505
    %v7277 = vunpack.c.l.b16 %v3506
    %v7278 = vunpack.c.h.b16 %v3506
    %v7279 = vunpack.c.l.b16 %v3507
    %v7280 = vunpack.c.h.b16 %v3507
    %v7281 = vunpack.c.l.b16 %v3508
    %v7282 = vunpack.c.l.b16 %v3509
    %v7283 = vunpack.c.h.b16 %v3509
    %v7284 = vunpack.c.l.b16 %v3510
    %v7285 = vunpack.c.h.b16 %v3510
    %v7286 = vunpack.c.l.b16 %v3511
    %v7287 = vunpack.c.l.b16 %v3512
    %v7288 = vunpack.c.h.b16 %v3512
    %v7289 = vunpack.c.l.b16 %v3513
    %v7290 = vunpack.c.h.b16 %v3513
    %v7291 = vunpack.c.l.b16 %v3514
    %v7292 = vunpack.c.l.b16 %v3515
    %v7293 = vunpack.c.h.b16 %v3515
    %v7294 = vunpack.c.l.b16 %v3516
    %v7295 = vunpack.c.h.b16 %v3516
    %v7296 = vunpack.c.l.b16 %v3517
    %v7297 = vunpack.c.l.b16 %v3518
    %v7298 = vunpack.c.h.b16 %v3518
    %v7299 = vunpack.c.l.b16 %v3519
    %v7300 = vunpack.c.h.b16 %v3519
    %v7301 = vunpack.c.l.b16 %v3520
    %v7302 = vunpack.c.l.b16 %v3521
    %v7303 = vunpack.c.h.b16 %v3521
    %v7304 = vunpack.c.l.b16 %v3522
    %v7305 = vunpack.c.h.b16 %v3522
    %v7306 = vunpack.c.l.b16 %v3523
    %v7307 = vunpack.c.l.b16 %v3524
    %v7308 = vunpack.c.h.b16 %v3524
    %v7309 = vunpack.c.l.b16 %v3525
    %v7310 = vunpack.c.h.b16 %v3525
    %v7311 = vunpack.c.l.b16 %v3526
    %v7312 = vunpack.c.l.b16 %v3527
    %v7313 = vunpack.c.h.b16 %v3527
    %v7314 = vunpack.c.l.b16 %v3528
    %v7315 = vunpack.c.h.b16 %v3528
    %v7316 = vunpack.c.l.b16 %v3529
    %v7317 = vunpack.c.l.b16 %v3530
    %v7318 = vunpack.c.h.b16 %v3530
    %v7319 = vunpack.c.l.b16 %v3531
    %v7320 = vunpack.c.h.b16 %v3531
    %v7321 = vunpack.c.l.b16 %v3532
    %v7322 = vunpack.c.l.b16 %v3533
    %v7323 = vunpack.c.h.b16 %v3533
    %v7324 = vunpack.c.l.b16 %v3534
    %v7325 = vunpack.c.h.b16 %v3534
    %v7326 = vunpack.c.l.b16 %v3535
    %v7327 = vunpack.c.l.b16 %v3536
    %v7328 = vunpack.c.h.b16 %v3536
    %v7329 = vunpack.c.l.b16 %v3537
    %v7330 = vunpack.c.h.b16 %v3537
    %v7331 = vunpack.c.l.b16 %v3538
    %v7332 = vunpack.c.l.b16 %v3539
    %v7333 = vunpack.c.h.b16 %v3539
    %v7334 = vunpack.c.l.b16 %v3540
    %v7335 = vunpack.c.h.b16 %v3540
    %v7336 = vunpack.c.l.b16 %v3541
    %v7337 = vunpack.c.l.b16 %v3542
    %v7338 = vunpack.c.h.b16 %v3542
    %v7339 = vunpack.c.l.b16 %v3543
    %v7340 = vunpack.c.h.b16 %v3543
    %v7341 = vunpack.c.l.b16 %v3544
    %v7342 = vunpack.c.l.b16 %v3545
    %v7343 = vunpack.c.h.b16 %v3545
    %v7344 = vunpack.c.l.b16 %v3546
    %v7345 = vunpack.c.h.b16 %v3546
    %v7346 = vunpack.c.l.b16 %v3547
    %v7347 = vunpack.c.l.b16 %v3548
    %v7348 = vunpack.c.h.b16 %v3548
    %v7349 = vunpack.c.l.b16 %v3549
    %v7350 = vunpack.c.h.b16 %v3549
    %v7351 = vunpack.c.l.b16 %v3550
    %v7352 = vunpack.c.l.b16 %v3551
    %v7353 = vunpack.c.h.b16 %v3551
    %v7354 = vunpack.c.l.b16 %v3552
    %v7355 = vunpack.c.h.b16 %v3552
    %v7356 = vunpack.c.l.b16 %v3553
    %v7357 = vunpack.c.l.b16 %v3554
    %v7358 = vunpack.c.h.b16 %v3554
    %v7359 = vunpack.c.l.b16 %v3555
    %v7360 = vunpack.c.h.b16 %v3555
    %v7361 = vunpack.c.l.b16 %v3556
    %v7362 = vunpack.c.l.b16 %v3557
    %v7363 = vunpack.c.h.b16 %v3557
    %v7364 = vunpack.c.l.b16 %v3558
    %v7365 = vunpack.c.h.b16 %v3558
    %v7366 = vunpack.c.l.b16 %v3559
    %v7367 = vunpack.c.l.b16 %v3560
    %v7368 = vunpack.c.h.b16 %v3560
    %v7369 = vunpack.c.l.b16 %v3561
    %v7370 = vunpack.c.h.b16 %v3561
    %v7371 = vunpack.c.l.b16 %v3562
    %v7372 = vunpack.c.l.b16 %v3563
    %v7373 = vunpack.c.h.b16 %v3563
    %v7374 = vunpack.c.l.b16 %v3564
    %v7375 = vunpack.c.h.b16 %v3564
    %v7376 = vunpack.c.l.b16 %v3565
    %v7377 = vunpack.c.l.b16 %v3566
    %v7378 = vunpack.c.h.b16 %v3566
    %v7379 = vunpack.c.l.b16 %v3567
    %v7380 = vunpack.c.h.b16 %v3567
    %v7381 = vunpack.c.l.b16 %v3568
    %v7382 = vunpack.c.l.b16 %v3569
    %v7383 = vunpack.c.h.b16 %v3569
    %v7384 = vunpack.c.l.b16 %v3570
    %v7385 = vunpack.c.h.b16 %v3570
    %v7386 = vunpack.c.l.b16 %v3571
    %v7387 = vunpack.c.l.b16 %v3572
    %v7388 = vunpack.c.h.b16 %v3572
    %v7389 = vunpack.c.l.b16 %v3573
    %v7390 = vunpack.c.h.b16 %v3573
    %v7391 = vunpack.c.l.b16 %v3574
    %v7392 = vunpack.c.l.b16 %v3575
    %v7393 = vunpack.c.h.b16 %v3575
    %v7394 = vunpack.c.l.b16 %v3576
    %v7395 = vunpack.c.h.b16 %v3576
    %v7396 = vunpack.c.l.b16 %v3577
    %v7397 = vunpack.c.l.b16 %v3578
    %v7398 = vunpack.c.h.b16 %v3578
    %v7399 = vunpack.c.l.b16 %v3579
    %v7400 = vunpack.c.h.b16 %v3579
    %v7401 = vunpack.c.l.b16 %v3580
    %v7402 = vunpack.c.l.b16 %v3581
    %v7403 = vunpack.c.h.b16 %v3581
    %v7404 = vunpack.c.l.b16 %v3582
    %v7405 = vunpack.c.h.b16 %v3582
    %v7406 = vunpack.c.l.b16 %v3583
    %v7407 = vunpack.c.l.b16 %v3584
    %v7408 = vunpack.c.h.b16 %v3584
    %v7409 = vunpack.c.l.b16 %v3585
    %v7410 = vunpack.c.h.b16 %v3585
    %v7411 = vunpack.c.l.b16 %v3586
    %v7412 = vunpack.c.l.b16 %v3587
    %v7413 = vunpack.c.h.b16 %v3587
    %v7414 = vunpack.c.l.b16 %v3588
    %v7415 = vunpack.c.h.b16 %v3588
    %v7416 = vunpack.c.l.b16 %v3589
    %v7417 = vunpack.c.l.b16 %v3590
    %v7418 = vunpack.c.h.b16 %v3590
    %v7419 = vunpack.c.l.b16 %v3591
    %v7420 = vunpack.c.h.b16 %v3591
    %v7421 = vunpack.c.l.b16 %v3592
    %v7422 = vunpack.c.l.b16 %v3593
    %v7423 = vunpack.c.h.b16 %v3593
    %v7424 = vunpack.c.l.b16 %v3594
    %v7425 = vunpack.c.h.b16 %v3594
    %v7426 = vunpack.c.l.b16 %v3595
    %v7427 = vunpack.c.l.b16 %v3596
    %v7428 = vunpack.c.h.b16 %v3596
    %v7429 = vunpack.c.l.b16 %v3597
    %v7430 = vunpack.c.h.b16 %v3597
    %v7431 = vunpack.c.l.b16 %v3598
    %v7432 = vunpack.c.l.b16 %v3599
    %v7433 = vunpack.c.h.b16 %v3599
    %v7434 = vunpack.c.l.b16 %v3600
    %v7435 = vunpack.c.h.b16 %v3600
    %v7436 = vunpack.c.l.b16 %v3601
    %v7437 = vunpack.c.l.b16 %v3602
    %v7438 = vunpack.c.h.b16 %v3602
    %v7439 = vunpack.c.l.b16 %v3603
    %v7440 = vunpack.c.h.b16 %v3603
    %v7441 = vunpack.c.l.b16 %v3604
    %v7442 = vunpack.c.l.b16 %v3605
    %v7443 = vunpack.c.h.b16 %v3605
    %v7444 = vunpack.c.l.b16 %v3606
    %v7445 = vunpack.c.h.b16 %v3606
    %v7446 = vunpack.c.l.b16 %v3607
    %v7447 = vunpack.c.l.b16 %v3608
    %v7448 = vunpack.c.h.b16 %v3608
    %v7449 = vunpack.c.l.b16 %v3609
    %v7450 = vunpack.c.h.b16 %v3609
    %v7451 = vunpack.c.l.b16 %v3610
    %v7452 = vunpack.c.l.b16 %v3611
    %v7453 = vunpack.c.h.b16 %v3611
    %v7454 = vunpack.c.l.b16 %v3612
    %v7455 = vunpack.c.h.b16 %v3612
    %v7456 = vunpack.c.l.b16 %v3613
    %v7457 = vunpack.c.l.b16 %v3614
    %v7458 = vunpack.c.h.b16 %v3614
    %v7459 = vunpack.c.l.b16 %v3615
    %v7460 = vunpack.c.h.b16 %v3615
    %v7461 = vunpack.c.l.b16 %v3616
    %v7462 = vunpack.c.l.b16 %v3617
    %v7463 = vunpack.c.h.b16 %v3617
    %v7464 = vunpack.c.l.b16 %v3618
    %v7465 = vunpack.c.h.b16 %v3618
    %v7466 = vunpack.c.l.b16 %v3619
    %v7467 = vunpack.c.l.b16 %v3620
    %v7468 = vunpack.c.h.b16 %v3620
    %v7469 = vunpack.c.l.b16 %v3621
    %v7470 = vunpack.c.h.b16 %v3621
    %v7471 = vunpack.c.l.b16 %v3622
    %v7472 = vunpack.c.l.b16 %v3623
    %v7473 = vunpack.c.h.b16 %v3623
    %v7474 = vunpack.c.l.b16 %v3624
    %v7475 = vunpack.c.h.b16 %v3624
    %v7476 = vunpack.c.l.b16 %v3625
    %v7477 = vunpack.c.l.b16 %v3626
    %v7478 = vunpack.c.h.b16 %v3626
    %v7479 = vunpack.c.l.b16 %v3627
    %v7480 = vunpack.c.h.b16 %v3627
    %v7481 = vunpack.c.l.b16 %v3628
    %v7482 = vunpack.c.l.b16 %v3629
    %v7483 = vunpack.c.h.b16 %v3629
    %v7484 = vunpack.c.l.b16 %v3630
    %v7485 = vunpack.c.h.b16 %v3630
    %v7486 = vunpack.c.l.b16 %v3631
    %v7487 = vunpack.c.l.b16 %v3632
    %v7488 = vunpack.c.h.b16 %v3632
    %v7489 = vunpack.c.l.b16 %v3633
    %v7490 = vunpack.c.h.b16 %v3633
    %v7491 = vunpack.c.l.b16 %v3634
    %v7492 = vunpack.c.l.b16 %v3635
    %v7493 = vunpack.c.h.b16 %v3635
    %v7494 = vunpack.c.l.b16 %v3636
    %v7495 = vunpack.c.h.b16 %v3636
    %v7496 = vunpack.c.l.b16 %v3637
    %v7497 = vunpack.c.l.b16 %v3638
    %v7498 = vunpack.c.h.b16 %v3638
    %v7499 = vunpack.c.l.b16 %v3639
    %v7500 = vunpack.c.h.b16 %v3639
    %v7501 = vunpack.c.l.b16 %v3640
    %v7502 = vunpack.c.l.b16 %v3641
    %v7503 = vunpack.c.h.b16 %v3641
    %v7504 = vunpack.c.l.b16 %v3642
    %v7505 = vunpack.c.h.b16 %v3642
    %v7506 = vunpack.c.l.b16 %v3643
    %v7507 = vunpack.c.l.b16 %v3644
    %v7508 = vunpack.c.h.b16 %v3644
    %v7509 = vunpack.c.l.b16 %v3645
    %v7510 = vunpack.c.h.b16 %v3645
    %v7511 = vunpack.c.l.b16 %v3646
    %v7512 = vunpack.c.l.b16 %v3647
    %v7513 = vunpack.c.h.b16 %v3647
    %v7514 = vunpack.c.l.b16 %v3648
    %v7515 = vunpack.c.h.b16 %v3648
    %v7516 = vunpack.c.l.b16 %v3649
    %v7517 = vunpack.c.l.b16 %v3650
    %v7518 = vunpack.c.h.b16 %v3650
    %v7519 = vunpack.c.l.b16 %v3651
    %v7520 = vunpack.c.h.b16 %v3651
    %v7521 = vunpack.c.l.b16 %v3652
    %v7522 = vunpack.c.l.b16 %v3653
    %v7523 = vunpack.c.h.b16 %v3653
    %v7524 = vunpack.c.l.b16 %v3654
    %v7525 = vunpack.c.h.b16 %v3654
    %v7526 = vunpack.c.l.b16 %v3655
    %v7527 = vunpack.c.l.b16 %v3656
    %v7528 = vunpack.c.h.b16 %v3656
    %v7529 = vunpack.c.l.b16 %v3657
    %v7530 = vunpack.c.h.b16 %v3657
    %v7531 = vunpack.c.l.b16 %v3658
    %v7532 = vunpack.c.l.b16 %v3659
    %v7533 = vunpack.c.h.b16 %v3659
    %v7534 = vunpack.c.l.b16 %v3660
    %v7535 = vunpack.c.h.b16 %v3660
    %v7536 = vunpack.c.l.b16 %v3661
    %v7537 = vunpack.c.l.b16 %v3662
    %v7538 = vunpack.c.h.b16 %v3662
    %v7539 = vunpack.c.l.b16 %v3663
    %v7540 = vunpack.c.h.b16 %v3663
    %v7541 = vunpack.c.l.b16 %v3664
    %v7542 = vunpack.c.l.b16 %v3665
    %v7543 = vunpack.c.h.b16 %v3665
    %v7544 = vunpack.c.l.b16 %v3666
    %v7545 = vunpack.c.h.b16 %v3666
    %v7546 = vunpack.c.l.b16 %v3667
    %v7547 = vunpack.c.l.b16 %v3668
    %v7548 = vunpack.c.h.b16 %v3668
    %v7549 = vunpack.c.l.b16 %v3669
    %v7550 = vunpack.c.h.b16 %v3669
    %v7551 = vunpack.c.l.b16 %v3670
    %v7552 = vunpack.c.l.b16 %v3671
    %v7553 = vunpack.c.h.b16 %v3671
    %v7554 = vunpack.c.l.b16 %v3672
    %v7555 = vunpack.c.h.b16 %v3672
    %v7556 = vunpack.c.l.b16 %v3673
    %v7557 = vunpack.c.l.b16 %v3674
    %v7558 = vunpack.c.h.b16 %v3674
    %v7559 = vunpack.c.l.b16 %v3675
    %v7560 = vunpack.c.h.b16 %v3675
    %v7561 = vunpack.c.l.b16 %v3676
    %v7562 = vunpack.c.l.b16 %v3677
    %v7563 = vunpack.c.h.b16 %v3677
    %v7564 = vunpack.c.l.b16 %v3678
    %v7565 = vunpack.c.h.b16 %v3678
    %v7566 = vunpack.c.l.b16 %v3679
    %v7567 = vunpack.c.l.b16 %v3680
    %v7568 = vunpack.c.h.b16 %v3680
    %v7569 = vunpack.c.l.b16 %v3681
    %v7570 = vunpack.c.h.b16 %v3681
    %v7571 = vunpack.c.l.b16 %v3682
    %v7572 = vunpack.c.l.b16 %v3683
    %v7573 = vunpack.c.h.b16 %v3683
    %v7574 = vunpack.c.l.b16 %v3684
    %v7575 = vunpack.c.h.b16 %v3684
    %v7576 = vunpack.c.l.b16 %v3685
    %v7577 = vunpack.c.l.b16 %v3686
    %v7578 = vunpack.c.h.b16 %v3686
    %v7579 = vunpack.c.l.b16 %v3687
    %v7580 = vunpack.c.h.b16 %v3687
    %v7581 = vunpack.c.l.b16 %v3688
    %v7582 = vunpack.c.l.b16 %v3689
    %v7583 = vunpack.c.h.b16 %v3689
    %v7584 = vunpack.c.l.b16 %v3690
    %v7585 = vunpack.c.h.b16 %v3690
    %v7586 = vunpack.c.l.b16 %v3691
    %v7587 = vunpack.c.l.b16 %v3692
    %v7588 = vunpack.c.h.b16 %v3692
    %v7589 = vunpack.c.l.b16 %v3693
    %v7590 = vunpack.c.h.b16 %v3693
    %v7591 = vunpack.c.l.b16 %v3694
    %v7592 = vunpack.c.l.b16 %v3695
    %v7593 = vunpack.c.h.b16 %v3695
    %v7594 = vunpack.c.l.b16 %v3696
    %v7595 = vunpack.c.h.b16 %v3696
    %v7596 = vunpack.c.l.b16 %v3697
    %v7597 = vunpack.c.l.b16 %v3698
    %v7598 = vunpack.c.h.b16 %v3698
    %v7599 = vunpack.c.l.b16 %v3699
    %v7600 = vunpack.c.h.b16 %v3699
    %v7601 = vunpack.c.l.b16 %v3700
    %v7602 = vunpack.c.l.b16 %v3701
    %v7603 = vunpack.c.h.b16 %v3701
    %v7604 = vunpack.c.l.b16 %v3702
    %v7605 = vunpack.c.h.b16 %v3702
    %v7606 = vunpack.c.l.b16 %v3703
    %v7607 = vunpack.c.l.b16 %v3704
    %v7608 = vunpack.c.h.b16 %v3704
    %v7609 = vunpack.c.l.b16 %v3705
    %v7610 = vunpack.c.h.b16 %v3705
    %v7611 = vunpack.c.l.b16 %v3706
    %v7612 = vunpack.c.l.b16 %v3707
    %v7613 = vunpack.c.h.b16 %v3707
    %v7614 = vunpack.c.l.b16 %v3708
    %v7615 = vunpack.c.h.b16 %v3708
    %v7616 = vunpack.c.l.b16 %v3709
    %v7617 = vunpack.c.l.b16 %v3710
    %v7618 = vunpack.c.h.b16 %v3710
    %v7619 = vunpack.c.l.b16 %v3711
    %v7620 = vunpack.c.h.b16 %v3711
    %v7621 = vunpack.c.l.b16 %v3712
    %v7622 = vunpack.c.l.b16 %v3713
    %v7623 = vunpack.c.h.b16 %v3713
    %v7624 = vunpack.c.l.b16 %v3714
    %v7625 = vunpack.c.h.b16 %v3714
    %v7626 = vunpack.c.l.b16 %v3715
    %v7627 = vunpack.c.l.b16 %v3716
    %v7628 = vunpack.c.h.b16 %v3716
    %v7629 = vunpack.c.l.b16 %v3717
    %v7630 = vunpack.c.h.b16 %v3717
    %v7631 = vunpack.c.l.b16 %v3718
    %v7632 = vunpack.c.l.b16 %v3719
    %v7633 = vunpack.c.h.b16 %v3719
    %v7634 = vunpack.c.l.b16 %v3720
    %v7635 = vunpack.c.h.b16 %v3720
    %v7636 = vunpack.c.l.b16 %v3721
    %v7637 = vunpack.c.l.b16 %v3722
    %v7638 = vunpack.c.h.b16 %v3722
    %v7639 = vunpack.c.l.b16 %v3723
    %v7640 = vunpack.c.h.b16 %v3723
    %v7641 = vunpack.c.l.b16 %v3724
    %v7642 = vunpack.c.l.b16 %v3725
    %v7643 = vunpack.c.h.b16 %v3725
    %v7644 = vunpack.c.l.b16 %v3726
    %v7645 = vunpack.c.h.b16 %v3726
    %v7646 = vunpack.c.l.b16 %v3727
    %v7647 = vunpack.c.l.b16 %v3728
    %v7648 = vunpack.c.h.b16 %v3728
    %v7649 = vunpack.c.l.b16 %v3729
    %v7650 = vunpack.c.h.b16 %v3729
    %v7651 = vunpack.c.l.b16 %v3730
    %v7652 = vunpack.c.l.b16 %v3731
    %v7653 = vunpack.c.h.b16 %v3731
    %v7654 = vunpack.c.l.b16 %v3732
    %v7655 = vunpack.c.h.b16 %v3732
    %v7656 = vunpack.c.l.b16 %v3733
    %v7657 = vunpack.c.l.b16 %v3734
    %v7658 = vunpack.c.h.b16 %v3734
    %v7659 = vunpack.c.l.b16 %v3735
    %v7660 = vunpack.c.h.b16 %v3735
    %v7661 = vunpack.c.l.b16 %v3736
    %v7662 = vunpack.c.l.b16 %v3737
    %v7663 = vunpack.c.h.b16 %v3737
    %v7664 = vunpack.c.l.b16 %v3738
    %v7665 = vunpack.c.h.b16 %v3738
    %v7666 = vunpack.c.l.b16 %v3739
    %v7667 = vunpack.c.l.b16 %v3740
    %v7668 = vunpack.c.h.b16 %v3740
    %v7669 = vunpack.c.l.b16 %v3741
    %v7670 = vunpack.c.h.b16 %v3741
    %v7671 = vunpack.c.l.b16 %v3742
    %v7672 = vunpack.c.l.b16 %v3743
    %v7673 = vunpack.c.h.b16 %v3743
    %v7674 = vunpack.c.l.b16 %v3744
    %v7675 = vunpack.c.h.b16 %v3744
    %v7676 = vunpack.c.l.b16 %v3745
    %v7677 = vunpack.c.l.b16 %v3746
    %v7678 = vunpack.c.h.b16 %v3746
    %v7679 = vunpack.c.l.b16 %v3747
    %v7680 = vunpack.c.h.b16 %v3747
    %v7681 = vunpack.c.l.b16 %v3748
    %v7682 = vunpack.c.l.b16 %v3749
    %v7683 = vunpack.c.h.b16 %v3749
    %v7684 = vunpack.c.l.b16 %v3750
    %v7685 = vunpack.c.h.b16 %v3750
    %v7686 = vunpack.c.l.b16 %v3751
    %v7687 = vunpack.c.l.b16 %v3752
    %v7688 = vunpack.c.h.b16 %v3752
    %v7689 = vunpack.c.l.b16 %v3753
    %v7690 = vunpack.c.h.b16 %v3753
    %v7691 = vunpack.c.l.b16 %v3754
    %v7692 = vunpack.c.l.b16 %v3755
    %v7693 = vunpack.c.h.b16 %v3755
    %v7694 = vunpack.c.l.b16 %v3756
    %v7695 = vunpack.c.h.b16 %v3756
    %v7696 = vunpack.c.l.b16 %v3757
    %v7697 = vunpack.c.l.b16 %v3758
    %v7698 = vunpack.c.h.b16 %v3758
    %v7699 = vunpack.c.l.b16 %v3759
    %v7700 = vunpack.c.h.b16 %v3759
    %v7701 = vunpack.c.l.b16 %v3760
    %v7702 = vunpack.c.l.b16 %v3761
    %v7703 = vunpack.c.h.b16 %v3761
    %v7704 = vunpack.c.l.b16 %v3762
    %v7705 = vunpack.c.h.b16 %v3762
    %v7706 = vunpack.c.l.b16 %v3763
    %v7707 = vunpack.c.l.b16 %v3764
    %v7708 = vunpack.c.h.b16 %v3764
    %v7709 = vunpack.c.l.b16 %v3765
    %v7710 = vunpack.c.h.b16 %v3765
    %v7711 = vunpack.c.l.b16 %v3766
    %v7712 = vunpack.c.l.b16 %v3767
    %v7713 = vunpack.c.h.b16 %v3767
    %v7714 = vunpack.c.l.b16 %v3768
    %v7715 = vunpack.c.h.b16 %v3768
    %v7716 = vunpack.c.l.b16 %v3769
    %v7717 = vunpack.c.l.b16 %v3770
    %v7718 = vunpack.c.h.b16 %v3770
    %v7719 = vunpack.c.l.b16 %v3771
    %v7720 = vunpack.c.h.b16 %v3771
    %v7721 = vunpack.c.l.b16 %v3772
    %v7722 = vunpack.c.l.b16 %v3773
    %v7723 = vunpack.c.h.b16 %v3773
    %v7724 = vunpack.c.l.b16 %v3774
    %v7725 = vunpack.c.h.b16 %v3774
    %v7726 = vunpack.c.l.b16 %v3775
    %v7727 = vunpack.c.l.b16 %v3776
    %v7728 = vunpack.c.h.b16 %v3776
    %v7729 = vunpack.c.l.b16 %v3777
    %v7730 = vunpack.c.h.b16 %v3777
    %v7731 = vunpack.c.l.b16 %v3778
    %v7732 = vunpack.c.l.b16 %v3779
    %v7733 = vunpack.c.h.b16 %v3779
    %v7734 = vunpack.c.l.b16 %v3780
    %v7735 = vunpack.c.h.b16 %v3780
    %v7736 = vunpack.c.l.b16 %v3781
    %v7737 = vunpack.c.l.b16 %v3782
    %v7738 = vunpack.c.h.b16 %v3782
    %v7739 = vunpack.c.l.b16 %v3783
    %v7740 = vunpack.c.h.b16 %v3783
    %v7741 = vunpack.c.l.b16 %v3784
    %v7742 = vunpack.c.l.b16 %v3785
    %v7743 = vunpack.c.h.b16 %v3785
    %v7744 = vunpack.c.l.b16 %v3786
    %v7745 = vunpack.c.h.b16 %v3786
    %v7746 = vunpack.c.l.b16 %v3787
    %v7747 = vunpack.c.l.b16 %v3788
    %v7748 = vunpack.c.h.b16 %v3788
    %v7749 = vunpack.c.l.b16 %v3789
    %v7750 = vunpack.c.h.b16 %v3789
    %v7751 = vunpack.c.l.b16 %v3790
    %v7752 = vunpack.c.l.b16 %v3791
    %v7753 = vunpack.c.h.b16 %v3791
    %v7754 = vunpack.c.l.b16 %v3792
    %v7755 = vunpack.c.h.b16 %v3792
    %v7756 = vunpack.c.l.b16 %v3793
    %v7757 = vunpack.c.l.b16 %v3794
    %v7758 = vunpack.c.h.b16 %v3794
    %v7759 = vunpack.c.l.b16 %v3795
    %v7760 = vunpack.c.h.b16 %v3795
    %v7761 = vunpack.c.l.b16 %v3796
    %v7762 = vunpack.c.l.b16 %v3797
    %v7763 = vunpack.c.h.b16 %v3797
    %v7764 = vunpack.c.l.b16 %v3798
    %v7765 = vunpack.c.h.b16 %v3798
    %v7766 = vunpack.c.l.b16 %v3799
    %v7767 = vunpack.c.l.b16 %v3800
    %v7768 = vunpack.c.h.b16 %v3800
    %v7769 = vunpack.c.l.b16 %v3801
    %v7770 = vunpack.c.h.b16 %v3801
    %v7771 = vunpack.c.l.b16 %v3802
    %v7772 = vunpack.c.l.b16 %v3803
    %v7773 = vunpack.c.h.b16 %v3803
    %v7774 = vunpack.c.l.b16 %v3804
    %v7775 = vunpack.c.h.b16 %v3804
    %v7776 = vunpack.c.l.b16 %v3805
    %v7777 = vunpack.c.l.b16 %v3806
    %v7778 = vunpack.c.h.b16 %v3806
    %v7779 = vunpack.c.l.b16 %v3807
    %v7780 = vunpack.c.h.b16 %v3807
    %v7781 = vunpack.c.l.b16 %v3808
    %v7782 = vunpack.c.l.b16 %v3809
    %v7783 = vunpack.c.h.b16 %v3809
    %v7784 = vunpack.c.l.b16 %v3810
    %v7785 = vunpack.c.h.b16 %v3810
    %v7786 = vunpack.c.l.b16 %v3811
    %v7787 = vunpack.c.l.b16 %v3812
    %v7788 = vunpack.c.h.b16 %v3812
    %v7789 = vunpack.c.l.b16 %v3813
    %v7790 = vunpack.c.h.b16 %v3813
    %v7791 = vunpack.c.l.b16 %v3814
    %v7792 = vunpack.c.l.b16 %v3815
    %v7793 = vunpack.c.h.b16 %v3815
    %v7794 = vunpack.c.l.b16 %v3816
    %v7795 = vunpack.c.h.b16 %v3816
    %v7796 = vunpack.c.l.b16 %v3817
    %v7797 = vunpack.c.l.b16 %v3818
    %v7798 = vunpack.c.h.b16 %v3818
    %v7799 = vunpack.c.l.b16 %v3819
    %v7800 = vunpack.c.h.b16 %v3819
    %v7801 = vunpack.c.l.b16 %v3820
    %v7802 = vunpack.c.l.b16 %v3821
    %v7803 = vunpack.c.h.b16 %v3821
    %v7804 = vunpack.c.l.b16 %v3822
    %v7805 = vunpack.c.h.b16 %v3822
    %v7806 = vunpack.c.l.b16 %v3823
    %v7807 = vunpack.c.l.b16 %v3824
    %v7808 = vunpack.c.h.b16 %v3824
    %v7809 = vunpack.c.l.b16 %v3825
    %v7810 = vunpack.c.h.b16 %v3825
    %v7811 = vunpack.c.l.b16 %v3826
    %v7812 = vunpack.c.l.b16 %v3827
    %v7813 = vunpack.c.h.b16 %v3827
    %v7814 = vunpack.c.l.b16 %v3828
    %v7815 = vunpack.c.h.b16 %v3828
    %v7816 = vunpack.c.l.b16 %v3829
    %v7817 = vunpack.c.l.b16 %v3830
    %v7818 = vunpack.c.h.b16 %v3830
    %v7819 = vunpack.c.l.b16 %v3831
    %v7820 = vunpack.c.h.b16 %v3831
    %v7821 = vunpack.c.l.b16 %v3832
    %v7822 = vunpack.c.l.b16 %v3833
    %v7823 = vunpack.c.h.b16 %v3833
    %v7824 = vunpack.c.l.b16 %v3834
    %v7825 = vunpack.c.h.b16 %v3834
    %v7826 = vunpack.c.l.b16 %v3835
    %v7827 = vunpack.c.l.b16 %v3836
    %v7828 = vunpack.c.h.b16 %v3836
    %v7829 = vunpack.c.l.b16 %v3837
    %v7830 = vunpack.c.h.b16 %v3837
    %v7831 = vunpack.c.l.b16 %v3838
    %v7832 = vunpack.c.l.b16 %v3839
    %v7833 = vunpack.c.h.b16 %v3839
    %v7834 = vunpack.c.l.b16 %v3840
    %v7835 = vunpack.c.h.b16 %v3840
    %v7836 = vunpack.c.l.b16 %v3841
    %v7837 = vunpack.c.l.b16 %v3842
    %v7838 = vunpack.c.h.b16 %v3842
    %v7839 = vunpack.c.l.b16 %v3843
    %v7840 = vunpack.c.h.b16 %v3843
    %v7841 = vunpack.c.l.b16 %v3844
    %v7842 = vunpack.c.l.b16 %v3845
    %v7843 = vunpack.c.h.b16 %v3845
    %v7844 = vunpack.c.l.b16 %v3846
    %v7845 = vunpack.c.h.b16 %v3846
    %v7846 = vunpack.c.l.b16 %v3847
    %v7847 = vunpack.c.l.b16 %v3848
    %v7848 = vunpack.c.h.b16 %v3848
    %v7849 = vunpack.c.l.b16 %v3849
    %v7850 = vunpack.c.h.b16 %v3849
    %v7851 = vunpack.c.l.b16 %v3850
    %v7852 = vunpack.c.l.b16 %v3851
    %v7853 = vunpack.c.h.b16 %v3851
    %v7854 = vunpack.c.l.b16 %v3852
    %v7855 = vunpack.c.h.b16 %v3852
    %v7856 = vunpack.c.l.b16 %v3853
    %v7857 = vunpack.c.l.b16 %v3854
    %v7858 = vunpack.c.h.b16 %v3854
    %v7859 = vunpack.c.l.b16 %v3855
    %v7860 = vunpack.c.h.b16 %v3855
    %v7861 = vunpack.c.l.b16 %v3856
    %v7862 = vunpack.c.l.b16 %v3857
    %v7863 = vunpack.c.h.b16 %v3857
    %v7864 = vunpack.c.l.b16 %v3858
    %v7865 = vunpack.c.h.b16 %v3858
    %v7866 = vunpack.c.l.b16 %v3859
    %v7867 = vunpack.c.l.b16 %v3860
    %v7868 = vunpack.c.h.b16 %v3860
    %v7869 = vunpack.c.l.b16 %v3861
    %v7870 = vunpack.c.h.b16 %v3861
    %v7871 = vunpack.c.l.b16 %v3862
    %v7872 = vunpack.c.l.b16 %v3863
    %v7873 = vunpack.c.h.b16 %v3863
    %v7874 = vunpack.c.l.b16 %v3864
    %v7875 = vunpack.c.h.b16 %v3864
    %v7876 = vunpack.c.l.b16 %v3865
    %v7877 = vunpack.c.l.b16 %v3866
    %v7878 = vunpack.c.h.b16 %v3866
    %v7879 = vunpack.c.l.b16 %v3867
    %v7880 = vunpack.c.h.b16 %v3867
    %v7881 = vunpack.c.l.b16 %v3868
    %v7882 = vunpack.c.l.b16 %v3869
    %v7883 = vunpack.c.h.b16 %v3869
    %v7884 = vunpack.c.l.b16 %v3870
    %v7885 = vunpack.c.h.b16 %v3870
    %v7886 = vunpack.c.l.b16 %v3871
    %v7887 = vunpack.c.l.b16 %v3872
    %v7888 = vunpack.c.h.b16 %v3872
    %v7889 = vunpack.c.l.b16 %v3873
    %v7890 = vunpack.c.h.b16 %v3873
    %v7891 = vunpack.c.l.b16 %v3874
    %v7892 = vunpack.c.l.b16 %v3875
    %v7893 = vunpack.c.h.b16 %v3875
    %v7894 = vunpack.c.l.b16 %v3876
    %v7895 = vunpack.c.h.b16 %v3876
    %v7896 = vunpack.c.l.b16 %v3877
    %v7897 = vunpack.c.l.b16 %v3878
    %v7898 = vunpack.c.h.b16 %v3878
    %v7899 = vunpack.c.l.b16 %v3879
    %v7900 = vunpack.c.h.b16 %v3879
    %v7901 = vunpack.c.l.b16 %v3880
    %v7902 = vunpack.c.l.b16 %v3881
    %v7903 = vunpack.c.h.b16 %v3881
    %v7904 = vunpack.c.l.b16 %v3882
    %v7905 = vunpack.c.h.b16 %v3882
    %v7906 = vunpack.c.l.b16 %v3883
    %v7907 = vunpack.c.l.b16 %v3884
    %v7908 = vunpack.c.h.b16 %v3884
    %v7909 = vunpack.c.l.b16 %v3885
    %v7910 = vunpack.c.h.b16 %v3885
    %v7911 = vunpack.c.l.b16 %v3886
    %v7912 = vunpack.c.l.b16 %v3887
    %v7913 = vunpack.c.h.b16 %v3887
    %v7914 = vunpack.c.l.b16 %v3888
    %v7915 = vunpack.c.h.b16 %v3888
    %v7916 = vunpack.c.l.b16 %v3889
    %v7917 = vunpack.c.l.b16 %v3890
    %v7918 = vunpack.c.h.b16 %v3890
    %v7919 = vunpack.c.l.b16 %v3891
    %v7920 = vunpack.c.h.b16 %v3891
    %v7921 = vunpack.c.l.b16 %v3892
    %v7922 = vunpack.c.l.b16 %v3893
    %v7923 = vunpack.c.h.b16 %v3893
    %v7924 = vunpack.c.l.b16 %v3894
    %v7925 = vunpack.c.h.b16 %v3894
    %v7926 = vunpack.c.l.b16 %v3895
    %v7927 = vunpack.c.l.b16 %v3896
    %v7928 = vunpack.c.h.b16 %v3896
    %v7929 = vunpack.c.l.b16 %v3897
    %v7930 = vunpack.c.h.b16 %v3897
    %v7931 = vunpack.c.l.b16 %v3898
    %v7932 = vunpack.c.l.b16 %v3899
    %v7933 = vunpack.c.h.b16 %v3899
    %v7934 = vunpack.c.l.b16 %v3900
    %v7935 = vunpack.c.h.b16 %v3900
    %v7936 = vunpack.c.l.b16 %v3901
    %v7937 = vunpack.c.l.b16 %v3902
    %v7938 = vunpack.c.h.b16 %v3902
    %v7939 = vunpack.c.l.b16 %v3903
    %v7940 = vunpack.c.h.b16 %v3903
    %v7941 = vunpack.c.l.b16 %v3904
    %v7942 = vunpack.c.l.b16 %v3905
    %v7943 = vunpack.c.h.b16 %v3905
    %v7944 = vunpack.c.l.b16 %v3906
    %v7945 = vunpack.c.h.b16 %v3906
    %v7946 = vunpack.c.l.b16 %v3907
    %v7947 = vunpack.c.l.b16 %v3908
    %v7948 = vunpack.c.h.b16 %v3908
    %v7949 = vunpack.c.l.b16 %v3909
    %v7950 = vunpack.c.h.b16 %v3909
    %v7951 = vunpack.c.l.b16 %v3910
    %v7952 = vunpack.c.l.b16 %v3911
    %v7953 = vunpack.c.h.b16 %v3911
    %v7954 = vunpack.c.l.b16 %v3912
    %v7955 = vunpack.c.h.b16 %v3912
    %v7956 = vunpack.c.l.b16 %v3913
    %v7957 = vunpack.c.l.b16 %v3914
    %v7958 = vunpack.c.h.b16 %v3914
    %v7959 = vunpack.c.l.b16 %v3915
    %v7960 = vunpack.c.h.b16 %v3915
    %v7961 = vunpack.c.l.b16 %v3916
    %v7962 = vunpack.c.l.b16 %v3917
    %v7963 = vunpack.c.h.b16 %v3917
    %v7964 = vunpack.c.l.b16 %v3918
    %v7965 = vunpack.c.h.b16 %v3918
    %v7966 = vunpack.c.l.b16 %v3919
    %v7967 = vunpack.c.l.b16 %v3920
    %v7968 = vunpack.c.h.b16 %v3920
    %v7969 = vunpack.c.l.b16 %v3921
    %v7970 = vunpack.c.h.b16 %v3921
    %v7971 = vunpack.c.l.b16 %v3922
    %v7972 = vunpack.c.l.b16 %v3923
    %v7973 = vunpack.c.h.b16 %v3923
    %v7974 = vunpack.c.l.b16 %v3924
    %v7975 = vunpack.c.h.b16 %v3924
    %v7976 = vunpack.c.l.b16 %v3925
    %v7977 = vunpack.c.l.b16 %v3926
    %v7978 = vunpack.c.h.b16 %v3926
    %v7979 = vunpack.c.l.b16 %v3927
    %v7980 = vunpack.c.h.b16 %v3927
    %v7981 = vunpack.c.l.b16 %v3928
    %v7982 = vunpack.c.l.b16 %v3929
    %v7983 = vunpack.c.h.b16 %v3929
    %v7984 = vunpack.c.l.b16 %v3930
    %v7985 = vunpack.c.h.b16 %v3930
    %v7986 = vunpack.c.l.b16 %v3931
    %v7987 = vunpack.c.l.b16 %v3932
    %v7988 = vunpack.c.h.b16 %v3932
    %v7989 = vunpack.c.l.b16 %v3933
    %v7990 = vunpack.c.h.b16 %v3933
    %v7991 = vunpack.c.l.b16 %v3934
    %v7992 = vunpack.c.l.b16 %v3935
    %v7993 = vunpack.c.h.b16 %v3935
    %v7994 = vunpack.c.l.b16 %v3936
    %v7995 = vunpack.c.h.b16 %v3936
    %v7996 = vunpack.c.l.b16 %v3937
    %v7997 = vunpack.c.l.b16 %v3938
    %v7998 = vunpack.c.h.b16 %v3938
    %v7999 = vunpack.c.l.b16 %v3939
    %v8000 = vunpack.c.h.b16 %v3939
    %v8001 = vunpack.c.l.b16 %v3940
    %v8002 = vunpack.c.l.b16 %v3941
    %v8003 = vunpack.c.h.b16 %v3941
    %v8004 = vunpack.c.l.b16 %v3942
    %v8005 = vunpack.c.h.b16 %v3942
    %v8006 = vunpack.c.l.b16 %v3943
    %v8007 = vunpack.c.l.b16 %v3944
    %v8008 = vunpack.c.h.b16 %v3944
    %v8009 = vunpack.c.l.b16 %v3945
    %v8010 = vunpack.c.h.b16 %v3945
    %v8011 = vunpack.c.l.b16 %v3946
    %v8012 = vunpack.c.l.b16 %v3947
    %v8013 = vunpack.c.h.b16 %v3947
    %v8014 = vunpack.c.l.b16 %v3948
    %v8015 = vunpack.c.h.b16 %v3948
    %v8016 = vunpack.c.l.b16 %v3949
    %v8017 = vunpack.c.l.b16 %v3950
    %v8018 = vunpack.c.h.b16 %v3950
    %v8019 = vunpack.c.l.b16 %v3951
    %v8020 = vunpack.c.h.b16 %v3951
    %v8021 = vunpack.c.l.b16 %v3952
    %v8022 = vunpack.c.l.b16 %v3953
    %v8023 = vunpack.c.h.b16 %v3953
    %v8024 = vunpack.c.l.b16 %v3954
    %v8025 = vunpack.c.h.b16 %v3954
    %v8026 = vunpack.c.l.b16 %v3955
    %v8027 = vunpack.c.l.b16 %v3956
    %v8028 = vunpack.c.h.b16 %v3956
    %v8029 = vunpack.c.l.b16 %v3957
    %v8030 = vunpack.c.h.b16 %v3957
    %v8031 = vunpack.c.l.b16 %v3958
    %v8032 = vunpack.c.l.b16 %v3959
    %v8033 = vunpack.c.h.b16 %v3959
    %v8034 = vunpack.c.l.b16 %v3960
    %v8035 = vunpack.c.h.b16 %v3960
    %v8036 = vunpack.c.l.b16 %v3961
    %v8037 = vunpack.c.l.b16 %v3962
    %v8038 = vunpack.c.h.b16 %v3962
    %v8039 = vunpack.c.l.b16 %v3963
    %v8040 = vunpack.c.h.b16 %v3963
    %v8041 = vunpack.c.l.b16 %v3964
    %v8042 = vunpack.c.l.b16 %v3965
    %v8043 = vunpack.c.h.b16 %v3965
    %v8044 = vunpack.c.l.b16 %v3966
    %v8045 = vunpack.c.h.b16 %v3966
    %v8046 = vunpack.c.l.b16 %v3967
    %v8047 = vunpack.c.l.b16 %v3968
    %v8048 = vunpack.c.h.b16 %v3968
    %v8049 = vunpack.c.l.b16 %v3969
    %v8050 = vunpack.c.h.b16 %v3969
    %v8051 = vunpack.c.l.b16 %v3970
    %v8052 = vunpack.c.l.b16 %v3971
    %v8053 = vunpack.c.h.b16 %v3971
    %v8054 = vunpack.c.l.b16 %v3972
    %v8055 = vunpack.c.h.b16 %v3972
    %v8056 = vunpack.c.l.b16 %v3973
    %v8057 = vunpack.c.l.b16 %v3974
    %v8058 = vunpack.c.h.b16 %v3974
    %v8059 = vunpack.c.l.b16 %v3975
    %v8060 = vunpack.c.h.b16 %v3975
    %v8061 = vunpack.c.l.b16 %v3976
    %v8062 = vunpack.c.l.b16 %v3977
    %v8063 = vunpack.c.h.b16 %v3977
    %v8064 = vunpack.c.l.b16 %v3978
    %v8065 = vunpack.c.h.b16 %v3978
    %v8066 = vunpack.c.l.b16 %v3979
    %v8067 = vunpack.c.l.b16 %v3980
    %v8068 = vunpack.c.h.b16 %v3980
    %v8069 = vunpack.c.l.b16 %v3981
    %v8070 = vunpack.c.h.b16 %v3981
    %v8071 = vunpack.c.l.b16 %v3982
    %v8072 = vunpack.c.l.b16 %v3983
    %v8073 = vunpack.c.h.b16 %v3983
    %v8074 = vunpack.c.l.b16 %v3984
    %v8075 = vunpack.c.h.b16 %v3984
    %v8076 = vunpack.c.l.b16 %v3985
    %v8077 = vunpack.c.l.b16 %v3986
    %v8078 = vunpack.c.h.b16 %v3986
    %v8079 = vunpack.c.l.b16 %v3987
    %v8080 = vunpack.c.h.b16 %v3987
    %v8081 = vunpack.c.l.b16 %v3988
    %v8082 = vunpack.c.l.b16 %v3989
    %v8083 = vunpack.c.h.b16 %v3989
    %v8084 = vunpack.c.l.b16 %v3990
    %v8085 = vunpack.c.h.b16 %v3990
    %v8086 = vunpack.c.l.b16 %v3991
    %v8087 = vunpack.c.l.b16 %v3992
    %v8088 = vunpack.c.h.b16 %v3992
    %v8089 = vunpack.c.l.b16 %v3993
    %v8090 = vunpack.c.h.b16 %v3993
    %v8091 = vunpack.c.l.b16 %v3994
    %v8092 = vunpack.c.l.b16 %v3995
    %v8093 = vunpack.c.h.b16 %v3995
    %v8094 = vunpack.c.l.b16 %v3996
    %v8095 = vunpack.c.h.b16 %v3996
    %v8096 = vunpack.c.l.b16 %v3997
    %v8097 = vunpack.c.l.b16 %v3998
    %v8098 = vunpack.c.h.b16 %v3998
    %v8099 = vunpack.c.l.b16 %v3999
    %v8100 = vunpack.c.h.b16 %v3999
    %v8101 = vunpack.c.l.b16 %v4000
    %v8102 = vunpack.c.l.b16 %v4001
    %v8103 = vunpack.c.h.b16 %v4001
    %v8104 = vunpack.c.l.b16 %v4002
    %v8105 = vunpack.c.h.b16 %v4002
    %v8106 = vunpack.c.l.b16 %v4003
    %v8107 = vunpack.c.l.b16 %v4004
    %v8108 = vunpack.c.h.b16 %v4004
    %v8109 = vunpack.c.l.b16 %v4005
    %v8110 = vunpack.c.h.b16 %v4005
    %v8111 = vunpack.c.l.b16 %v4006
    %v8112 = vunpack.c.l.b16 %v4007
    %v8113 = vunpack.c.h.b16 %v4007
    %v8114 = vunpack.c.l.b16 %v4008
    %v8115 = vunpack.c.h.b16 %v4008
    %v8116 = vunpack.c.l.b16 %v4009
    %v8117 = vunpack.c.l.b16 %v4010
    %v8118 = vunpack.c.h.b16 %v4010
    %v8119 = vunpack.c.l.b16 %v4011
    %v8120 = vunpack.c.h.b16 %v4011
    %v8121 = vunpack.c.l.b16 %v4012
    %v8122 = vunpack.c.l.b16 %v4013
    %v8123 = vunpack.c.h.b16 %v4013
    %v8124 = vunpack.c.l.b16 %v4014
    %v8125 = vunpack.c.h.b16 %v4014
    %v8126 = vunpack.c.l.b16 %v4015
    %v8127 = vunpack.c.l.b16 %v4016
    %v8128 = vunpack.c.h.b16 %v4016
    %v8129 = vunpack.c.l.b16 %v4017
    %v8130 = vunpack.c.h.b16 %v4017
    %v8131 = vunpack.c.l.b16 %v4018
    %v8132 = vunpack.c.l.b16 %v4019
    %v8133 = vunpack.c.h.b16 %v4019
    %v8134 = vunpack.c.l.b16 %v4020
    %v8135 = vunpack.c.h.b16 %v4020
    %v8136 = vunpack.c.l.b16 %v4021
    %v8137 = vunpack.c.l.b16 %v4022
    %v8138 = vunpack.c.h.b16 %v4022
    %v8139 = vunpack.c.l.b16 %v4023
    %v8140 = vunpack.c.h.b16 %v4023
    %v8141 = vunpack.c.l.b16 %v4024
    %v8142 = vunpack.c.l.b16 %v4025
    %v8143 = vunpack.c.h.b16 %v4025
    %v8144 = vunpack.c.l.b16 %v4026
    %v8145 = vunpack.c.h.b16 %v4026
    %v8146 = vunpack.c.l.b16 %v4027
    %v8147 = vunpack.c.l.b16 %v4028
    %v8148 = vunpack.c.h.b16 %v4028
    %v8149 = vunpack.c.l.b16 %v4029
    %v8150 = vunpack.c.h.b16 %v4029
    %v8151 = vunpack.c.l.b16 %v4030
    %v8152 = vunpack.c.l.b16 %v4031
    %v8153 = vunpack.c.h.b16 %v4031
    %v8154 = vunpack.c.l.b16 %v4032
    %v8155 = vunpack.c.h.b16 %v4032
    %v8156 = vunpack.c.l.b16 %v4033
    %v8157 = vpack.c.b16 %v5602, %v5597
    %v8158 = vpack.c.b16 %v5603, %v5598
    %v8159 = vpack.c.b16 %v5604, %v5599
    %v8160 = vpack.c.b16 %v5605, %v5600
    %v8161 = vpack.c.b16 %v5606, %v5601
    %v8162 = vpack.c.b16 %v5612, %v5607
    %v8163 = vpack.c.b16 %v5613, %v5608
    %v8164 = vpack.c.b16 %v5614, %v5609
    %v8165 = vpack.c.b16 %v5615, %v5610
    %v8166 = vpack.c.b16 %v5616, %v5611
    %v8167 = vpack.c.b16 %v5622, %v5617
    %v8168 = vpack.c.b16 %v5623, %v5618
    %v8169 = vpack.c.b16 %v5624, %v5619
    %v8170 = vpack.c.b16 %v5625, %v5620
    %v8171 = vpack.c.b16 %v5626, %v5621
    %v8172 = vpack.c.b16 %v5632, %v5627
    %v8173 = vpack.c.b16 %v5633, %v5628
    %v8174 = vpack.c.b16 %v5634, %v5629
    %v8175 = vpack.c.b16 %v5635, %v5630
    %v8176 = vpack.c.b16 %v5636, %v5631
    %v8177 = vpack.c.b16 %v5642, %v5637
    %v8178 = vpack.c.b16 %v5643, %v5638
    %v8179 = vpack.c.b16 %v5644, %v5639
    %v8180 = vpack.c.b16 %v5645, %v5640
    %v8181 = vpack.c.b16 %v5646, %v5641
    %v8182 = vpack.c.b16 %v5652, %v5647
    %v8183 = vpack.c.b16 %v5653, %v5648
    %v8184 = vpack.c.b16 %v5654, %v5649
    %v8185 = vpack.c.b16 %v5655, %v5650
    %v8186 = vpack.c.b16 %v5656, %v5651
    %v8187 = vpack.c.b16 %v5662, %v5657
    %v8188 = vpack.c.b16 %v5663, %v5658
    %v8189 = vpack.c.b16 %v5664, %v5659
    %v8190 = vpack.c.b16 %v5665, %v5660
    %v8191 = vpack.c.b16 %v5666, %v5661
    %v8192 = vpack.c.b16 %v5672, %v5667
    %v8193 = vpack.c.b16 %v5673, %v5668
    %v8194 = vpack.c.b16 %v5674, %v5669
    %v8195 = vpack.c.b16 %v5675, %v5670
    %v8196 = vpack.c.b16 %v5676, %v5671
    %v8197 = vpack.c.b16 %v5682, %v5677
    %v8198 = vpack.c.b16 %v5683, %v5678
    %v8199 = vpack.c.b16 %v5684, %v5679
    %v8200 = vpack.c.b16 %v5685, %v5680
    %v8201 = vpack.c.b16 %v5686, %v5681
    %v8202 = vpack.c.b16 %v5692, %v5687
    %v8203 = vpack.c.b16 %v5693, %v5688
    %v8204 = vpack.c.b16 %v5694, %v5689
    %v8205 = vpack.c.b16 %v5695, %v5690
    %v8206 = vpack.c.b16 %v5696, %v5691
    %v8207 = vpack.c.b16 %v5702, %v5697
    %v8208 = vpack.c.b16 %v5703, %v5698
    %v8209 = vpack.c.b16 %v5704, %v5699
    %v8210 = vpack.c.b16 %v5705, %v5700
    %v8211 = vpack.c.b16 %v5706, %v5701
    %v8212 = vpack.c.b16 %v5712, %v5707
    %v8213 = vpack.c.b16 %v5713, %v5708
    %v8214 = vpack.c.b16 %v5714, %v5709
    %v8215 = vpack.c.b16 %v5715, %v5710
    %v8216 = vpack.c.b16 %v5716, %v5711
    %v8217 = vpack.c.b16 %v5722, %v5717
    %v8218 = vpack.c.b16 %v5723, %v5718
    %v8219 = vpack.c.b16 %v5724, %v5719
    %v8220 = vpack.c.b16 %v5725, %v5720
    %v8221 = vpack.c.b16 %v5726, %v5721
    %v8222 = vpack.c.b16 %v5732, %v5727
    %v8223 = vpack.c.b16 %v5733, %v5728
    %v8224 = vpack.c.b16 %v5734, %v5729
    %v8225 = vpack.c.b16 %v5735, %v5730
    %v8226 = vpack.c.b16 %v5736, %v5731
    %v8227 = vpack.c.b16 %v5742, %v5737
    %v8228 = vpack.c.b16 %v5743, %v5738
    %v8229 = vpack.c.b16 %v5744, %v5739
    %v8230 = vpack.c.b16 %v5745, %v5740
    %v8231 = vpack.c.b16 %v5746, %v5741
    %v8232 = vpack.c.b16 %v5752, %v5747
    %v8233 = vpack.c.b16 %v5753, %v5748
    %v8234 = vpack.c.b16 %v5754, %v5749
    %v8235 = vpack.c.b16 %v5755, %v5750
    %v8236 = vpack.c.b16 %v5756, %v5751
    %v8237 = vpack.c.b16 %v5762, %v5757
    %v8238 = vpack.c.b16 %v5763, %v5758
    %v8239 = vpack.c.b16 %v5764, %v5759
    %v8240 = vpack.c.b16 %v5765, %v5760
    %v8241 = vpack.c.b16 %v5766, %v5761
    %v8242 = vpack.c.b16 %v5772, %v5767
    %v8243 = vpack.c.b16 %v5773, %v5768
    %v8244 = vpack.c.b16 %v5774, %v5769
    %v8245 = vpack.c.b16 %v5775, %v5770
    %v8246 = vpack.c.b16 %v5776, %v5771
    %v8247 = vpack.c.b16 %v5782, %v5777
    %v8248 = vpack.c.b16 %v5783, %v5778
    %v8249 = vpack.c.b16 %v5784, %v5779
    %v8250 = vpack.c.b16 %v5785, %v5780
    %v8251 = vpack.c.b16 %v5786, %v5781
    %v8252 = vpack.c.b16 %v5792, %v5787
    %v8253 = vpack.c.b16 %v5793, %v5788
    %v8254 = vpack.c.b16 %v5794, %v5789
    %v8255 = vpack.c.b16 %v5795, %v5790
    %v8256 = vpack.c.b16 %v5796, %v5791
    %v8257 = vpack.c.b16 %v5802, %v5797
    %v8258 = vpack.c.b16 %v5803, %v5798
    %v8259 = vpack.c.b16 %v5804, %v5799
    %v8260 = vpack.c.b16 %v5805, %v5800
    %v8261 = vpack.c.b16 %v5806, %v5801
    %v8262 = vpack.c.b16 %v5812, %v5807
    %v8263 = vpack.c.b16 %v5813, %v5808
    %v8264 = vpack.c.b16 %v5814, %v5809
    %v8265 = vpack.c.b16 %v5815, %v5810
    %v8266 = vpack.c.b16 %v5816, %v5811
    %v8267 = vpack.c.b16 %v5822, %v5817
    %v8268 = vpack.c.b16 %v5823, %v5818
    %v8269 = vpack.c.b16 %v5824, %v5819
    %v8270 = vpack.c.b16 %v5825, %v5820
    %v8271 = vpack.c.b16 %v5826, %v5821
    %v8272 = vpack.c.b16 %v5832, %v5827
    %v8273 = vpack.c.b16 %v5833, %v5828
    %v8274 = vpack.c.b16 %v5834, %v5829
    %v8275 = vpack.c.b16 %v5835, %v5830
    %v8276 = vpack.c.b16 %v5836, %v5831
    %v8277 = vpack.c.b16 %v5842, %v5837
    %v8278 = vpack.c.b16 %v5843, %v5838
    %v8279 = vpack.c.b16 %v5844, %v5839
    %v8280 = vpack.c.b16 %v5845, %v5840
    %v8281 = vpack.c.b16 %v5846, %v5841
    %v8282 = vpack.c.b16 %v5852, %v5847
    %v8283 = vpack.c.b16 %v5853, %v5848
    %v8284 = vpack.c.b16 %v5854, %v5849
    %v8285 = vpack.c.b16 %v5855, %v5850
    %v8286 = vpack.c.b16 %v5856, %v5851
    %v8287 = vpack.c.b16 %v5862, %v5857
    %v8288 = vpack.c.b16 %v5863, %v5858
    %v8289 = vpack.c.b16 %v5864, %v5859
    %v8290 = vpack.c.b16 %v5865, %v5860
    %v8291 = vpack.c.b16 %v5866, %v5861
    %v8292 = vpack.c.b16 %v5872, %v5867
    %v8293 = vpack.c.b16 %v5873, %v5868
    %v8294 = vpack.c.b16 %v5874, %v5869
    %v8295 = vpack.c.b16 %v5875, %v5870
    %v8296 = vpack.c.b16 %v5876, %v5871
    %v8297 = vpack.c.b16 %v5882, %v5877
    %v8298 = vpack.c.b16 %v5883, %v5878
    %v8299 = vpack.c.b16 %v5884, %v5879
    %v8300 = vpack.c.b16 %v5885, %v5880
    %v8301 = vpack.c.b16 %v5886, %v5881
    %v8302 = vpack.c.b16 %v5892, %v5887
    %v8303 = vpack.c.b16 %v5893, %v5888
    %v8304 = vpack.c.b16 %v5894, %v5889
    %v8305 = vpack.c.b16 %v5895, %v5890
    %v8306 = vpack.c.b16 %v5896, %v5891
    %v8307 = vpack.c.b16 %v5902, %v5897
    %v8308 = vpack.c.b16 %v5903, %v5898
    %v8309 = vpack.c.b16 %v5904, %v5899
    %v8310 = vpack.c.b16 %v5905, %v5900
    %v8311 = vpack.c.b16 %v5906, %v5901
    %v8312 = vpack.c.b16 %v5912, %v5907
    %v8313 = vpack.c.b16 %v5913, %v5908
    %v8314 = vpack.c.b16 %v5914, %v5909
    %v8315 = vpack.c.b16 %v5915, %v5910
    %v8316 = vpack.c.b16 %v5916, %v5911
    %v8317 = vpack.c.b16 %v5922, %v5917
    %v8318 = vpack.c.b16 %v5923, %v5918
    %v8319 = vpack.c.b16 %v5924, %v5919
    %v8320 = vpack.c.b16 %v5925, %v5920
    %v8321 = vpack.c.b16 %v5926, %v5921
    %v8322 = vpack.c.b16 %v5932, %v5927
    %v8323 = vpack.c.b16 %v5933, %v5928
    %v8324 = vpack.c.b16 %v5934, %v5929
    %v8325 = vpack.c.b16 %v5935, %v5930
    %v8326 = vpack.c.b16 %v5936, %v5931
    %v8327 = vpack.c.b16 %v5942, %v5937
    %v8328 = vpack.c.b16 %v5943, %v5938
    %v8329 = vpack.c.b16 %v5944, %v5939
    %v8330 = vpack.c.b16 %v5945, %v5940
    %v8331 = vpack.c.b16 %v5946, %v5941
    %v8332 = vpack.c.b16 %v5952, %v5947
    %v8333 = vpack.c.b16 %v5953, %v5948
    %v8334 = vpack.c.b16 %v5954, %v5949
    %v8335 = vpack.c.b16 %v5955, %v5950
    %v8336 = vpack.c.b16 %v5956, %v5951
    %v8337 = vpack.c.b16 %v5962, %v5957
    %v8338 = vpack.c.b16 %v5963, %v5958
    %v8339 = vpack.c.b16 %v5964, %v5959
    %v8340 = vpack.c.b16 %v5965, %v5960
    %v8341 = vpack.c.b16 %v5966, %v5961
    %v8342 = vpack.c.b16 %v5972, %v5967
    %v8343 = vpack.c.b16 %v5973, %v5968
    %v8344 = vpack.c.b16 %v5974, %v5969
    %v8345 = vpack.c.b16 %v5975, %v5970
    %v8346 = vpack.c.b16 %v5976, %v5971
    %v8347 = vpack.c.b16 %v5982, %v5977
    %v8348 = vpack.c.b16 %v5983, %v5978
    %v8349 = vpack.c.b16 %v5984, %v5979
    %v8350 = vpack.c.b16 %v5985, %v5980
    %v8351 = vpack.c.b16 %v5986, %v5981
    %v8352 = vpack.c.b16 %v5992, %v5987
    %v8353 = vpack.c.b16 %v5993, %v5988
    %v8354 = vpack.c.b16 %v5994, %v5989
    %v8355 = vpack.c.b16 %v5995, %v5990
    %v8356 = vpack.c.b16 %v5996, %v5991
    %v8357 = vpack.c.b16 %v6002, %v5997
    %v8358 = vpack.c.b16 %v6003, %v5998
    %v8359 = vpack.c.b16 %v6004, %v5999
    %v8360 = vpack.c.b16 %v6005, %v6000
    %v8361 = vpack.c.b16 %v6006, %v6001
    %v8362 = vpack.c.b16 %v6012, %v6007
    %v8363 = vpack.c.b16 %v6013, %v6008
    %v8364 = vpack.c.b16 %v6014, %v6009
    %v8365 = vpack.c.b16 %v6015, %v6010
    %v8366 = vpack.c.b16 %v6016, %v6011
    %v8367 = vpack.c.b16 %v6022, %v6017
    %v8368 = vpack.c.b16 %v6023, %v6018
    %v8369 = vpack.c.b16 %v6024, %v6019
    %v8370 = vpack.c.b16 %v6025, %v6020
    %v8371 = vpack.c.b16 %v6026, %v6021
    %v8372 = vpack.c.b16 %v6032, %v6027
    %v8373 = vpack.c.b16 %v6033, %v6028
    %v8374 = vpack.c.b16 %v6034, %v6029
    %v8375 = vpack.c.b16 %v6035, %v6030
    %v8376 = vpack.c.b16 %v6036, %v6031
    %v8377 = vpack.c.b16 %v6042, %v6037
    %v8378 = vpack.c.b16 %v6043, %v6038
    %v8379 = vpack.c.b16 %v6044, %v6039
    %v8380 = vpack.c.b16 %v6045, %v6040
    %v8381 = vpack.c.b16 %v6046, %v6041
    %v8382 = vpack.c.b16 %v6052, %v6047
    %v8383 = vpack.c.b16 %v6053, %v6048
    %v8384 = vpack.c.b16 %v6054, %v6049
    %v8385 = vpack.c.b16 %v6055, %v6050
    %v8386 = vpack.c.b16 %v6056, %v6051
    %v8387 = vpack.c.b16 %v6062, %v6057
    %v8388 = vpack.c.b16 %v6063, %v6058
    %v8389 = vpack.c.b16 %v6064, %v6059
    %v8390 = vpack.c.b16 %v6065, %v6060
    %v8391 = vpack.c.b16 %v6066, %v6061
    %v8392 = vpack.c.b16 %v6072, %v6067
    %v8393 = vpack.c.b16 %v6073, %v6068
    %v8394 = vpack.c.b16 %v6074, %v6069
    %v8395 = vpack.c.b16 %v6075, %v6070
    %v8396 = vpack.c.b16 %v6076, %v6071
    %v8397 = vpack.c.b16 %v6082, %v6077
    %v8398 = vpack.c.b16 %v6083, %v6078
    %v8399 = vpack.c.b16 %v6084, %v6079
    %v8400 = vpack.c.b16 %v6085, %v6080
    %v8401 = vpack.c.b16 %v6086, %v6081
    %v8402 = vpack.c.b16 %v6092, %v6087
    %v8403 = vpack.c.b16 %v6093, %v6088
    %v8404 = vpack.c.b16 %v6094, %v6089
    %v8405 = vpack.c.b16 %v6095, %v6090
    %v8406 = vpack.c.b16 %v6096, %v6091
    %v8407 = vpack.c.b16 %v6102, %v6097
    %v8408 = vpack.c.b16 %v6103, %v6098
    %v8409 = vpack.c.b16 %v6104, %v6099
    %v8410 = vpack.c.b16 %v6105, %v6100
    %v8411 = vpack.c.b16 %v6106, %v6101
    %v8412 = vpack.c.b16 %v6112, %v6107
    %v8413 = vpack.c.b16 %v6113, %v6108
    %v8414 = vpack.c.b16 %v6114, %v6109
    %v8415 = vpack.c.b16 %v6115, %v6110
    %v8416 = vpack.c.b16 %v6116, %v6111
    %v8417 = vpack.c.b16 %v6122, %v6117
    %v8418 = vpack.c.b16 %v6123, %v6118
    %v8419 = vpack.c.b16 %v6124, %v6119
    %v8420 = vpack.c.b16 %v6125, %v6120
    %v8421 = vpack.c.b16 %v6126, %v6121
    %v8422 = vpack.c.b16 %v6132, %v6127
    %v8423 = vpack.c.b16 %v6133, %v6128
    %v8424 = vpack.c.b16 %v6134, %v6129
    %v8425 = vpack.c.b16 %v6135, %v6130
    %v8426 = vpack.c.b16 %v6136, %v6131
    %v8427 = vpack.c.b16 %v6142, %v6137
    %v8428 = vpack.c.b16 %v6143, %v6138
    %v8429 = vpack.c.b16 %v6144, %v6139
    %v8430 = vpack.c.b16 %v6145, %v6140
    %v8431 = vpack.c.b16 %v6146, %v6141
    %v8432 = vpack.c.b16 %v6152, %v6147
    %v8433 = vpack.c.b16 %v6153, %v6148
    %v8434 = vpack.c.b16 %v6154, %v6149
    %v8435 = vpack.c.b16 %v6155, %v6150
    %v8436 = vpack.c.b16 %v6156, %v6151
    %v8437 = vpack.c.b16 %v6162, %v6157
    %v8438 = vpack.c.b16 %v6163, %v6158
    %v8439 = vpack.c.b16 %v6164, %v6159
    %v8440 = vpack.c.b16 %v6165, %v6160
    %v8441 = vpack.c.b16 %v6166, %v6161
    %v8442 = vpack.c.b16 %v6172, %v6167
    %v8443 = vpack.c.b16 %v6173, %v6168
    %v8444 = vpack.c.b16 %v6174, %v6169
    %v8445 = vpack.c.b16 %v6175, %v6170
    %v8446 = vpack.c.b16 %v6176, %v6171
    %v8447 = vpack.c.b16 %v6182, %v6177
    %v8448 = vpack.c.b16 %v6183, %v6178
    %v8449 = vpack.c.b16 %v6184, %v6179
    %v8450 = vpack.c.b16 %v6185, %v6180
    %v8451 = vpack.c.b16 %v6186, %v6181
    %v8452 = vpack.c.b16 %v6192, %v6187
    %v8453 = vpack.c.b16 %v6193, %v6188
    %v8454 = vpack.c.b16 %v6194, %v6189
    %v8455 = vpack.c.b16 %v6195, %v6190
    %v8456 = vpack.c.b16 %v6196, %v6191
    %v8457 = vpack.c.b16 %v6202, %v6197
    %v8458 = vpack.c.b16 %v6203, %v6198
    %v8459 = vpack.c.b16 %v6204, %v6199
    %v8460 = vpack.c.b16 %v6205, %v6200
    %v8461 = vpack.c.b16 %v6206, %v6201
    %v8462 = vpack.c.b16 %v6212, %v6207
    %v8463 = vpack.c.b16 %v6213, %v6208
    %v8464 = vpack.c.b16 %v6214, %v6209
    %v8465 = vpack.c.b16 %v6215, %v6210
    %v8466 = vpack.c.b16 %v6216, %v6211
    %v8467 = vpack.c.b16 %v6222, %v6217
    %v8468 = vpack.c.b16 %v6223, %v6218
    %v8469 = vpack.c.b16 %v6224, %v6219
    %v8470 = vpack.c.b16 %v6225, %v6220
    %v8471 = vpack.c.b16 %v6226, %v6221
    %v8472 = vpack.c.b16 %v6232, %v6227
    %v8473 = vpack.c.b16 %v6233, %v6228
    %v8474 = vpack.c.b16 %v6234, %v6229
    %v8475 = vpack.c.b16 %v6235, %v6230
    %v8476 = vpack.c.b16 %v6236, %v6231
    %v8477 = vpack.c.b16 %v6242, %v6237
    %v8478 = vpack.c.b16 %v6243, %v6238
    %v8479 = vpack.c.b16 %v6244, %v6239
    %v8480 = vpack.c.b16 %v6245, %v6240
    %v8481 = vpack.c.b16 %v6246, %v6241
    %v8482 = vpack.c.b16 %v6252, %v6247
    %v8483 = vpack.c.b16 %v6253, %v6248
    %v8484 = vpack.c.b16 %v6254, %v6249
    %v8485 = vpack.c.b16 %v6255, %v6250
    %v8486 = vpack.c.b16 %v6256, %v6251
    %v8487 = vpack.c.b16 %v6262, %v6257
    %v8488 = vpack.c.b16 %v6263, %v6258
    %v8489 = vpack.c.b16 %v6264, %v6259
    %v8490 = vpack.c.b16 %v6265, %v6260
    %v8491 = vpack.c.b16 %v6266, %v6261
    %v8492 = vpack.c.b16 %v6272, %v6267
    %v8493 = vpack.c.b16 %v6273, %v6268
    %v8494 = vpack.c.b16 %v6274, %v6269
    %v8495 = vpack.c.b16 %v6275, %v6270
    %v8496 = vpack.c.b16 %v6276, %v6271
    %v8497 = vpack.c.b16 %v6282, %v6277
    %v8498 = vpack.c.b16 %v6283, %v6278
    %v8499 = vpack.c.b16 %v6284, %v6279
    %v8500 = vpack.c.b16 %v6285, %v6280
    %v8501 = vpack.c.b16 %v6286, %v6281
    %v8502 = vpack.c.b16 %v6292, %v6287
    %v8503 = vpack.c.b16 %v6293, %v6288
    %v8504 = vpack.c.b16 %v6294, %v6289
    %v8505 = vpack.c.b16 %v6295, %v6290
    %v8506 = vpack.c.b16 %v6296, %v6291
    %v8507 = vpack.c.b16 %v6302, %v6297
    %v8508 = vpack.c.b16 %v6303, %v6298
    %v8509 = vpack.c.b16 %v6304, %v6299
    %v8510 = vpack.c.b16 %v6305, %v6300
    %v8511 = vpack.c.b16 %v6306, %v6301
    %v8512 = vpack.c.b16 %v6312, %v6307
    %v8513 = vpack.c.b16 %v6313, %v6308
    %v8514 = vpack.c.b16 %v6314, %v6309
    %v8515 = vpack.c.b16 %v6315, %v6310
    %v8516 = vpack.c.b16 %v6316, %v6311
    %v8517 = vpack.c.b16 %v6322, %v6317
    %v8518 = vpack.c.b16 %v6323, %v6318
    %v8519 = vpack.c.b16 %v6324, %v6319
    %v8520 = vpack.c.b16 %v6325, %v6320
    %v8521 = vpack.c.b16 %v6326, %v6321
    %v8522 = vpack.c.b16 %v6332, %v6327
    %v8523 = vpack.c.b16 %v6333, %v6328
    %v8524 = vpack.c.b16 %v6334, %v6329
    %v8525 = vpack.c.b16 %v6335, %v6330
    %v8526 = vpack.c.b16 %v6336, %v6331
    %v8527 = vpack.c.b16 %v6342, %v6337
    %v8528 = vpack.c.b16 %v6343, %v6338
    %v8529 = vpack.c.b16 %v6344, %v6339
    %v8530 = vpack.c.b16 %v6345, %v6340
    %v8531 = vpack.c.b16 %v6346, %v6341
    %v8532 = vpack.c.b16 %v6352, %v6347
    %v8533 = vpack.c.b16 %v6353, %v6348
    %v8534 = vpack.c.b16 %v6354, %v6349
    %v8535 = vpack.c.b16 %v6355, %v6350
    %v8536 = vpack.c.b16 %v6356, %v6351
    %v8537 = vpack.c.b16 %v6362, %v6357
    %v8538 = vpack.c.b16 %v6363, %v6358
    %v8539 = vpack.c.b16 %v6364, %v6359
    %v8540 = vpack.c.b16 %v6365, %v6360
    %v8541 = vpack.c.b16 %v6366, %v6361
    %v8542 = vpack.c.b16 %v6372, %v6367
    %v8543 = vpack.c.b16 %v6373, %v6368
    %v8544 = vpack.c.b16 %v6374, %v6369
    %v8545 = vpack.c.b16 %v6375, %v6370
    %v8546 = vpack.c.b16 %v6376, %v6371
    %v8547 = vpack.c.b16 %v6382, %v6377
    %v8548 = vpack.c.b16 %v6383, %v6378
    %v8549 = vpack.c.b16 %v6384, %v6379
    %v8550 = vpack.c.b16 %v6385, %v6380
    %v8551 = vpack.c.b16 %v6386, %v6381
    %v8552 = vpack.c.b16 %v6392, %v6387
    %v8553 = vpack.c.b16 %v6393, %v6388
    %v8554 = vpack.c.b16 %v6394, %v6389
    %v8555 = vpack.c.b16 %v6395, %v6390
    %v8556 = vpack.c.b16 %v6396, %v6391
    %v8557 = vpack.c.b16 %v6402, %v6397
    %v8558 = vpack.c.b16 %v6403, %v6398
    %v8559 = vpack.c.b16 %v6404, %v6399
    %v8560 = vpack.c.b16 %v6405, %v6400
    %v8561 = vpack.c.b16 %v6406, %v6401
    %v8562 = vpack.c.b16 %v6412, %v6407
    %v8563 = vpack.c.b16 %v6413, %v6408
    %v8564 = vpack.c.b16 %v6414, %v6409
    %v8565 = vpack.c.b16 %v6415, %v6410
    %v8566 = vpack.c.b16 %v6416, %v6411
    %v8567 = vpack.c.b16 %v6422, %v6417
    %v8568 = vpack.c.b16 %v6423, %v6418
    %v8569 = vpack.c.b16 %v6424, %v6419
    %v8570 = vpack.c.b16 %v6425, %v6420
    %v8571 = vpack.c.b16 %v6426, %v6421
    %v8572 = vpack.c.b16 %v6432, %v6427
    %v8573 = vpack.c.b16 %v6433, %v6428
    %v8574 = vpack.c.b16 %v6434, %v6429
    %v8575 = vpack.c.b16 %v6435, %v6430
    %v8576 = vpack.c.b16 %v6436, %v6431
    %v8577 = vpack.c.b16 %v6442, %v6437
    %v8578 = vpack.c.b16 %v6443, %v6438
    %v8579 = vpack.c.b16 %v6444, %v6439
    %v8580 = vpack.c.b16 %v6445, %v6440
    %v8581 = vpack.c.b16 %v6446, %v6441
    %v8582 = vpack.c.b16 %v6452, %v6447
    %v8583 = vpack.c.b16 %v6453, %v6448
    %v8584 = vpack.c.b16 %v6454, %v6449
    %v8585 = vpack.c.b16 %v6455, %v6450
    %v8586 = vpack.c.b16 %v6456, %v6451
    %v8587 = vpack.c.b16 %v6462, %v6457
    %v8588 = vpack.c.b16 %v6463, %v6458
    %v8589 = vpack.c.b16 %v6464, %v6459
    %v8590 = vpack.c.b16 %v6465, %v6460
    %v8591 = vpack.c.b16 %v6466, %v6461
    %v8592 = vpack.c.b16 %v6472, %v6467
    %v8593 = vpack.c.b16 %v6473, %v6468
    %v8594 = vpack.c.b16 %v6474, %v6469
    %v8595 = vpack.c.b16 %v6475, %v6470
    %v8596 = vpack.c.b16 %v6476, %v6471
    %v8597 = vpack.c.b16 %v6482, %v6477
    %v8598 = vpack.c.b16 %v6483, %v6478
    %v8599 = vpack.c.b16 %v6484, %v6479
    %v8600 = vpack.c.b16 %v6485, %v6480
    %v8601 = vpack.c.b16 %v6486, %v6481
    %v8602 = vpack.c.b16 %v6492, %v6487
    %v8603 = vpack.c.b16 %v6493, %v6488
    %v8604 = vpack.c.b16 %v6494, %v6489
    %v8605 = vpack.c.b16 %v6495, %v6490
    %v8606 = vpack.c.b16 %v6496, %v6491
    %v8607 = vpack.c.b16 %v6502, %v6497
    %v8608 = vpack.c.b16 %v6503, %v6498
    %v8609 = vpack.c.b16 %v6504, %v6499
    %v8610 = vpack.c.b16 %v6505, %v6500
    %v8611 = vpack.c.b16 %v6506, %v6501
    %v8612 = vpack.c.b16 %v6512, %v6507
    %v8613 = vpack.c.b16 %v6513, %v6508
    %v8614 = vpack.c.b16 %v6514, %v6509
    %v8615 = vpack.c.b16 %v6515, %v6510
    %v8616 = vpack.c.b16 %v6516, %v6511
    %v8617 = vpack.c.b16 %v6522, %v6517
    %v8618 = vpack.c.b16 %v6523, %v6518
    %v8619 = vpack.c.b16 %v6524, %v6519
    %v8620 = vpack.c.b16 %v6525, %v6520
    %v8621 = vpack.c.b16 %v6526, %v6521
    %v8622 = vpack.c.b16 %v6532, %v6527
    %v8623 = vpack.c.b16 %v6533, %v6528
    %v8624 = vpack.c.b16 %v6534, %v6529
    %v8625 = vpack.c.b16 %v6535, %v6530
    %v8626 = vpack.c.b16 %v6536, %v6531
    %v8627 = vpack.c.b16 %v6542, %v6537
    %v8628 = vpack.c.b16 %v6543, %v6538
    %v8629 = vpack.c.b16 %v6544, %v6539
    %v8630 = vpack.c.b16 %v6545, %v6540
    %v8631 = vpack.c.b16 %v6546, %v6541
    %v8632 = vpack.c.b16 %v6552, %v6547
    %v8633 = vpack.c.b16 %v6553, %v6548
    %v8634 = vpack.c.b16 %v6554, %v6549
    %v8635 = vpack.c.b16 %v6555, %v6550
    %v8636 = vpack.c.b16 %v6556, %v6551
    %v8637 = vpack.c.b16 %v6562, %v6557
    %v8638 = vpack.c.b16 %v6563, %v6558
    %v8639 = vpack.c.b16 %v6564, %v6559
    %v8640 = vpack.c.b16 %v6565, %v6560
    %v8641 = vpack.c.b16 %v6566, %v6561
    %v8642 = vpack.c.b16 %v6572, %v6567
    %v8643 = vpack.c.b16 %v6573, %v6568
    %v8644 = vpack.c.b16 %v6574, %v6569
    %v8645 = vpack.c.b16 %v6575, %v6570
    %v8646 = vpack.c.b16 %v6576, %v6571
    %v8647 = vpack.c.b16 %v6582, %v6577
    %v8648 = vpack.c.b16 %v6583, %v6578
    %v8649 = vpack.c.b16 %v6584, %v6579
    %v8650 = vpack.c.b16 %v6585, %v6580
    %v8651 = vpack.c.b16 %v6586, %v6581
    %v8652 = vpack.c.b16 %v6592, %v6587
    %v8653 = vpack.c.b16 %v6593, %v6588
    %v8654 = vpack.c.b16 %v6594, %v6589
    %v8655 = vpack.c.b16 %v6595, %v6590
    %v8656 = vpack.c.b16 %v6596, %v6591
    %v8657 = vpack.c.b16 %v6602, %v6597
    %v8658 = vpack.c.b16 %v6603, %v6598
    %v8659 = vpack.c.b16 %v6604, %v6599
    %v8660 = vpack.c.b16 %v6605, %v6600
    %v8661 = vpack.c.b16 %v6606, %v6601
    %v8662 = vpack.c.b16 %v6612, %v6607
    %v8663 = vpack.c.b16 %v6613, %v6608
    %v8664 = vpack.c.b16 %v6614, %v6609
    %v8665 = vpack.c.b16 %v6615, %v6610
    %v8666 = vpack.c.b16 %v6616, %v6611
    %v8667 = vpack.c.b16 %v6622, %v6617
    %v8668 = vpack.c.b16 %v6623, %v6618
    %v8669 = vpack.c.b16 %v6624, %v6619
    %v8670 = vpack.c.b16 %v6625, %v6620
    %v8671 = vpack.c.b16 %v6626, %v6621
    %v8672 = vpack.c.b16 %v6632, %v6627
    %v8673 = vpack.c.b16 %v6633, %v6628
    %v8674 = vpack.c.b16 %v6634, %v6629
    %v8675 = vpack.c.b16 %v6635, %v6630
    %v8676 = vpack.c.b16 %v6636, %v6631
    %v8677 = vpack.c.b16 %v6642, %v6637
    %v8678 = vpack.c.b16 %v6643, %v6638
    %v8679 = vpack.c.b16 %v6644, %v6639
    %v8680 = vpack.c.b16 %v6645, %v6640
    %v8681 = vpack.c.b16 %v6646, %v6641
    %v8682 = vpack.c.b16 %v6652, %v6647
    %v8683 = vpack.c.b16 %v6653, %v6648
    %v8684 = vpack.c.b16 %v6654, %v6649
    %v8685 = vpack.c.b16 %v6655, %v6650
    %v8686 = vpack.c.b16 %v6656, %v6651
    %v8687 = vpack.c.b16 %v6662, %v6657
    %v8688 = vpack.c.b16 %v6663, %v6658
    %v8689 = vpack.c.b16 %v6664, %v6659
    %v8690 = vpack.c.b16 %v6665, %v6660
    %v8691 = vpack.c.b16 %v6666, %v6661
    %v8692 = vpack.c.b16 %v6672, %v6667
    %v8693 = vpack.c.b16 %v6673, %v6668
    %v8694 = vpack.c.b16 %v6674, %v6669
    %v8695 = vpack.c.b16 %v6675, %v6670
    %v8696 = vpack.c.b16 %v6676, %v6671
    %v8697 = vpack.c.b16 %v6682, %v6677
    %v8698 = vpack.c.b16 %v6683, %v6678
    %v8699 = vpack.c.b16 %v6684, %v6679
    %v8700 = vpack.c.b16 %v6685, %v6680
    %v8701 = vpack.c.b16 %v6686, %v6681
    %v8702 = vpack.c.b16 %v6692, %v6687
    %v8703 = vpack.c.b16 %v6693, %v6688
    %v8704 = vpack.c.b16 %v6694, %v6689
    %v8705 = vpack.c.b16 %v6695, %v6690
    %v8706 = vpack.c.b16 %v6696, %v6691
    %v8707 = vpack.c.b16 %v6702, %v6697
    %v8708 = vpack.c.b16 %v6703, %v6698
    %v8709 = vpack.c.b16 %v6704, %v6699
    %v8710 = vpack.c.b16 %v6705, %v6700
    %v8711 = vpack.c.b16 %v6706, %v6701
    %v8712 = vpack.c.b16 %v6712, %v6707
    %v8713 = vpack.c.b16 %v6713, %v6708
    %v8714 = vpack.c.b16 %v6714, %v6709
    %v8715 = vpack.c.b16 %v6715, %v6710
    %v8716 = vpack.c.b16 %v6716, %v6711
    %v8717 = vpack.c.b16 %v6722, %v6717
    %v8718 = vpack.c.b16 %v6723, %v6718
    %v8719 = vpack.c.b16 %v6724, %v6719
    %v8720 = vpack.c.b16 %v6725, %v6720
    %v8721 = vpack.c.b16 %v6726, %v6721
    %v8722 = vpack.c.b16 %v6732, %v6727
    %v8723 = vpack.c.b16 %v6733, %v6728
    %v8724 = vpack.c.b16 %v6734, %v6729
    %v8725 = vpack.c.b16 %v6735, %v6730
    %v8726 = vpack.c.b16 %v6736, %v6731
    %v8727 = vpack.c.b16 %v6742, %v6737
    %v8728 = vpack.c.b16 %v6743, %v6738
    %v8729 = vpack.c.b16 %v6744, %v6739
    %v8730 = vpack.c.b16 %v6745, %v6740
    %v8731 = vpack.c.b16 %v6746, %v6741
    %v8732 = vpack.c.b16 %v6752, %v6747
    %v8733 = vpack.c.b16 %v6753, %v6748
    %v8734 = vpack.c.b16 %v6754, %v6749
    %v8735 = vpack.c.b16 %v6755, %v6750
    %v8736 = vpack.c.b16 %v6756, %v6751
    %v8737 = vpack.c.b16 %v6762, %v6757
    %v8738 = vpack.c.b16 %v6763, %v6758
    %v8739 = vpack.c.b16 %v6764, %v6759
    %v8740 = vpack.c.b16 %v6765, %v6760
    %v8741 = vpack.c.b16 %v6766, %v6761
    %v8742 = vpack.c.b16 %v6772, %v6767
    %v8743 = vpack.c.b16 %v6773, %v6768
    %v8744 = vpack.c.b16 %v6774, %v6769
    %v8745 = vpack.c.b16 %v6775, %v6770
    %v8746 = vpack.c.b16 %v6776, %v6771
    %v8747 = vpack.c.b16 %v6782, %v6777
    %v8748 = vpack.c.b16 %v6783, %v6778
    %v8749 = vpack.c.b16 %v6784, %v6779
    %v8750 = vpack.c.b16 %v6785, %v6780
    %v8751 = vpack.c.b16 %v6786, %v6781
    %v8752 = vpack.c.b16 %v6792, %v6787
    %v8753 = vpack.c.b16 %v6793, %v6788
    %v8754 = vpack.c.b16 %v6794, %v6789
    %v8755 = vpack.c.b16 %v6795, %v6790
    %v8756 = vpack.c.b16 %v6796, %v6791
    %v8757 = vpack.c.b16 %v6802, %v6797
    %v8758 = vpack.c.b16 %v6803, %v6798
    %v8759 = vpack.c.b16 %v6804, %v6799
    %v8760 = vpack.c.b16 %v6805, %v6800
    %v8761 = vpack.c.b16 %v6806, %v6801
    %v8762 = vpack.c.b16 %v6812, %v6807
    %v8763 = vpack.c.b16 %v6813, %v6808
    %v8764 = vpack.c.b16 %v6814, %v6809
    %v8765 = vpack.c.b16 %v6815, %v6810
    %v8766 = vpack.c.b16 %v6816, %v6811
    %v8767 = vpack.c.b16 %v6822, %v6817
    %v8768 = vpack.c.b16 %v6823, %v6818
    %v8769 = vpack.c.b16 %v6824, %v6819
    %v8770 = vpack.c.b16 %v6825, %v6820
    %v8771 = vpack.c.b16 %v6826, %v6821
    %v8772 = vpack.c.b16 %v6832, %v6827
    %v8773 = vpack.c.b16 %v6833, %v6828
    %v8774 = vpack.c.b16 %v6834, %v6829
    %v8775 = vpack.c.b16 %v6835, %v6830
    %v8776 = vpack.c.b16 %v6836, %v6831
    %v8777 = vpack.c.b16 %v6842, %v6837
    %v8778 = vpack.c.b16 %v6843, %v6838
    %v8779 = vpack.c.b16 %v6844, %v6839
    %v8780 = vpack.c.b16 %v6845, %v6840
    %v8781 = vpack.c.b16 %v6846, %v6841
    %v8782 = vpack.c.b16 %v6852, %v6847
    %v8783 = vpack.c.b16 %v6853, %v6848
    %v8784 = vpack.c.b16 %v6854, %v6849
    %v8785 = vpack.c.b16 %v6855, %v6850
    %v8786 = vpack.c.b16 %v6856, %v6851
    %v8787 = vpack.c.b16 %v6862, %v6857
    %v8788 = vpack.c.b16 %v6863, %v6858
    %v8789 = vpack.c.b16 %v6864, %v6859
    %v8790 = vpack.c.b16 %v6865, %v6860
    %v8791 = vpack.c.b16 %v6866, %v6861
    %v8792 = vpack.c.b16 %v6872, %v6867
    %v8793 = vpack.c.b16 %v6873, %v6868
    %v8794 = vpack.c.b16 %v6874, %v6869
    %v8795 = vpack.c.b16 %v6875, %v6870
    %v8796 = vpack.c.b16 %v6876, %v6871
    %v8797 = vpack.c.b16 %v6882, %v6877
    %v8798 = vpack.c.b16 %v6883, %v6878
    %v8799 = vpack.c.b16 %v6884, %v6879
    %v8800 = vpack.c.b16 %v6885, %v6880
    %v8801 = vpack.c.b16 %v6886, %v6881
    %v8802 = vpack.c.b16 %v6892, %v6887
    %v8803 = vpack.c.b16 %v6893, %v6888
    %v8804 = vpack.c.b16 %v6894, %v6889
    %v8805 = vpack.c.b16 %v6895, %v6890
    %v8806 = vpack.c.b16 %v6896, %v6891
    %v8807 = vpack.c.b16 %v6902, %v6897
    %v8808 = vpack.c.b16 %v6903, %v6898
    %v8809 = vpack.c.b16 %v6904, %v6899
    %v8810 = vpack.c.b16 %v6905, %v6900
    %v8811 = vpack.c.b16 %v6906, %v6901
    %v8812 = vpack.c.b16 %v6912, %v6907
    %v8813 = vpack.c.b16 %v6913, %v6908
    %v8814 = vpack.c.b16 %v6914, %v6909
    %v8815 = vpack.c.b16 %v6915, %v6910
    %v8816 = vpack.c.b16 %v6916, %v6911
    %v8817 = vpack.c.b16 %v6922, %v6917
    %v8818 = vpack.c.b16 %v6923, %v6918
    %v8819 = vpack.c.b16 %v6924, %v6919
    %v8820 = vpack.c.b16 %v6925, %v6920
    %v8821 = vpack.c.b16 %v6926, %v6921
    %v8822 = vpack.c.b16 %v6932, %v6927
    %v8823 = vpack.c.b16 %v6933, %v6928
    %v8824 = vpack.c.b16 %v6934, %v6929
    %v8825 = vpack.c.b16 %v6935, %v6930
    %v8826 = vpack.c.b16 %v6936, %v6931
    %v8827 = vpack.c.b16 %v6942, %v6937
    %v8828 = vpack.c.b16 %v6943, %v6938
    %v8829 = vpack.c.b16 %v6944, %v6939
    %v8830 = vpack.c.b16 %v6945, %v6940
    %v8831 = vpack.c.b16 %v6946, %v6941
    %v8832 = vpack.c.b16 %v6952, %v6947
    %v8833 = vpack.c.b16 %v6953, %v6948
    %v8834 = vpack.c.b16 %v6954, %v6949
    %v8835 = vpack.c.b16 %v6955, %v6950
    %v8836 = vpack.c.b16 %v6956, %v6951
    %v8837 = vpack.c.b16 %v6962, %v6957
    %v8838 = vpack.c.b16 %v6963, %v6958
    %v8839 = vpack.c.b16 %v6964, %v6959
    %v8840 = vpack.c.b16 %v6965, %v6960
    %v8841 = vpack.c.b16 %v6966, %v6961
    %v8842 = vpack.c.b16 %v6972, %v6967
    %v8843 = vpack.c.b16 %v6973, %v6968
    %v8844 = vpack.c.b16 %v6974, %v6969
    %v8845 = vpack.c.b16 %v6975, %v6970
    %v8846 = vpack.c.b16 %v6976, %v6971
    %v8847 = vpack.c.b16 %v6982, %v6977
    %v8848 = vpack.c.b16 %v6983, %v6978
    %v8849 = vpack.c.b16 %v6984, %v6979
    %v8850 = vpack.c.b16 %v6985, %v6980
    %v8851 = vpack.c.b16 %v6986, %v6981
    %v8852 = vpack.c.b16 %v6992, %v6987
    %v8853 = vpack.c.b16 %v6993, %v6988
    %v8854 = vpack.c.b16 %v6994, %v6989
    %v8855 = vpack.c.b16 %v6995, %v6990
    %v8856 = vpack.c.b16 %v6996, %v6991
    %v8857 = vpack.c.b16 %v7002, %v6997
    %v8858 = vpack.c.b16 %v7003, %v6998
    %v8859 = vpack.c.b16 %v7004, %v6999
    %v8860 = vpack.c.b16 %v7005, %v7000
    %v8861 = vpack.c.b16 %v7006, %v7001
    %v8862 = vpack.c.b16 %v7012, %v7007
    %v8863 = vpack.c.b16 %v7013, %v7008
    %v8864 = vpack.c.b16 %v7014, %v7009
    %v8865 = vpack.c.b16 %v7015, %v7010
    %v8866 = vpack.c.b16 %v7016, %v7011
    %v8867 = vpack.c.b16 %v7022, %v7017
    %v8868 = vpack.c.b16 %v7023, %v7018
    %v8869 = vpack.c.b16 %v7024, %v7019
    %v8870 = vpack.c.b16 %v7025, %v7020
    %v8871 = vpack.c.b16 %v7026, %v7021
    %v8872 = vpack.c.b16 %v7032, %v7027
    %v8873 = vpack.c.b16 %v7033, %v7028
    %v8874 = vpack.c.b16 %v7034, %v7029
    %v8875 = vpack.c.b16 %v7035, %v7030
    %v8876 = vpack.c.b16 %v7036, %v7031
    %v8877 = vpack.c.b16 %v7042, %v7037
    %v8878 = vpack.c.b16 %v7043, %v7038
    %v8879 = vpack.c.b16 %v7044, %v7039
    %v8880 = vpack.c.b16 %v7045, %v7040
    %v8881 = vpack.c.b16 %v7046, %v7041
    %v8882 = vpack.c.b16 %v7052, %v7047
    %v8883 = vpack.c.b16 %v7053, %v7048
    %v8884 = vpack.c.b16 %v7054, %v7049
    %v8885 = vpack.c.b16 %v7055, %v7050
    %v8886 = vpack.c.b16 %v7056, %v7051
    %v8887 = vpack.c.b16 %v7062, %v7057
    %v8888 = vpack.c.b16 %v7063, %v7058
    %v8889 = vpack.c.b16 %v7064, %v7059
    %v8890 = vpack.c.b16 %v7065, %v7060
    %v8891 = vpack.c.b16 %v7066, %v7061
    %v8892 = vpack.c.b16 %v7072, %v7067
    %v8893 = vpack.c.b16 %v7073, %v7068
    %v8894 = vpack.c.b16 %v7074, %v7069
    %v8895 = vpack.c.b16 %v7075, %v7070
    %v8896 = vpack.c.b16 %v7076, %v7071
    %v8897 = vpack.c.b16 %v7082, %v7077
    %v8898 = vpack.c.b16 %v7083, %v7078
    %v8899 = vpack.c.b16 %v7084, %v7079
    %v8900 = vpack.c.b16 %v7085, %v7080
    %v8901 = vpack.c.b16 %v7086, %v7081
    %v8902 = vpack.c.b16 %v7092, %v7087
    %v8903 = vpack.c.b16 %v7093, %v7088
    %v8904 = vpack.c.b16 %v7094, %v7089
    %v8905 = vpack.c.b16 %v7095, %v7090
    %v8906 = vpack.c.b16 %v7096, %v7091
    %v8907 = vpack.c.b16 %v7102, %v7097
    %v8908 = vpack.c.b16 %v7103, %v7098
    %v8909 = vpack.c.b16 %v7104, %v7099
    %v8910 = vpack.c.b16 %v7105, %v7100
    %v8911 = vpack.c.b16 %v7106, %v7101
    %v8912 = vpack.c.b16 %v7112, %v7107
    %v8913 = vpack.c.b16 %v7113, %v7108
    %v8914 = vpack.c.b16 %v7114, %v7109
    %v8915 = vpack.c.b16 %v7115, %v7110
    %v8916 = vpack.c.b16 %v7116, %v7111
    %v8917 = vpack.c.b16 %v7122, %v7117
    %v8918 = vpack.c.b16 %v7123, %v7118
    %v8919 = vpack.c.b16 %v7124, %v7119
    %v8920 = vpack.c.b16 %v7125, %v7120
    %v8921 = vpack.c.b16 %v7126, %v7121
    %v8922 = vpack.c.b16 %v7132, %v7127
    %v8923 = vpack.c.b16 %v7133, %v7128
    %v8924 = vpack.c.b16 %v7134, %v7129
    %v8925 = vpack.c.b16 %v7135, %v7130
    %v8926 = vpack.c.b16 %v7136, %v7131
    %v8927 = vpack.c.b16 %v7142, %v7137
    %v8928 = vpack.c.b16 %v7143, %v7138
    %v8929 = vpack.c.b16 %v7144, %v7139
    %v8930 = vpack.c.b16 %v7145, %v7140
    %v8931 = vpack.c.b16 %v7146, %v7141
    %v8932 = vpack.c.b16 %v7152, %v7147
    %v8933 = vpack.c.b16 %v7153, %v7148
    %v8934 = vpack.c.b16 %v7154, %v7149
    %v8935 = vpack.c.b16 %v7155, %v7150
    %v8936 = vpack.c.b16 %v7156, %v7151
    %v8937 = vpack.c.b16 %v7162, %v7157
    %v8938 = vpack.c.b16 %v7163, %v7158
    %v8939 = vpack.c.b16 %v7164, %v7159
    %v8940 = vpack.c.b16 %v7165, %v7160
    %v8941 = vpack.c.b16 %v7166, %v7161
    %v8942 = vpack.c.b16 %v7172, %v7167
    %v8943 = vpack.c.b16 %v7173, %v7168
    %v8944 = vpack.c.b16 %v7174, %v7169
    %v8945 = vpack.c.b16 %v7175, %v7170
    %v8946 = vpack.c.b16 %v7176, %v7171
    %v8947 = vpack.c.b16 %v7182, %v7177
    %v8948 = vpack.c.b16 %v7183, %v7178
    %v8949 = vpack.c.b16 %v7184, %v7179
    %v8950 = vpack.c.b16 %v7185, %v7180
    %v8951 = vpack.c.b16 %v7186, %v7181
    %v8952 = vpack.c.b16 %v7192, %v7187
    %v8953 = vpack.c.b16 %v7193, %v7188
    %v8954 = vpack.c.b16 %v7194, %v7189
    %v8955 = vpack.c.b16 %v7195, %v7190
    %v8956 = vpack.c.b16 %v7196, %v7191
    %v8957 = vpack.c.b16 %v7202, %v7197
    %v8958 = vpack.c.b16 %v7203, %v7198
    %v8959 = vpack.c.b16 %v7204, %v7199
    %v8960 = vpack.c.b16 %v7205, %v7200
    %v8961 = vpack.c.b16 %v7206, %v7201
    %v8962 = vpack.c.b16 %v7212, %v7207
    %v8963 = vpack.c.b16 %v7213, %v7208
    %v8964 = vpack.c.b16 %v7214, %v7209
    %v8965 = vpack.c.b16 %v7215, %v7210
    %v8966 = vpack.c.b16 %v7216, %v7211
    %v8967 = vpack.c.b16 %v7222, %v7217
    %v8968 = vpack.c.b16 %v7223, %v7218
    %v8969 = vpack.c.b16 %v7224, %v7219
    %v8970 = vpack.c.b16 %v7225, %v7220
    %v8971 = vpack.c.b16 %v7226, %v7221
    %v8972 = vpack.c.b16 %v7232, %v7227
    %v8973 = vpack.c.b16 %v7233, %v7228
    %v8974 = vpack.c.b16 %v7234, %v7229
    %v8975 = vpack.c.b16 %v7235, %v7230
    %v8976 = vpack.c.b16 %v7236, %v7231
    %v8977 = vpack.c.b16 %v7242, %v7237
    %v8978 = vpack.c.b16 %v7243, %v7238
    %v8979 = vpack.c.b16 %v7244, %v7239
    %v8980 = vpack.c.b16 %v7245, %v7240
    %v8981 = vpack.c.b16 %v7246, %v7241
    %v8982 = vpack.c.b16 %v7252, %v7247
    %v8983 = vpack.c.b16 %v7253, %v7248
    %v8984 = vpack.c.b16 %v7254, %v7249
    %v8985 = vpack.c.b16 %v7255, %v7250
    %v8986 = vpack.c.b16 %v7256, %v7251
    %v8987 = vpack.c.b16 %v7262, %v7257
    %v8988 = vpack.c.b16 %v7263, %v7258
    %v8989 = vpack.c.b16 %v7264, %v7259
    %v8990 = vpack.c.b16 %v7265, %v7260
    %v8991 = vpack.c.b16 %v7266, %v7261
    %v8992 = vpack.c.b16 %v7272, %v7267
    %v8993 = vpack.c.b16 %v7273, %v7268
    %v8994 = vpack.c.b16 %v7274, %v7269
    %v8995 = vpack.c.b16 %v7275, %v7270
    %v8996 = vpack.c.b16 %v7276, %v7271
    %v8997 = vpack.c.b16 %v7282, %v7277
    %v8998 = vpack.c.b16 %v7283, %v7278
    %v8999 = vpack.c.b16 %v7284, %v7279
    %v9000 = vpack.c.b16 %v7285, %v7280
    %v9001 = vpack.c.b16 %v7286, %v7281
    %v9002 = vpack.c.b16 %v7292, %v7287
    %v9003 = vpack.c.b16 %v7293, %v7288
    %v9004 = vpack.c.b16 %v7294, %v7289
    %v9005 = vpack.c.b16 %v7295, %v7290
    %v9006 = vpack.c.b16 %v7296, %v7291
    %v9007 = vpack.c.b16 %v7302, %v7297
    %v9008 = vpack.c.b16 %v7303, %v7298
    %v9009 = vpack.c.b16 %v7304, %v7299
    %v9010 = vpack.c.b16 %v7305, %v7300
    %v9011 = vpack.c.b16 %v7306, %v7301
    %v9012 = vpack.c.b16 %v7312, %v7307
    %v9013 = vpack.c.b16 %v7313, %v7308
    %v9014 = vpack.c.b16 %v7314, %v7309
    %v9015 = vpack.c.b16 %v7315, %v7310
    %v9016 = vpack.c.b16 %v7316, %v7311
    %v9017 = vpack.c.b16 %v7322, %v7317
    %v9018 = vpack.c.b16 %v7323, %v7318
    %v9019 = vpack.c.b16 %v7324, %v7319
    %v9020 = vpack.c.b16 %v7325, %v7320
    %v9021 = vpack.c.b16 %v7326, %v7321
    %v9022 = vpack.c.b16 %v7332, %v7327
    %v9023 = vpack.c.b16 %v7333, %v7328
    %v9024 = vpack.c.b16 %v7334, %v7329
    %v9025 = vpack.c.b16 %v7335, %v7330
    %v9026 = vpack.c.b16 %v7336, %v7331
    %v9027 = vpack.c.b16 %v7342, %v7337
    %v9028 = vpack.c.b16 %v7343, %v7338
    %v9029 = vpack.c.b16 %v7344, %v7339
    %v9030 = vpack.c.b16 %v7345, %v7340
    %v9031 = vpack.c.b16 %v7346, %v7341
    %v9032 = vpack.c.b16 %v7352, %v7347
    %v9033 = vpack.c.b16 %v7353, %v7348
    %v9034 = vpack.c.b16 %v7354, %v7349
    %v9035 = vpack.c.b16 %v7355, %v7350
    %v9036 = vpack.c.b16 %v7356, %v7351
    %v9037 = vpack.c.b16 %v7362, %v7357
    %v9038 = vpack.c.b16 %v7363, %v7358
    %v9039 = vpack.c.b16 %v7364, %v7359
    %v9040 = vpack.c.b16 %v7365, %v7360
    %v9041 = vpack.c.b16 %v7366, %v7361
    %v9042 = vpack.c.b16 %v7372, %v7367
    %v9043 = vpack.c.b16 %v7373, %v7368
    %v9044 = vpack.c.b16 %v7374, %v7369
    %v9045 = vpack.c.b16 %v7375, %v7370
    %v9046 = vpack.c.b16 %v7376, %v7371
    %v9047 = vpack.c.b16 %v7382, %v7377
    %v9048 = vpack.c.b16 %v7383, %v7378
    %v9049 = vpack.c.b16 %v7384, %v7379
    %v9050 = vpack.c.b16 %v7385, %v7380
    %v9051 = vpack.c.b16 %v7386, %v7381
    %v9052 = vpack.c.b16 %v7392, %v7387
    %v9053 = vpack.c.b16 %v7393, %v7388
    %v9054 = vpack.c.b16 %v7394, %v7389
    %v9055 = vpack.c.b16 %v7395, %v7390
    %v9056 = vpack.c.b16 %v7396, %v7391
    %v9057 = vpack.c.b16 %v7402, %v7397
    %v9058 = vpack.c.b16 %v7403, %v7398
    %v9059 = vpack.c.b16 %v7404, %v7399
    %v9060 = vpack.c.b16 %v7405, %v7400
    %v9061 = vpack.c.b16 %v7406, %v7401
    %v9062 = vpack.c.b16 %v7412, %v7407
    %v9063 = vpack.c.b16 %v7413, %v7408
    %v9064 = vpack.c.b16 %v7414, %v7409
    %v9065 = vpack.c.b16 %v7415, %v7410
    %v9066 = vpack.c.b16 %v7416, %v7411
    %v9067 = vpack.c.b16 %v7422, %v7417
    %v9068 = vpack.c.b16 %v7423, %v7418
    %v9069 = vpack.c.b16 %v7424, %v7419
    %v9070 = vpack.c.b16 %v7425, %v7420
    %v9071 = vpack.c.b16 %v7426, %v7421
    %v9072 = vpack.c.b16 %v7432, %v7427
    %v9073 = vpack.c.b16 %v7433, %v7428
    %v9074 = vpack.c.b16 %v7434, %v7429
    %v9075 = vpack.c.b16 %v7435, %v7430
    %v9076 = vpack.c.b16 %v7436, %v7431
    %v9077 = vpack.c.b16 %v7442, %v7437
    %v9078 = vpack.c.b16 %v7443, %v7438
    %v9079 = vpack.c.b16 %v7444, %v7439
    %v9080 = vpack.c.b16 %v7445, %v7440
    %v9081 = vpack.c.b16 %v7446, %v7441
    %v9082 = vpack.c.b16 %v7452, %v7447
    %v9083 = vpack.c.b16 %v7453, %v7448
    %v9084 = vpack.c.b16 %v7454, %v7449
    %v9085 = vpack.c.b16 %v7455, %v7450
    %v9086 = vpack.c.b16 %v7456, %v7451
    %v9087 = vpack.c.b16 %v7462, %v7457
    %v9088 = vpack.c.b16 %v7463, %v7458
    %v9089 = vpack.c.b16 %v7464, %v7459
    %v9090 = vpack.c.b16 %v7465, %v7460
    %v9091 = vpack.c.b16 %v7466, %v7461
    %v9092 = vpack.c.b16 %v7472, %v7467
    %v9093 = vpack.c.b16 %v7473, %v7468
    %v9094 = vpack.c.b16 %v7474, %v7469
    %v9095 = vpack.c.b16 %v7475, %v7470
    %v9096 = vpack.c.b16 %v7476, %v7471
    %v9097 = vpack.c.b16 %v7482, %v7477
    %v9098 = vpack.c.b16 %v7483, %v7478
    %v9099 = vpack.c.b16 %v7484, %v7479
    %v9100 = vpack.c.b16 %v7485, %v7480
    %v9101 = vpack.c.b16 %v7486, %v7481
    %v9102 = vpack.c.b16 %v7492, %v7487
    %v9103 = vpack.c.b16 %v7493, %v7488
    %v9104 = vpack.c.b16 %v7494, %v7489
    %v9105 = vpack.c.b16 %v7495, %v7490
    %v9106 = vpack.c.b16 %v7496, %v7491
    %v9107 = vpack.c.b16 %v7502, %v7497
    %v9108 = vpack.c.b16 %v7503, %v7498
    %v9109 = vpack.c.b16 %v7504, %v7499
    %v9110 = vpack.c.b16 %v7505, %v7500
    %v9111 = vpack.c.b16 %v7506, %v7501
    %v9112 = vpack.c.b16 %v7512, %v7507
    %v9113 = vpack.c.b16 %v7513, %v7508
    %v9114 = vpack.c.b16 %v7514, %v7509
    %v9115 = vpack.c.b16 %v7515, %v7510
    %v9116 = vpack.c.b16 %v7516, %v7511
    %v9117 = vpack.c.b16 %v7522, %v7517
    %v9118 = vpack.c.b16 %v7523, %v7518
    %v9119 = vpack.c.b16 %v7524, %v7519
    %v9120 = vpack.c.b16 %v7525, %v7520
    %v9121 = vpack.c.b16 %v7526, %v7521
    %v9122 = vpack.c.b16 %v7532, %v7527
    %v9123 = vpack.c.b16 %v7533, %v7528
    %v9124 = vpack.c.b16 %v7534, %v7529
    %v9125 = vpack.c.b16 %v7535, %v7530
    %v9126 = vpack.c.b16 %v7536, %v7531
    %v9127 = vpack.c.b16 %v7542, %v7537
    %v9128 = vpack.c.b16 %v7543, %v7538
    %v9129 = vpack.c.b16 %v7544, %v7539
    %v9130 = vpack.c.b16 %v7545, %v7540
    %v9131 = vpack.c.b16 %v7546, %v7541
    %v9132 = vpack.c.b16 %v7552, %v7547
    %v9133 = vpack.c.b16 %v7553, %v7548
    %v9134 = vpack.c.b16 %v7554, %v7549
    %v9135 = vpack.c.b16 %v7555, %v7550
    %v9136 = vpack.c.b16 %v7556, %v7551
    %v9137 = vpack.c.b16 %v7562, %v7557
    %v9138 = vpack.c.b16 %v7563, %v7558
    %v9139 = vpack.c.b16 %v7564, %v7559
    %v9140 = vpack.c.b16 %v7565, %v7560
    %v9141 = vpack.c.b16 %v7566, %v7561
    %v9142 = vpack.c.b16 %v7572, %v7567
    %v9143 = vpack.c.b16 %v7573, %v7568
    %v9144 = vpack.c.b16 %v7574, %v7569
    %v9145 = vpack.c.b16 %v7575, %v7570
    %v9146 = vpack.c.b16 %v7576, %v7571
    %v9147 = vpack.c.b16 %v7582, %v7577
    %v9148 = vpack.c.b16 %v7583, %v7578
    %v9149 = vpack.c.b16 %v7584, %v7579
    %v9150 = vpack.c.b16 %v7585, %v7580
    %v9151 = vpack.c.b16 %v7586, %v7581
    %v9152 = vpack.c.b16 %v7592, %v7587
    %v9153 = vpack.c.b16 %v7593, %v7588
    %v9154 = vpack.c.b16 %v7594, %v7589
    %v9155 = vpack.c.b16 %v7595, %v7590
    %v9156 = vpack.c.b16 %v7596, %v7591
    %v9157 = vpack.c.b16 %v7602, %v7597
    %v9158 = vpack.c.b16 %v7603, %v7598
    %v9159 = vpack.c.b16 %v7604, %v7599
    %v9160 = vpack.c.b16 %v7605, %v7600
    %v9161 = vpack.c.b16 %v7606, %v7601
    %v9162 = vpack.c.b16 %v7612, %v7607
    %v9163 = vpack.c.b16 %v7613, %v7608
    %v9164 = vpack.c.b16 %v7614, %v7609
    %v9165 = vpack.c.b16 %v7615, %v7610
    %v9166 = vpack.c.b16 %v7616, %v7611
    %v9167 = vpack.c.b16 %v7622, %v7617
    %v9168 = vpack.c.b16 %v7623, %v7618
    %v9169 = vpack.c.b16 %v7624, %v7619
    %v9170 = vpack.c.b16 %v7625, %v7620
    %v9171 = vpack.c.b16 %v7626, %v7621
    %v9172 = vpack.c.b16 %v7632, %v7627
    %v9173 = vpack.c.b16 %v7633, %v7628
    %v9174 = vpack.c.b16 %v7634, %v7629
    %v9175 = vpack.c.b16 %v7635, %v7630
    %v9176 = vpack.c.b16 %v7636, %v7631
    %v9177 = vpack.c.b16 %v7642, %v7637
    %v9178 = vpack.c.b16 %v7643, %v7638
    %v9179 = vpack.c.b16 %v7644, %v7639
    %v9180 = vpack.c.b16 %v7645, %v7640
    %v9181 = vpack.c.b16 %v7646, %v7641
    %v9182 = vpack.c.b16 %v7652, %v7647
    %v9183 = vpack.c.b16 %v7653, %v7648
    %v9184 = vpack.c.b16 %v7654, %v7649
    %v9185 = vpack.c.b16 %v7655, %v7650
    %v9186 = vpack.c.b16 %v7656, %v7651
    %v9187 = vpack.c.b16 %v7662, %v7657
    %v9188 = vpack.c.b16 %v7663, %v7658
    %v9189 = vpack.c.b16 %v7664, %v7659
    %v9190 = vpack.c.b16 %v7665, %v7660
    %v9191 = vpack.c.b16 %v7666, %v7661
    %v9192 = vpack.c.b16 %v7672, %v7667
    %v9193 = vpack.c.b16 %v7673, %v7668
    %v9194 = vpack.c.b16 %v7674, %v7669
    %v9195 = vpack.c.b16 %v7675, %v7670
    %v9196 = vpack.c.b16 %v7676, %v7671
    %v9197 = vpack.c.b16 %v7682, %v7677
    %v9198 = vpack.c.b16 %v7683, %v7678
    %v9199 = vpack.c.b16 %v7684, %v7679
    %v9200 = vpack.c.b16 %v7685, %v7680
    %v9201 = vpack.c.b16 %v7686, %v7681
    %v9202 = vpack.c.b16 %v7692, %v7687
    %v9203 = vpack.c.b16 %v7693, %v7688
    %v9204 = vpack.c.b16 %v7694, %v7689
    %v9205 = vpack.c.b16 %v7695, %v7690
    %v9206 = vpack.c.b16 %v7696, %v7691
    %v9207 = vpack.c.b16 %v7702, %v7697
    %v9208 = vpack.c.b16 %v7703, %v7698
    %v9209 = vpack.c.b16 %v7704, %v7699
    %v9210 = vpack.c.b16 %v7705, %v7700
    %v9211 = vpack.c.b16 %v7706, %v7701
    %v9212 = vpack.c.b16 %v7712, %v7707
    %v9213 = vpack.c.b16 %v7713, %v7708
    %v9214 = vpack.c.b16 %v7714, %v7709
    %v9215 = vpack.c.b16 %v7715, %v7710
    %v9216 = vpack.c.b16 %v7716, %v7711
    %v9217 = vpack.c.b16 %v7722, %v7717
    %v9218 = vpack.c.b16 %v7723, %v7718
    %v9219 = vpack.c.b16 %v7724, %v7719
    %v9220 = vpack.c.b16 %v7725, %v7720
    %v9221 = vpack.c.b16 %v7726, %v7721
    %v9222 = vpack.c.b16 %v7732, %v7727
    %v9223 = vpack.c.b16 %v7733, %v7728
    %v9224 = vpack.c.b16 %v7734, %v7729
    %v9225 = vpack.c.b16 %v7735, %v7730
    %v9226 = vpack.c.b16 %v7736, %v7731
    %v9227 = vpack.c.b16 %v7742, %v7737
    %v9228 = vpack.c.b16 %v7743, %v7738
    %v9229 = vpack.c.b16 %v7744, %v7739
    %v9230 = vpack.c.b16 %v7745, %v7740
    %v9231 = vpack.c.b16 %v7746, %v7741
    %v9232 = vpack.c.b16 %v7752, %v7747
    %v9233 = vpack.c.b16 %v7753, %v7748
    %v9234 = vpack.c.b16 %v7754, %v7749
    %v9235 = vpack.c.b16 %v7755, %v7750
    %v9236 = vpack.c.b16 %v7756, %v7751
    %v9237 = vpack.c.b16 %v7762, %v7757
    %v9238 = vpack.c.b16 %v7763, %v7758
    %v9239 = vpack.c.b16 %v7764, %v7759
    %v9240 = vpack.c.b16 %v7765, %v7760
    %v9241 = vpack.c.b16 %v7766, %v7761
    %v9242 = vpack.c.b16 %v7772, %v7767
    %v9243 = vpack.c.b16 %v7773, %v7768
    %v9244 = vpack.c.b16 %v7774, %v7769
    %v9245 = vpack.c.b16 %v7775, %v7770
    %v9246 = vpack.c.b16 %v7776, %v7771
    %v9247 = vpack.c.b16 %v7782, %v7777
    %v9248 = vpack.c.b16 %v7783, %v7778
    %v9249 = vpack.c.b16 %v7784, %v7779
    %v9250 = vpack.c.b16 %v7785, %v7780
    %v9251 = vpack.c.b16 %v7786, %v7781
    %v9252 = vpack.c.b16 %v7792, %v7787
    %v9253 = vpack.c.b16 %v7793, %v7788
    %v9254 = vpack.c.b16 %v7794, %v7789
    %v9255 = vpack.c.b16 %v7795, %v7790
    %v9256 = vpack.c.b16 %v7796, %v7791
    %v9257 = vpack.c.b16 %v7802, %v7797
    %v9258 = vpack.c.b16 %v7803, %v7798
    %v9259 = vpack.c.b16 %v7804, %v7799
    %v9260 = vpack.c.b16 %v7805, %v7800
    %v9261 = vpack.c.b16 %v7806, %v7801
    %v9262 = vpack.c.b16 %v7812, %v7807
    %v9263 = vpack.c.b16 %v7813, %v7808
    %v9264 = vpack.c.b16 %v7814, %v7809
    %v9265 = vpack.c.b16 %v7815, %v7810
    %v9266 = vpack.c.b16 %v7816, %v7811
    %v9267 = vpack.c.b16 %v7822, %v7817
    %v9268 = vpack.c.b16 %v7823, %v7818
    %v9269 = vpack.c.b16 %v7824, %v7819
    %v9270 = vpack.c.b16 %v7825, %v7820
    %v9271 = vpack.c.b16 %v7826, %v7821
    %v9272 = vpack.c.b16 %v7832, %v7827
    %v9273 = vpack.c.b16 %v7833, %v7828
    %v9274 = vpack.c.b16 %v7834, %v7829
    %v9275 = vpack.c.b16 %v7835, %v7830
    %v9276 = vpack.c.b16 %v7836, %v7831
    %v9277 = vpack.c.b16 %v7842, %v7837
    %v9278 = vpack.c.b16 %v7843, %v7838
    %v9279 = vpack.c.b16 %v7844, %v7839
    %v9280 = vpack.c.b16 %v7845, %v7840
    %v9281 = vpack.c.b16 %v7846, %v7841
    %v9282 = vpack.c.b16 %v7852, %v7847
    %v9283 = vpack.c.b16 %v7853, %v7848
    %v9284 = vpack.c.b16 %v7854, %v7849
    %v9285 = vpack.c.b16 %v7855, %v7850
    %v9286 = vpack.c.b16 %v7856, %v7851
    %v9287 = vpack.c.b16 %v7862, %v7857
    %v9288 = vpack.c.b16 %v7863, %v7858
    %v9289 = vpack.c.b16 %v7864, %v7859
    %v9290 = vpack.c.b16 %v7865, %v7860
    %v9291 = vpack.c.b16 %v7866, %v7861
    %v9292 = vpack.c.b16 %v7872, %v7867
    %v9293 = vpack.c.b16 %v7873, %v7868
    %v9294 = vpack.c.b16 %v7874, %v7869
    %v9295 = vpack.c.b16 %v7875, %v7870
    %v9296 = vpack.c.b16 %v7876, %v7871
    %v9297 = vpack.c.b16 %v7882, %v7877
    %v9298 = vpack.c.b16 %v7883, %v7878
    %v9299 = vpack.c.b16 %v7884, %v7879
    %v9300 = vpack.c.b16 %v7885, %v7880
    %v9301 = vpack.c.b16 %v7886, %v7881
    %v9302 = vpack.c.b16 %v7892, %v7887
    %v9303 = vpack.c.b16 %v7893, %v7888
    %v9304 = vpack.c.b16 %v7894, %v7889
    %v9305 = vpack.c.b16 %v7895, %v7890
    %v9306 = vpack.c.b16 %v7896, %v7891
    %v9307 = vpack.c.b16 %v7902, %v7897
    %v9308 = vpack.c.b16 %v7903, %v7898
    %v9309 = vpack.c.b16 %v7904, %v7899
    %v9310 = vpack.c.b16 %v7905, %v7900
    %v9311 = vpack.c.b16 %v7906, %v7901
    %v9312 = vpack.c.b16 %v7912, %v7907
    %v9313 = vpack.c.b16 %v7913, %v7908
    %v9314 = vpack.c.b16 %v7914, %v7909
    %v9315 = vpack.c.b16 %v7915, %v7910
    %v9316 = vpack.c.b16 %v7916, %v7911
    %v9317 = vpack.c.b16 %v7922, %v7917
    %v9318 = vpack.c.b16 %v7923, %v7918
    %v9319 = vpack.c.b16 %v7924, %v7919
    %v9320 = vpack.c.b16 %v7925, %v7920
    %v9321 = vpack.c.b16 %v7926, %v7921
    %v9322 = vpack.c.b16 %v7932, %v7927
    %v9323 = vpack.c.b16 %v7933, %v7928
    %v9324 = vpack.c.b16 %v7934, %v7929
    %v9325 = vpack.c.b16 %v7935, %v7930
    %v9326 = vpack.c.b16 %v7936, %v7931
    %v9327 = vpack.c.b16 %v7942, %v7937
    %v9328 = vpack.c.b16 %v7943, %v7938
    %v9329 = vpack.c.b16 %v7944, %v7939
    %v9330 = vpack.c.b16 %v7945, %v7940
    %v9331 = vpack.c.b16 %v7946, %v7941
    %v9332 = vpack.c.b16 %v7952, %v7947
    %v9333 = vpack.c.b16 %v7953, %v7948
    %v9334 = vpack.c.b16 %v7954, %v7949
    %v9335 = vpack.c.b16 %v7955, %v7950
    %v9336 = vpack.c.b16 %v7956, %v7951
    %v9337 = vpack.c.b16 %v7962, %v7957
    %v9338 = vpack.c.b16 %v7963, %v7958
    %v9339 = vpack.c.b16 %v7964, %v7959
    %v9340 = vpack.c.b16 %v7965, %v7960
    %v9341 = vpack.c.b16 %v7966, %v7961
    %v9342 = vpack.c.b16 %v7972, %v7967
    %v9343 = vpack.c.b16 %v7973, %v7968
    %v9344 = vpack.c.b16 %v7974, %v7969
    %v9345 = vpack.c.b16 %v7975, %v7970
    %v9346 = vpack.c.b16 %v7976, %v7971
    %v9347 = vpack.c.b16 %v7982, %v7977
    %v9348 = vpack.c.b16 %v7983, %v7978
    %v9349 = vpack.c.b16 %v7984, %v7979
    %v9350 = vpack.c.b16 %v7985, %v7980
    %v9351 = vpack.c.b16 %v7986, %v7981
    %v9352 = vpack.c.b16 %v7992, %v7987
    %v9353 = vpack.c.b16 %v7993, %v7988
    %v9354 = vpack.c.b16 %v7994, %v7989
    %v9355 = vpack.c.b16 %v7995, %v7990
    %v9356 = vpack.c.b16 %v7996, %v7991
    %v9357 = vpack.c.b16 %v8002, %v7997
    %v9358 = vpack.c.b16 %v8003, %v7998
    %v9359 = vpack.c.b16 %v8004, %v7999
    %v9360 = vpack.c.b16 %v8005, %v8000
    %v9361 = vpack.c.b16 %v8006, %v8001
    %v9362 = vpack.c.b16 %v8012, %v8007
    %v9363 = vpack.c.b16 %v8013, %v8008
    %v9364 = vpack.c.b16 %v8014, %v8009
    %v9365 = vpack.c.b16 %v8015, %v8010
    %v9366 = vpack.c.b16 %v8016, %v8011
    %v9367 = vpack.c.b16 %v8022, %v8017
    %v9368 = vpack.c.b16 %v8023, %v8018
    %v9369 = vpack.c.b16 %v8024, %v8019
    %v9370 = vpack.c.b16 %v8025, %v8020
    %v9371 = vpack.c.b16 %v8026, %v8021
    %v9372 = vpack.c.b16 %v8032, %v8027
    %v9373 = vpack.c.b16 %v8033, %v8028
    %v9374 = vpack.c.b16 %v8034, %v8029
    %v9375 = vpack.c.b16 %v8035, %v8030
    %v9376 = vpack.c.b16 %v8036, %v8031
    %v9377 = vpack.c.b16 %v8042, %v8037
    %v9378 = vpack.c.b16 %v8043, %v8038
    %v9379 = vpack.c.b16 %v8044, %v8039
    %v9380 = vpack.c.b16 %v8045, %v8040
    %v9381 = vpack.c.b16 %v8046, %v8041
    %v9382 = vpack.c.b16 %v8052, %v8047
    %v9383 = vpack.c.b16 %v8053, %v8048
    %v9384 = vpack.c.b16 %v8054, %v8049
    %v9385 = vpack.c.b16 %v8055, %v8050
    %v9386 = vpack.c.b16 %v8056, %v8051
    %v9387 = vpack.c.b16 %v8062, %v8057
    %v9388 = vpack.c.b16 %v8063, %v8058
    %v9389 = vpack.c.b16 %v8064, %v8059
    %v9390 = vpack.c.b16 %v8065, %v8060
    %v9391 = vpack.c.b16 %v8066, %v8061
    %v9392 = vpack.c.b16 %v8072, %v8067
    %v9393 = vpack.c.b16 %v8073, %v8068
    %v9394 = vpack.c.b16 %v8074, %v8069
    %v9395 = vpack.c.b16 %v8075, %v8070
    %v9396 = vpack.c.b16 %v8076, %v8071
    %v9397 = vpack.c.b16 %v8082, %v8077
    %v9398 = vpack.c.b16 %v8083, %v8078
    %v9399 = vpack.c.b16 %v8084, %v8079
    %v9400 = vpack.c.b16 %v8085, %v8080
    %v9401 = vpack.c.b16 %v8086, %v8081
    %v9402 = vpack.c.b16 %v8092, %v8087
    %v9403 = vpack.c.b16 %v8093, %v8088
    %v9404 = vpack.c.b16 %v8094, %v8089
    %v9405 = vpack.c.b16 %v8095, %v8090
    %v9406 = vpack.c.b16 %v8096, %v8091
    %v9407 = vpack.c.b16 %v8102, %v8097
    %v9408 = vpack.c.b16 %v8103, %v8098
    %v9409 = vpack.c.b16 %v8104, %v8099
    %v9410 = vpack.c.b16 %v8105, %v8100
    %v9411 = vpack.c.b16 %v8106, %v8101
    %v9412 = vpack.c.b16 %v8112, %v8107
    %v9413 = vpack.c.b16 %v8113, %v8108
    %v9414 = vpack.c.b16 %v8114, %v8109
    %v9415 = vpack.c.b16 %v8115, %v8110
    %v9416 = vpack.c.b16 %v8116, %v8111
    %v9417 = vpack.c.b16 %v8122, %v8117
    %v9418 = vpack.c.b16 %v8123, %v8118
    %v9419 = vpack.c.b16 %v8124, %v8119
    %v9420 = vpack.c.b16 %v8125, %v8120
    %v9421 = vpack.c.b16 %v8126, %v8121
    %v9422 = vpack.c.b16 %v8132, %v8127
    %v9423 = vpack.c.b16 %v8133, %v8128
    %v9424 = vpack.c.b16 %v8134, %v8129
    %v9425 = vpack.c.b16 %v8135, %v8130
    %v9426 = vpack.c.b16 %v8136, %v8131
    %v9427 = vpack.c.b16 %v8142, %v8137
    %v9428 = vpack.c.b16 %v8143, %v8138
    %v9429 = vpack.c.b16 %v8144, %v8139
    %v9430 = vpack.c.b16 %v8145, %v8140
    %v9431 = vpack.c.b16 %v8146, %v8141
    %v9432 = vpack.c.b16 %v8152, %v8147
    %v9433 = vpack.c.b16 %v8153, %v8148
    %v9434 = vpack.c.b16 %v8154, %v8149
    %v9435 = vpack.c.b16 %v8155, %v8150
    %v9436 = vpack.c.b16 %v8156, %v8151
    %10717 = vmatprep.subr.bf16.mxu0 %v8158
    %10718 = vmatpush1.bf16.msra.mxu0 %v8157
    %10719 = vmatprep.subr.bf16.mxu0 %v8163
    %10720 = vmatpush1.bf16.msra.mxu0 %v8162
    %10721 = vmatprep.subr.bf16.mxu0 %v8168
    %10722 = vmatpush1.bf16.msra.mxu0 %v8167
    %10723 = vmatprep.subr.bf16.mxu0 %v8173
    %10724 = vmatpush1.bf16.msra.mxu0 %v8172
    %10725 = vmatprep.subr.bf16.mxu0 %v8178
    %10726 = vmatpush1.bf16.msra.mxu0 %v8177
    %10727 = vmatprep.subr.bf16.mxu0 %v8183
    %10728 = vmatpush1.bf16.msra.mxu0 %v8182
    %10729 = vmatprep.subr.bf16.mxu0 %v8188
    %10730 = vmatpush1.bf16.msra.mxu0 %v8187
    %10731 = vmatprep.subr.bf16.mxu0 %v8193
    %10732 = vmatpush1.bf16.msra.mxu0 %v8192
    %10733 = vmatprep.subr.bf16.mxu0 %v8198
    %10734 = vmatpush1.bf16.msra.mxu0 %v8197
    %10735 = vmatprep.subr.bf16.mxu0 %v8203
    %10736 = vmatpush1.bf16.msra.mxu0 %v8202
    %10737 = vmatprep.subr.bf16.mxu0 %v8208
    %10738 = vmatpush1.bf16.msra.mxu0 %v8207
    %10739 = vmatprep.subr.bf16.mxu0 %v8213
    %10740 = vmatpush1.bf16.msra.mxu0 %v8212
    %10741 = vmatprep.subr.bf16.mxu0 %v8218
    %10742 = vmatpush1.bf16.msra.mxu0 %v8217
    %10743 = vmatprep.subr.bf16.mxu0 %v8223
    %10744 = vmatpush1.bf16.msra.mxu0 %v8222
    %10745 = vmatprep.subr.bf16.mxu0 %v8228
    %10746 = vmatpush1.bf16.msra.mxu0 %v8227
    %10747 = vmatprep.subr.bf16.mxu0 %v8233
    %10748 = vmatpush1.bf16.msra.mxu0 %v8232
    %10749 = vmatprep.mubr.bf16.mxu0 %v2467
    %10750 = vmatmul.mubr.bf16.gmra.mrb[0].mxu0 %v2466
    %v10751 = vpop.f32.mrb[0].mxu0
    %v10752 = vadd.f32 %v4039, %v10751
    %v10753 = vpop.f32.mrb[0].mxu0
    %v10754 = vadd.f32 %v4043, %v10753
    %v10755 = vpop.f32.mrb[0].mxu0
    %v10756 = vpop.f32.mrb[0].mxu0
    %10757 = vdwg.mxu0
    %10758 = vmatprep.subr.bf16.mxu0 %v8238
    %10759 = vmatpush1.bf16.msra.mxu0 %v8237
    %10760 = vmatprep.subr.bf16.mxu0 %v8243
    %10761 = vmatpush1.bf16.msra.mxu0 %v8242
    %10762 = vmatprep.subr.bf16.mxu0 %v8248
    %10763 = vmatpush1.bf16.msra.mxu0 %v8247
    %10764 = vmatprep.subr.bf16.mxu0 %v8253
    %10765 = vmatpush1.bf16.msra.mxu0 %v8252
    %10766 = vmatprep.subr.bf16.mxu0 %v8258
    %10767 = vmatpush1.bf16.msra.mxu0 %v8257
    %10768 = vmatprep.subr.bf16.mxu0 %v8263
    %10769 = vmatpush1.bf16.msra.mxu0 %v8262
    %10770 = vmatprep.subr.bf16.mxu0 %v8268
    %10771 = vmatpush1.bf16.msra.mxu0 %v8267
    %10772 = vmatprep.subr.bf16.mxu0 %v8273
    %10773 = vmatpush1.bf16.msra.mxu0 %v8272
    %10774 = vmatprep.subr.bf16.mxu0 %v8278
    %10775 = vmatpush1.bf16.msra.mxu0 %v8277
    %10776 = vmatprep.subr.bf16.mxu0 %v8283
    %10777 = vmatpush1.bf16.msra.mxu0 %v8282
    %10778 = vmatprep.subr.bf16.mxu0 %v8288
    %10779 = vmatpush1.bf16.msra.mxu0 %v8287
    %10780 = vmatprep.subr.bf16.mxu0 %v8293
    %10781 = vmatpush1.bf16.msra.mxu0 %v8292
    %10782 = vmatprep.subr.bf16.mxu0 %v8298
    %10783 = vmatpush1.bf16.msra.mxu0 %v8297
    %10784 = vmatprep.subr.bf16.mxu0 %v8303
    %10785 = vmatpush1.bf16.msra.mxu0 %v8302
    %10786 = vmatprep.subr.bf16.mxu0 %v8308
    %10787 = vmatpush1.bf16.msra.mxu0 %v8307
    %10788 = vmatprep.subr.bf16.mxu0 %v8313
    %10789 = vmatpush1.bf16.msra.mxu0 %v8312
    %10790 = vmatprep.mubr.bf16.mxu0 %v2469
    %10791 = vmatmul.mubr.bf16.gmra.mrb[0].mxu0 %v2468
    %v10792 = vpop.f32.mrb[0].mxu0
    %v10793 = vadd.f32 %v10752, %v10792
    %v10794 = vpop.f32.mrb[0].mxu0
    %v10795 = vadd.f32 %v10754, %v10794
    %v10796 = vpop.f32.mrb[0].mxu0
    %v10797 = vpop.f32.mrb[0].mxu0
    %10798 = vdwg.mxu0
    %10799 = vmatprep.subr.bf16.mxu0 %v8318
    %10800 = vmatpush1.bf16.msra.mxu0 %v8317
    %10801 = vmatprep.subr.bf16.mxu0 %v8323
    %10802 = vmatpush1.bf16.msra.mxu0 %v8322
    %10803 = vmatprep.subr.bf16.mxu0 %v8328
    %10804 = vmatpush1.bf16.msra.mxu0 %v8327
    %10805 = vmatprep.subr.bf16.mxu0 %v8333
    %10806 = vmatpush1.bf16.msra.mxu0 %v8332
    %10807 = vmatprep.subr.bf16.mxu0 %v8338
    %10808 = vmatpush1.bf16.msra.mxu0 %v8337
    %10809 = vmatprep.subr.bf16.mxu0 %v8343
    %10810 = vmatpush1.bf16.msra.mxu0 %v8342
    %10811 = vmatprep.subr.bf16.mxu0 %v8348
    %10812 = vmatpush1.bf16.msra.mxu0 %v8347
    %10813 = vmatprep.subr.bf16.mxu0 %v8353
    %10814 = vmatpush1.bf16.msra.mxu0 %v8352
    %10815 = vmatprep.subr.bf16.mxu0 %v8358
    %10816 = vmatpush1.bf16.msra.mxu0 %v8357
    %10817 = vmatprep.subr.bf16.mxu0 %v8363
    %10818 = vmatpush1.bf16.msra.mxu0 %v8362
    %10819 = vmatprep.subr.bf16.mxu0 %v8368
    %10820 = vmatpush1.bf16.msra.mxu0 %v8367
    %10821 = vmatprep.subr.bf16.mxu0 %v8373
    %10822 = vmatpush1.bf16.msra.mxu0 %v8372
    %10823 = vmatprep.subr.bf16.mxu0 %v8378
    %10824 = vmatpush1.bf16.msra.mxu0 %v8377
    %10825 = vmatprep.subr.bf16.mxu0 %v8383
    %10826 = vmatpush1.bf16.msra.mxu0 %v8382
    %10827 = vmatprep.subr.bf16.mxu0 %v8388
    %10828 = vmatpush1.bf16.msra.mxu0 %v8387
    %10829 = vmatprep.subr.bf16.mxu0 %v8393
    %10830 = vmatpush1.bf16.msra.mxu0 %v8392
    %10831 = vmatprep.mubr.bf16.mxu0 %v2471
    %10832 = vmatmul.mubr.bf16.gmra.mrb[0].mxu0 %v2470
    %v10833 = vpop.f32.mrb[0].mxu0
    %v10834 = vadd.f32 %v10793, %v10833
    %v10835 = vpop.f32.mrb[0].mxu0
    %v10836 = vadd.f32 %v10795, %v10835
    %v10837 = vpop.f32.mrb[0].mxu0
    %v10838 = vpop.f32.mrb[0].mxu0
    %10839 = vdwg.mxu0
    %10840 = vmatprep.subr.bf16.mxu0 %v8398
    %10841 = vmatpush1.bf16.msra.mxu0 %v8397
    %10842 = vmatprep.subr.bf16.mxu0 %v8403
    %10843 = vmatpush1.bf16.msra.mxu0 %v8402
    %10844 = vmatprep.subr.bf16.mxu0 %v8408
    %10845 = vmatpush1.bf16.msra.mxu0 %v8407
    %10846 = vmatprep.subr.bf16.mxu0 %v8413
    %10847 = vmatpush1.bf16.msra.mxu0 %v8412
    %10848 = vmatprep.subr.bf16.mxu0 %v8418
    %10849 = vmatpush1.bf16.msra.mxu0 %v8417
    %10850 = vmatprep.subr.bf16.mxu0 %v8423
    %10851 = vmatpush1.bf16.msra.mxu0 %v8422
    %10852 = vmatprep.subr.bf16.mxu0 %v8428
    %10853 = vmatpush1.bf16.msra.mxu0 %v8427
    %10854 = vmatprep.subr.bf16.mxu0 %v8433
    %10855 = vmatpush1.bf16.msra.mxu0 %v8432
    %10856 = vmatprep.subr.bf16.mxu0 %v8438
    %10857 = vmatpush1.bf16.msra.mxu0 %v8437
    %10858 = vmatprep.subr.bf16.mxu0 %v8443
    %10859 = vmatpush1.bf16.msra.mxu0 %v8442
    %10860 = vmatprep.subr.bf16.mxu0 %v8448
    %10861 = vmatpush1.bf16.msra.mxu0 %v8447
    %10862 = vmatprep.subr.bf16.mxu0 %v8453
    %10863 = vmatpush1.bf16.msra.mxu0 %v8452
    %10864 = vmatprep.subr.bf16.mxu0 %v8458
    %10865 = vmatpush1.bf16.msra.mxu0 %v8457
    %10866 = vmatprep.subr.bf16.mxu0 %v8463
    %10867 = vmatpush1.bf16.msra.mxu0 %v8462
    %10868 = vmatprep.subr.bf16.mxu0 %v8468
    %10869 = vmatpush1.bf16.msra.mxu0 %v8467
    %10870 = vmatprep.subr.bf16.mxu0 %v8473
    %10871 = vmatpush1.bf16.msra.mxu0 %v8472
    %10872 = vmatprep.mubr.bf16.mxu0 %v2473
    %10873 = vmatmul.mubr.bf16.gmra.mrb[0].mxu0 %v2472
    %v10874 = vpop.f32.mrb[0].mxu0
    %v10875 = vadd.f32 %v10834, %v10874
    %v10876 = vpop.f32.mrb[0].mxu0
    %v10877 = vadd.f32 %v10836, %v10876
    %v10878 = vpop.f32.mrb[0].mxu0
    %v10879 = vpop.f32.mrb[0].mxu0
    %10880 = vdwg.mxu0
    %10881 = vmatprep.subr.bf16.mxu0 %v8478
    %10882 = vmatpush1.bf16.msra.mxu0 %v8477
    %10883 = vmatprep.subr.bf16.mxu0 %v8483
    %10884 = vmatpush1.bf16.msra.mxu0 %v8482
    %10885 = vmatprep.subr.bf16.mxu0 %v8488
    %10886 = vmatpush1.bf16.msra.mxu0 %v8487
    %10887 = vmatprep.subr.bf16.mxu0 %v8493
    %10888 = vmatpush1.bf16.msra.mxu0 %v8492
    %10889 = vmatprep.subr.bf16.mxu0 %v8498
    %10890 = vmatpush1.bf16.msra.mxu0 %v8497
    %10891 = vmatprep.subr.bf16.mxu0 %v8503
    %10892 = vmatpush1.bf16.msra.mxu0 %v8502
    %10893 = vmatprep.subr.bf16.mxu0 %v8508
    %10894 = vmatpush1.bf16.msra.mxu0 %v8507
    %10895 = vmatprep.subr.bf16.mxu0 %v8513
    %10896 = vmatpush1.bf16.msra.mxu0 %v8512
    %10897 = vmatprep.subr.bf16.mxu0 %v8518
    %10898 = vmatpush1.bf16.msra.mxu0 %v8517
    %10899 = vmatprep.subr.bf16.mxu0 %v8523
    %10900 = vmatpush1.bf16.msra.mxu0 %v8522
    %10901 = vmatprep.subr.bf16.mxu0 %v8528
    %10902 = vmatpush1.bf16.msra.mxu0 %v8527
    %10903 = vmatprep.subr.bf16.mxu0 %v8533
    %10904 = vmatpush1.bf16.msra.mxu0 %v8532
    %10905 = vmatprep.subr.bf16.mxu0 %v8538
    %10906 = vmatpush1.bf16.msra.mxu0 %v8537
    %10907 = vmatprep.subr.bf16.mxu0 %v8543
    %10908 = vmatpush1.bf16.msra.mxu0 %v8542
    %10909 = vmatprep.subr.bf16.mxu0 %v8548
    %10910 = vmatpush1.bf16.msra.mxu0 %v8547
    %10911 = vmatprep.subr.bf16.mxu0 %v8553
    %10912 = vmatpush1.bf16.msra.mxu0 %v8552
    %10913 = vmatprep.mubr.bf16.mxu0 %v2475
    %10914 = vmatmul.mubr.bf16.gmra.mrb[0].mxu0 %v2474
    %v10915 = vpop.f32.mrb[0].mxu0
    %v10916 = vadd.f32 %v10875, %v10915
    %v10917 = vpop.f32.mrb[0].mxu0
    %v10918 = vadd.f32 %v10877, %v10917
    %v10919 = vpop.f32.mrb[0].mxu0
    %v10920 = vpop.f32.mrb[0].mxu0
    %10921 = vdwg.mxu0
    %10922 = vmatprep.subr.bf16.mxu0 %v8558
    %10923 = vmatpush1.bf16.msra.mxu0 %v8557
    %10924 = vmatprep.subr.bf16.mxu0 %v8563
    %10925 = vmatpush1.bf16.msra.mxu0 %v8562
    %10926 = vmatprep.subr.bf16.mxu0 %v8568
    %10927 = vmatpush1.bf16.msra.mxu0 %v8567
    %10928 = vmatprep.subr.bf16.mxu0 %v8573
    %10929 = vmatpush1.bf16.msra.mxu0 %v8572
    %10930 = vmatprep.subr.bf16.mxu0 %v8578
    %10931 = vmatpush1.bf16.msra.mxu0 %v8577
    %10932 = vmatprep.subr.bf16.mxu0 %v8583
    %10933 = vmatpush1.bf16.msra.mxu0 %v8582
    %10934 = vmatprep.subr.bf16.mxu0 %v8588
    %10935 = vmatpush1.bf16.msra.mxu0 %v8587
    %10936 = vmatprep.subr.bf16.mxu0 %v8593
    %10937 = vmatpush1.bf16.msra.mxu0 %v8592
    %10938 = vmatprep.subr.bf16.mxu0 %v8598
    %10939 = vmatpush1.bf16.msra.mxu0 %v8597
    %10940 = vmatprep.subr.bf16.mxu0 %v8603
    %10941 = vmatpush1.bf16.msra.mxu0 %v8602
    %10942 = vmatprep.subr.bf16.mxu0 %v8608
    %10943 = vmatpush1.bf16.msra.mxu0 %v8607
    %10944 = vmatprep.subr.bf16.mxu0 %v8613
    %10945 = vmatpush1.bf16.msra.mxu0 %v8612
    %10946 = vmatprep.subr.bf16.mxu0 %v8618
    %10947 = vmatpush1.bf16.msra.mxu0 %v8617
    %10948 = vmatprep.subr.bf16.mxu0 %v8623
    %10949 = vmatpush1.bf16.msra.mxu0 %v8622
    %10950 = vmatprep.subr.bf16.mxu0 %v8628
    %10951 = vmatpush1.bf16.msra.mxu0 %v8627
    %10952 = vmatprep.subr.bf16.mxu0 %v8633
    %10953 = vmatpush1.bf16.msra.mxu0 %v8632
    %10954 = vmatprep.mubr.bf16.mxu0 %v2477
    %10955 = vmatmul.mubr.bf16.gmra.mrb[0].mxu0 %v2476
    %v10956 = vpop.f32.mrb[0].mxu0
    %v10957 = vadd.f32 %v10916, %v10956
    %v10958 = vpop.f32.mrb[0].mxu0
    %v10959 = vadd.f32 %v10918, %v10958
    %v10960 = vpop.f32.mrb[0].mxu0
    %v10961 = vpop.f32.mrb[0].mxu0
    %10962 = vdwg.mxu0
    %10963 = vmatprep.subr.bf16.mxu0 %v8638
    %10964 = vmatpush1.bf16.msra.mxu0 %v8637
    %10965 = vmatprep.subr.bf16.mxu0 %v8643
    %10966 = vmatpush1.bf16.msra.mxu0 %v8642
    %10967 = vmatprep.subr.bf16.mxu0 %v8648
    %10968 = vmatpush1.bf16.msra.mxu0 %v8647
    %10969 = vmatprep.subr.bf16.mxu0 %v8653
    %10970 = vmatpush1.bf16.msra.mxu0 %v8652
    %10971 = vmatprep.subr.bf16.mxu0 %v8658
    %10972 = vmatpush1.bf16.msra.mxu0 %v8657
    %10973 = vmatprep.subr.bf16.mxu0 %v8663
    %10974 = vmatpush1.bf16.msra.mxu0 %v8662
    %10975 = vmatprep.subr.bf16.mxu0 %v8668
    %10976 = vmatpush1.bf16.msra.mxu0 %v8667
    %10977 = vmatprep.subr.bf16.mxu0 %v8673
    %10978 = vmatpush1.bf16.msra.mxu0 %v8672
    %10979 = vmatprep.subr.bf16.mxu0 %v8678
    %10980 = vmatpush1.bf16.msra.mxu0 %v8677
    %10981 = vmatprep.subr.bf16.mxu0 %v8683
    %10982 = vmatpush1.bf16.msra.mxu0 %v8682
    %10983 = vmatprep.subr.bf16.mxu0 %v8688
    %10984 = vmatpush1.bf16.msra.mxu0 %v8687
    %10985 = vmatprep.subr.bf16.mxu0 %v8693
    %10986 = vmatpush1.bf16.msra.mxu0 %v8692
    %10987 = vmatprep.subr.bf16.mxu0 %v8698
    %10988 = vmatpush1.bf16.msra.mxu0 %v8697
    %10989 = vmatprep.subr.bf16.mxu0 %v8703
    %10990 = vmatpush1.bf16.msra.mxu0 %v8702
    %10991 = vmatprep.subr.bf16.mxu0 %v8708
    %10992 = vmatpush1.bf16.msra.mxu0 %v8707
    %10993 = vmatprep.subr.bf16.mxu0 %v8713
    %10994 = vmatpush1.bf16.msra.mxu0 %v8712
    %10995 = vmatprep.mubr.bf16.mxu0 %v2479
    %10996 = vmatmul.mubr.bf16.gmra.mrb[0].mxu0 %v2478
    %v10997 = vpop.f32.mrb[0].mxu0
    %v10998 = vadd.f32 %v10957, %v10997
    %v10999 = vpop.f32.mrb[0].mxu0
    %v11000 = vadd.f32 %v10959, %v10999
    %v11001 = vpop.f32.mrb[0].mxu0
    %v11002 = vpop.f32.mrb[0].mxu0
    %11003 = vdwg.mxu0
    %11004 = vmatprep.subr.bf16.mxu0 %v8718
    %11005 = vmatpush1.bf16.msra.mxu0 %v8717
    %11006 = vmatprep.subr.bf16.mxu0 %v8723
    %11007 = vmatpush1.bf16.msra.mxu0 %v8722
    %11008 = vmatprep.subr.bf16.mxu0 %v8728
    %11009 = vmatpush1.bf16.msra.mxu0 %v8727
    %11010 = vmatprep.subr.bf16.mxu0 %v8733
    %11011 = vmatpush1.bf16.msra.mxu0 %v8732
    %11012 = vmatprep.subr.bf16.mxu0 %v8738
    %11013 = vmatpush1.bf16.msra.mxu0 %v8737
    %11014 = vmatprep.subr.bf16.mxu0 %v8743
    %11015 = vmatpush1.bf16.msra.mxu0 %v8742
    %11016 = vmatprep.subr.bf16.mxu0 %v8748
    %11017 = vmatpush1.bf16.msra.mxu0 %v8747
    %11018 = vmatprep.subr.bf16.mxu0 %v8753
    %11019 = vmatpush1.bf16.msra.mxu0 %v8752
    %11020 = vmatprep.subr.bf16.mxu0 %v8758
    %11021 = vmatpush1.bf16.msra.mxu0 %v8757
    %11022 = vmatprep.subr.bf16.mxu0 %v8763
    %11023 = vmatpush1.bf16.msra.mxu0 %v8762
    %11024 = vmatprep.subr.bf16.mxu0 %v8768
    %11025 = vmatpush1.bf16.msra.mxu0 %v8767
    %11026 = vmatprep.subr.bf16.mxu0 %v8773
    %11027 = vmatpush1.bf16.msra.mxu0 %v8772
    %11028 = vmatprep.subr.bf16.mxu0 %v8778
    %11029 = vmatpush1.bf16.msra.mxu0 %v8777
    %11030 = vmatprep.subr.bf16.mxu0 %v8783
    %11031 = vmatpush1.bf16.msra.mxu0 %v8782
    %11032 = vmatprep.subr.bf16.mxu0 %v8788
    %11033 = vmatpush1.bf16.msra.mxu0 %v8787
    %11034 = vmatprep.subr.bf16.mxu0 %v8793
    %11035 = vmatpush1.bf16.msra.mxu0 %v8792
    %11036 = vmatprep.mubr.bf16.mxu0 %v2481
    %11037 = vmatmul.mubr.bf16.gmra.mrb[0].mxu0 %v2480
    %v11038 = vpop.f32.mrb[0].mxu0
    %v11039 = vadd.f32 %v10998, %v11038
    %v11040 = vpop.f32.mrb[0].mxu0
    %v11041 = vadd.f32 %v11000, %v11040
    %v11042 = vpop.f32.mrb[0].mxu0
    %v11043 = vpop.f32.mrb[0].mxu0
    %11044 = vdwg.mxu0
    %11045 = vmatprep.subr.bf16.mxu0 %v8798
    %11046 = vmatpush1.bf16.msra.mxu0 %v8797
    %11047 = vmatprep.subr.bf16.mxu0 %v8803
    %11048 = vmatpush1.bf16.msra.mxu0 %v8802
    %11049 = vmatprep.subr.bf16.mxu0 %v8808
    %11050 = vmatpush1.bf16.msra.mxu0 %v8807
    %11051 = vmatprep.subr.bf16.mxu0 %v8813
    %11052 = vmatpush1.bf16.msra.mxu0 %v8812
    %11053 = vmatprep.subr.bf16.mxu0 %v8818
    %11054 = vmatpush1.bf16.msra.mxu0 %v8817
    %11055 = vmatprep.subr.bf16.mxu0 %v8823
    %11056 = vmatpush1.bf16.msra.mxu0 %v8822
    %11057 = vmatprep.subr.bf16.mxu0 %v8828
    %11058 = vmatpush1.bf16.msra.mxu0 %v8827
    %11059 = vmatprep.subr.bf16.mxu0 %v8833
    %11060 = vmatpush1.bf16.msra.mxu0 %v8832
    %11061 = vmatprep.subr.bf16.mxu0 %v8838
    %11062 = vmatpush1.bf16.msra.mxu0 %v8837
    %11063 = vmatprep.subr.bf16.mxu0 %v8843
    %11064 = vmatpush1.bf16.msra.mxu0 %v8842
    %11065 = vmatprep.subr.bf16.mxu0 %v8848
    %11066 = vmatpush1.bf16.msra.mxu0 %v8847
    %11067 = vmatprep.subr.bf16.mxu0 %v8853
    %11068 = vmatpush1.bf16.msra.mxu0 %v8852
    %11069 = vmatprep.subr.bf16.mxu0 %v8858
    %11070 = vmatpush1.bf16.msra.mxu0 %v8857
    %11071 = vmatprep.subr.bf16.mxu0 %v8863
    %11072 = vmatpush1.bf16.msra.mxu0 %v8862
    %11073 = vmatprep.subr.bf16.mxu0 %v8868
    %11074 = vmatpush1.bf16.msra.mxu0 %v8867
    %11075 = vmatprep.subr.bf16.mxu0 %v8873
    %11076 = vmatpush1.bf16.msra.mxu0 %v8872
    %11077 = vmatprep.mubr.bf16.mxu0 %v2483
    %11078 = vmatmul.mubr.bf16.gmra.mrb[0].mxu0 %v2482
    %v11079 = vpop.f32.mrb[0].mxu0
    %v11080 = vadd.f32 %v11039, %v11079
    %v11081 = vpop.f32.mrb[0].mxu0
    %v11082 = vadd.f32 %v11041, %v11081
    %v11083 = vpop.f32.mrb[0].mxu0
    %v11084 = vpop.f32.mrb[0].mxu0
    %11085 = vdwg.mxu0
    %11086 = vmatprep.subr.bf16.mxu0 %v8878
    %11087 = vmatpush1.bf16.msra.mxu0 %v8877
    %11088 = vmatprep.subr.bf16.mxu0 %v8883
    %11089 = vmatpush1.bf16.msra.mxu0 %v8882
    %11090 = vmatprep.subr.bf16.mxu0 %v8888
    %11091 = vmatpush1.bf16.msra.mxu0 %v8887
    %11092 = vmatprep.subr.bf16.mxu0 %v8893
    %11093 = vmatpush1.bf16.msra.mxu0 %v8892
    %11094 = vmatprep.subr.bf16.mxu0 %v8898
    %11095 = vmatpush1.bf16.msra.mxu0 %v8897
    %11096 = vmatprep.subr.bf16.mxu0 %v8903
    %11097 = vmatpush1.bf16.msra.mxu0 %v8902
    %11098 = vmatprep.subr.bf16.mxu0 %v8908
    %11099 = vmatpush1.bf16.msra.mxu0 %v8907
    %11100 = vmatprep.subr.bf16.mxu0 %v8913
    %11101 = vmatpush1.bf16.msra.mxu0 %v8912
    %11102 = vmatprep.subr.bf16.mxu0 %v8918
    %11103 = vmatpush1.bf16.msra.mxu0 %v8917
    %11104 = vmatprep.subr.bf16.mxu0 %v8923
    %11105 = vmatpush1.bf16.msra.mxu0 %v8922
    %11106 = vmatprep.subr.bf16.mxu0 %v8928
    %11107 = vmatpush1.bf16.msra.mxu0 %v8927
    %11108 = vmatprep.subr.bf16.mxu0 %v8933
    %11109 = vmatpush1.bf16.msra.mxu0 %v8932
    %11110 = vmatprep.subr.bf16.mxu0 %v8938
    %11111 = vmatpush1.bf16.msra.mxu0 %v8937
    %11112 = vmatprep.subr.bf16.mxu0 %v8943
    %11113 = vmatpush1.bf16.msra.mxu0 %v8942
    %11114 = vmatprep.subr.bf16.mxu0 %v8948
    %11115 = vmatpush1.bf16.msra.mxu0 %v8947
    %11116 = vmatprep.subr.bf16.mxu0 %v8953
    %11117 = vmatpush1.bf16.msra.mxu0 %v8952
    %11118 = vmatprep.mubr.bf16.mxu0 %v2485
    %11119 = vmatmul.mubr.bf16.gmra.mrb[0].mxu0 %v2484
    %v11120 = vpop.f32.mrb[0].mxu0
    %v11121 = vadd.f32 %v11080, %v11120
    %v11122 = vpop.f32.mrb[0].mxu0
    %v11123 = vadd.f32 %v11082, %v11122
    %v11124 = vpop.f32.mrb[0].mxu0
    %v11125 = vpop.f32.mrb[0].mxu0
    %11126 = vdwg.mxu0
    %11127 = vmatprep.subr.bf16.mxu0 %v8958
    %11128 = vmatpush1.bf16.msra.mxu0 %v8957
    %11129 = vmatprep.subr.bf16.mxu0 %v8963
    %11130 = vmatpush1.bf16.msra.mxu0 %v8962
    %11131 = vmatprep.subr.bf16.mxu0 %v8968
    %11132 = vmatpush1.bf16.msra.mxu0 %v8967
    %11133 = vmatprep.subr.bf16.mxu0 %v8973
    %11134 = vmatpush1.bf16.msra.mxu0 %v8972
    %11135 = vmatprep.subr.bf16.mxu0 %v8978
    %11136 = vmatpush1.bf16.msra.mxu0 %v8977
    %11137 = vmatprep.subr.bf16.mxu0 %v8983
    %11138 = vmatpush1.bf16.msra.mxu0 %v8982
    %11139 = vmatprep.subr.bf16.mxu0 %v8988
    %11140 = vmatpush1.bf16.msra.mxu0 %v8987
    %11141 = vmatprep.subr.bf16.mxu0 %v8993
    %11142 = vmatpush1.bf16.msra.mxu0 %v8992
    %11143 = vmatprep.subr.bf16.mxu0 %v8998
    %11144 = vmatpush1.bf16.msra.mxu0 %v8997
    %11145 = vmatprep.subr.bf16.mxu0 %v9003
    %11146 = vmatpush1.bf16.msra.mxu0 %v9002
    %11147 = vmatprep.subr.bf16.mxu0 %v9008
    %11148 = vmatpush1.bf16.msra.mxu0 %v9007
    %11149 = vmatprep.subr.bf16.mxu0 %v9013
    %11150 = vmatpush1.bf16.msra.mxu0 %v9012
    %11151 = vmatprep.subr.bf16.mxu0 %v9018
    %11152 = vmatpush1.bf16.msra.mxu0 %v9017
    %11153 = vmatprep.subr.bf16.mxu0 %v9023
    %11154 = vmatpush1.bf16.msra.mxu0 %v9022
    %11155 = vmatprep.subr.bf16.mxu0 %v9028
    %11156 = vmatpush1.bf16.msra.mxu0 %v9027
    %11157 = vmatprep.subr.bf16.mxu0 %v9033
    %11158 = vmatpush1.bf16.msra.mxu0 %v9032
    %11159 = vmatprep.mubr.bf16.mxu0 %v2487
    %11160 = vmatmul.mubr.bf16.gmra.mrb[0].mxu0 %v2486
    %v11161 = vpop.f32.mrb[0].mxu0
    %v11162 = vadd.f32 %v11121, %v11161
    %v11163 = vpop.f32.mrb[0].mxu0
    %v11164 = vadd.f32 %v11123, %v11163
    %v11165 = vpop.f32.mrb[0].mxu0
    %v11166 = vpop.f32.mrb[0].mxu0
    %11167 = vdwg.mxu0
    %11168 = vmatprep.subr.bf16.mxu0 %v9038
    %11169 = vmatpush1.bf16.msra.mxu0 %v9037
    %11170 = vmatprep.subr.bf16.mxu0 %v9043
    %11171 = vmatpush1.bf16.msra.mxu0 %v9042
    %11172 = vmatprep.subr.bf16.mxu0 %v9048
    %11173 = vmatpush1.bf16.msra.mxu0 %v9047
    %11174 = vmatprep.subr.bf16.mxu0 %v9053
    %11175 = vmatpush1.bf16.msra.mxu0 %v9052
    %11176 = vmatprep.subr.bf16.mxu0 %v9058
    %11177 = vmatpush1.bf16.msra.mxu0 %v9057
    %11178 = vmatprep.subr.bf16.mxu0 %v9063
    %11179 = vmatpush1.bf16.msra.mxu0 %v9062
    %11180 = vmatprep.subr.bf16.mxu0 %v9068
    %11181 = vmatpush1.bf16.msra.mxu0 %v9067
    %11182 = vmatprep.subr.bf16.mxu0 %v9073
    %11183 = vmatpush1.bf16.msra.mxu0 %v9072
    %11184 = vmatprep.subr.bf16.mxu0 %v9078
    %11185 = vmatpush1.bf16.msra.mxu0 %v9077
    %11186 = vmatprep.subr.bf16.mxu0 %v9083
    %11187 = vmatpush1.bf16.msra.mxu0 %v9082
    %11188 = vmatprep.subr.bf16.mxu0 %v9088
    %11189 = vmatpush1.bf16.msra.mxu0 %v9087
    %11190 = vmatprep.subr.bf16.mxu0 %v9093
    %11191 = vmatpush1.bf16.msra.mxu0 %v9092
    %11192 = vmatprep.subr.bf16.mxu0 %v9098
    %11193 = vmatpush1.bf16.msra.mxu0 %v9097
    %11194 = vmatprep.subr.bf16.mxu0 %v9103
    %11195 = vmatpush1.bf16.msra.mxu0 %v9102
    %11196 = vmatprep.subr.bf16.mxu0 %v9108
    %11197 = vmatpush1.bf16.msra.mxu0 %v9107
    %11198 = vmatprep.subr.bf16.mxu0 %v9113
    %11199 = vmatpush1.bf16.msra.mxu0 %v9112
    %11200 = vmatprep.mubr.bf16.mxu0 %v2489
    %11201 = vmatmul.mubr.bf16.gmra.mrb[0].mxu0 %v2488
    %v11202 = vpop.f32.mrb[0].mxu0
    %v11203 = vadd.f32 %v11162, %v11202
    %v11204 = vpop.f32.mrb[0].mxu0
    %v11205 = vadd.f32 %v11164, %v11204
    %v11206 = vpop.f32.mrb[0].mxu0
    %v11207 = vpop.f32.mrb[0].mxu0
    %11208 = vdwg.mxu0
    %11209 = vmatprep.subr.bf16.mxu0 %v9118
    %11210 = vmatpush1.bf16.msra.mxu0 %v9117
    %11211 = vmatprep.subr.bf16.mxu0 %v9123
    %11212 = vmatpush1.bf16.msra.mxu0 %v9122
    %11213 = vmatprep.subr.bf16.mxu0 %v9128
    %11214 = vmatpush1.bf16.msra.mxu0 %v9127
    %11215 = vmatprep.subr.bf16.mxu0 %v9133
    %11216 = vmatpush1.bf16.msra.mxu0 %v9132
    %11217 = vmatprep.subr.bf16.mxu0 %v9138
    %11218 = vmatpush1.bf16.msra.mxu0 %v9137
    %11219 = vmatprep.subr.bf16.mxu0 %v9143
    %11220 = vmatpush1.bf16.msra.mxu0 %v9142
    %11221 = vmatprep.subr.bf16.mxu0 %v9148
    %11222 = vmatpush1.bf16.msra.mxu0 %v9147
    %11223 = vmatprep.subr.bf16.mxu0 %v9153
    %11224 = vmatpush1.bf16.msra.mxu0 %v9152
    %11225 = vmatprep.subr.bf16.mxu0 %v9158
    %11226 = vmatpush1.bf16.msra.mxu0 %v9157
    %11227 = vmatprep.subr.bf16.mxu0 %v9163
    %11228 = vmatpush1.bf16.msra.mxu0 %v9162
    %11229 = vmatprep.subr.bf16.mxu0 %v9168
    %11230 = vmatpush1.bf16.msra.mxu0 %v9167
    %11231 = vmatprep.subr.bf16.mxu0 %v9173
    %11232 = vmatpush1.bf16.msra.mxu0 %v9172
    %11233 = vmatprep.subr.bf16.mxu0 %v9178
    %11234 = vmatpush1.bf16.msra.mxu0 %v9177
    %11235 = vmatprep.subr.bf16.mxu0 %v9183
    %11236 = vmatpush1.bf16.msra.mxu0 %v9182
    %11237 = vmatprep.subr.bf16.mxu0 %v9188
    %11238 = vmatpush1.bf16.msra.mxu0 %v9187
    %11239 = vmatprep.subr.bf16.mxu0 %v9193
    %11240 = vmatpush1.bf16.msra.mxu0 %v9192
    %11241 = vmatprep.mubr.bf16.mxu0 %v2491
    %11242 = vmatmul.mubr.bf16.gmra.mrb[0].mxu0 %v2490
    %v11243 = vpop.f32.mrb[0].mxu0
    %v11244 = vadd.f32 %v11203, %v11243
    %v11245 = vpop.f32.mrb[0].mxu0
    %v11246 = vadd.f32 %v11205, %v11245
    %v11247 = vpop.f32.mrb[0].mxu0
    %v11248 = vpop.f32.mrb[0].mxu0
    %11249 = vdwg.mxu0
    %11250 = vmatprep.subr.bf16.mxu0 %v9198
    %11251 = vmatpush1.bf16.msra.mxu0 %v9197
    %11252 = vmatprep.subr.bf16.mxu0 %v9203
    %11253 = vmatpush1.bf16.msra.mxu0 %v9202
    %11254 = vmatprep.subr.bf16.mxu0 %v9208
    %11255 = vmatpush1.bf16.msra.mxu0 %v9207
    %11256 = vmatprep.subr.bf16.mxu0 %v9213
    %11257 = vmatpush1.bf16.msra.mxu0 %v9212
    %11258 = vmatprep.subr.bf16.mxu0 %v9218
    %11259 = vmatpush1.bf16.msra.mxu0 %v9217
    %11260 = vmatprep.subr.bf16.mxu0 %v9223
    %11261 = vmatpush1.bf16.msra.mxu0 %v9222
    %11262 = vmatprep.subr.bf16.mxu0 %v9228
    %11263 = vmatpush1.bf16.msra.mxu0 %v9227
    %11264 = vmatprep.subr.bf16.mxu0 %v9233
    %11265 = vmatpush1.bf16.msra.mxu0 %v9232
    %11266 = vmatprep.subr.bf16.mxu0 %v9238
    %11267 = vmatpush1.bf16.msra.mxu0 %v9237
    %11268 = vmatprep.subr.bf16.mxu0 %v9243
    %11269 = vmatpush1.bf16.msra.mxu0 %v9242
    %11270 = vmatprep.subr.bf16.mxu0 %v9248
    %11271 = vmatpush1.bf16.msra.mxu0 %v9247
    %11272 = vmatprep.subr.bf16.mxu0 %v9253
    %11273 = vmatpush1.bf16.msra.mxu0 %v9252
    %11274 = vmatprep.subr.bf16.mxu0 %v9258
    %11275 = vmatpush1.bf16.msra.mxu0 %v9257
    %11276 = vmatprep.subr.bf16.mxu0 %v9263
    %11277 = vmatpush1.bf16.msra.mxu0 %v9262
    %11278 = vmatprep.subr.bf16.mxu0 %v9268
    %11279 = vmatpush1.bf16.msra.mxu0 %v9267
    %11280 = vmatprep.subr.bf16.mxu0 %v9273
    %11281 = vmatpush1.bf16.msra.mxu0 %v9272
    %11282 = vmatprep.mubr.bf16.mxu0 %v2493
    %11283 = vmatmul.mubr.bf16.gmra.mrb[0].mxu0 %v2492
    %v11284 = vpop.f32.mrb[0].mxu0
    %v11285 = vadd.f32 %v11244, %v11284
    %v11286 = vpop.f32.mrb[0].mxu0
    %v11287 = vadd.f32 %v11246, %v11286
    %v11288 = vpop.f32.mrb[0].mxu0
    %v11289 = vpop.f32.mrb[0].mxu0
    %11290 = vdwg.mxu0
    %11291 = vmatprep.subr.bf16.mxu0 %v9278
    %11292 = vmatpush1.bf16.msra.mxu0 %v9277
    %11293 = vmatprep.subr.bf16.mxu0 %v9283
    %11294 = vmatpush1.bf16.msra.mxu0 %v9282
    %11295 = vmatprep.subr.bf16.mxu0 %v9288
    %11296 = vmatpush1.bf16.msra.mxu0 %v9287
    %11297 = vmatprep.subr.bf16.mxu0 %v9293
    %11298 = vmatpush1.bf16.msra.mxu0 %v9292
    %11299 = vmatprep.subr.bf16.mxu0 %v9298
    %11300 = vmatpush1.bf16.msra.mxu0 %v9297
    %11301 = vmatprep.subr.bf16.mxu0 %v9303
    %11302 = vmatpush1.bf16.msra.mxu0 %v9302
    %11303 = vmatprep.subr.bf16.mxu0 %v9308
    %11304 = vmatpush1.bf16.msra.mxu0 %v9307
    %11305 = vmatprep.subr.bf16.mxu0 %v9313
    %11306 = vmatpush1.bf16.msra.mxu0 %v9312
    %11307 = vmatprep.subr.bf16.mxu0 %v9318
    %11308 = vmatpush1.bf16.msra.mxu0 %v9317
    %11309 = vmatprep.subr.bf16.mxu0 %v9323
    %11310 = vmatpush1.bf16.msra.mxu0 %v9322
    %11311 = vmatprep.subr.bf16.mxu0 %v9328
    %11312 = vmatpush1.bf16.msra.mxu0 %v9327
    %11313 = vmatprep.subr.bf16.mxu0 %v9333
    %11314 = vmatpush1.bf16.msra.mxu0 %v9332
    %11315 = vmatprep.subr.bf16.mxu0 %v9338
    %11316 = vmatpush1.bf16.msra.mxu0 %v9337
    %11317 = vmatprep.subr.bf16.mxu0 %v9343
    %11318 = vmatpush1.bf16.msra.mxu0 %v9342
    %11319 = vmatprep.subr.bf16.mxu0 %v9348
    %11320 = vmatpush1.bf16.msra.mxu0 %v9347
    %11321 = vmatprep.subr.bf16.mxu0 %v9353
    %11322 = vmatpush1.bf16.msra.mxu0 %v9352
    %11323 = vmatprep.mubr.bf16.mxu0 %v2495
    %11324 = vmatmul.mubr.bf16.gmra.mrb[0].mxu0 %v2494
    %v11325 = vpop.f32.mrb[0].mxu0
    %v11326 = vadd.f32 %v11285, %v11325
    %v11327 = vpop.f32.mrb[0].mxu0
    %v11328 = vadd.f32 %v11287, %v11327
    %v11329 = vpop.f32.mrb[0].mxu0
    %v11330 = vpop.f32.mrb[0].mxu0
    %11331 = vdwg.mxu0
    %11332 = vmatprep.subr.bf16.mxu0 %v9358
    %11333 = vmatpush1.bf16.msra.mxu0 %v9357
    %11334 = vmatprep.subr.bf16.mxu0 %v9363
    %11335 = vmatpush1.bf16.msra.mxu0 %v9362
    %11336 = vmatprep.subr.bf16.mxu0 %v9368
    %11337 = vmatpush1.bf16.msra.mxu0 %v9367
    %11338 = vmatprep.subr.bf16.mxu0 %v9373
    %11339 = vmatpush1.bf16.msra.mxu0 %v9372
    %11340 = vmatprep.subr.bf16.mxu0 %v9378
    %11341 = vmatpush1.bf16.msra.mxu0 %v9377
    %11342 = vmatprep.subr.bf16.mxu0 %v9383
    %11343 = vmatpush1.bf16.msra.mxu0 %v9382
    %11344 = vmatprep.subr.bf16.mxu0 %v9388
    %11345 = vmatpush1.bf16.msra.mxu0 %v9387
    %11346 = vmatprep.subr.bf16.mxu0 %v9393
    %11347 = vmatpush1.bf16.msra.mxu0 %v9392
    %11348 = vmatprep.subr.bf16.mxu0 %v9398
    %11349 = vmatpush1.bf16.msra.mxu0 %v9397
    %11350 = vmatprep.subr.bf16.mxu0 %v9403
    %11351 = vmatpush1.bf16.msra.mxu0 %v9402
    %11352 = vmatprep.subr.bf16.mxu0 %v9408
    %11353 = vmatpush1.bf16.msra.mxu0 %v9407
    %11354 = vmatprep.subr.bf16.mxu0 %v9413
    %11355 = vmatpush1.bf16.msra.mxu0 %v9412
    %11356 = vmatprep.subr.bf16.mxu0 %v9418
    %11357 = vmatpush1.bf16.msra.mxu0 %v9417
    %11358 = vmatprep.subr.bf16.mxu0 %v9423
    %11359 = vmatpush1.bf16.msra.mxu0 %v9422
    %11360 = vmatprep.subr.bf16.mxu0 %v9428
    %11361 = vmatpush1.bf16.msra.mxu0 %v9427
    %11362 = vmatprep.subr.bf16.mxu0 %v9433
    %11363 = vmatpush1.bf16.msra.mxu0 %v9432
    %11364 = vmatprep.mubr.bf16.mxu0 %v2497
    %11365 = vmatmul.mubr.bf16.gmra.mrb[0].mxu0 %v2496
    %v11366 = vpop.f32.mrb[0].mxu0
    %v11367 = vadd.f32 %v11326, %v11366
    %v11368 = vpop.f32.mrb[0].mxu0
    %v11369 = vadd.f32 %v11328, %v11368
    %v11370 = vpop.f32.mrb[0].mxu0
    %v11371 = vpop.f32.mrb[0].mxu0
    %11372 = vdwg.mxu0
    %11373 = vmatprep.subr.bf16.mxu0 %v8160
    %11374 = vmatpush1.bf16.msra.mxu0 %v8159
    %11375 = vmatprep.subr.bf16.mxu0 %v8165
    %11376 = vmatpush1.bf16.msra.mxu0 %v8164
    %11377 = vmatprep.subr.bf16.mxu0 %v8170
    %11378 = vmatpush1.bf16.msra.mxu0 %v8169
    %11379 = vmatprep.subr.bf16.mxu0 %v8175
    %11380 = vmatpush1.bf16.msra.mxu0 %v8174
    %11381 = vmatprep.subr.bf16.mxu0 %v8180
    %11382 = vmatpush1.bf16.msra.mxu0 %v8179
    %11383 = vmatprep.subr.bf16.mxu0 %v8185
    %11384 = vmatpush1.bf16.msra.mxu0 %v8184
    %11385 = vmatprep.subr.bf16.mxu0 %v8190
    %11386 = vmatpush1.bf16.msra.mxu0 %v8189
    %11387 = vmatprep.subr.bf16.mxu0 %v8195
    %11388 = vmatpush1.bf16.msra.mxu0 %v8194
    %11389 = vmatprep.subr.bf16.mxu0 %v8200
    %11390 = vmatpush1.bf16.msra.mxu0 %v8199
    %11391 = vmatprep.subr.bf16.mxu0 %v8205
    %11392 = vmatpush1.bf16.msra.mxu0 %v8204
    %11393 = vmatprep.subr.bf16.mxu0 %v8210
    %11394 = vmatpush1.bf16.msra.mxu0 %v8209
    %11395 = vmatprep.subr.bf16.mxu0 %v8215
    %11396 = vmatpush1.bf16.msra.mxu0 %v8214
    %11397 = vmatprep.subr.bf16.mxu0 %v8220
    %11398 = vmatpush1.bf16.msra.mxu0 %v8219
    %11399 = vmatprep.subr.bf16.mxu0 %v8225
    %11400 = vmatpush1.bf16.msra.mxu0 %v8224
    %11401 = vmatprep.subr.bf16.mxu0 %v8230
    %11402 = vmatpush1.bf16.msra.mxu0 %v8229
    %11403 = vmatprep.subr.bf16.mxu0 %v8235
    %11404 = vmatpush1.bf16.msra.mxu0 %v8234
    %11405 = vmatprep.mubr.bf16.mxu0 %v2467
    %11406 = vmatmul.mubr.bf16.gmra.mrb[0].mxu0 %v2466
    %v11407 = vpop.f32.mrb[0].mxu0
    %v11408 = vadd.f32 %v4047, %v11407
    %v11409 = vpop.f32.mrb[0].mxu0
    %v11410 = vadd.f32 %v4051, %v11409
    %v11411 = vpop.f32.mrb[0].mxu0
    %v11412 = vpop.f32.mrb[0].mxu0
    %11413 = vdwg.mxu0
    %11414 = vmatprep.subr.bf16.mxu0 %v8240
    %11415 = vmatpush1.bf16.msra.mxu0 %v8239
    %11416 = vmatprep.subr.bf16.mxu0 %v8245
    %11417 = vmatpush1.bf16.msra.mxu0 %v8244
    %11418 = vmatprep.subr.bf16.mxu0 %v8250
    %11419 = vmatpush1.bf16.msra.mxu0 %v8249
    %11420 = vmatprep.subr.bf16.mxu0 %v8255
    %11421 = vmatpush1.bf16.msra.mxu0 %v8254
    %11422 = vmatprep.subr.bf16.mxu0 %v8260
    %11423 = vmatpush1.bf16.msra.mxu0 %v8259
    %11424 = vmatprep.subr.bf16.mxu0 %v8265
    %11425 = vmatpush1.bf16.msra.mxu0 %v8264
    %11426 = vmatprep.subr.bf16.mxu0 %v8270
    %11427 = vmatpush1.bf16.msra.mxu0 %v8269
    %11428 = vmatprep.subr.bf16.mxu0 %v8275
    %11429 = vmatpush1.bf16.msra.mxu0 %v8274
    %11430 = vmatprep.subr.bf16.mxu0 %v8280
    %11431 = vmatpush1.bf16.msra.mxu0 %v8279
    %11432 = vmatprep.subr.bf16.mxu0 %v8285
    %11433 = vmatpush1.bf16.msra.mxu0 %v8284
    %11434 = vmatprep.subr.bf16.mxu0 %v8290
    %11435 = vmatpush1.bf16.msra.mxu0 %v8289
    %11436 = vmatprep.subr.bf16.mxu0 %v8295
    %11437 = vmatpush1.bf16.msra.mxu0 %v8294
    %11438 = vmatprep.subr.bf16.mxu0 %v8300
    %11439 = vmatpush1.bf16.msra.mxu0 %v8299
    %11440 = vmatprep.subr.bf16.mxu0 %v8305
    %11441 = vmatpush1.bf16.msra.mxu0 %v8304
    %11442 = vmatprep.subr.bf16.mxu0 %v8310
    %11443 = vmatpush1.bf16.msra.mxu0 %v8309
    %11444 = vmatprep.subr.bf16.mxu0 %v8315
    %11445 = vmatpush1.bf16.msra.mxu0 %v8314
    %11446 = vmatprep.mubr.bf16.mxu0 %v2469
    %11447 = vmatmul.mubr.bf16.gmra.mrb[0].mxu0 %v2468
    %v11448 = vpop.f32.mrb[0].mxu0
    %v11449 = vadd.f32 %v11408, %v11448
    %v11450 = vpop.f32.mrb[0].mxu0
    %v11451 = vadd.f32 %v11410, %v11450
    %v11452 = vpop.f32.mrb[0].mxu0
    %v11453 = vpop.f32.mrb[0].mxu0
    %11454 = vdwg.mxu0
    %11455 = vmatprep.subr.bf16.mxu0 %v8320
    %11456 = vmatpush1.bf16.msra.mxu0 %v8319
    %11457 = vmatprep.subr.bf16.mxu0 %v8325
    %11458 = vmatpush1.bf16.msra.mxu0 %v8324
    %11459 = vmatprep.subr.bf16.mxu0 %v8330
    %11460 = vmatpush1.bf16.msra.mxu0 %v8329
    %11461 = vmatprep.subr.bf16.mxu0 %v8335
    %11462 = vmatpush1.bf16.msra.mxu0 %v8334
    %11463 = vmatprep.subr.bf16.mxu0 %v8340
    %11464 = vmatpush1.bf16.msra.mxu0 %v8339
    %11465 = vmatprep.subr.bf16.mxu0 %v8345
    %11466 = vmatpush1.bf16.msra.mxu0 %v8344
    %11467 = vmatprep.subr.bf16.mxu0 %v8350
    %11468 = vmatpush1.bf16.msra.mxu0 %v8349
    %11469 = vmatprep.subr.bf16.mxu0 %v8355
    %11470 = vmatpush1.bf16.msra.mxu0 %v8354
    %11471 = vmatprep.subr.bf16.mxu0 %v8360
    %11472 = vmatpush1.bf16.msra.mxu0 %v8359
    %11473 = vmatprep.subr.bf16.mxu0 %v8365
    %11474 = vmatpush1.bf16.msra.mxu0 %v8364
    %11475 = vmatprep.subr.bf16.mxu0 %v8370
    %11476 = vmatpush1.bf16.msra.mxu0 %v8369
    %11477 = vmatprep.subr.bf16.mxu0 %v8375
    %11478 = vmatpush1.bf16.msra.mxu0 %v8374
    %11479 = vmatprep.subr.bf16.mxu0 %v8380
    %11480 = vmatpush1.bf16.msra.mxu0 %v8379
    %11481 = vmatprep.subr.bf16.mxu0 %v8385
    %11482 = vmatpush1.bf16.msra.mxu0 %v8384
    %11483 = vmatprep.subr.bf16.mxu0 %v8390
    %11484 = vmatpush1.bf16.msra.mxu0 %v8389
    %11485 = vmatprep.subr.bf16.mxu0 %v8395
    %11486 = vmatpush1.bf16.msra.mxu0 %v8394
    %11487 = vmatprep.mubr.bf16.mxu0 %v2471
    %11488 = vmatmul.mubr.bf16.gmra.mrb[0].mxu0 %v2470
    %v11489 = vpop.f32.mrb[0].mxu0
    %v11490 = vadd.f32 %v11449, %v11489
    %v11491 = vpop.f32.mrb[0].mxu0
    %v11492 = vadd.f32 %v11451, %v11491
    %v11493 = vpop.f32.mrb[0].mxu0
    %v11494 = vpop.f32.mrb[0].mxu0
    %11495 = vdwg.mxu0
    %11496 = vmatprep.subr.bf16.mxu0 %v8400
    %11497 = vmatpush1.bf16.msra.mxu0 %v8399
    %11498 = vmatprep.subr.bf16.mxu0 %v8405
    %11499 = vmatpush1.bf16.msra.mxu0 %v8404
    %11500 = vmatprep.subr.bf16.mxu0 %v8410
    %11501 = vmatpush1.bf16.msra.mxu0 %v8409
    %11502 = vmatprep.subr.bf16.mxu0 %v8415
    %11503 = vmatpush1.bf16.msra.mxu0 %v8414
    %11504 = vmatprep.subr.bf16.mxu0 %v8420
    %11505 = vmatpush1.bf16.msra.mxu0 %v8419
    %11506 = vmatprep.subr.bf16.mxu0 %v8425
    %11507 = vmatpush1.bf16.msra.mxu0 %v8424
    %11508 = vmatprep.subr.bf16.mxu0 %v8430
    %11509 = vmatpush1.bf16.msra.mxu0 %v8429
    %11510 = vmatprep.subr.bf16.mxu0 %v8435
    %11511 = vmatpush1.bf16.msra.mxu0 %v8434
    %11512 = vmatprep.subr.bf16.mxu0 %v8440
    %11513 = vmatpush1.bf16.msra.mxu0 %v8439
    %11514 = vmatprep.subr.bf16.mxu0 %v8445
    %11515 = vmatpush1.bf16.msra.mxu0 %v8444
    %11516 = vmatprep.subr.bf16.mxu0 %v8450
    %11517 = vmatpush1.bf16.msra.mxu0 %v8449
    %11518 = vmatprep.subr.bf16.mxu0 %v8455
    %11519 = vmatpush1.bf16.msra.mxu0 %v8454
    %11520 = vmatprep.subr.bf16.mxu0 %v8460
    %11521 = vmatpush1.bf16.msra.mxu0 %v8459
    %11522 = vmatprep.subr.bf16.mxu0 %v8465
    %11523 = vmatpush1.bf16.msra.mxu0 %v8464
    %11524 = vmatprep.subr.bf16.mxu0 %v8470
    %11525 = vmatpush1.bf16.msra.mxu0 %v8469
    %11526 = vmatprep.subr.bf16.mxu0 %v8475
    %11527 = vmatpush1.bf16.msra.mxu0 %v8474
    %11528 = vmatprep.mubr.bf16.mxu0 %v2473
    %11529 = vmatmul.mubr.bf16.gmra.mrb[0].mxu0 %v2472
    %v11530 = vpop.f32.mrb[0].mxu0
    %v11531 = vadd.f32 %v11490, %v11530
    %v11532 = vpop.f32.mrb[0].mxu0
    %v11533 = vadd.f32 %v11492, %v11532
    %v11534 = vpop.f32.mrb[0].mxu0
    %v11535 = vpop.f32.mrb[0].mxu0
    %11536 = vdwg.mxu0
    %11537 = vmatprep.subr.bf16.mxu0 %v8480
    %11538 = vmatpush1.bf16.msra.mxu0 %v8479
    %11539 = vmatprep.subr.bf16.mxu0 %v8485
    %11540 = vmatpush1.bf16.msra.mxu0 %v8484
    %11541 = vmatprep.subr.bf16.mxu0 %v8490
    %11542 = vmatpush1.bf16.msra.mxu0 %v8489
    %11543 = vmatprep.subr.bf16.mxu0 %v8495
    %11544 = vmatpush1.bf16.msra.mxu0 %v8494
    %11545 = vmatprep.subr.bf16.mxu0 %v8500
    %11546 = vmatpush1.bf16.msra.mxu0 %v8499
    %11547 = vmatprep.subr.bf16.mxu0 %v8505
    %11548 = vmatpush1.bf16.msra.mxu0 %v8504
    %11549 = vmatprep.subr.bf16.mxu0 %v8510
    %11550 = vmatpush1.bf16.msra.mxu0 %v8509
    %11551 = vmatprep.subr.bf16.mxu0 %v8515
    %11552 = vmatpush1.bf16.msra.mxu0 %v8514
    %11553 = vmatprep.subr.bf16.mxu0 %v8520
    %11554 = vmatpush1.bf16.msra.mxu0 %v8519
    %11555 = vmatprep.subr.bf16.mxu0 %v8525
    %11556 = vmatpush1.bf16.msra.mxu0 %v8524
    %11557 = vmatprep.subr.bf16.mxu0 %v8530
    %11558 = vmatpush1.bf16.msra.mxu0 %v8529
    %11559 = vmatprep.subr.bf16.mxu0 %v8535
    %11560 = vmatpush1.bf16.msra.mxu0 %v8534
    %11561 = vmatprep.subr.bf16.mxu0 %v8540
    %11562 = vmatpush1.bf16.msra.mxu0 %v8539
    %11563 = vmatprep.subr.bf16.mxu0 %v8545
    %11564 = vmatpush1.bf16.msra.mxu0 %v8544
    %11565 = vmatprep.subr.bf16.mxu0 %v8550
    %11566 = vmatpush1.bf16.msra.mxu0 %v8549
    %11567 = vmatprep.subr.bf16.mxu0 %v8555
    %11568 = vmatpush1.bf16.msra.mxu0 %v8554
    %11569 = vmatprep.mubr.bf16.mxu0 %v2475
    %11570 = vmatmul.mubr.bf16.gmra.mrb[0].mxu0 %v2474
    %v11571 = vpop.f32.mrb[0].mxu0
    %v11572 = vadd.f32 %v11531, %v11571
    %v11573 = vpop.f32.mrb[0].mxu0
    %v11574 = vadd.f32 %v11533, %v11573
    %v11575 = vpop.f32.mrb[0].mxu0
    %v11576 = vpop.f32.mrb[0].mxu0
    %11577 = vdwg.mxu0
    %11578 = vmatprep.subr.bf16.mxu0 %v8560
    %11579 = vmatpush1.bf16.msra.mxu0 %v8559
    %11580 = vmatprep.subr.bf16.mxu0 %v8565
    %11581 = vmatpush1.bf16.msra.mxu0 %v8564
    %11582 = vmatprep.subr.bf16.mxu0 %v8570
    %11583 = vmatpush1.bf16.msra.mxu0 %v8569
    %11584 = vmatprep.subr.bf16.mxu0 %v8575
    %11585 = vmatpush1.bf16.msra.mxu0 %v8574
    %11586 = vmatprep.subr.bf16.mxu0 %v8580
    %11587 = vmatpush1.bf16.msra.mxu0 %v8579
    %11588 = vmatprep.subr.bf16.mxu0 %v8585
    %11589 = vmatpush1.bf16.msra.mxu0 %v8584
    %11590 = vmatprep.subr.bf16.mxu0 %v8590
    %11591 = vmatpush1.bf16.msra.mxu0 %v8589
    %11592 = vmatprep.subr.bf16.mxu0 %v8595
    %11593 = vmatpush1.bf16.msra.mxu0 %v8594
    %11594 = vmatprep.subr.bf16.mxu0 %v8600
    %11595 = vmatpush1.bf16.msra.mxu0 %v8599
    %11596 = vmatprep.subr.bf16.mxu0 %v8605
    %11597 = vmatpush1.bf16.msra.mxu0 %v8604
    %11598 = vmatprep.subr.bf16.mxu0 %v8610
    %11599 = vmatpush1.bf16.msra.mxu0 %v8609
    %11600 = vmatprep.subr.bf16.mxu0 %v8615
    %11601 = vmatpush1.bf16.msra.mxu0 %v8614
    %11602 = vmatprep.subr.bf16.mxu0 %v8620
    %11603 = vmatpush1.bf16.msra.mxu0 %v8619
    %11604 = vmatprep.subr.bf16.mxu0 %v8625
    %11605 = vmatpush1.bf16.msra.mxu0 %v8624
    %11606 = vmatprep.subr.bf16.mxu0 %v8630
    %11607 = vmatpush1.bf16.msra.mxu0 %v8629
    %11608 = vmatprep.subr.bf16.mxu0 %v8635
    %11609 = vmatpush1.bf16.msra.mxu0 %v8634
    %11610 = vmatprep.mubr.bf16.mxu0 %v2477
    %11611 = vmatmul.mubr.bf16.gmra.mrb[0].mxu0 %v2476
    %v11612 = vpop.f32.mrb[0].mxu0
    %v11613 = vadd.f32 %v11572, %v11612
    %v11614 = vpop.f32.mrb[0].mxu0
    %v11615 = vadd.f32 %v11574, %v11614
    %v11616 = vpop.f32.mrb[0].mxu0
    %v11617 = vpop.f32.mrb[0].mxu0
    %11618 = vdwg.mxu0
    %11619 = vmatprep.subr.bf16.mxu0 %v8640
    %11620 = vmatpush1.bf16.msra.mxu0 %v8639
    %11621 = vmatprep.subr.bf16.mxu0 %v8645
    %11622 = vmatpush1.bf16.msra.mxu0 %v8644
    %11623 = vmatprep.subr.bf16.mxu0 %v8650
    %11624 = vmatpush1.bf16.msra.mxu0 %v8649
    %11625 = vmatprep.subr.bf16.mxu0 %v8655
    %11626 = vmatpush1.bf16.msra.mxu0 %v8654
    %11627 = vmatprep.subr.bf16.mxu0 %v8660
    %11628 = vmatpush1.bf16.msra.mxu0 %v8659
    %11629 = vmatprep.subr.bf16.mxu0 %v8665
    %11630 = vmatpush1.bf16.msra.mxu0 %v8664
    %11631 = vmatprep.subr.bf16.mxu0 %v8670
    %11632 = vmatpush1.bf16.msra.mxu0 %v8669
    %11633 = vmatprep.subr.bf16.mxu0 %v8675
    %11634 = vmatpush1.bf16.msra.mxu0 %v8674
    %11635 = vmatprep.subr.bf16.mxu0 %v8680
    %11636 = vmatpush1.bf16.msra.mxu0 %v8679
    %11637 = vmatprep.subr.bf16.mxu0 %v8685
    %11638 = vmatpush1.bf16.msra.mxu0 %v8684
    %11639 = vmatprep.subr.bf16.mxu0 %v8690
    %11640 = vmatpush1.bf16.msra.mxu0 %v8689
    %11641 = vmatprep.subr.bf16.mxu0 %v8695
    %11642 = vmatpush1.bf16.msra.mxu0 %v8694
    %11643 = vmatprep.subr.bf16.mxu0 %v8700
    %11644 = vmatpush1.bf16.msra.mxu0 %v8699
    %11645 = vmatprep.subr.bf16.mxu0 %v8705
    %11646 = vmatpush1.bf16.msra.mxu0 %v8704
    %11647 = vmatprep.subr.bf16.mxu0 %v8710
    %11648 = vmatpush1.bf16.msra.mxu0 %v8709
    %11649 = vmatprep.subr.bf16.mxu0 %v8715
    %11650 = vmatpush1.bf16.msra.mxu0 %v8714
    %11651 = vmatprep.mubr.bf16.mxu0 %v2479
    %11652 = vmatmul.mubr.bf16.gmra.mrb[0].mxu0 %v2478
    %v11653 = vpop.f32.mrb[0].mxu0
    %v11654 = vadd.f32 %v11613, %v11653
    %v11655 = vpop.f32.mrb[0].mxu0
    %v11656 = vadd.f32 %v11615, %v11655
    %v11657 = vpop.f32.mrb[0].mxu0
    %v11658 = vpop.f32.mrb[0].mxu0
    %11659 = vdwg.mxu0
    %11660 = vmatprep.subr.bf16.mxu0 %v8720
    %11661 = vmatpush1.bf16.msra.mxu0 %v8719
    %11662 = vmatprep.subr.bf16.mxu0 %v8725
    %11663 = vmatpush1.bf16.msra.mxu0 %v8724
    %11664 = vmatprep.subr.bf16.mxu0 %v8730
    %11665 = vmatpush1.bf16.msra.mxu0 %v8729
    %11666 = vmatprep.subr.bf16.mxu0 %v8735
    %11667 = vmatpush1.bf16.msra.mxu0 %v8734
    %11668 = vmatprep.subr.bf16.mxu0 %v8740
    %11669 = vmatpush1.bf16.msra.mxu0 %v8739
    %11670 = vmatprep.subr.bf16.mxu0 %v8745
    %11671 = vmatpush1.bf16.msra.mxu0 %v8744
    %11672 = vmatprep.subr.bf16.mxu0 %v8750
    %11673 = vmatpush1.bf16.msra.mxu0 %v8749
    %11674 = vmatprep.subr.bf16.mxu0 %v8755
    %11675 = vmatpush1.bf16.msra.mxu0 %v8754
    %11676 = vmatprep.subr.bf16.mxu0 %v8760
    %11677 = vmatpush1.bf16.msra.mxu0 %v8759
    %11678 = vmatprep.subr.bf16.mxu0 %v8765
    %11679 = vmatpush1.bf16.msra.mxu0 %v8764
    %11680 = vmatprep.subr.bf16.mxu0 %v8770
    %11681 = vmatpush1.bf16.msra.mxu0 %v8769
    %11682 = vmatprep.subr.bf16.mxu0 %v8775
    %11683 = vmatpush1.bf16.msra.mxu0 %v8774
    %11684 = vmatprep.subr.bf16.mxu0 %v8780
    %11685 = vmatpush1.bf16.msra.mxu0 %v8779
    %11686 = vmatprep.subr.bf16.mxu0 %v8785
    %11687 = vmatpush1.bf16.msra.mxu0 %v8784
    %11688 = vmatprep.subr.bf16.mxu0 %v8790
    %11689 = vmatpush1.bf16.msra.mxu0 %v8789
    %11690 = vmatprep.subr.bf16.mxu0 %v8795
    %11691 = vmatpush1.bf16.msra.mxu0 %v8794
    %11692 = vmatprep.mubr.bf16.mxu0 %v2481
    %11693 = vmatmul.mubr.bf16.gmra.mrb[0].mxu0 %v2480
    %v11694 = vpop.f32.mrb[0].mxu0
    %v11695 = vadd.f32 %v11654, %v11694
    %v11696 = vpop.f32.mrb[0].mxu0
    %v11697 = vadd.f32 %v11656, %v11696
    %v11698 = vpop.f32.mrb[0].mxu0
    %v11699 = vpop.f32.mrb[0].mxu0
    %11700 = vdwg.mxu0
    %11701 = vmatprep.subr.bf16.mxu0 %v8800
    %11702 = vmatpush1.bf16.msra.mxu0 %v8799
    %11703 = vmatprep.subr.bf16.mxu0 %v8805
    %11704 = vmatpush1.bf16.msra.mxu0 %v8804
    %11705 = vmatprep.subr.bf16.mxu0 %v8810
    %11706 = vmatpush1.bf16.msra.mxu0 %v8809
    %11707 = vmatprep.subr.bf16.mxu0 %v8815
    %11708 = vmatpush1.bf16.msra.mxu0 %v8814
    %11709 = vmatprep.subr.bf16.mxu0 %v8820
    %11710 = vmatpush1.bf16.msra.mxu0 %v8819
    %11711 = vmatprep.subr.bf16.mxu0 %v8825
    %11712 = vmatpush1.bf16.msra.mxu0 %v8824
    %11713 = vmatprep.subr.bf16.mxu0 %v8830
    %11714 = vmatpush1.bf16.msra.mxu0 %v8829
    %11715 = vmatprep.subr.bf16.mxu0 %v8835
    %11716 = vmatpush1.bf16.msra.mxu0 %v8834
    %11717 = vmatprep.subr.bf16.mxu0 %v8840
    %11718 = vmatpush1.bf16.msra.mxu0 %v8839
    %11719 = vmatprep.subr.bf16.mxu0 %v8845
    %11720 = vmatpush1.bf16.msra.mxu0 %v8844
    %11721 = vmatprep.subr.bf16.mxu0 %v8850
    %11722 = vmatpush1.bf16.msra.mxu0 %v8849
    %11723 = vmatprep.subr.bf16.mxu0 %v8855
    %11724 = vmatpush1.bf16.msra.mxu0 %v8854
    %11725 = vmatprep.subr.bf16.mxu0 %v8860
    %11726 = vmatpush1.bf16.msra.mxu0 %v8859
    %11727 = vmatprep.subr.bf16.mxu0 %v8865
    %11728 = vmatpush1.bf16.msra.mxu0 %v8864
    %11729 = vmatprep.subr.bf16.mxu0 %v8870
    %11730 = vmatpush1.bf16.msra.mxu0 %v8869
    %11731 = vmatprep.subr.bf16.mxu0 %v8875
    %11732 = vmatpush1.bf16.msra.mxu0 %v8874
    %11733 = vmatprep.mubr.bf16.mxu0 %v2483
    %11734 = vmatmul.mubr.bf16.gmra.mrb[0].mxu0 %v2482
    %v11735 = vpop.f32.mrb[0].mxu0
    %v11736 = vadd.f32 %v11695, %v11735
    %v11737 = vpop.f32.mrb[0].mxu0
    %v11738 = vadd.f32 %v11697, %v11737
    %v11739 = vpop.f32.mrb[0].mxu0
    %v11740 = vpop.f32.mrb[0].mxu0
    %11741 = vdwg.mxu0
    %11742 = vmatprep.subr.bf16.mxu0 %v8880
    %11743 = vmatpush1.bf16.msra.mxu0 %v8879
    %11744 = vmatprep.subr.bf16.mxu0 %v8885
    %11745 = vmatpush1.bf16.msra.mxu0 %v8884
    %11746 = vmatprep.subr.bf16.mxu0 %v8890
    %11747 = vmatpush1.bf16.msra.mxu0 %v8889
    %11748 = vmatprep.subr.bf16.mxu0 %v8895
    %11749 = vmatpush1.bf16.msra.mxu0 %v8894
    %11750 = vmatprep.subr.bf16.mxu0 %v8900
    %11751 = vmatpush1.bf16.msra.mxu0 %v8899
    %11752 = vmatprep.subr.bf16.mxu0 %v8905
    %11753 = vmatpush1.bf16.msra.mxu0 %v8904
    %11754 = vmatprep.subr.bf16.mxu0 %v8910
    %11755 = vmatpush1.bf16.msra.mxu0 %v8909
    %11756 = vmatprep.subr.bf16.mxu0 %v8915
    %11757 = vmatpush1.bf16.msra.mxu0 %v8914
    %11758 = vmatprep.subr.bf16.mxu0 %v8920
    %11759 = vmatpush1.bf16.msra.mxu0 %v8919
    %11760 = vmatprep.subr.bf16.mxu0 %v8925
    %11761 = vmatpush1.bf16.msra.mxu0 %v8924
    %11762 = vmatprep.subr.bf16.mxu0 %v8930
    %11763 = vmatpush1.bf16.msra.mxu0 %v8929
    %11764 = vmatprep.subr.bf16.mxu0 %v8935
    %11765 = vmatpush1.bf16.msra.mxu0 %v8934
    %11766 = vmatprep.subr.bf16.mxu0 %v8940
    %11767 = vmatpush1.bf16.msra.mxu0 %v8939
    %11768 = vmatprep.subr.bf16.mxu0 %v8945
    %11769 = vmatpush1.bf16.msra.mxu0 %v8944
    %11770 = vmatprep.subr.bf16.mxu0 %v8950
    %11771 = vmatpush1.bf16.msra.mxu0 %v8949
    %11772 = vmatprep.subr.bf16.mxu0 %v8955
    %11773 = vmatpush1.bf16.msra.mxu0 %v8954
    %11774 = vmatprep.mubr.bf16.mxu0 %v2485
    %11775 = vmatmul.mubr.bf16.gmra.mrb[0].mxu0 %v2484
    %v11776 = vpop.f32.mrb[0].mxu0
    %v11777 = vadd.f32 %v11736, %v11776
    %v11778 = vpop.f32.mrb[0].mxu0
    %v11779 = vadd.f32 %v11738, %v11778
    %v11780 = vpop.f32.mrb[0].mxu0
    %v11781 = vpop.f32.mrb[0].mxu0
    %11782 = vdwg.mxu0
    %11783 = vmatprep.subr.bf16.mxu0 %v8960
    %11784 = vmatpush1.bf16.msra.mxu0 %v8959
    %11785 = vmatprep.subr.bf16.mxu0 %v8965
    %11786 = vmatpush1.bf16.msra.mxu0 %v8964
    %11787 = vmatprep.subr.bf16.mxu0 %v8970
    %11788 = vmatpush1.bf16.msra.mxu0 %v8969
    %11789 = vmatprep.subr.bf16.mxu0 %v8975
    %11790 = vmatpush1.bf16.msra.mxu0 %v8974
    %11791 = vmatprep.subr.bf16.mxu0 %v8980
    %11792 = vmatpush1.bf16.msra.mxu0 %v8979
    %11793 = vmatprep.subr.bf16.mxu0 %v8985
    %11794 = vmatpush1.bf16.msra.mxu0 %v8984
    %11795 = vmatprep.subr.bf16.mxu0 %v8990
    %11796 = vmatpush1.bf16.msra.mxu0 %v8989
    %11797 = vmatprep.subr.bf16.mxu0 %v8995
    %11798 = vmatpush1.bf16.msra.mxu0 %v8994
    %11799 = vmatprep.subr.bf16.mxu0 %v9000
    %11800 = vmatpush1.bf16.msra.mxu0 %v8999
    %11801 = vmatprep.subr.bf16.mxu0 %v9005
    %11802 = vmatpush1.bf16.msra.mxu0 %v9004
    %11803 = vmatprep.subr.bf16.mxu0 %v9010
    %11804 = vmatpush1.bf16.msra.mxu0 %v9009
    %11805 = vmatprep.subr.bf16.mxu0 %v9015
    %11806 = vmatpush1.bf16.msra.mxu0 %v9014
    %11807 = vmatprep.subr.bf16.mxu0 %v9020
    %11808 = vmatpush1.bf16.msra.mxu0 %v9019
    %11809 = vmatprep.subr.bf16.mxu0 %v9025
    %11810 = vmatpush1.bf16.msra.mxu0 %v9024
    %11811 = vmatprep.subr.bf16.mxu0 %v9030
    %11812 = vmatpush1.bf16.msra.mxu0 %v9029
    %11813 = vmatprep.subr.bf16.mxu0 %v9035
    %11814 = vmatpush1.bf16.msra.mxu0 %v9034
    %11815 = vmatprep.mubr.bf16.mxu0 %v2487
    %11816 = vmatmul.mubr.bf16.gmra.mrb[0].mxu0 %v2486
    %v11817 = vpop.f32.mrb[0].mxu0
    %v11818 = vadd.f32 %v11777, %v11817
    %v11819 = vpop.f32.mrb[0].mxu0
    %v11820 = vadd.f32 %v11779, %v11819
    %v11821 = vpop.f32.mrb[0].mxu0
    %v11822 = vpop.f32.mrb[0].mxu0
    %11823 = vdwg.mxu0
    %11824 = vmatprep.subr.bf16.mxu0 %v9040
    %11825 = vmatpush1.bf16.msra.mxu0 %v9039
    %11826 = vmatprep.subr.bf16.mxu0 %v9045
    %11827 = vmatpush1.bf16.msra.mxu0 %v9044
    %11828 = vmatprep.subr.bf16.mxu0 %v9050
    %11829 = vmatpush1.bf16.msra.mxu0 %v9049
    %11830 = vmatprep.subr.bf16.mxu0 %v9055
    %11831 = vmatpush1.bf16.msra.mxu0 %v9054
    %11832 = vmatprep.subr.bf16.mxu0 %v9060
    %11833 = vmatpush1.bf16.msra.mxu0 %v9059
    %11834 = vmatprep.subr.bf16.mxu0 %v9065
    %11835 = vmatpush1.bf16.msra.mxu0 %v9064
    %11836 = vmatprep.subr.bf16.mxu0 %v9070
    %11837 = vmatpush1.bf16.msra.mxu0 %v9069
    %11838 = vmatprep.subr.bf16.mxu0 %v9075
    %11839 = vmatpush1.bf16.msra.mxu0 %v9074
    %11840 = vmatprep.subr.bf16.mxu0 %v9080
    %11841 = vmatpush1.bf16.msra.mxu0 %v9079
    %11842 = vmatprep.subr.bf16.mxu0 %v9085
    %11843 = vmatpush1.bf16.msra.mxu0 %v9084
    %11844 = vmatprep.subr.bf16.mxu0 %v9090
    %11845 = vmatpush1.bf16.msra.mxu0 %v9089
    %11846 = vmatprep.subr.bf16.mxu0 %v9095
    %11847 = vmatpush1.bf16.msra.mxu0 %v9094
    %11848 = vmatprep.subr.bf16.mxu0 %v9100
    %11849 = vmatpush1.bf16.msra.mxu0 %v9099
    %11850 = vmatprep.subr.bf16.mxu0 %v9105
    %11851 = vmatpush1.bf16.msra.mxu0 %v9104
    %11852 = vmatprep.subr.bf16.mxu0 %v9110
    %11853 = vmatpush1.bf16.msra.mxu0 %v9109
    %11854 = vmatprep.subr.bf16.mxu0 %v9115
    %11855 = vmatpush1.bf16.msra.mxu0 %v9114
    %11856 = vmatprep.mubr.bf16.mxu0 %v2489
    %11857 = vmatmul.mubr.bf16.gmra.mrb[0].mxu0 %v2488
    %v11858 = vpop.f32.mrb[0].mxu0
    %v11859 = vadd.f32 %v11818, %v11858
    %v11860 = vpop.f32.mrb[0].mxu0
    %v11861 = vadd.f32 %v11820, %v11860
    %v11862 = vpop.f32.mrb[0].mxu0
    %v11863 = vpop.f32.mrb[0].mxu0
    %11864 = vdwg.mxu0
    %11865 = vmatprep.subr.bf16.mxu0 %v9120
    %11866 = vmatpush1.bf16.msra.mxu0 %v9119
    %11867 = vmatprep.subr.bf16.mxu0 %v9125
    %11868 = vmatpush1.bf16.msra.mxu0 %v9124
    %11869 = vmatprep.subr.bf16.mxu0 %v9130
    %11870 = vmatpush1.bf16.msra.mxu0 %v9129
    %11871 = vmatprep.subr.bf16.mxu0 %v9135
    %11872 = vmatpush1.bf16.msra.mxu0 %v9134
    %11873 = vmatprep.subr.bf16.mxu0 %v9140
    %11874 = vmatpush1.bf16.msra.mxu0 %v9139
    %11875 = vmatprep.subr.bf16.mxu0 %v9145
    %11876 = vmatpush1.bf16.msra.mxu0 %v9144
    %11877 = vmatprep.subr.bf16.mxu0 %v9150
    %11878 = vmatpush1.bf16.msra.mxu0 %v9149
    %11879 = vmatprep.subr.bf16.mxu0 %v9155
    %11880 = vmatpush1.bf16.msra.mxu0 %v9154
    %11881 = vmatprep.subr.bf16.mxu0 %v9160
    %11882 = vmatpush1.bf16.msra.mxu0 %v9159
    %11883 = vmatprep.subr.bf16.mxu0 %v9165
    %11884 = vmatpush1.bf16.msra.mxu0 %v9164
    %11885 = vmatprep.subr.bf16.mxu0 %v9170
    %11886 = vmatpush1.bf16.msra.mxu0 %v9169
    %11887 = vmatprep.subr.bf16.mxu0 %v9175
    %11888 = vmatpush1.bf16.msra.mxu0 %v9174
    %11889 = vmatprep.subr.bf16.mxu0 %v9180
    %11890 = vmatpush1.bf16.msra.mxu0 %v9179
    %11891 = vmatprep.subr.bf16.mxu0 %v9185
    %11892 = vmatpush1.bf16.msra.mxu0 %v9184
    %11893 = vmatprep.subr.bf16.mxu0 %v9190
    %11894 = vmatpush1.bf16.msra.mxu0 %v9189
    %11895 = vmatprep.subr.bf16.mxu0 %v9195
    %11896 = vmatpush1.bf16.msra.mxu0 %v9194
    %11897 = vmatprep.mubr.bf16.mxu0 %v2491
    %11898 = vmatmul.mubr.bf16.gmra.mrb[0].mxu0 %v2490
    %v11899 = vpop.f32.mrb[0].mxu0
    %v11900 = vadd.f32 %v11859, %v11899
    %v11901 = vpop.f32.mrb[0].mxu0
    %v11902 = vadd.f32 %v11861, %v11901
    %v11903 = vpop.f32.mrb[0].mxu0
    %v11904 = vpop.f32.mrb[0].mxu0
    %11905 = vdwg.mxu0
    %11906 = vmatprep.subr.bf16.mxu0 %v9200
    %11907 = vmatpush1.bf16.msra.mxu0 %v9199
    %11908 = vmatprep.subr.bf16.mxu0 %v9205
    %11909 = vmatpush1.bf16.msra.mxu0 %v9204
    %11910 = vmatprep.subr.bf16.mxu0 %v9210
    %11911 = vmatpush1.bf16.msra.mxu0 %v9209
    %11912 = vmatprep.subr.bf16.mxu0 %v9215
    %11913 = vmatpush1.bf16.msra.mxu0 %v9214
    %11914 = vmatprep.subr.bf16.mxu0 %v9220
    %11915 = vmatpush1.bf16.msra.mxu0 %v9219
    %11916 = vmatprep.subr.bf16.mxu0 %v9225
    %11917 = vmatpush1.bf16.msra.mxu0 %v9224
    %11918 = vmatprep.subr.bf16.mxu0 %v9230
    %11919 = vmatpush1.bf16.msra.mxu0 %v9229
    %11920 = vmatprep.subr.bf16.mxu0 %v9235
    %11921 = vmatpush1.bf16.msra.mxu0 %v9234
    %11922 = vmatprep.subr.bf16.mxu0 %v9240
    %11923 = vmatpush1.bf16.msra.mxu0 %v9239
    %11924 = vmatprep.subr.bf16.mxu0 %v9245
    %11925 = vmatpush1.bf16.msra.mxu0 %v9244
    %11926 = vmatprep.subr.bf16.mxu0 %v9250
    %11927 = vmatpush1.bf16.msra.mxu0 %v9249
    %11928 = vmatprep.subr.bf16.mxu0 %v9255
    %11929 = vmatpush1.bf16.msra.mxu0 %v9254
    %11930 = vmatprep.subr.bf16.mxu0 %v9260
    %11931 = vmatpush1.bf16.msra.mxu0 %v9259
    %11932 = vmatprep.subr.bf16.mxu0 %v9265
    %11933 = vmatpush1.bf16.msra.mxu0 %v9264
    %11934 = vmatprep.subr.bf16.mxu0 %v9270
    %11935 = vmatpush1.bf16.msra.mxu0 %v9269
    %11936 = vmatprep.subr.bf16.mxu0 %v9275
    %11937 = vmatpush1.bf16.msra.mxu0 %v9274
    %11938 = vmatprep.mubr.bf16.mxu0 %v2493
    %11939 = vmatmul.mubr.bf16.gmra.mrb[0].mxu0 %v2492
    %v11940 = vpop.f32.mrb[0].mxu0
    %v11941 = vadd.f32 %v11900, %v11940
    %v11942 = vpop.f32.mrb[0].mxu0
    %v11943 = vadd.f32 %v11902, %v11942
    %v11944 = vpop.f32.mrb[0].mxu0
    %v11945 = vpop.f32.mrb[0].mxu0
    %11946 = vdwg.mxu0
    %11947 = vmatprep.subr.bf16.mxu0 %v9280
    %11948 = vmatpush1.bf16.msra.mxu0 %v9279
    %11949 = vmatprep.subr.bf16.mxu0 %v9285
    %11950 = vmatpush1.bf16.msra.mxu0 %v9284
    %11951 = vmatprep.subr.bf16.mxu0 %v9290
    %11952 = vmatpush1.bf16.msra.mxu0 %v9289
    %11953 = vmatprep.subr.bf16.mxu0 %v9295
    %11954 = vmatpush1.bf16.msra.mxu0 %v9294
    %11955 = vmatprep.subr.bf16.mxu0 %v9300
    %11956 = vmatpush1.bf16.msra.mxu0 %v9299
    %11957 = vmatprep.subr.bf16.mxu0 %v9305
    %11958 = vmatpush1.bf16.msra.mxu0 %v9304
    %11959 = vmatprep.subr.bf16.mxu0 %v9310
    %11960 = vmatpush1.bf16.msra.mxu0 %v9309
    %11961 = vmatprep.subr.bf16.mxu0 %v9315
    %11962 = vmatpush1.bf16.msra.mxu0 %v9314
    %11963 = vmatprep.subr.bf16.mxu0 %v9320
    %11964 = vmatpush1.bf16.msra.mxu0 %v9319
    %11965 = vmatprep.subr.bf16.mxu0 %v9325
    %11966 = vmatpush1.bf16.msra.mxu0 %v9324
    %11967 = vmatprep.subr.bf16.mxu0 %v9330
    %11968 = vmatpush1.bf16.msra.mxu0 %v9329
    %11969 = vmatprep.subr.bf16.mxu0 %v9335
    %11970 = vmatpush1.bf16.msra.mxu0 %v9334
    %11971 = vmatprep.subr.bf16.mxu0 %v9340
    %11972 = vmatpush1.bf16.msra.mxu0 %v9339
    %11973 = vmatprep.subr.bf16.mxu0 %v9345
    %11974 = vmatpush1.bf16.msra.mxu0 %v9344
    %11975 = vmatprep.subr.bf16.mxu0 %v9350
    %11976 = vmatpush1.bf16.msra.mxu0 %v9349
    %11977 = vmatprep.subr.bf16.mxu0 %v9355
    %11978 = vmatpush1.bf16.msra.mxu0 %v9354
    %11979 = vmatprep.mubr.bf16.mxu0 %v2495
    %11980 = vmatmul.mubr.bf16.gmra.mrb[0].mxu0 %v2494
    %v11981 = vpop.f32.mrb[0].mxu0
    %v11982 = vadd.f32 %v11941, %v11981
    %v11983 = vpop.f32.mrb[0].mxu0
    %v11984 = vadd.f32 %v11943, %v11983
    %v11985 = vpop.f32.mrb[0].mxu0
    %v11986 = vpop.f32.mrb[0].mxu0
    %11987 = vdwg.mxu0
    %11988 = vmatprep.subr.bf16.mxu0 %v9360
    %11989 = vmatpush1.bf16.msra.mxu0 %v9359
    %11990 = vmatprep.subr.bf16.mxu0 %v9365
    %11991 = vmatpush1.bf16.msra.mxu0 %v9364
    %11992 = vmatprep.subr.bf16.mxu0 %v9370
    %11993 = vmatpush1.bf16.msra.mxu0 %v9369
    %11994 = vmatprep.subr.bf16.mxu0 %v9375
    %11995 = vmatpush1.bf16.msra.mxu0 %v9374
    %11996 = vmatprep.subr.bf16.mxu0 %v9380
    %11997 = vmatpush1.bf16.msra.mxu0 %v9379
    %11998 = vmatprep.subr.bf16.mxu0 %v9385
    %11999 = vmatpush1.bf16.msra.mxu0 %v9384
    %12000 = vmatprep.subr.bf16.mxu0 %v9390
    %12001 = vmatpush1.bf16.msra.mxu0 %v9389
    %12002 = vmatprep.subr.bf16.mxu0 %v9395
    %12003 = vmatpush1.bf16.msra.mxu0 %v9394
    %12004 = vmatprep.subr.bf16.mxu0 %v9400
    %12005 = vmatpush1.bf16.msra.mxu0 %v9399
    %12006 = vmatprep.subr.bf16.mxu0 %v9405
    %12007 = vmatpush1.bf16.msra.mxu0 %v9404
    %12008 = vmatprep.subr.bf16.mxu0 %v9410
    %12009 = vmatpush1.bf16.msra.mxu0 %v9409
    %12010 = vmatprep.subr.bf16.mxu0 %v9415
    %12011 = vmatpush1.bf16.msra.mxu0 %v9414
    %12012 = vmatprep.subr.bf16.mxu0 %v9420
    %12013 = vmatpush1.bf16.msra.mxu0 %v9419
    %12014 = vmatprep.subr.bf16.mxu0 %v9425
    %12015 = vmatpush1.bf16.msra.mxu0 %v9424
    %12016 = vmatprep.subr.bf16.mxu0 %v9430
    %12017 = vmatpush1.bf16.msra.mxu0 %v9429
    %12018 = vmatprep.subr.bf16.mxu0 %v9435
    %12019 = vmatpush1.bf16.msra.mxu0 %v9434
    %12020 = vmatprep.mubr.bf16.mxu0 %v2497
    %12021 = vmatmul.mubr.bf16.gmra.mrb[0].mxu0 %v2496
    %v12022 = vpop.f32.mrb[0].mxu0
    %v12023 = vadd.f32 %v11982, %v12022
    %v12024 = vpop.f32.mrb[0].mxu0
    %v12025 = vadd.f32 %v11984, %v12024
    %v12026 = vpop.f32.mrb[0].mxu0
    %v12027 = vpop.f32.mrb[0].mxu0
    %12028 = vdwg.mxu0
    %12029 = vmatprep.subr.bf16.mxu0 0
    %12030 = vmatpush1.bf16.msra.mxu0 %v8161
    %12031 = vmatprep.subr.bf16.mxu0 0
    %12032 = vmatpush1.bf16.msra.mxu0 %v8166
    %12033 = vmatprep.subr.bf16.mxu0 0
    %12034 = vmatpush1.bf16.msra.mxu0 %v8171
    %12035 = vmatprep.subr.bf16.mxu0 0
    %12036 = vmatpush1.bf16.msra.mxu0 %v8176
    %12037 = vmatprep.subr.bf16.mxu0 0
    %12038 = vmatpush1.bf16.msra.mxu0 %v8181
    %12039 = vmatprep.subr.bf16.mxu0 0
    %12040 = vmatpush1.bf16.msra.mxu0 %v8186
    %12041 = vmatprep.subr.bf16.mxu0 0
    %12042 = vmatpush1.bf16.msra.mxu0 %v8191
    %12043 = vmatprep.subr.bf16.mxu0 0
    %12044 = vmatpush1.bf16.msra.mxu0 %v8196
    %12045 = vmatprep.subr.bf16.mxu0 0
    %12046 = vmatpush1.bf16.msra.mxu0 %v8201
    %12047 = vmatprep.subr.bf16.mxu0 0
    %12048 = vmatpush1.bf16.msra.mxu0 %v8206
    %12049 = vmatprep.subr.bf16.mxu0 0
    %12050 = vmatpush1.bf16.msra.mxu0 %v8211
    %12051 = vmatprep.subr.bf16.mxu0 0
    %12052 = vmatpush1.bf16.msra.mxu0 %v8216
    %12053 = vmatprep.subr.bf16.mxu0 0
    %12054 = vmatpush1.bf16.msra.mxu0 %v8221
    %12055 = vmatprep.subr.bf16.mxu0 0
    %12056 = vmatpush1.bf16.msra.mxu0 %v8226
    %12057 = vmatprep.subr.bf16.mxu0 0
    %12058 = vmatpush1.bf16.msra.mxu0 %v8231
    %12059 = vmatprep.subr.bf16.mxu0 0
    %12060 = vmatpush1.bf16.msra.mxu0 %v8236
    %12061 = vmatprep.mubr.bf16.mxu0 %v2467
    %12062 = vmatmul.mubr.bf16.gmra.mrb[0].mxu0 %v2466
    %v12063 = vpop.f32.mrb[0].mxu0
    %v12064 = vadd.f32 %v4055, %v12063
    %v12065 = vpop.f32.mrb[0].mxu0
    %v12066 = vpop.f32.mrb[0].mxu0
    %v12067 = vpop.f32.mrb[0].mxu0
    %12068 = vdwg.mxu0
    %12069 = vmatprep.subr.bf16.mxu0 0
    %12070 = vmatpush1.bf16.msra.mxu0 %v8241
    %12071 = vmatprep.subr.bf16.mxu0 0
    %12072 = vmatpush1.bf16.msra.mxu0 %v8246
    %12073 = vmatprep.subr.bf16.mxu0 0
    %12074 = vmatpush1.bf16.msra.mxu0 %v8251
    %12075 = vmatprep.subr.bf16.mxu0 0
    %12076 = vmatpush1.bf16.msra.mxu0 %v8256
    %12077 = vmatprep.subr.bf16.mxu0 0
    %12078 = vmatpush1.bf16.msra.mxu0 %v8261
    %12079 = vmatprep.subr.bf16.mxu0 0
    %12080 = vmatpush1.bf16.msra.mxu0 %v8266
    %12081 = vmatprep.subr.bf16.mxu0 0
    %12082 = vmatpush1.bf16.msra.mxu0 %v8271
    %12083 = vmatprep.subr.bf16.mxu0 0
    %12084 = vmatpush1.bf16.msra.mxu0 %v8276
    %12085 = vmatprep.subr.bf16.mxu0 0
    %12086 = vmatpush1.bf16.msra.mxu0 %v8281
    %12087 = vmatprep.subr.bf16.mxu0 0
    %12088 = vmatpush1.bf16.msra.mxu0 %v8286
    %12089 = vmatprep.subr.bf16.mxu0 0
    %12090 = vmatpush1.bf16.msra.mxu0 %v8291
    %12091 = vmatprep.subr.bf16.mxu0 0
    %12092 = vmatpush1.bf16.msra.mxu0 %v8296
    %12093 = vmatprep.subr.bf16.mxu0 0
    %12094 = vmatpush1.bf16.msra.mxu0 %v8301
    %12095 = vmatprep.subr.bf16.mxu0 0
    %12096 = vmatpush1.bf16.msra.mxu0 %v8306
    %12097 = vmatprep.subr.bf16.mxu0 0
    %12098 = vmatpush1.bf16.msra.mxu0 %v8311
    %12099 = vmatprep.subr.bf16.mxu0 0
    %12100 = vmatpush1.bf16.msra.mxu0 %v8316
    %12101 = vmatprep.mubr.bf16.mxu0 %v2469
    %12102 = vmatmul.mubr.bf16.gmra.mrb[0].mxu0 %v2468
    %v12103 = vpop.f32.mrb[0].mxu0
    %v12104 = vadd.f32 %v12064, %v12103
    %v12105 = vpop.f32.mrb[0].mxu0
    %v12106 = vpop.f32.mrb[0].mxu0
    %v12107 = vpop.f32.mrb[0].mxu0
    %12108 = vdwg.mxu0
    %12109 = vmatprep.subr.bf16.mxu0 0
    %12110 = vmatpush1.bf16.msra.mxu0 %v8321
    %12111 = vmatprep.subr.bf16.mxu0 0
    %12112 = vmatpush1.bf16.msra.mxu0 %v8326
    %12113 = vmatprep.subr.bf16.mxu0 0
    %12114 = vmatpush1.bf16.msra.mxu0 %v8331
    %12115 = vmatprep.subr.bf16.mxu0 0
    %12116 = vmatpush1.bf16.msra.mxu0 %v8336
    %12117 = vmatprep.subr.bf16.mxu0 0
    %12118 = vmatpush1.bf16.msra.mxu0 %v8341
    %12119 = vmatprep.subr.bf16.mxu0 0
    %12120 = vmatpush1.bf16.msra.mxu0 %v8346
    %12121 = vmatprep.subr.bf16.mxu0 0
    %12122 = vmatpush1.bf16.msra.mxu0 %v8351
    %12123 = vmatprep.subr.bf16.mxu0 0
    %12124 = vmatpush1.bf16.msra.mxu0 %v8356
    %12125 = vmatprep.subr.bf16.mxu0 0
    %12126 = vmatpush1.bf16.msra.mxu0 %v8361
    %12127 = vmatprep.subr.bf16.mxu0 0
    %12128 = vmatpush1.bf16.msra.mxu0 %v8366
    %12129 = vmatprep.subr.bf16.mxu0 0
    %12130 = vmatpush1.bf16.msra.mxu0 %v8371
    %12131 = vmatprep.subr.bf16.mxu0 0
    %12132 = vmatpush1.bf16.msra.mxu0 %v8376
    %12133 = vmatprep.subr.bf16.mxu0 0
    %12134 = vmatpush1.bf16.msra.mxu0 %v8381
    %12135 = vmatprep.subr.bf16.mxu0 0
    %12136 = vmatpush1.bf16.msra.mxu0 %v8386
    %12137 = vmatprep.subr.bf16.mxu0 0
    %12138 = vmatpush1.bf16.msra.mxu0 %v8391
    %12139 = vmatprep.subr.bf16.mxu0 0
    %12140 = vmatpush1.bf16.msra.mxu0 %v8396
    %12141 = vmatprep.mubr.bf16.mxu0 %v2471
    %12142 = vmatmul.mubr.bf16.gmra.mrb[0].mxu0 %v2470
    %v12143 = vpop.f32.mrb[0].mxu0
    %v12144 = vadd.f32 %v12104, %v12143
    %v12145 = vpop.f32.mrb[0].mxu0
    %v12146 = vpop.f32.mrb[0].mxu0
    %v12147 = vpop.f32.mrb[0].mxu0
    %12148 = vdwg.mxu0
    %12149 = vmatprep.subr.bf16.mxu0 0
    %12150 = vmatpush1.bf16.msra.mxu0 %v8401
    %12151 = vmatprep.subr.bf16.mxu0 0
    %12152 = vmatpush1.bf16.msra.mxu0 %v8406
    %12153 = vmatprep.subr.bf16.mxu0 0
    %12154 = vmatpush1.bf16.msra.mxu0 %v8411
    %12155 = vmatprep.subr.bf16.mxu0 0
    %12156 = vmatpush1.bf16.msra.mxu0 %v8416
    %12157 = vmatprep.subr.bf16.mxu0 0
    %12158 = vmatpush1.bf16.msra.mxu0 %v8421
    %12159 = vmatprep.subr.bf16.mxu0 0
    %12160 = vmatpush1.bf16.msra.mxu0 %v8426
    %12161 = vmatprep.subr.bf16.mxu0 0
    %12162 = vmatpush1.bf16.msra.mxu0 %v8431
    %12163 = vmatprep.subr.bf16.mxu0 0
    %12164 = vmatpush1.bf16.msra.mxu0 %v8436
    %12165 = vmatprep.subr.bf16.mxu0 0
    %12166 = vmatpush1.bf16.msra.mxu0 %v8441
    %12167 = vmatprep.subr.bf16.mxu0 0
    %12168 = vmatpush1.bf16.msra.mxu0 %v8446
    %12169 = vmatprep.subr.bf16.mxu0 0
    %12170 = vmatpush1.bf16.msra.mxu0 %v8451
    %12171 = vmatprep.subr.bf16.mxu0 0
    %12172 = vmatpush1.bf16.msra.mxu0 %v8456
    %12173 = vmatprep.subr.bf16.mxu0 0
    %12174 = vmatpush1.bf16.msra.mxu0 %v8461
    %12175 = vmatprep.subr.bf16.mxu0 0
    %12176 = vmatpush1.bf16.msra.mxu0 %v8466
    %12177 = vmatprep.subr.bf16.mxu0 0
    %12178 = vmatpush1.bf16.msra.mxu0 %v8471
    %12179 = vmatprep.subr.bf16.mxu0 0
    %12180 = vmatpush1.bf16.msra.mxu0 %v8476
    %12181 = vmatprep.mubr.bf16.mxu0 %v2473
    %12182 = vmatmul.mubr.bf16.gmra.mrb[0].mxu0 %v2472
    %v12183 = vpop.f32.mrb[0].mxu0
    %v12184 = vadd.f32 %v12144, %v12183
    %v12185 = vpop.f32.mrb[0].mxu0
    %v12186 = vpop.f32.mrb[0].mxu0
    %v12187 = vpop.f32.mrb[0].mxu0
    %12188 = vdwg.mxu0
    %12189 = vmatprep.subr.bf16.mxu0 0
    %12190 = vmatpush1.bf16.msra.mxu0 %v8481
    %12191 = vmatprep.subr.bf16.mxu0 0
    %12192 = vmatpush1.bf16.msra.mxu0 %v8486
    %12193 = vmatprep.subr.bf16.mxu0 0
    %12194 = vmatpush1.bf16.msra.mxu0 %v8491
    %12195 = vmatprep.subr.bf16.mxu0 0
    %12196 = vmatpush1.bf16.msra.mxu0 %v8496
    %12197 = vmatprep.subr.bf16.mxu0 0
    %12198 = vmatpush1.bf16.msra.mxu0 %v8501
    %12199 = vmatprep.subr.bf16.mxu0 0
    %12200 = vmatpush1.bf16.msra.mxu0 %v8506
    %12201 = vmatprep.subr.bf16.mxu0 0
    %12202 = vmatpush1.bf16.msra.mxu0 %v8511
    %12203 = vmatprep.subr.bf16.mxu0 0
    %12204 = vmatpush1.bf16.msra.mxu0 %v8516
    %12205 = vmatprep.subr.bf16.mxu0 0
    %12206 = vmatpush1.bf16.msra.mxu0 %v8521
    %12207 = vmatprep.subr.bf16.mxu0 0
    %12208 = vmatpush1.bf16.msra.mxu0 %v8526
    %12209 = vmatprep.subr.bf16.mxu0 0
    %12210 = vmatpush1.bf16.msra.mxu0 %v8531
    %12211 = vmatprep.subr.bf16.mxu0 0
    %12212 = vmatpush1.bf16.msra.mxu0 %v8536
    %12213 = vmatprep.subr.bf16.mxu0 0
    %12214 = vmatpush1.bf16.msra.mxu0 %v8541
    %12215 = vmatprep.subr.bf16.mxu0 0
    %12216 = vmatpush1.bf16.msra.mxu0 %v8546
    %12217 = vmatprep.subr.bf16.mxu0 0
    %12218 = vmatpush1.bf16.msra.mxu0 %v8551
    %12219 = vmatprep.subr.bf16.mxu0 0
    %12220 = vmatpush1.bf16.msra.mxu0 %v8556
    %12221 = vmatprep.mubr.bf16.mxu0 %v2475
    %12222 = vmatmul.mubr.bf16.gmra.mrb[0].mxu0 %v2474
    %v12223 = vpop.f32.mrb[0].mxu0
    %v12224 = vadd.f32 %v12184, %v12223
    %v12225 = vpop.f32.mrb[0].mxu0
    %v12226 = vpop.f32.mrb[0].mxu0
    %v12227 = vpop.f32.mrb[0].mxu0
    %12228 = vdwg.mxu0
    %12229 = vmatprep.subr.bf16.mxu0 0
    %12230 = vmatpush1.bf16.msra.mxu0 %v8561
    %12231 = vmatprep.subr.bf16.mxu0 0
    %12232 = vmatpush1.bf16.msra.mxu0 %v8566
    %12233 = vmatprep.subr.bf16.mxu0 0
    %12234 = vmatpush1.bf16.msra.mxu0 %v8571
    %12235 = vmatprep.subr.bf16.mxu0 0
    %12236 = vmatpush1.bf16.msra.mxu0 %v8576
    %12237 = vmatprep.subr.bf16.mxu0 0
    %12238 = vmatpush1.bf16.msra.mxu0 %v8581
    %12239 = vmatprep.subr.bf16.mxu0 0
    %12240 = vmatpush1.bf16.msra.mxu0 %v8586
    %12241 = vmatprep.subr.bf16.mxu0 0
    %12242 = vmatpush1.bf16.msra.mxu0 %v8591
    %12243 = vmatprep.subr.bf16.mxu0 0
    %12244 = vmatpush1.bf16.msra.mxu0 %v8596
    %12245 = vmatprep.subr.bf16.mxu0 0
    %12246 = vmatpush1.bf16.msra.mxu0 %v8601
    %12247 = vmatprep.subr.bf16.mxu0 0
    %12248 = vmatpush1.bf16.msra.mxu0 %v8606
    %12249 = vmatprep.subr.bf16.mxu0 0
    %12250 = vmatpush1.bf16.msra.mxu0 %v8611
    %12251 = vmatprep.subr.bf16.mxu0 0
    %12252 = vmatpush1.bf16.msra.mxu0 %v8616
    %12253 = vmatprep.subr.bf16.mxu0 0
    %12254 = vmatpush1.bf16.msra.mxu0 %v8621
    %12255 = vmatprep.subr.bf16.mxu0 0
    %12256 = vmatpush1.bf16.msra.mxu0 %v8626
    %12257 = vmatprep.subr.bf16.mxu0 0
    %12258 = vmatpush1.bf16.msra.mxu0 %v8631
    %12259 = vmatprep.subr.bf16.mxu0 0
    %12260 = vmatpush1.bf16.msra.mxu0 %v8636
    %12261 = vmatprep.mubr.bf16.mxu0 %v2477
    %12262 = vmatmul.mubr.bf16.gmra.mrb[0].mxu0 %v2476
    %v12263 = vpop.f32.mrb[0].mxu0
    %v12264 = vadd.f32 %v12224, %v12263
    %v12265 = vpop.f32.mrb[0].mxu0
    %v12266 = vpop.f32.mrb[0].mxu0
    %v12267 = vpop.f32.mrb[0].mxu0
    %12268 = vdwg.mxu0
    %12269 = vmatprep.subr.bf16.mxu0 0
    %12270 = vmatpush1.bf16.msra.mxu0 %v8641
    %12271 = vmatprep.subr.bf16.mxu0 0
    %12272 = vmatpush1.bf16.msra.mxu0 %v8646
    %12273 = vmatprep.subr.bf16.mxu0 0
    %12274 = vmatpush1.bf16.msra.mxu0 %v8651
    %12275 = vmatprep.subr.bf16.mxu0 0
    %12276 = vmatpush1.bf16.msra.mxu0 %v8656
    %12277 = vmatprep.subr.bf16.mxu0 0
    %12278 = vmatpush1.bf16.msra.mxu0 %v8661
    %12279 = vmatprep.subr.bf16.mxu0 0
    %12280 = vmatpush1.bf16.msra.mxu0 %v8666
    %12281 = vmatprep.subr.bf16.mxu0 0
    %12282 = vmatpush1.bf16.msra.mxu0 %v8671
    %12283 = vmatprep.subr.bf16.mxu0 0
    %12284 = vmatpush1.bf16.msra.mxu0 %v8676
    %12285 = vmatprep.subr.bf16.mxu0 0
    %12286 = vmatpush1.bf16.msra.mxu0 %v8681
    %12287 = vmatprep.subr.bf16.mxu0 0
    %12288 = vmatpush1.bf16.msra.mxu0 %v8686
    %12289 = vmatprep.subr.bf16.mxu0 0
    %12290 = vmatpush1.bf16.msra.mxu0 %v8691
    %12291 = vmatprep.subr.bf16.mxu0 0
    %12292 = vmatpush1.bf16.msra.mxu0 %v8696
    %12293 = vmatprep.subr.bf16.mxu0 0
    %12294 = vmatpush1.bf16.msra.mxu0 %v8701
    %12295 = vmatprep.subr.bf16.mxu0 0
    %12296 = vmatpush1.bf16.msra.mxu0 %v8706
    %12297 = vmatprep.subr.bf16.mxu0 0
    %12298 = vmatpush1.bf16.msra.mxu0 %v8711
    %12299 = vmatprep.subr.bf16.mxu0 0
    %12300 = vmatpush1.bf16.msra.mxu0 %v8716
    %12301 = vmatprep.mubr.bf16.mxu0 %v2479
    %12302 = vmatmul.mubr.bf16.gmra.mrb[0].mxu0 %v2478
    %v12303 = vpop.f32.mrb[0].mxu0
    %v12304 = vadd.f32 %v12264, %v12303
    %v12305 = vpop.f32.mrb[0].mxu0
    %v12306 = vpop.f32.mrb[0].mxu0
    %v12307 = vpop.f32.mrb[0].mxu0
    %12308 = vdwg.mxu0
    %12309 = vmatprep.subr.bf16.mxu0 0
    %12310 = vmatpush1.bf16.msra.mxu0 %v8721
    %12311 = vmatprep.subr.bf16.mxu0 0
    %12312 = vmatpush1.bf16.msra.mxu0 %v8726
    %12313 = vmatprep.subr.bf16.mxu0 0
    %12314 = vmatpush1.bf16.msra.mxu0 %v8731
    %12315 = vmatprep.subr.bf16.mxu0 0
    %12316 = vmatpush1.bf16.msra.mxu0 %v8736
    %12317 = vmatprep.subr.bf16.mxu0 0
    %12318 = vmatpush1.bf16.msra.mxu0 %v8741
    %12319 = vmatprep.subr.bf16.mxu0 0
    %12320 = vmatpush1.bf16.msra.mxu0 %v8746
    %12321 = vmatprep.subr.bf16.mxu0 0
    %12322 = vmatpush1.bf16.msra.mxu0 %v8751
    %12323 = vmatprep.subr.bf16.mxu0 0
    %12324 = vmatpush1.bf16.msra.mxu0 %v8756
    %12325 = vmatprep.subr.bf16.mxu0 0
    %12326 = vmatpush1.bf16.msra.mxu0 %v8761
    %12327 = vmatprep.subr.bf16.mxu0 0
    %12328 = vmatpush1.bf16.msra.mxu0 %v8766
    %12329 = vmatprep.subr.bf16.mxu0 0
    %12330 = vmatpush1.bf16.msra.mxu0 %v8771
    %12331 = vmatprep.subr.bf16.mxu0 0
    %12332 = vmatpush1.bf16.msra.mxu0 %v8776
    %12333 = vmatprep.subr.bf16.mxu0 0
    %12334 = vmatpush1.bf16.msra.mxu0 %v8781
    %12335 = vmatprep.subr.bf16.mxu0 0
    %12336 = vmatpush1.bf16.msra.mxu0 %v8786
    %12337 = vmatprep.subr.bf16.mxu0 0
    %12338 = vmatpush1.bf16.msra.mxu0 %v8791
    %12339 = vmatprep.subr.bf16.mxu0 0
    %12340 = vmatpush1.bf16.msra.mxu0 %v8796
    %12341 = vmatprep.mubr.bf16.mxu0 %v2481
    %12342 = vmatmul.mubr.bf16.gmra.mrb[0].mxu0 %v2480
    %v12343 = vpop.f32.mrb[0].mxu0
    %v12344 = vadd.f32 %v12304, %v12343
    %v12345 = vpop.f32.mrb[0].mxu0
    %v12346 = vpop.f32.mrb[0].mxu0
    %v12347 = vpop.f32.mrb[0].mxu0
    %12348 = vdwg.mxu0
    %12349 = vmatprep.subr.bf16.mxu0 0
    %12350 = vmatpush1.bf16.msra.mxu0 %v8801
    %12351 = vmatprep.subr.bf16.mxu0 0
    %12352 = vmatpush1.bf16.msra.mxu0 %v8806
    %12353 = vmatprep.subr.bf16.mxu0 0
    %12354 = vmatpush1.bf16.msra.mxu0 %v8811
    %12355 = vmatprep.subr.bf16.mxu0 0
    %12356 = vmatpush1.bf16.msra.mxu0 %v8816
    %12357 = vmatprep.subr.bf16.mxu0 0
    %12358 = vmatpush1.bf16.msra.mxu0 %v8821
    %12359 = vmatprep.subr.bf16.mxu0 0
    %12360 = vmatpush1.bf16.msra.mxu0 %v8826
    %12361 = vmatprep.subr.bf16.mxu0 0
    %12362 = vmatpush1.bf16.msra.mxu0 %v8831
    %12363 = vmatprep.subr.bf16.mxu0 0
    %12364 = vmatpush1.bf16.msra.mxu0 %v8836
    %12365 = vmatprep.subr.bf16.mxu0 0
    %12366 = vmatpush1.bf16.msra.mxu0 %v8841
    %12367 = vmatprep.subr.bf16.mxu0 0
    %12368 = vmatpush1.bf16.msra.mxu0 %v8846
    %12369 = vmatprep.subr.bf16.mxu0 0
    %12370 = vmatpush1.bf16.msra.mxu0 %v8851
    %12371 = vmatprep.subr.bf16.mxu0 0
    %12372 = vmatpush1.bf16.msra.mxu0 %v8856
    %12373 = vmatprep.subr.bf16.mxu0 0
    %12374 = vmatpush1.bf16.msra.mxu0 %v8861
    %12375 = vmatprep.subr.bf16.mxu0 0
    %12376 = vmatpush1.bf16.msra.mxu0 %v8866
    %12377 = vmatprep.subr.bf16.mxu0 0
    %12378 = vmatpush1.bf16.msra.mxu0 %v8871
    %12379 = vmatprep.subr.bf16.mxu0 0
    %12380 = vmatpush1.bf16.msra.mxu0 %v8876
    %12381 = vmatprep.mubr.bf16.mxu0 %v2483
    %12382 = vmatmul.mubr.bf16.gmra.mrb[0].mxu0 %v2482
    %v12383 = vpop.f32.mrb[0].mxu0
    %v12384 = vadd.f32 %v12344, %v12383
    %v12385 = vpop.f32.mrb[0].mxu0
    %v12386 = vpop.f32.mrb[0].mxu0
    %v12387 = vpop.f32.mrb[0].mxu0
    %12388 = vdwg.mxu0
    %12389 = vmatprep.subr.bf16.mxu0 0
    %12390 = vmatpush1.bf16.msra.mxu0 %v8881
    %12391 = vmatprep.subr.bf16.mxu0 0
    %12392 = vmatpush1.bf16.msra.mxu0 %v8886
    %12393 = vmatprep.subr.bf16.mxu0 0
    %12394 = vmatpush1.bf16.msra.mxu0 %v8891
    %12395 = vmatprep.subr.bf16.mxu0 0
    %12396 = vmatpush1.bf16.msra.mxu0 %v8896
    %12397 = vmatprep.subr.bf16.mxu0 0
    %12398 = vmatpush1.bf16.msra.mxu0 %v8901
    %12399 = vmatprep.subr.bf16.mxu0 0
    %12400 = vmatpush1.bf16.msra.mxu0 %v8906
    %12401 = vmatprep.subr.bf16.mxu0 0
    %12402 = vmatpush1.bf16.msra.mxu0 %v8911
    %12403 = vmatprep.subr.bf16.mxu0 0
    %12404 = vmatpush1.bf16.msra.mxu0 %v8916
    %12405 = vmatprep.subr.bf16.mxu0 0
    %12406 = vmatpush1.bf16.msra.mxu0 %v8921
    %12407 = vmatprep.subr.bf16.mxu0 0
    %12408 = vmatpush1.bf16.msra.mxu0 %v8926
    %12409 = vmatprep.subr.bf16.mxu0 0
    %12410 = vmatpush1.bf16.msra.mxu0 %v8931
    %12411 = vmatprep.subr.bf16.mxu0 0
    %12412 = vmatpush1.bf16.msra.mxu0 %v8936
    %12413 = vmatprep.subr.bf16.mxu0 0
    %12414 = vmatpush1.bf16.msra.mxu0 %v8941
    %12415 = vmatprep.subr.bf16.mxu0 0
    %12416 = vmatpush1.bf16.msra.mxu0 %v8946
    %12417 = vmatprep.subr.bf16.mxu0 0
    %12418 = vmatpush1.bf16.msra.mxu0 %v8951
    %12419 = vmatprep.subr.bf16.mxu0 0
    %12420 = vmatpush1.bf16.msra.mxu0 %v8956
    %12421 = vmatprep.mubr.bf16.mxu0 %v2485
    %12422 = vmatmul.mubr.bf16.gmra.mrb[0].mxu0 %v2484
    %v12423 = vpop.f32.mrb[0].mxu0
    %v12424 = vadd.f32 %v12384, %v12423
    %v12425 = vpop.f32.mrb[0].mxu0
    %v12426 = vpop.f32.mrb[0].mxu0
    %v12427 = vpop.f32.mrb[0].mxu0
    %12428 = vdwg.mxu0
    %12429 = vmatprep.subr.bf16.mxu0 0
    %12430 = vmatpush1.bf16.msra.mxu0 %v8961
    %12431 = vmatprep.subr.bf16.mxu0 0
    %12432 = vmatpush1.bf16.msra.mxu0 %v8966
    %12433 = vmatprep.subr.bf16.mxu0 0
    %12434 = vmatpush1.bf16.msra.mxu0 %v8971
    %12435 = vmatprep.subr.bf16.mxu0 0
    %12436 = vmatpush1.bf16.msra.mxu0 %v8976
    %12437 = vmatprep.subr.bf16.mxu0 0
    %12438 = vmatpush1.bf16.msra.mxu0 %v8981
    %12439 = vmatprep.subr.bf16.mxu0 0
    %12440 = vmatpush1.bf16.msra.mxu0 %v8986
    %12441 = vmatprep.subr.bf16.mxu0 0
    %12442 = vmatpush1.bf16.msra.mxu0 %v8991
    %12443 = vmatprep.subr.bf16.mxu0 0
    %12444 = vmatpush1.bf16.msra.mxu0 %v8996
    %12445 = vmatprep.subr.bf16.mxu0 0
    %12446 = vmatpush1.bf16.msra.mxu0 %v9001
    %12447 = vmatprep.subr.bf16.mxu0 0
    %12448 = vmatpush1.bf16.msra.mxu0 %v9006
    %12449 = vmatprep.subr.bf16.mxu0 0
    %12450 = vmatpush1.bf16.msra.mxu0 %v9011
    %12451 = vmatprep.subr.bf16.mxu0 0
    %12452 = vmatpush1.bf16.msra.mxu0 %v9016
    %12453 = vmatprep.subr.bf16.mxu0 0
    %12454 = vmatpush1.bf16.msra.mxu0 %v9021
    %12455 = vmatprep.subr.bf16.mxu0 0
    %12456 = vmatpush1.bf16.msra.mxu0 %v9026
    %12457 = vmatprep.subr.bf16.mxu0 0
    %12458 = vmatpush1.bf16.msra.mxu0 %v9031
    %12459 = vmatprep.subr.bf16.mxu0 0
    %12460 = vmatpush1.bf16.msra.mxu0 %v9036
    %12461 = vmatprep.mubr.bf16.mxu0 %v2487
    %12462 = vmatmul.mubr.bf16.gmra.mrb[0].mxu0 %v2486
    %v12463 = vpop.f32.mrb[0].mxu0
    %v12464 = vadd.f32 %v12424, %v12463
    %v12465 = vpop.f32.mrb[0].mxu0
    %v12466 = vpop.f32.mrb[0].mxu0
    %v12467 = vpop.f32.mrb[0].mxu0
    %12468 = vdwg.mxu0
    %12469 = vmatprep.subr.bf16.mxu0 0
    %12470 = vmatpush1.bf16.msra.mxu0 %v9041
    %12471 = vmatprep.subr.bf16.mxu0 0
    %12472 = vmatpush1.bf16.msra.mxu0 %v9046
    %12473 = vmatprep.subr.bf16.mxu0 0
    %12474 = vmatpush1.bf16.msra.mxu0 %v9051
    %12475 = vmatprep.subr.bf16.mxu0 0
    %12476 = vmatpush1.bf16.msra.mxu0 %v9056
    %12477 = vmatprep.subr.bf16.mxu0 0
    %12478 = vmatpush1.bf16.msra.mxu0 %v9061
    %12479 = vmatprep.subr.bf16.mxu0 0
    %12480 = vmatpush1.bf16.msra.mxu0 %v9066
    %12481 = vmatprep.subr.bf16.mxu0 0
    %12482 = vmatpush1.bf16.msra.mxu0 %v9071
    %12483 = vmatprep.subr.bf16.mxu0 0
    %12484 = vmatpush1.bf16.msra.mxu0 %v9076
    %12485 = vmatprep.subr.bf16.mxu0 0
    %12486 = vmatpush1.bf16.msra.mxu0 %v9081
    %12487 = vmatprep.subr.bf16.mxu0 0
    %12488 = vmatpush1.bf16.msra.mxu0 %v9086
    %12489 = vmatprep.subr.bf16.mxu0 0
    %12490 = vmatpush1.bf16.msra.mxu0 %v9091
    %12491 = vmatprep.subr.bf16.mxu0 0
    %12492 = vmatpush1.bf16.msra.mxu0 %v9096
    %12493 = vmatprep.subr.bf16.mxu0 0
    %12494 = vmatpush1.bf16.msra.mxu0 %v9101
    %12495 = vmatprep.subr.bf16.mxu0 0
    %12496 = vmatpush1.bf16.msra.mxu0 %v9106
    %12497 = vmatprep.subr.bf16.mxu0 0
    %12498 = vmatpush1.bf16.msra.mxu0 %v9111
    %12499 = vmatprep.subr.bf16.mxu0 0
    %12500 = vmatpush1.bf16.msra.mxu0 %v9116
    %12501 = vmatprep.mubr.bf16.mxu0 %v2489
    %12502 = vmatmul.mubr.bf16.gmra.mrb[0].mxu0 %v2488
    %v12503 = vpop.f32.mrb[0].mxu0
    %v12504 = vadd.f32 %v12464, %v12503
    %v12505 = vpop.f32.mrb[0].mxu0
    %v12506 = vpop.f32.mrb[0].mxu0
    %v12507 = vpop.f32.mrb[0].mxu0
    %12508 = vdwg.mxu0
    %12509 = vmatprep.subr.bf16.mxu0 0
    %12510 = vmatpush1.bf16.msra.mxu0 %v9121
    %12511 = vmatprep.subr.bf16.mxu0 0
    %12512 = vmatpush1.bf16.msra.mxu0 %v9126
    %12513 = vmatprep.subr.bf16.mxu0 0
    %12514 = vmatpush1.bf16.msra.mxu0 %v9131
    %12515 = vmatprep.subr.bf16.mxu0 0
    %12516 = vmatpush1.bf16.msra.mxu0 %v9136
    %12517 = vmatprep.subr.bf16.mxu0 0
    %12518 = vmatpush1.bf16.msra.mxu0 %v9141
    %12519 = vmatprep.subr.bf16.mxu0 0
    %12520 = vmatpush1.bf16.msra.mxu0 %v9146
    %12521 = vmatprep.subr.bf16.mxu0 0
    %12522 = vmatpush1.bf16.msra.mxu0 %v9151
    %12523 = vmatprep.subr.bf16.mxu0 0
    %12524 = vmatpush1.bf16.msra.mxu0 %v9156
    %12525 = vmatprep.subr.bf16.mxu0 0
    %12526 = vmatpush1.bf16.msra.mxu0 %v9161
    %12527 = vmatprep.subr.bf16.mxu0 0
    %12528 = vmatpush1.bf16.msra.mxu0 %v9166
    %12529 = vmatprep.subr.bf16.mxu0 0
    %12530 = vmatpush1.bf16.msra.mxu0 %v9171
    %12531 = vmatprep.subr.bf16.mxu0 0
    %12532 = vmatpush1.bf16.msra.mxu0 %v9176
    %12533 = vmatprep.subr.bf16.mxu0 0
    %12534 = vmatpush1.bf16.msra.mxu0 %v9181
    %12535 = vmatprep.subr.bf16.mxu0 0
    %12536 = vmatpush1.bf16.msra.mxu0 %v9186
    %12537 = vmatprep.subr.bf16.mxu0 0
    %12538 = vmatpush1.bf16.msra.mxu0 %v9191
    %12539 = vmatprep.subr.bf16.mxu0 0
    %12540 = vmatpush1.bf16.msra.mxu0 %v9196
    %12541 = vmatprep.mubr.bf16.mxu0 %v2491
    %12542 = vmatmul.mubr.bf16.gmra.mrb[0].mxu0 %v2490
    %v12543 = vpop.f32.mrb[0].mxu0
    %v12544 = vadd.f32 %v12504, %v12543
    %v12545 = vpop.f32.mrb[0].mxu0
    %v12546 = vpop.f32.mrb[0].mxu0
    %v12547 = vpop.f32.mrb[0].mxu0
    %12548 = vdwg.mxu0
    %12549 = vmatprep.subr.bf16.mxu0 0
    %12550 = vmatpush1.bf16.msra.mxu0 %v9201
    %12551 = vmatprep.subr.bf16.mxu0 0
    %12552 = vmatpush1.bf16.msra.mxu0 %v9206
    %12553 = vmatprep.subr.bf16.mxu0 0
    %12554 = vmatpush1.bf16.msra.mxu0 %v9211
    %12555 = vmatprep.subr.bf16.mxu0 0
    %12556 = vmatpush1.bf16.msra.mxu0 %v9216
    %12557 = vmatprep.subr.bf16.mxu0 0
    %12558 = vmatpush1.bf16.msra.mxu0 %v9221
    %12559 = vmatprep.subr.bf16.mxu0 0
    %12560 = vmatpush1.bf16.msra.mxu0 %v9226
    %12561 = vmatprep.subr.bf16.mxu0 0
    %12562 = vmatpush1.bf16.msra.mxu0 %v9231
    %12563 = vmatprep.subr.bf16.mxu0 0
    %12564 = vmatpush1.bf16.msra.mxu0 %v9236
    %12565 = vmatprep.subr.bf16.mxu0 0
    %12566 = vmatpush1.bf16.msra.mxu0 %v9241
    %12567 = vmatprep.subr.bf16.mxu0 0
    %12568 = vmatpush1.bf16.msra.mxu0 %v9246
    %12569 = vmatprep.subr.bf16.mxu0 0
    %12570 = vmatpush1.bf16.msra.mxu0 %v9251
    %12571 = vmatprep.subr.bf16.mxu0 0
    %12572 = vmatpush1.bf16.msra.mxu0 %v9256
    %12573 = vmatprep.subr.bf16.mxu0 0
    %12574 = vmatpush1.bf16.msra.mxu0 %v9261
    %12575 = vmatprep.subr.bf16.mxu0 0
    %12576 = vmatpush1.bf16.msra.mxu0 %v9266
    %12577 = vmatprep.subr.bf16.mxu0 0
    %12578 = vmatpush1.bf16.msra.mxu0 %v9271
    %12579 = vmatprep.subr.bf16.mxu0 0
    %12580 = vmatpush1.bf16.msra.mxu0 %v9276
    %12581 = vmatprep.mubr.bf16.mxu0 %v2493
    %12582 = vmatmul.mubr.bf16.gmra.mrb[0].mxu0 %v2492
    %v12583 = vpop.f32.mrb[0].mxu0
    %v12584 = vadd.f32 %v12544, %v12583
    %v12585 = vpop.f32.mrb[0].mxu0
    %v12586 = vpop.f32.mrb[0].mxu0
    %v12587 = vpop.f32.mrb[0].mxu0
    %12588 = vdwg.mxu0
    %12589 = vmatprep.subr.bf16.mxu0 0
    %12590 = vmatpush1.bf16.msra.mxu0 %v9281
    %12591 = vmatprep.subr.bf16.mxu0 0
    %12592 = vmatpush1.bf16.msra.mxu0 %v9286
    %12593 = vmatprep.subr.bf16.mxu0 0
    %12594 = vmatpush1.bf16.msra.mxu0 %v9291
    %12595 = vmatprep.subr.bf16.mxu0 0
    %12596 = vmatpush1.bf16.msra.mxu0 %v9296
    %12597 = vmatprep.subr.bf16.mxu0 0
    %12598 = vmatpush1.bf16.msra.mxu0 %v9301
    %12599 = vmatprep.subr.bf16.mxu0 0
    %12600 = vmatpush1.bf16.msra.mxu0 %v9306
    %12601 = vmatprep.subr.bf16.mxu0 0
    %12602 = vmatpush1.bf16.msra.mxu0 %v9311
    %12603 = vmatprep.subr.bf16.mxu0 0
    %12604 = vmatpush1.bf16.msra.mxu0 %v9316
    %12605 = vmatprep.subr.bf16.mxu0 0
    %12606 = vmatpush1.bf16.msra.mxu0 %v9321
    %12607 = vmatprep.subr.bf16.mxu0 0
    %12608 = vmatpush1.bf16.msra.mxu0 %v9326
    %12609 = vmatprep.subr.bf16.mxu0 0
    %12610 = vmatpush1.bf16.msra.mxu0 %v9331
    %12611 = vmatprep.subr.bf16.mxu0 0
    %12612 = vmatpush1.bf16.msra.mxu0 %v9336
    %12613 = vmatprep.subr.bf16.mxu0 0
    %12614 = vmatpush1.bf16.msra.mxu0 %v9341
    %12615 = vmatprep.subr.bf16.mxu0 0
    %12616 = vmatpush1.bf16.msra.mxu0 %v9346
    %12617 = vmatprep.subr.bf16.mxu0 0
    %12618 = vmatpush1.bf16.msra.mxu0 %v9351
    %12619 = vmatprep.subr.bf16.mxu0 0
    %12620 = vmatpush1.bf16.msra.mxu0 %v9356
    %12621 = vmatprep.mubr.bf16.mxu0 %v2495
    %12622 = vmatmul.mubr.bf16.gmra.mrb[0].mxu0 %v2494
    %v12623 = vpop.f32.mrb[0].mxu0
    %v12624 = vadd.f32 %v12584, %v12623
    %v12625 = vpop.f32.mrb[0].mxu0
    %v12626 = vpop.f32.mrb[0].mxu0
    %v12627 = vpop.f32.mrb[0].mxu0
    %12628 = vdwg.mxu0
    %12629 = vmatprep.subr.bf16.mxu0 0
    %12630 = vmatpush1.bf16.msra.mxu0 %v9361
    %12631 = vmatprep.subr.bf16.mxu0 0
    %12632 = vmatpush1.bf16.msra.mxu0 %v9366
    %12633 = vmatprep.subr.bf16.mxu0 0
    %12634 = vmatpush1.bf16.msra.mxu0 %v9371
    %12635 = vmatprep.subr.bf16.mxu0 0
    %12636 = vmatpush1.bf16.msra.mxu0 %v9376
    %12637 = vmatprep.subr.bf16.mxu0 0
    %12638 = vmatpush1.bf16.msra.mxu0 %v9381
    %12639 = vmatprep.subr.bf16.mxu0 0
    %12640 = vmatpush1.bf16.msra.mxu0 %v9386
    %12641 = vmatprep.subr.bf16.mxu0 0
    %12642 = vmatpush1.bf16.msra.mxu0 %v9391
    %12643 = vmatprep.subr.bf16.mxu0 0
    %12644 = vmatpush1.bf16.msra.mxu0 %v9396
    %12645 = vmatprep.subr.bf16.mxu0 0
    %12646 = vmatpush1.bf16.msra.mxu0 %v9401
    %12647 = vmatprep.subr.bf16.mxu0 0
    %12648 = vmatpush1.bf16.msra.mxu0 %v9406
    %12649 = vmatprep.subr.bf16.mxu0 0
    %12650 = vmatpush1.bf16.msra.mxu0 %v9411
    %12651 = vmatprep.subr.bf16.mxu0 0
    %12652 = vmatpush1.bf16.msra.mxu0 %v9416
    %12653 = vmatprep.subr.bf16.mxu0 0
    %12654 = vmatpush1.bf16.msra.mxu0 %v9421
    %12655 = vmatprep.subr.bf16.mxu0 0
    %12656 = vmatpush1.bf16.msra.mxu0 %v9426
    %12657 = vmatprep.subr.bf16.mxu0 0
    %12658 = vmatpush1.bf16.msra.mxu0 %v9431
    %12659 = vmatprep.subr.bf16.mxu0 0
    %12660 = vmatpush1.bf16.msra.mxu0 %v9436
    %12661 = vmatprep.mubr.bf16.mxu0 %v2497
    %12662 = vmatmul.mubr.bf16.gmra.mrb[0].mxu0 %v2496
    %v12663 = vpop.f32.mrb[0].mxu0
    %v12664 = vadd.f32 %v12624, %v12663
    %v12665 = vpop.f32.mrb[0].mxu0
    %v12666 = vpop.f32.mrb[0].mxu0
    %v12667 = vpop.f32.mrb[0].mxu0
    %12668 = vdwg.mxu0
    %12669 = vst [vmem:[%s5] sm:$0xff] %v11367
    %12670 = vst [vmem:[%s5 + $0x8] sm:$0xff] %v11369
    %12671 = vst [vmem:[%s5 + $0x10] sm:$0xff] %v12023
    %12672 = vst [vmem:[%s5 + $0x18] sm:$0xff] %v12025
    %12673 = vst [vmem:[%s5 + $0x20] sm:$0xff] %v12664
    // Predicated region
    $region38: #{dnn_forward.1} parent=1 // pred_check
      _
    $region39: #{dnn_forward.1} parent=1 // pred_check_branch
      %12675 = sbr.rel (0) target = $region41
    $region40: #{dnn_forward.1} parent=1 // pred_region
      _
    $region41: #{dnn_forward.1} parent=1 // pred_fallthru
      _
    // Predicated region
    $region42: #{dnn_forward.1} parent=1 // pred_check
      _
    $region43: #{dnn_forward.1} parent=1 // pred_check_branch
      %12677 = sbr.rel (0) target = $region45
    $region44: #{dnn_forward.1} parent=1 // pred_region
      _
    $region45: #{dnn_forward.1} parent=1 // pred_fallthru
      _
    %12678 = vsyncpa [#allocation3], 1
    %12679 = vsyncpa [#allocation5], 1
    %12680 = vsyncpa [#allocation8], 1

</llo_original>
